<compile_context>
chip_gen: v7x
topology: tpu7x:2x2x1
jax: 0.10.0
libtpu: 0.0.40
codegen_flags: <defaults>
</compile_context>

<pallas_src>
import functools

import jax
import jax.numpy as jnp
from jax import lax
from jax.experimental import pallas as pl
from jax.experimental.pallas import tpu as pltpu

# ----------------------------- model config ---------------------------------
VOCAB_SIZE = 50
EMBED_SIZE = 200
EMBED_PAD = 256           # lane-aligned embedding width (extra cols are zero)
HIDDEN_SIZE = 128
NUM_LAYERS = 2
NUM_CLASSES = 5
BATCH_TILE = 8            # f32 sublane tile


# ------------------------------ fused kernel ---------------------------------
def _net_kernel(x_ref,
                wih1_ref, whh1f_ref, whh1b_ref, b1_ref,
                wih2f_ref, wih2b_ref, whh2f_ref, whh2b_ref, b2f_ref, b2b_ref,
                fcw_ref, fcb_ref,
                o_ref,
                pre1f_sc, pre1b_sc, h1f_sc, h1b_sc, pre2f_sc,
                *, seq, batch, hidden):
    H = hidden
    G = 4 * H
    in_dim = x_ref.shape[2]

    # (1) Hoisted layer-1 input projection: all time steps, BOTH directions, one matmul.
    x2d = x_ref[...].reshape(seq * batch, in_dim)
    pre1 = jnp.dot(x2d, wih1_ref[...], preferred_element_type=jnp.float32) + b1_ref[...]
    pre1f_sc[...] = pre1[:, :G].reshape(seq, batch, G)
    pre1b_sc[...] = pre1[:, G:].reshape(seq, batch, G)

    zeros_hc = jnp.zeros((batch, H), jnp.float32)

    def lstm_step(pre_t, h, c, whh_ref):
        # gates = preact[t] + h_prev @ W_hh   (PyTorch gate order i, f, g, o)
        gates = pre_t + jnp.dot(h, whh_ref[...], preferred_element_type=jnp.float32)
        i_g = jax.nn.sigmoid(gates[:, 0 * H:1 * H])
        f_g = jax.nn.sigmoid(gates[:, 1 * H:2 * H])
        g_g = jnp.tanh(gates[:, 2 * H:3 * H])
        o_g = jax.nn.sigmoid(gates[:, 3 * H:4 * H])
        c_new = f_g * c + i_g * g_g
        h_new = o_g * jnp.tanh(c_new)
        return h_new, c_new

    # (2) Layer-1 forward recurrence (serial path = one small MXU push + gates/step).
    def step1f(t, carry):
        h, c = carry
        h, c = lstm_step(pre1f_sc[t], h, c, whh1f_ref)
        h1f_sc[t] = h
        return h, c
    lax.fori_loop(0, seq, step1f, (zeros_hc, zeros_hc), unroll=True)

    # (3) Layer-1 backward recurrence via reversed time index (no [::-1] copies).
    def step1b(t, carry):
        h, c = carry
        idx = seq - 1 - t
        h, c = lstm_step(pre1b_sc[idx], h, c, whh1b_ref)
        h1b_sc[idx] = h
        return h, c
    lax.fori_loop(0, seq, step1b, (zeros_hc, zeros_hc), unroll=True)

    # (4) Layer-2 forward input projection for all t; split W_ih rows so the
    #     bidirectional concat never materializes.
    h1f_2d = h1f_sc[...].reshape(seq * batch, H)
    h1b_2d = h1b_sc[...].reshape(seq * batch, H)
    pre2f = (jnp.dot(h1f_2d, wih2f_ref[0:H, :], preferred_element_type=jnp.float32)
             + jnp.dot(h1b_2d, wih2f_ref[H:2 * H, :], preferred_element_type=jnp.float32)
             + b2f_ref[...])
    pre2f_sc[...] = pre2f.reshape(seq, batch, G)

    # (5) Layer-2 forward recurrence; only the final hidden state is consumed.
    def step2f(t, carry):
        h, c = carry
        return lstm_step(pre2f_sc[t], h, c, whh2f_ref)
    h2f, _ = lax.fori_loop(0, seq, step2f, (zeros_hc, zeros_hc), unroll=True)

    # (6) Layer-2 backward direction: out[:, -1, H:] is its state after processing
    #     ONLY the last time step from a zero initial state -> a single LSTM step.
    pre2b_last = (jnp.dot(h1f_sc[seq - 1], wih2b_ref[0:H, :],
                          preferred_element_type=jnp.float32)
                  + jnp.dot(h1b_sc[seq - 1], wih2b_ref[H:2 * H, :],
                            preferred_element_type=jnp.float32)
                  + b2b_ref[...])
    h2b, _ = lstm_step(pre2b_last, zeros_hc, zeros_hc, whh2b_ref)

    # (7) Fused FC head on [h2_fwd_last, h2_bwd_at_last] (split fc_w rows, no concat).
    logits = (jnp.dot(h2f, fcw_ref[0:H, :], preferred_element_type=jnp.float32)
              + jnp.dot(h2b, fcw_ref[H:2 * H, :], preferred_element_type=jnp.float32)
              + fcb_ref[...])
    o_ref[...] = logits


def _run_net_kernel(x_seq, p):
    """x_seq: (seq, batch_p, EMBED_PAD) f32, time-major -> logits (batch_p, NUM_CLASSES)."""
    seq, batch_p, _ = x_seq.shape
    H = HIDDEN_SIZE
    kernel = functools.partial(_net_kernel, seq=seq, batch=batch_p, hidden=H)
    return pl.pallas_call(
        kernel,
        out_shape=jax.ShapeDtypeStruct((batch_p, NUM_CLASSES), jnp.float32),
        scratch_shapes=[
            pltpu.VMEM((seq, batch_p, 4 * H), jnp.float32),   # layer-1 fwd preacts
            pltpu.VMEM((seq, batch_p, 4 * H), jnp.float32),   # layer-1 bwd preacts
            pltpu.VMEM((seq, batch_p, H), jnp.float32),       # layer-1 fwd hidden seq
            pltpu.VMEM((seq, batch_p, H), jnp.float32),       # layer-1 bwd hidden seq
            pltpu.VMEM((seq, batch_p, 4 * H), jnp.float32),   # layer-2 fwd preacts
        ],
    )(x_seq,
      p["wih1"], p["whh1f"], p["whh1b"], p["b1"],
      p["wih2f"], p["wih2b"], p["whh2f"], p["whh2b"], p["b2f"], p["b2b"],
      p["fc_w"], p["fc_b"])


# ------------------------------- forward -------------------------------------
@jax.jit
def net_forward(token_ids, params):
    """token_ids: (seq, batch) int32 -> logits (batch, num_classes)."""
    seq, batch = token_ids.shape
    batch_p = max(BATCH_TILE, ((batch + BATCH_TILE - 1) // BATCH_TILE) * BATCH_TILE)
    pad = batch_p - batch
    # Pad batch with the padding_idx token (whose embedding row is zero).
    ids = jnp.pad(token_ids, ((0, 0), (0, pad)), constant_values=VOCAB_SIZE - 1)
    # Direct time-major gather -> (seq, batch_p, EMBED_PAD); no glue transposes.
    x_seq = jnp.take(params["emb"], ids, axis=0)
    logits = _run_net_kernel(x_seq, params)
    return logits[:batch]


# --------------------------- parameter creation ------------------------------
def _xavier_normal(key, fan_out, fan_in):
    """nn.init.xavier_normal_ on a torch (fan_out, fan_in) weight."""
    std = (2.0 / (fan_in + fan_out)) ** 0.5
    return jax.random.normal(key, (fan_out, fan_in), dtype=jnp.float32) * std


def init_params(key):
    H = HIDDEN_SIZE
    keys = jax.random.split(key, 10)
    ki = iter(keys)

    # Embedding: torch default N(0,1), padding row zeroed; features padded to 256 lanes.
    emb = jax.random.normal(next(ki), (VOCAB_SIZE, EMBED_SIZE), dtype=jnp.float32)
    emb = emb.at[VOCAB_SIZE - 1].set(0.0)
    emb = jnp.pad(emb, ((0, 0), (0, EMBED_PAD - EMBED_SIZE)))

    def wih_l0(k):  # torch (4H, E) -> transposed (E_PAD, 4H), zero-padded rows
        w = _xavier_normal(k, 4 * H, EMBED_SIZE).T
        return jnp.pad(w, ((0, EMBED_PAD - EMBED_SIZE), (0, 0)))

    # Layer 1: fwd/bwd W_ih concatenated column-wise -> one hoisted matmul.
    wih1 = jnp.concatenate([wih_l0(next(ki)), wih_l0(next(ki))], axis=1)   # (E_PAD, 8H)
    whh1f = _xavier_normal(next(ki), 4 * H, H).T                           # (H, 4H)
    whh1b = _xavier_normal(next(ki), 4 * H, H).T
    b1 = jnp.zeros((1, 8 * H), jnp.float32)     # spec: nn.init.constant_(bias, 0)

    # Layer 2 (input = [fwd, bwd] of layer 1; rows [:H] multiply fwd, [H:] multiply bwd).
    wih2f = _xavier_normal(next(ki), 4 * H, 2 * H).T                       # (2H, 4H)
    wih2b = _xavier_normal(next(ki), 4 * H, 2 * H).T
    whh2f = _xavier_normal(next(ki), 4 * H, H).T
    whh2b = _xavier_normal(next(ki), 4 * H, H).T
    b2f = jnp.zeros((1, 4 * H), jnp.float32)
    b2b = jnp.zeros((1, 4 * H), jnp.float32)

    fc_w = _xavier_normal(next(ki), NUM_CLASSES, 2 * H).T                  # (2H, 5)
    fc_b = jnp.zeros((1, NUM_CLASSES), jnp.float32)

    return dict(emb=emb, wih1=wih1, whh1f=whh1f, whh1b=whh1b, b1=b1,
                wih2f=wih2f, wih2b=wih2b, whh2f=whh2f, whh2b=whh2b,
                b2f=b2f, b2b=b2b, fc_w=fc_w, fc_b=fc_b)


# --------------------------------- main ---------------------------------------
if __name__ == "__main__":
    key = jax.random.PRNGKey(0)
    pkey, dkey = jax.random.split(key)

    params = init_params(pkey)

    SEQ, BATCH = 8, 2
    token_ids = jax.random.randint(dkey, (SEQ, BATCH), 0, VOCAB_SIZE, dtype=jnp.int32)

    logits = net_forward(token_ids, params)
    logits = jax.block_until_ready(logits)

    assert logits.shape == (BATCH, NUM_CLASSES)
    assert bool(jnp.all(jnp.isfinite(logits)))
    print("KERNEL_OK")
</pallas_src>

<mosaic_0001>
module attributes {stable_mosaic.version = 11 : i64} {
  func.func @_net_kernel(%arg0: memref<8x8x256xf32, #tpu.memory_space<vmem>>, %arg1: memref<256x1024xf32, #tpu.memory_space<vmem>>, %arg2: memref<128x512xf32, #tpu.memory_space<vmem>>, %arg3: memref<128x512xf32, #tpu.memory_space<vmem>>, %arg4: memref<1x1024xf32, #tpu.memory_space<vmem>>, %arg5: memref<256x512xf32, #tpu.memory_space<vmem>>, %arg6: memref<256x512xf32, #tpu.memory_space<vmem>>, %arg7: memref<128x512xf32, #tpu.memory_space<vmem>>, %arg8: memref<128x512xf32, #tpu.memory_space<vmem>>, %arg9: memref<1x512xf32, #tpu.memory_space<vmem>>, %arg10: memref<1x512xf32, #tpu.memory_space<vmem>>, %arg11: memref<256x5xf32, #tpu.memory_space<vmem>>, %arg12: memref<1x5xf32, #tpu.memory_space<vmem>>, %arg13: memref<8x5xf32, #tpu.memory_space<vmem>>, %arg14: memref<8x8x512xf32, #tpu.memory_space<vmem>>, %arg15: memref<8x8x512xf32, #tpu.memory_space<vmem>>, %arg16: memref<8x8x128xf32, #tpu.memory_space<vmem>>, %arg17: memref<8x8x128xf32, #tpu.memory_space<vmem>>, %arg18: memref<8x8x512xf32, #tpu.memory_space<vmem>>) attributes {dimension_semantics = [], scalar_prefetch = 0 : i64, scratch_operands = 5 : i64, tpu.core_type = #tpu.core_type<tc>} {
    %c0 = arith.constant 0 : index
    %c0_0 = arith.constant 0 : index
    %c0_1 = arith.constant 0 : index
    %0 = vector.load %arg0[%c0, %c0_0, %c0_1] : memref<8x8x256xf32, #tpu.memory_space<vmem>>, vector<8x8x256xf32>
    %1 = vector.shape_cast %0 : vector<8x8x256xf32> to vector<64x256xf32>
    %c0_2 = arith.constant 0 : index
    %c0_3 = arith.constant 0 : index
    %2 = vector.load %arg1[%c0_2, %c0_3] : memref<256x1024xf32, #tpu.memory_space<vmem>>, vector<256x1024xf32>
    %cst = arith.constant dense<0.000000e+00> : vector<64x1024xf32>
    %3 = tpu.matmul %1, %2, %cst {dimension_numbers = #tpu.dot_dimension_numbers<[1], [0], [0], [1], [0, 0, 1, 1], [], []>} : vector<64x256xf32>, vector<256x1024xf32>, vector<64x1024xf32> -> vector<64x1024xf32>
    %c0_4 = arith.constant 0 : index
    %c0_5 = arith.constant 0 : index
    %4 = vector.load %arg4[%c0_4, %c0_5] : memref<1x1024xf32, #tpu.memory_space<vmem>>, vector<1x1024xf32>
    %5 = vector.broadcast %4 : vector<1x1024xf32> to vector<64x1024xf32>
    %6 = arith.addf %3, %5 : vector<64x1024xf32>
    %7 = vector.extract_strided_slice %6 {offsets = [0, 0], sizes = [64, 512], strides = [1, 1]} : vector<64x1024xf32> to vector<64x512xf32>
    %8 = vector.shape_cast %7 : vector<64x512xf32> to vector<8x8x512xf32>
    %c0_6 = arith.constant 0 : index
    %c0_7 = arith.constant 0 : index
    %c0_8 = arith.constant 0 : index
    %9 = vector.load %arg14[%c0_6, %c0_7, %c0_8] : memref<8x8x512xf32, #tpu.memory_space<vmem>>, vector<8x8x512xf32>
    tpu.vector_store %arg14[%c0_6, %c0_7, %c0_8], %8 {strides = array<i32>} : memref<8x8x512xf32, #tpu.memory_space<vmem>>, vector<8x8x512xf32>,
    %10 = vector.extract_strided_slice %6 {offsets = [0, 512], sizes = [64, 512], strides = [1, 1]} : vector<64x1024xf32> to vector<64x512xf32>
    %11 = vector.shape_cast %10 : vector<64x512xf32> to vector<8x8x512xf32>
    %c0_9 = arith.constant 0 : index
    %c0_10 = arith.constant 0 : index
    %c0_11 = arith.constant 0 : index
    %12 = vector.load %arg15[%c0_9, %c0_10, %c0_11] : memref<8x8x512xf32, #tpu.memory_space<vmem>>, vector<8x8x512xf32>
    tpu.vector_store %arg15[%c0_9, %c0_10, %c0_11], %11 {strides = array<i32>} : memref<8x8x512xf32, #tpu.memory_space<vmem>>, vector<8x8x512xf32>,
    %cst_12 = arith.constant 0.000000e+00 : f32
    %13 = vector.broadcast %cst_12 : f32 to vector<8x128xf32>
    %c0_i32 = arith.constant 0 : i32
    %14 = arith.index_cast %c0_i32 : i32 to index
    %c0_13 = arith.constant 0 : index
    %c0_14 = arith.constant 0 : index
    %15 = vector.load %arg14[%14, %c0_13, %c0_14] : memref<8x8x512xf32, #tpu.memory_space<vmem>>, vector<1x8x512xf32>
    %16 = vector.shape_cast %15 : vector<1x8x512xf32> to vector<8x512xf32>
    %c0_15 = arith.constant 0 : index
    %c0_16 = arith.constant 0 : index
    %17 = vector.load %arg2[%c0_15, %c0_16] : memref<128x512xf32, #tpu.memory_space<vmem>>, vector<128x512xf32>
    %cst_17 = arith.constant dense<0.000000e+00> : vector<8x512xf32>
    %18 = tpu.matmul %13, %17, %cst_17 {dimension_numbers = #tpu.dot_dimension_numbers<[1], [0], [0], [1], [0, 0, 1, 1], [], []>} : vector<8x128xf32>, vector<128x512xf32>, vector<8x512xf32> -> vector<8x512xf32>
    %19 = arith.addf %16, %18 : vector<8x512xf32>
    %20 = vector.extract_strided_slice %19 {offsets = [0, 0], sizes = [8, 128], strides = [1, 1]} : vector<8x512xf32> to vector<8x128xf32>
    %21 = arith.negf %20 : vector<8x128xf32>
    %22 = math.exp %21 : vector<8x128xf32>
    %cst_18 = arith.constant 1.000000e+00 : f32
    %23 = vector.broadcast %cst_18 : f32 to vector<8x128xf32>
    %24 = arith.addf %23, %22 : vector<8x128xf32>
    %25 = arith.divf %23, %24 : vector<8x128xf32>
    %26 = vector.extract_strided_slice %19 {offsets = [0, 128], sizes = [8, 128], strides = [1, 1]} : vector<8x512xf32> to vector<8x128xf32>
    %27 = arith.negf %26 : vector<8x128xf32>
    %28 = math.exp %27 : vector<8x128xf32>
    %cst_19 = arith.constant 1.000000e+00 : f32
    %29 = vector.broadcast %cst_19 : f32 to vector<8x128xf32>
    %30 = arith.addf %29, %28 : vector<8x128xf32>
    %31 = arith.divf %29, %30 : vector<8x128xf32>
    %32 = vector.extract_strided_slice %19 {offsets = [0, 256], sizes = [8, 128], strides = [1, 1]} : vector<8x512xf32> to vector<8x128xf32>
    %33 = math.tanh %32 : vector<8x128xf32>
    %34 = vector.extract_strided_slice %19 {offsets = [0, 384], sizes = [8, 128], strides = [1, 1]} : vector<8x512xf32> to vector<8x128xf32>
    %35 = arith.negf %34 : vector<8x128xf32>
    %36 = math.exp %35 : vector<8x128xf32>
    %cst_20 = arith.constant 1.000000e+00 : f32
    %37 = vector.broadcast %cst_20 : f32 to vector<8x128xf32>
    %38 = arith.addf %37, %36 : vector<8x128xf32>
    %39 = arith.divf %37, %38 : vector<8x128xf32>
    %40 = arith.mulf %31, %13 : vector<8x128xf32>
    %41 = arith.mulf %25, %33 : vector<8x128xf32>
    %42 = arith.addf %40, %41 : vector<8x128xf32>
    %43 = math.tanh %42 : vector<8x128xf32>
    %44 = arith.mulf %39, %43 : vector<8x128xf32>
    %45 = arith.index_cast %c0_i32 : i32 to index
    %c0_21 = arith.constant 0 : index
    %c0_22 = arith.constant 0 : index
    %46 = vector.load %arg16[%45, %c0_21, %c0_22] : memref<8x8x128xf32, #tpu.memory_space<vmem>>, vector<1x8x128xf32>
    %47 = vector.shape_cast %46 : vector<1x8x128xf32> to vector<8x128xf32>
    %48 = vector.shape_cast %44 : vector<8x128xf32> to vector<1x8x128xf32>
    tpu.vector_store %arg16[%45, %c0_21, %c0_22], %48 {strides = array<i32>} : memref<8x8x128xf32, #tpu.memory_space<vmem>>, vector<1x8x128xf32>,
    %c1_i32 = arith.constant 1 : i32
    %49 = arith.index_cast %c1_i32 : i32 to index
    %c0_23 = arith.constant 0 : index
    %c0_24 = arith.constant 0 : index
    %50 = vector.load %arg14[%49, %c0_23, %c0_24] : memref<8x8x512xf32, #tpu.memory_space<vmem>>, vector<1x8x512xf32>
    %51 = vector.shape_cast %50 : vector<1x8x512xf32> to vector<8x512xf32>
    %c0_25 = arith.constant 0 : index
    %c0_26 = arith.constant 0 : index
    %52 = vector.load %arg2[%c0_25, %c0_26] : memref<128x512xf32, #tpu.memory_space<vmem>>, vector<128x512xf32>
    %cst_27 = arith.constant dense<0.000000e+00> : vector<8x512xf32>
    %53 = tpu.matmul %44, %52, %cst_27 {dimension_numbers = #tpu.dot_dimension_numbers<[1], [0], [0], [1], [0, 0, 1, 1], [], []>} : vector<8x128xf32>, vector<128x512xf32>, vector<8x512xf32> -> vector<8x512xf32>
    %54 = arith.addf %51, %53 : vector<8x512xf32>
    %55 = vector.extract_strided_slice %54 {offsets = [0, 0], sizes = [8, 128], strides = [1, 1]} : vector<8x512xf32> to vector<8x128xf32>
    %56 = arith.negf %55 : vector<8x128xf32>
    %57 = math.exp %56 : vector<8x128xf32>
    %cst_28 = arith.constant 1.000000e+00 : f32
    %58 = vector.broadcast %cst_28 : f32 to vector<8x128xf32>
    %59 = arith.addf %58, %57 : vector<8x128xf32>
    %60 = arith.divf %58, %59 : vector<8x128xf32>
    %61 = vector.extract_strided_slice %54 {offsets = [0, 128], sizes = [8, 128], strides = [1, 1]} : vector<8x512xf32> to vector<8x128xf32>
    %62 = arith.negf %61 : vector<8x128xf32>
    %63 = math.exp %62 : vector<8x128xf32>
    %cst_29 = arith.constant 1.000000e+00 : f32
    %64 = vector.broadcast %cst_29 : f32 to vector<8x128xf32>
    %65 = arith.addf %64, %63 : vector<8x128xf32>
    %66 = arith.divf %64, %65 : vector<8x128xf32>
    %67 = vector.extract_strided_slice %54 {offsets = [0, 256], sizes = [8, 128], strides = [1, 1]} : vector<8x512xf32> to vector<8x128xf32>
    %68 = math.tanh %67 : vector<8x128xf32>
    %69 = vector.extract_strided_slice %54 {offsets = [0, 384], sizes = [8, 128], strides = [1, 1]} : vector<8x512xf32> to vector<8x128xf32>
    %70 = arith.negf %69 : vector<8x128xf32>
    %71 = math.exp %70 : vector<8x128xf32>
    %cst_30 = arith.constant 1.000000e+00 : f32
    %72 = vector.broadcast %cst_30 : f32 to vector<8x128xf32>
    %73 = arith.addf %72, %71 : vector<8x128xf32>
    %74 = arith.divf %72, %73 : vector<8x128xf32>
    %75 = arith.mulf %66, %42 : vector<8x128xf32>
    %76 = arith.mulf %60, %68 : vector<8x128xf32>
    %77 = arith.addf %75, %76 : vector<8x128xf32>
    %78 = math.tanh %77 : vector<8x128xf32>
    %79 = arith.mulf %74, %78 : vector<8x128xf32>
    %80 = arith.index_cast %c1_i32 : i32 to index
    %c0_31 = arith.constant 0 : index
    %c0_32 = arith.constant 0 : index
    %81 = vector.load %arg16[%80, %c0_31, %c0_32] : memref<8x8x128xf32, #tpu.memory_space<vmem>>, vector<1x8x128xf32>
    %82 = vector.shape_cast %81 : vector<1x8x128xf32> to vector<8x128xf32>
    %83 = vector.shape_cast %79 : vector<8x128xf32> to vector<1x8x128xf32>
    tpu.vector_store %arg16[%80, %c0_31, %c0_32], %83 {strides = array<i32>} : memref<8x8x128xf32, #tpu.memory_space<vmem>>, vector<1x8x128xf32>,
    %c2_i32 = arith.constant 2 : i32
    %84 = arith.index_cast %c2_i32 : i32 to index
    %c0_33 = arith.constant 0 : index
    %c0_34 = arith.constant 0 : index
    %85 = vector.load %arg14[%84, %c0_33, %c0_34] : memref<8x8x512xf32, #tpu.memory_space<vmem>>, vector<1x8x512xf32>
    %86 = vector.shape_cast %85 : vector<1x8x512xf32> to vector<8x512xf32>
    %c0_35 = arith.constant 0 : index
    %c0_36 = arith.constant 0 : index
    %87 = vector.load %arg2[%c0_35, %c0_36] : memref<128x512xf32, #tpu.memory_space<vmem>>, vector<128x512xf32>
    %cst_37 = arith.constant dense<0.000000e+00> : vector<8x512xf32>
    %88 = tpu.matmul %79, %87, %cst_37 {dimension_numbers = #tpu.dot_dimension_numbers<[1], [0], [0], [1], [0, 0, 1, 1], [], []>} : vector<8x128xf32>, vector<128x512xf32>, vector<8x512xf32> -> vector<8x512xf32>
    %89 = arith.addf %86, %88 : vector<8x512xf32>
    %90 = vector.extract_strided_slice %89 {offsets = [0, 0], sizes = [8, 128], strides = [1, 1]} : vector<8x512xf32> to vector<8x128xf32>
    %91 = arith.negf %90 : vector<8x128xf32>
    %92 = math.exp %91 : vector<8x128xf32>
    %cst_38 = arith.constant 1.000000e+00 : f32
    %93 = vector.broadcast %cst_38 : f32 to vector<8x128xf32>
    %94 = arith.addf %93, %92 : vector<8x128xf32>
    %95 = arith.divf %93, %94 : vector<8x128xf32>
    %96 = vector.extract_strided_slice %89 {offsets = [0, 128], sizes = [8, 128], strides = [1, 1]} : vector<8x512xf32> to vector<8x128xf32>
    %97 = arith.negf %96 : vector<8x128xf32>
    %98 = math.exp %97 : vector<8x128xf32>
    %cst_39 = arith.constant 1.000000e+00 : f32
    %99 = vector.broadcast %cst_39 : f32 to vector<8x128xf32>
    %100 = arith.addf %99, %98 : vector<8x128xf32>
    %101 = arith.divf %99, %100 : vector<8x128xf32>
    %102 = vector.extract_strided_slice %89 {offsets = [0, 256], sizes = [8, 128], strides = [1, 1]} : vector<8x512xf32> to vector<8x128xf32>
    %103 = math.tanh %102 : vector<8x128xf32>
    %104 = vector.extract_strided_slice %89 {offsets = [0, 384], sizes = [8, 128], strides = [1, 1]} : vector<8x512xf32> to vector<8x128xf32>
    %105 = arith.negf %104 : vector<8x128xf32>
    %106 = math.exp %105 : vector<8x128xf32>
    %cst_40 = arith.constant 1.000000e+00 : f32
    %107 = vector.broadcast %cst_40 : f32 to vector<8x128xf32>
    %108 = arith.addf %107, %106 : vector<8x128xf32>
    %109 = arith.divf %107, %108 : vector<8x128xf32>
    %110 = arith.mulf %101, %77 : vector<8x128xf32>
    %111 = arith.mulf %95, %103 : vector<8x128xf32>
    %112 = arith.addf %110, %111 : vector<8x128xf32>
    %113 = math.tanh %112 : vector<8x128xf32>
    %114 = arith.mulf %109, %113 : vector<8x128xf32>
    %115 = arith.index_cast %c2_i32 : i32 to index
    %c0_41 = arith.constant 0 : index
    %c0_42 = arith.constant 0 : index
    %116 = vector.load %arg16[%115, %c0_41, %c0_42] : memref<8x8x128xf32, #tpu.memory_space<vmem>>, vector<1x8x128xf32>
    %117 = vector.shape_cast %116 : vector<1x8x128xf32> to vector<8x128xf32>
    %118 = vector.shape_cast %114 : vector<8x128xf32> to vector<1x8x128xf32>
    tpu.vector_store %arg16[%115, %c0_41, %c0_42], %118 {strides = array<i32>} : memref<8x8x128xf32, #tpu.memory_space<vmem>>, vector<1x8x128xf32>,
    %c3_i32 = arith.constant 3 : i32
    %119 = arith.index_cast %c3_i32 : i32 to index
    %c0_43 = arith.constant 0 : index
    %c0_44 = arith.constant 0 : index
    %120 = vector.load %arg14[%119, %c0_43, %c0_44] : memref<8x8x512xf32, #tpu.memory_space<vmem>>, vector<1x8x512xf32>
    %121 = vector.shape_cast %120 : vector<1x8x512xf32> to vector<8x512xf32>
    %c0_45 = arith.constant 0 : index
    %c0_46 = arith.constant 0 : index
    %122 = vector.load %arg2[%c0_45, %c0_46] : memref<128x512xf32, #tpu.memory_space<vmem>>, vector<128x512xf32>
    %cst_47 = arith.constant dense<0.000000e+00> : vector<8x512xf32>
    %123 = tpu.matmul %114, %122, %cst_47 {dimension_numbers = #tpu.dot_dimension_numbers<[1], [0], [0], [1], [0, 0, 1, 1], [], []>} : vector<8x128xf32>, vector<128x512xf32>, vector<8x512xf32> -> vector<8x512xf32>
    %124 = arith.addf %121, %123 : vector<8x512xf32>
    %125 = vector.extract_strided_slice %124 {offsets = [0, 0], sizes = [8, 128], strides = [1, 1]} : vector<8x512xf32> to vector<8x128xf32>
    %126 = arith.negf %125 : vector<8x128xf32>
    %127 = math.exp %126 : vector<8x128xf32>
    %cst_48 = arith.constant 1.000000e+00 : f32
    %128 = vector.broadcast %cst_48 : f32 to vector<8x128xf32>
    %129 = arith.addf %128, %127 : vector<8x128xf32>
    %130 = arith.divf %128, %129 : vector<8x128xf32>
    %131 = vector.extract_strided_slice %124 {offsets = [0, 128], sizes = [8, 128], strides = [1, 1]} : vector<8x512xf32> to vector<8x128xf32>
    %132 = arith.negf %131 : vector<8x128xf32>
    %133 = math.exp %132 : vector<8x128xf32>
    %cst_49 = arith.constant 1.000000e+00 : f32
    %134 = vector.broadcast %cst_49 : f32 to vector<8x128xf32>
    %135 = arith.addf %134, %133 : vector<8x128xf32>
    %136 = arith.divf %134, %135 : vector<8x128xf32>
    %137 = vector.extract_strided_slice %124 {offsets = [0, 256], sizes = [8, 128], strides = [1, 1]} : vector<8x512xf32> to vector<8x128xf32>
    %138 = math.tanh %137 : vector<8x128xf32>
    %139 = vector.extract_strided_slice %124 {offsets = [0, 384], sizes = [8, 128], strides = [1, 1]} : vector<8x512xf32> to vector<8x128xf32>
    %140 = arith.negf %139 : vector<8x128xf32>
    %141 = math.exp %140 : vector<8x128xf32>
    %cst_50 = arith.constant 1.000000e+00 : f32
    %142 = vector.broadcast %cst_50 : f32 to vector<8x128xf32>
    %143 = arith.addf %142, %141 : vector<8x128xf32>
    %144 = arith.divf %142, %143 : vector<8x128xf32>
    %145 = arith.mulf %136, %112 : vector<8x128xf32>
    %146 = arith.mulf %130, %138 : vector<8x128xf32>
    %147 = arith.addf %145, %146 : vector<8x128xf32>
    %148 = math.tanh %147 : vector<8x128xf32>
    %149 = arith.mulf %144, %148 : vector<8x128xf32>
    %150 = arith.index_cast %c3_i32 : i32 to index
    %c0_51 = arith.constant 0 : index
    %c0_52 = arith.constant 0 : index
    %151 = vector.load %arg16[%150, %c0_51, %c0_52] : memref<8x8x128xf32, #tpu.memory_space<vmem>>, vector<1x8x128xf32>
    %152 = vector.shape_cast %151 : vector<1x8x128xf32> to vector<8x128xf32>
    %153 = vector.shape_cast %149 : vector<8x128xf32> to vector<1x8x128xf32>
    tpu.vector_store %arg16[%150, %c0_51, %c0_52], %153 {strides = array<i32>} : memref<8x8x128xf32, #tpu.memory_space<vmem>>, vector<1x8x128xf32>,
    %c4_i32 = arith.constant 4 : i32
    %154 = arith.index_cast %c4_i32 : i32 to index
    %c0_53 = arith.constant 0 : index
    %c0_54 = arith.constant 0 : index
    %155 = vector.load %arg14[%154, %c0_53, %c0_54] : memref<8x8x512xf32, #tpu.memory_space<vmem>>, vector<1x8x512xf32>
    %156 = vector.shape_cast %155 : vector<1x8x512xf32> to vector<8x512xf32>
    %c0_55 = arith.constant 0 : index
    %c0_56 = arith.constant 0 : index
    %157 = vector.load %arg2[%c0_55, %c0_56] : memref<128x512xf32, #tpu.memory_space<vmem>>, vector<128x512xf32>
    %cst_57 = arith.constant dense<0.000000e+00> : vector<8x512xf32>
    %158 = tpu.matmul %149, %157, %cst_57 {dimension_numbers = #tpu.dot_dimension_numbers<[1], [0], [0], [1], [0, 0, 1, 1], [], []>} : vector<8x128xf32>, vector<128x512xf32>, vector<8x512xf32> -> vector<8x512xf32>
    %159 = arith.addf %156, %158 : vector<8x512xf32>
    %160 = vector.extract_strided_slice %159 {offsets = [0, 0], sizes = [8, 128], strides = [1, 1]} : vector<8x512xf32> to vector<8x128xf32>
    %161 = arith.negf %160 : vector<8x128xf32>
    %162 = math.exp %161 : vector<8x128xf32>
    %cst_58 = arith.constant 1.000000e+00 : f32
    %163 = vector.broadcast %cst_58 : f32 to vector<8x128xf32>
    %164 = arith.addf %163, %162 : vector<8x128xf32>
    %165 = arith.divf %163, %164 : vector<8x128xf32>
    %166 = vector.extract_strided_slice %159 {offsets = [0, 128], sizes = [8, 128], strides = [1, 1]} : vector<8x512xf32> to vector<8x128xf32>
    %167 = arith.negf %166 : vector<8x128xf32>
    %168 = math.exp %167 : vector<8x128xf32>
    %cst_59 = arith.constant 1.000000e+00 : f32
    %169 = vector.broadcast %cst_59 : f32 to vector<8x128xf32>
    %170 = arith.addf %169, %168 : vector<8x128xf32>
    %171 = arith.divf %169, %170 : vector<8x128xf32>
    %172 = vector.extract_strided_slice %159 {offsets = [0, 256], sizes = [8, 128], strides = [1, 1]} : vector<8x512xf32> to vector<8x128xf32>
    %173 = math.tanh %172 : vector<8x128xf32>
    %174 = vector.extract_strided_slice %159 {offsets = [0, 384], sizes = [8, 128], strides = [1, 1]} : vector<8x512xf32> to vector<8x128xf32>
    %175 = arith.negf %174 : vector<8x128xf32>
    %176 = math.exp %175 : vector<8x128xf32>
    %cst_60 = arith.constant 1.000000e+00 : f32
    %177 = vector.broadcast %cst_60 : f32 to vector<8x128xf32>
    %178 = arith.addf %177, %176 : vector<8x128xf32>
    %179 = arith.divf %177, %178 : vector<8x128xf32>
    %180 = arith.mulf %171, %147 : vector<8x128xf32>
    %181 = arith.mulf %165, %173 : vector<8x128xf32>
    %182 = arith.addf %180, %181 : vector<8x128xf32>
    %183 = math.tanh %182 : vector<8x128xf32>
    %184 = arith.mulf %179, %183 : vector<8x128xf32>
    %185 = arith.index_cast %c4_i32 : i32 to index
    %c0_61 = arith.constant 0 : index
    %c0_62 = arith.constant 0 : index
    %186 = vector.load %arg16[%185, %c0_61, %c0_62] : memref<8x8x128xf32, #tpu.memory_space<vmem>>, vector<1x8x128xf32>
    %187 = vector.shape_cast %186 : vector<1x8x128xf32> to vector<8x128xf32>
    %188 = vector.shape_cast %184 : vector<8x128xf32> to vector<1x8x128xf32>
    tpu.vector_store %arg16[%185, %c0_61, %c0_62], %188 {strides = array<i32>} : memref<8x8x128xf32, #tpu.memory_space<vmem>>, vector<1x8x128xf32>,
    %c5_i32 = arith.constant 5 : i32
    %189 = arith.index_cast %c5_i32 : i32 to index
    %c0_63 = arith.constant 0 : index
    %c0_64 = arith.constant 0 : index
    %190 = vector.load %arg14[%189, %c0_63, %c0_64] : memref<8x8x512xf32, #tpu.memory_space<vmem>>, vector<1x8x512xf32>
    %191 = vector.shape_cast %190 : vector<1x8x512xf32> to vector<8x512xf32>
    %c0_65 = arith.constant 0 : index
    %c0_66 = arith.constant 0 : index
    %192 = vector.load %arg2[%c0_65, %c0_66] : memref<128x512xf32, #tpu.memory_space<vmem>>, vector<128x512xf32>
    %cst_67 = arith.constant dense<0.000000e+00> : vector<8x512xf32>
    %193 = tpu.matmul %184, %192, %cst_67 {dimension_numbers = #tpu.dot_dimension_numbers<[1], [0], [0], [1], [0, 0, 1, 1], [], []>} : vector<8x128xf32>, vector<128x512xf32>, vector<8x512xf32> -> vector<8x512xf32>
    %194 = arith.addf %191, %193 : vector<8x512xf32>
    %195 = vector.extract_strided_slice %194 {offsets = [0, 0], sizes = [8, 128], strides = [1, 1]} : vector<8x512xf32> to vector<8x128xf32>
    %196 = arith.negf %195 : vector<8x128xf32>
    %197 = math.exp %196 : vector<8x128xf32>
    %cst_68 = arith.constant 1.000000e+00 : f32
    %198 = vector.broadcast %cst_68 : f32 to vector<8x128xf32>
    %199 = arith.addf %198, %197 : vector<8x128xf32>
    %200 = arith.divf %198, %199 : vector<8x128xf32>
    %201 = vector.extract_strided_slice %194 {offsets = [0, 128], sizes = [8, 128], strides = [1, 1]} : vector<8x512xf32> to vector<8x128xf32>
    %202 = arith.negf %201 : vector<8x128xf32>
    %203 = math.exp %202 : vector<8x128xf32>
    %cst_69 = arith.constant 1.000000e+00 : f32
    %204 = vector.broadcast %cst_69 : f32 to vector<8x128xf32>
    %205 = arith.addf %204, %203 : vector<8x128xf32>
    %206 = arith.divf %204, %205 : vector<8x128xf32>
    %207 = vector.extract_strided_slice %194 {offsets = [0, 256], sizes = [8, 128], strides = [1, 1]} : vector<8x512xf32> to vector<8x128xf32>
    %208 = math.tanh %207 : vector<8x128xf32>
    %209 = vector.extract_strided_slice %194 {offsets = [0, 384], sizes = [8, 128], strides = [1, 1]} : vector<8x512xf32> to vector<8x128xf32>
    %210 = arith.negf %209 : vector<8x128xf32>
    %211 = math.exp %210 : vector<8x128xf32>
    %cst_70 = arith.constant 1.000000e+00 : f32
    %212 = vector.broadcast %cst_70 : f32 to vector<8x128xf32>
    %213 = arith.addf %212, %211 : vector<8x128xf32>
    %214 = arith.divf %212, %213 : vector<8x128xf32>
    %215 = arith.mulf %206, %182 : vector<8x128xf32>
    %216 = arith.mulf %200, %208 : vector<8x128xf32>
    %217 = arith.addf %215, %216 : vector<8x128xf32>
    %218 = math.tanh %217 : vector<8x128xf32>
    %219 = arith.mulf %214, %218 : vector<8x128xf32>
    %220 = arith.index_cast %c5_i32 : i32 to index
    %c0_71 = arith.constant 0 : index
    %c0_72 = arith.constant 0 : index
    %221 = vector.load %arg16[%220, %c0_71, %c0_72] : memref<8x8x128xf32, #tpu.memory_space<vmem>>, vector<1x8x128xf32>
    %222 = vector.shape_cast %221 : vector<1x8x128xf32> to vector<8x128xf32>
    %223 = vector.shape_cast %219 : vector<8x128xf32> to vector<1x8x128xf32>
    tpu.vector_store %arg16[%220, %c0_71, %c0_72], %223 {strides = array<i32>} : memref<8x8x128xf32, #tpu.memory_space<vmem>>, vector<1x8x128xf32>,
    %c6_i32 = arith.constant 6 : i32
    %224 = arith.index_cast %c6_i32 : i32 to index
    %c0_73 = arith.constant 0 : index
    %c0_74 = arith.constant 0 : index
    %225 = vector.load %arg14[%224, %c0_73, %c0_74] : memref<8x8x512xf32, #tpu.memory_space<vmem>>, vector<1x8x512xf32>
    %226 = vector.shape_cast %225 : vector<1x8x512xf32> to vector<8x512xf32>
    %c0_75 = arith.constant 0 : index
    %c0_76 = arith.constant 0 : index
    %227 = vector.load %arg2[%c0_75, %c0_76] : memref<128x512xf32, #tpu.memory_space<vmem>>, vector<128x512xf32>
    %cst_77 = arith.constant dense<0.000000e+00> : vector<8x512xf32>
    %228 = tpu.matmul %219, %227, %cst_77 {dimension_numbers = #tpu.dot_dimension_numbers<[1], [0], [0], [1], [0, 0, 1, 1], [], []>} : vector<8x128xf32>, vector<128x512xf32>, vector<8x512xf32> -> vector<8x512xf32>
    %229 = arith.addf %226, %228 : vector<8x512xf32>
    %230 = vector.extract_strided_slice %229 {offsets = [0, 0], sizes = [8, 128], strides = [1, 1]} : vector<8x512xf32> to vector<8x128xf32>
    %231 = arith.negf %230 : vector<8x128xf32>
    %232 = math.exp %231 : vector<8x128xf32>
    %cst_78 = arith.constant 1.000000e+00 : f32
    %233 = vector.broadcast %cst_78 : f32 to vector<8x128xf32>
    %234 = arith.addf %233, %232 : vector<8x128xf32>
    %235 = arith.divf %233, %234 : vector<8x128xf32>
    %236 = vector.extract_strided_slice %229 {offsets = [0, 128], sizes = [8, 128], strides = [1, 1]} : vector<8x512xf32> to vector<8x128xf32>
    %237 = arith.negf %236 : vector<8x128xf32>
    %238 = math.exp %237 : vector<8x128xf32>
    %cst_79 = arith.constant 1.000000e+00 : f32
    %239 = vector.broadcast %cst_79 : f32 to vector<8x128xf32>
    %240 = arith.addf %239, %238 : vector<8x128xf32>
    %241 = arith.divf %239, %240 : vector<8x128xf32>
    %242 = vector.extract_strided_slice %229 {offsets = [0, 256], sizes = [8, 128], strides = [1, 1]} : vector<8x512xf32> to vector<8x128xf32>
    %243 = math.tanh %242 : vector<8x128xf32>
    %244 = vector.extract_strided_slice %229 {offsets = [0, 384], sizes = [8, 128], strides = [1, 1]} : vector<8x512xf32> to vector<8x128xf32>
    %245 = arith.negf %244 : vector<8x128xf32>
    %246 = math.exp %245 : vector<8x128xf32>
    %cst_80 = arith.constant 1.000000e+00 : f32
    %247 = vector.broadcast %cst_80 : f32 to vector<8x128xf32>
    %248 = arith.addf %247, %246 : vector<8x128xf32>
    %249 = arith.divf %247, %248 : vector<8x128xf32>
    %250 = arith.mulf %241, %217 : vector<8x128xf32>
    %251 = arith.mulf %235, %243 : vector<8x128xf32>
    %252 = arith.addf %250, %251 : vector<8x128xf32>
    %253 = math.tanh %252 : vector<8x128xf32>
    %254 = arith.mulf %249, %253 : vector<8x128xf32>
    %255 = arith.index_cast %c6_i32 : i32 to index
    %c0_81 = arith.constant 0 : index
    %c0_82 = arith.constant 0 : index
    %256 = vector.load %arg16[%255, %c0_81, %c0_82] : memref<8x8x128xf32, #tpu.memory_space<vmem>>, vector<1x8x128xf32>
    %257 = vector.shape_cast %256 : vector<1x8x128xf32> to vector<8x128xf32>
    %258 = vector.shape_cast %254 : vector<8x128xf32> to vector<1x8x128xf32>
    tpu.vector_store %arg16[%255, %c0_81, %c0_82], %258 {strides = array<i32>} : memref<8x8x128xf32, #tpu.memory_space<vmem>>, vector<1x8x128xf32>,
    %c7_i32 = arith.constant 7 : i32
    %259 = arith.index_cast %c7_i32 : i32 to index
    %c0_83 = arith.constant 0 : index
    %c0_84 = arith.constant 0 : index
    %260 = vector.load %arg14[%259, %c0_83, %c0_84] : memref<8x8x512xf32, #tpu.memory_space<vmem>>, vector<1x8x512xf32>
    %261 = vector.shape_cast %260 : vector<1x8x512xf32> to vector<8x512xf32>
    %c0_85 = arith.constant 0 : index
    %c0_86 = arith.constant 0 : index
    %262 = vector.load %arg2[%c0_85, %c0_86] : memref<128x512xf32, #tpu.memory_space<vmem>>, vector<128x512xf32>
    %cst_87 = arith.constant dense<0.000000e+00> : vector<8x512xf32>
    %263 = tpu.matmul %254, %262, %cst_87 {dimension_numbers = #tpu.dot_dimension_numbers<[1], [0], [0], [1], [0, 0, 1, 1], [], []>} : vector<8x128xf32>, vector<128x512xf32>, vector<8x512xf32> -> vector<8x512xf32>
    %264 = arith.addf %261, %263 : vector<8x512xf32>
    %265 = vector.extract_strided_slice %264 {offsets = [0, 0], sizes = [8, 128], strides = [1, 1]} : vector<8x512xf32> to vector<8x128xf32>
    %266 = arith.negf %265 : vector<8x128xf32>
    %267 = math.exp %266 : vector<8x128xf32>
    %cst_88 = arith.constant 1.000000e+00 : f32
    %268 = vector.broadcast %cst_88 : f32 to vector<8x128xf32>
    %269 = arith.addf %268, %267 : vector<8x128xf32>
    %270 = arith.divf %268, %269 : vector<8x128xf32>
    %271 = vector.extract_strided_slice %264 {offsets = [0, 128], sizes = [8, 128], strides = [1, 1]} : vector<8x512xf32> to vector<8x128xf32>
    %272 = arith.negf %271 : vector<8x128xf32>
    %273 = math.exp %272 : vector<8x128xf32>
    %cst_89 = arith.constant 1.000000e+00 : f32
    %274 = vector.broadcast %cst_89 : f32 to vector<8x128xf32>
    %275 = arith.addf %274, %273 : vector<8x128xf32>
    %276 = arith.divf %274, %275 : vector<8x128xf32>
    %277 = vector.extract_strided_slice %264 {offsets = [0, 256], sizes = [8, 128], strides = [1, 1]} : vector<8x512xf32> to vector<8x128xf32>
    %278 = math.tanh %277 : vector<8x128xf32>
    %279 = vector.extract_strided_slice %264 {offsets = [0, 384], sizes = [8, 128], strides = [1, 1]} : vector<8x512xf32> to vector<8x128xf32>
    %280 = arith.negf %279 : vector<8x128xf32>
    %281 = math.exp %280 : vector<8x128xf32>
    %cst_90 = arith.constant 1.000000e+00 : f32
    %282 = vector.broadcast %cst_90 : f32 to vector<8x128xf32>
    %283 = arith.addf %282, %281 : vector<8x128xf32>
    %284 = arith.divf %282, %283 : vector<8x128xf32>
    %285 = arith.mulf %276, %252 : vector<8x128xf32>
    %286 = arith.mulf %270, %278 : vector<8x128xf32>
    %287 = arith.addf %285, %286 : vector<8x128xf32>
    %288 = math.tanh %287 : vector<8x128xf32>
    %289 = arith.mulf %284, %288 : vector<8x128xf32>
    %290 = arith.index_cast %c7_i32 : i32 to index
    %c0_91 = arith.constant 0 : index
    %c0_92 = arith.constant 0 : index
    %291 = vector.load %arg16[%290, %c0_91, %c0_92] : memref<8x8x128xf32, #tpu.memory_space<vmem>>, vector<1x8x128xf32>
    %292 = vector.shape_cast %291 : vector<1x8x128xf32> to vector<8x128xf32>
    %293 = vector.shape_cast %289 : vector<8x128xf32> to vector<1x8x128xf32>
    tpu.vector_store %arg16[%290, %c0_91, %c0_92], %293 {strides = array<i32>} : memref<8x8x128xf32, #tpu.memory_space<vmem>>, vector<1x8x128xf32>,
    %c8_i32 = arith.constant 8 : i32
    %c0_i32_93 = arith.constant 0 : i32
    %c7_i32_94 = arith.constant 7 : i32
    %294 = arith.subi %c7_i32_94, %c0_i32_93 : i32
    %295 = arith.index_cast %294 : i32 to index
    %c0_95 = arith.constant 0 : index
    %c0_96 = arith.constant 0 : index
    %296 = vector.load %arg15[%295, %c0_95, %c0_96] : memref<8x8x512xf32, #tpu.memory_space<vmem>>, vector<1x8x512xf32>
    %297 = vector.shape_cast %296 : vector<1x8x512xf32> to vector<8x512xf32>
    %c0_97 = arith.constant 0 : index
    %c0_98 = arith.constant 0 : index
    %298 = vector.load %arg3[%c0_97, %c0_98] : memref<128x512xf32, #tpu.memory_space<vmem>>, vector<128x512xf32>
    %cst_99 = arith.constant dense<0.000000e+00> : vector<8x512xf32>
    %299 = tpu.matmul %13, %298, %cst_99 {dimension_numbers = #tpu.dot_dimension_numbers<[1], [0], [0], [1], [0, 0, 1, 1], [], []>} : vector<8x128xf32>, vector<128x512xf32>, vector<8x512xf32> -> vector<8x512xf32>
    %300 = arith.addf %297, %299 : vector<8x512xf32>
    %301 = vector.extract_strided_slice %300 {offsets = [0, 0], sizes = [8, 128], strides = [1, 1]} : vector<8x512xf32> to vector<8x128xf32>
    %302 = arith.negf %301 : vector<8x128xf32>
    %303 = math.exp %302 : vector<8x128xf32>
    %cst_100 = arith.constant 1.000000e+00 : f32
    %304 = vector.broadcast %cst_100 : f32 to vector<8x128xf32>
    %305 = arith.addf %304, %303 : vector<8x128xf32>
    %306 = arith.divf %304, %305 : vector<8x128xf32>
    %307 = vector.extract_strided_slice %300 {offsets = [0, 128], sizes = [8, 128], strides = [1, 1]} : vector<8x512xf32> to vector<8x128xf32>
    %308 = arith.negf %307 : vector<8x128xf32>
    %309 = math.exp %308 : vector<8x128xf32>
    %cst_101 = arith.constant 1.000000e+00 : f32
    %310 = vector.broadcast %cst_101 : f32 to vector<8x128xf32>
    %311 = arith.addf %310, %309 : vector<8x128xf32>
    %312 = arith.divf %310, %311 : vector<8x128xf32>
    %313 = vector.extract_strided_slice %300 {offsets = [0, 256], sizes = [8, 128], strides = [1, 1]} : vector<8x512xf32> to vector<8x128xf32>
    %314 = math.tanh %313 : vector<8x128xf32>
    %315 = vector.extract_strided_slice %300 {offsets = [0, 384], sizes = [8, 128], strides = [1, 1]} : vector<8x512xf32> to vector<8x128xf32>
    %316 = arith.negf %315 : vector<8x128xf32>
    %317 = math.exp %316 : vector<8x128xf32>
    %cst_102 = arith.constant 1.000000e+00 : f32
    %318 = vector.broadcast %cst_102 : f32 to vector<8x128xf32>
    %319 = arith.addf %318, %317 : vector<8x128xf32>
    %320 = arith.divf %318, %319 : vector<8x128xf32>
    %321 = arith.mulf %312, %13 : vector<8x128xf32>
    %322 = arith.mulf %306, %314 : vector<8x128xf32>
    %323 = arith.addf %321, %322 : vector<8x128xf32>
    %324 = math.tanh %323 : vector<8x128xf32>
    %325 = arith.mulf %320, %324 : vector<8x128xf32>
    %326 = arith.index_cast %294 : i32 to index
    %c0_103 = arith.constant 0 : index
    %c0_104 = arith.constant 0 : index
    %327 = vector.load %arg17[%326, %c0_103, %c0_104] : memref<8x8x128xf32, #tpu.memory_space<vmem>>, vector<1x8x128xf32>
    %328 = vector.shape_cast %327 : vector<1x8x128xf32> to vector<8x128xf32>
    %329 = vector.shape_cast %325 : vector<8x128xf32> to vector<1x8x128xf32>
    tpu.vector_store %arg17[%326, %c0_103, %c0_104], %329 {strides = array<i32>} : memref<8x8x128xf32, #tpu.memory_space<vmem>>, vector<1x8x128xf32>,
    %c1_i32_105 = arith.constant 1 : i32
    %c7_i32_106 = arith.constant 7 : i32
    %330 = arith.subi %c7_i32_106, %c1_i32_105 : i32
    %331 = arith.index_cast %330 : i32 to index
    %c0_107 = arith.constant 0 : index
    %c0_108 = arith.constant 0 : index
    %332 = vector.load %arg15[%331, %c0_107, %c0_108] : memref<8x8x512xf32, #tpu.memory_space<vmem>>, vector<1x8x512xf32>
    %333 = vector.shape_cast %332 : vector<1x8x512xf32> to vector<8x512xf32>
    %c0_109 = arith.constant 0 : index
    %c0_110 = arith.constant 0 : index
    %334 = vector.load %arg3[%c0_109, %c0_110] : memref<128x512xf32, #tpu.memory_space<vmem>>, vector<128x512xf32>
    %cst_111 = arith.constant dense<0.000000e+00> : vector<8x512xf32>
    %335 = tpu.matmul %325, %334, %cst_111 {dimension_numbers = #tpu.dot_dimension_numbers<[1], [0], [0], [1], [0, 0, 1, 1], [], []>} : vector<8x128xf32>, vector<128x512xf32>, vector<8x512xf32> -> vector<8x512xf32>
    %336 = arith.addf %333, %335 : vector<8x512xf32>
    %337 = vector.extract_strided_slice %336 {offsets = [0, 0], sizes = [8, 128], strides = [1, 1]} : vector<8x512xf32> to vector<8x128xf32>
    %338 = arith.negf %337 : vector<8x128xf32>
    %339 = math.exp %338 : vector<8x128xf32>
    %cst_112 = arith.constant 1.000000e+00 : f32
    %340 = vector.broadcast %cst_112 : f32 to vector<8x128xf32>
    %341 = arith.addf %340, %339 : vector<8x128xf32>
    %342 = arith.divf %340, %341 : vector<8x128xf32>
    %343 = vector.extract_strided_slice %336 {offsets = [0, 128], sizes = [8, 128], strides = [1, 1]} : vector<8x512xf32> to vector<8x128xf32>
    %344 = arith.negf %343 : vector<8x128xf32>
    %345 = math.exp %344 : vector<8x128xf32>
    %cst_113 = arith.constant 1.000000e+00 : f32
    %346 = vector.broadcast %cst_113 : f32 to vector<8x128xf32>
    %347 = arith.addf %346, %345 : vector<8x128xf32>
    %348 = arith.divf %346, %347 : vector<8x128xf32>
    %349 = vector.extract_strided_slice %336 {offsets = [0, 256], sizes = [8, 128], strides = [1, 1]} : vector<8x512xf32> to vector<8x128xf32>
    %350 = math.tanh %349 : vector<8x128xf32>
    %351 = vector.extract_strided_slice %336 {offsets = [0, 384], sizes = [8, 128], strides = [1, 1]} : vector<8x512xf32> to vector<8x128xf32>
    %352 = arith.negf %351 : vector<8x128xf32>
    %353 = math.exp %352 : vector<8x128xf32>
    %cst_114 = arith.constant 1.000000e+00 : f32
    %354 = vector.broadcast %cst_114 : f32 to vector<8x128xf32>
    %355 = arith.addf %354, %353 : vector<8x128xf32>
    %356 = arith.divf %354, %355 : vector<8x128xf32>
    %357 = arith.mulf %348, %323 : vector<8x128xf32>
    %358 = arith.mulf %342, %350 : vector<8x128xf32>
    %359 = arith.addf %357, %358 : vector<8x128xf32>
    %360 = math.tanh %359 : vector<8x128xf32>
    %361 = arith.mulf %356, %360 : vector<8x128xf32>
    %362 = arith.index_cast %330 : i32 to index
    %c0_115 = arith.constant 0 : index
    %c0_116 = arith.constant 0 : index
    %363 = vector.load %arg17[%362, %c0_115, %c0_116] : memref<8x8x128xf32, #tpu.memory_space<vmem>>, vector<1x8x128xf32>
    %364 = vector.shape_cast %363 : vector<1x8x128xf32> to vector<8x128xf32>
    %365 = vector.shape_cast %361 : vector<8x128xf32> to vector<1x8x128xf32>
    tpu.vector_store %arg17[%362, %c0_115, %c0_116], %365 {strides = array<i32>} : memref<8x8x128xf32, #tpu.memory_space<vmem>>, vector<1x8x128xf32>,
    %c2_i32_117 = arith.constant 2 : i32
    %c7_i32_118 = arith.constant 7 : i32
    %366 = arith.subi %c7_i32_118, %c2_i32_117 : i32
    %367 = arith.index_cast %366 : i32 to index
    %c0_119 = arith.constant 0 : index
    %c0_120 = arith.constant 0 : index
    %368 = vector.load %arg15[%367, %c0_119, %c0_120] : memref<8x8x512xf32, #tpu.memory_space<vmem>>, vector<1x8x512xf32>
    %369 = vector.shape_cast %368 : vector<1x8x512xf32> to vector<8x512xf32>
    %c0_121 = arith.constant 0 : index
    %c0_122 = arith.constant 0 : index
    %370 = vector.load %arg3[%c0_121, %c0_122] : memref<128x512xf32, #tpu.memory_space<vmem>>, vector<128x512xf32>
    %cst_123 = arith.constant dense<0.000000e+00> : vector<8x512xf32>
    %371 = tpu.matmul %361, %370, %cst_123 {dimension_numbers = #tpu.dot_dimension_numbers<[1], [0], [0], [1], [0, 0, 1, 1], [], []>} : vector<8x128xf32>, vector<128x512xf32>, vector<8x512xf32> -> vector<8x512xf32>
    %372 = arith.addf %369, %371 : vector<8x512xf32>
    %373 = vector.extract_strided_slice %372 {offsets = [0, 0], sizes = [8, 128], strides = [1, 1]} : vector<8x512xf32> to vector<8x128xf32>
    %374 = arith.negf %373 : vector<8x128xf32>
    %375 = math.exp %374 : vector<8x128xf32>
    %cst_124 = arith.constant 1.000000e+00 : f32
    %376 = vector.broadcast %cst_124 : f32 to vector<8x128xf32>
    %377 = arith.addf %376, %375 : vector<8x128xf32>
    %378 = arith.divf %376, %377 : vector<8x128xf32>
    %379 = vector.extract_strided_slice %372 {offsets = [0, 128], sizes = [8, 128], strides = [1, 1]} : vector<8x512xf32> to vector<8x128xf32>
    %380 = arith.negf %379 : vector<8x128xf32>
    %381 = math.exp %380 : vector<8x128xf32>
    %cst_125 = arith.constant 1.000000e+00 : f32
    %382 = vector.broadcast %cst_125 : f32 to vector<8x128xf32>
    %383 = arith.addf %382, %381 : vector<8x128xf32>
    %384 = arith.divf %382, %383 : vector<8x128xf32>
    %385 = vector.extract_strided_slice %372 {offsets = [0, 256], sizes = [8, 128], strides = [1, 1]} : vector<8x512xf32> to vector<8x128xf32>
    %386 = math.tanh %385 : vector<8x128xf32>
    %387 = vector.extract_strided_slice %372 {offsets = [0, 384], sizes = [8, 128], strides = [1, 1]} : vector<8x512xf32> to vector<8x128xf32>
    %388 = arith.negf %387 : vector<8x128xf32>
    %389 = math.exp %388 : vector<8x128xf32>
    %cst_126 = arith.constant 1.000000e+00 : f32
    %390 = vector.broadcast %cst_126 : f32 to vector<8x128xf32>
    %391 = arith.addf %390, %389 : vector<8x128xf32>
    %392 = arith.divf %390, %391 : vector<8x128xf32>
    %393 = arith.mulf %384, %359 : vector<8x128xf32>
    %394 = arith.mulf %378, %386 : vector<8x128xf32>
    %395 = arith.addf %393, %394 : vector<8x128xf32>
    %396 = math.tanh %395 : vector<8x128xf32>
    %397 = arith.mulf %392, %396 : vector<8x128xf32>
    %398 = arith.index_cast %366 : i32 to index
    %c0_127 = arith.constant 0 : index
    %c0_128 = arith.constant 0 : index
    %399 = vector.load %arg17[%398, %c0_127, %c0_128] : memref<8x8x128xf32, #tpu.memory_space<vmem>>, vector<1x8x128xf32>
    %400 = vector.shape_cast %399 : vector<1x8x128xf32> to vector<8x128xf32>
    %401 = vector.shape_cast %397 : vector<8x128xf32> to vector<1x8x128xf32>
    tpu.vector_store %arg17[%398, %c0_127, %c0_128], %401 {strides = array<i32>} : memref<8x8x128xf32, #tpu.memory_space<vmem>>, vector<1x8x128xf32>,
    %c3_i32_129 = arith.constant 3 : i32
    %c7_i32_130 = arith.constant 7 : i32
    %402 = arith.subi %c7_i32_130, %c3_i32_129 : i32
    %403 = arith.index_cast %402 : i32 to index
    %c0_131 = arith.constant 0 : index
    %c0_132 = arith.constant 0 : index
    %404 = vector.load %arg15[%403, %c0_131, %c0_132] : memref<8x8x512xf32, #tpu.memory_space<vmem>>, vector<1x8x512xf32>
    %405 = vector.shape_cast %404 : vector<1x8x512xf32> to vector<8x512xf32>
    %c0_133 = arith.constant 0 : index
    %c0_134 = arith.constant 0 : index
    %406 = vector.load %arg3[%c0_133, %c0_134] : memref<128x512xf32, #tpu.memory_space<vmem>>, vector<128x512xf32>
    %cst_135 = arith.constant dense<0.000000e+00> : vector<8x512xf32>
    %407 = tpu.matmul %397, %406, %cst_135 {dimension_numbers = #tpu.dot_dimension_numbers<[1], [0], [0], [1], [0, 0, 1, 1], [], []>} : vector<8x128xf32>, vector<128x512xf32>, vector<8x512xf32> -> vector<8x512xf32>
    %408 = arith.addf %405, %407 : vector<8x512xf32>
    %409 = vector.extract_strided_slice %408 {offsets = [0, 0], sizes = [8, 128], strides = [1, 1]} : vector<8x512xf32> to vector<8x128xf32>
    %410 = arith.negf %409 : vector<8x128xf32>
    %411 = math.exp %410 : vector<8x128xf32>
    %cst_136 = arith.constant 1.000000e+00 : f32
    %412 = vector.broadcast %cst_136 : f32 to vector<8x128xf32>
    %413 = arith.addf %412, %411 : vector<8x128xf32>
    %414 = arith.divf %412, %413 : vector<8x128xf32>
    %415 = vector.extract_strided_slice %408 {offsets = [0, 128], sizes = [8, 128], strides = [1, 1]} : vector<8x512xf32> to vector<8x128xf32>
    %416 = arith.negf %415 : vector<8x128xf32>
    %417 = math.exp %416 : vector<8x128xf32>
    %cst_137 = arith.constant 1.000000e+00 : f32
    %418 = vector.broadcast %cst_137 : f32 to vector<8x128xf32>
    %419 = arith.addf %418, %417 : vector<8x128xf32>
    %420 = arith.divf %418, %419 : vector<8x128xf32>
    %421 = vector.extract_strided_slice %408 {offsets = [0, 256], sizes = [8, 128], strides = [1, 1]} : vector<8x512xf32> to vector<8x128xf32>
    %422 = math.tanh %421 : vector<8x128xf32>
    %423 = vector.extract_strided_slice %408 {offsets = [0, 384], sizes = [8, 128], strides = [1, 1]} : vector<8x512xf32> to vector<8x128xf32>
    %424 = arith.negf %423 : vector<8x128xf32>
    %425 = math.exp %424 : vector<8x128xf32>
    %cst_138 = arith.constant 1.000000e+00 : f32
    %426 = vector.broadcast %cst_138 : f32 to vector<8x128xf32>
    %427 = arith.addf %426, %425 : vector<8x128xf32>
    %428 = arith.divf %426, %427 : vector<8x128xf32>
    %429 = arith.mulf %420, %395 : vector<8x128xf32>
    %430 = arith.mulf %414, %422 : vector<8x128xf32>
    %431 = arith.addf %429, %430 : vector<8x128xf32>
    %432 = math.tanh %431 : vector<8x128xf32>
    %433 = arith.mulf %428, %432 : vector<8x128xf32>
    %434 = arith.index_cast %402 : i32 to index
    %c0_139 = arith.constant 0 : index
    %c0_140 = arith.constant 0 : index
    %435 = vector.load %arg17[%434, %c0_139, %c0_140] : memref<8x8x128xf32, #tpu.memory_space<vmem>>, vector<1x8x128xf32>
    %436 = vector.shape_cast %435 : vector<1x8x128xf32> to vector<8x128xf32>
    %437 = vector.shape_cast %433 : vector<8x128xf32> to vector<1x8x128xf32>
    tpu.vector_store %arg17[%434, %c0_139, %c0_140], %437 {strides = array<i32>} : memref<8x8x128xf32, #tpu.memory_space<vmem>>, vector<1x8x128xf32>,
    %c4_i32_141 = arith.constant 4 : i32
    %c7_i32_142 = arith.constant 7 : i32
    %438 = arith.subi %c7_i32_142, %c4_i32_141 : i32
    %439 = arith.index_cast %438 : i32 to index
    %c0_143 = arith.constant 0 : index
    %c0_144 = arith.constant 0 : index
    %440 = vector.load %arg15[%439, %c0_143, %c0_144] : memref<8x8x512xf32, #tpu.memory_space<vmem>>, vector<1x8x512xf32>
    %441 = vector.shape_cast %440 : vector<1x8x512xf32> to vector<8x512xf32>
    %c0_145 = arith.constant 0 : index
    %c0_146 = arith.constant 0 : index
    %442 = vector.load %arg3[%c0_145, %c0_146] : memref<128x512xf32, #tpu.memory_space<vmem>>, vector<128x512xf32>
    %cst_147 = arith.constant dense<0.000000e+00> : vector<8x512xf32>
    %443 = tpu.matmul %433, %442, %cst_147 {dimension_numbers = #tpu.dot_dimension_numbers<[1], [0], [0], [1], [0, 0, 1, 1], [], []>} : vector<8x128xf32>, vector<128x512xf32>, vector<8x512xf32> -> vector<8x512xf32>
    %444 = arith.addf %441, %443 : vector<8x512xf32>
    %445 = vector.extract_strided_slice %444 {offsets = [0, 0], sizes = [8, 128], strides = [1, 1]} : vector<8x512xf32> to vector<8x128xf32>
    %446 = arith.negf %445 : vector<8x128xf32>
    %447 = math.exp %446 : vector<8x128xf32>
    %cst_148 = arith.constant 1.000000e+00 : f32
    %448 = vector.broadcast %cst_148 : f32 to vector<8x128xf32>
    %449 = arith.addf %448, %447 : vector<8x128xf32>
    %450 = arith.divf %448, %449 : vector<8x128xf32>
    %451 = vector.extract_strided_slice %444 {offsets = [0, 128], sizes = [8, 128], strides = [1, 1]} : vector<8x512xf32> to vector<8x128xf32>
    %452 = arith.negf %451 : vector<8x128xf32>
    %453 = math.exp %452 : vector<8x128xf32>
    %cst_149 = arith.constant 1.000000e+00 : f32
    %454 = vector.broadcast %cst_149 : f32 to vector<8x128xf32>
    %455 = arith.addf %454, %453 : vector<8x128xf32>
    %456 = arith.divf %454, %455 : vector<8x128xf32>
    %457 = vector.extract_strided_slice %444 {offsets = [0, 256], sizes = [8, 128], strides = [1, 1]} : vector<8x512xf32> to vector<8x128xf32>
    %458 = math.tanh %457 : vector<8x128xf32>
    %459 = vector.extract_strided_slice %444 {offsets = [0, 384], sizes = [8, 128], strides = [1, 1]} : vector<8x512xf32> to vector<8x128xf32>
    %460 = arith.negf %459 : vector<8x128xf32>
    %461 = math.exp %460 : vector<8x128xf32>
    %cst_150 = arith.constant 1.000000e+00 : f32
    %462 = vector.broadcast %cst_150 : f32 to vector<8x128xf32>
    %463 = arith.addf %462, %461 : vector<8x128xf32>
    %464 = arith.divf %462, %463 : vector<8x128xf32>
    %465 = arith.mulf %456, %431 : vector<8x128xf32>
    %466 = arith.mulf %450, %458 : vector<8x128xf32>
    %467 = arith.addf %465, %466 : vector<8x128xf32>
    %468 = math.tanh %467 : vector<8x128xf32>
    %469 = arith.mulf %464, %468 : vector<8x128xf32>
    %470 = arith.index_cast %438 : i32 to index
    %c0_151 = arith.constant 0 : index
    %c0_152 = arith.constant 0 : index
    %471 = vector.load %arg17[%470, %c0_151, %c0_152] : memref<8x8x128xf32, #tpu.memory_space<vmem>>, vector<1x8x128xf32>
    %472 = vector.shape_cast %471 : vector<1x8x128xf32> to vector<8x128xf32>
    %473 = vector.shape_cast %469 : vector<8x128xf32> to vector<1x8x128xf32>
    tpu.vector_store %arg17[%470, %c0_151, %c0_152], %473 {strides = array<i32>} : memref<8x8x128xf32, #tpu.memory_space<vmem>>, vector<1x8x128xf32>,
    %c5_i32_153 = arith.constant 5 : i32
    %c7_i32_154 = arith.constant 7 : i32
    %474 = arith.subi %c7_i32_154, %c5_i32_153 : i32
    %475 = arith.index_cast %474 : i32 to index
    %c0_155 = arith.constant 0 : index
    %c0_156 = arith.constant 0 : index
    %476 = vector.load %arg15[%475, %c0_155, %c0_156] : memref<8x8x512xf32, #tpu.memory_space<vmem>>, vector<1x8x512xf32>
    %477 = vector.shape_cast %476 : vector<1x8x512xf32> to vector<8x512xf32>
    %c0_157 = arith.constant 0 : index
    %c0_158 = arith.constant 0 : index
    %478 = vector.load %arg3[%c0_157, %c0_158] : memref<128x512xf32, #tpu.memory_space<vmem>>, vector<128x512xf32>
    %cst_159 = arith.constant dense<0.000000e+00> : vector<8x512xf32>
    %479 = tpu.matmul %469, %478, %cst_159 {dimension_numbers = #tpu.dot_dimension_numbers<[1], [0], [0], [1], [0, 0, 1, 1], [], []>} : vector<8x128xf32>, vector<128x512xf32>, vector<8x512xf32> -> vector<8x512xf32>
    %480 = arith.addf %477, %479 : vector<8x512xf32>
    %481 = vector.extract_strided_slice %480 {offsets = [0, 0], sizes = [8, 128], strides = [1, 1]} : vector<8x512xf32> to vector<8x128xf32>
    %482 = arith.negf %481 : vector<8x128xf32>
    %483 = math.exp %482 : vector<8x128xf32>
    %cst_160 = arith.constant 1.000000e+00 : f32
    %484 = vector.broadcast %cst_160 : f32 to vector<8x128xf32>
    %485 = arith.addf %484, %483 : vector<8x128xf32>
    %486 = arith.divf %484, %485 : vector<8x128xf32>
    %487 = vector.extract_strided_slice %480 {offsets = [0, 128], sizes = [8, 128], strides = [1, 1]} : vector<8x512xf32> to vector<8x128xf32>
    %488 = arith.negf %487 : vector<8x128xf32>
    %489 = math.exp %488 : vector<8x128xf32>
    %cst_161 = arith.constant 1.000000e+00 : f32
    %490 = vector.broadcast %cst_161 : f32 to vector<8x128xf32>
    %491 = arith.addf %490, %489 : vector<8x128xf32>
    %492 = arith.divf %490, %491 : vector<8x128xf32>
    %493 = vector.extract_strided_slice %480 {offsets = [0, 256], sizes = [8, 128], strides = [1, 1]} : vector<8x512xf32> to vector<8x128xf32>
    %494 = math.tanh %493 : vector<8x128xf32>
    %495 = vector.extract_strided_slice %480 {offsets = [0, 384], sizes = [8, 128], strides = [1, 1]} : vector<8x512xf32> to vector<8x128xf32>
    %496 = arith.negf %495 : vector<8x128xf32>
    %497 = math.exp %496 : vector<8x128xf32>
    %cst_162 = arith.constant 1.000000e+00 : f32
    %498 = vector.broadcast %cst_162 : f32 to vector<8x128xf32>
    %499 = arith.addf %498, %497 : vector<8x128xf32>
    %500 = arith.divf %498, %499 : vector<8x128xf32>
    %501 = arith.mulf %492, %467 : vector<8x128xf32>
    %502 = arith.mulf %486, %494 : vector<8x128xf32>
    %503 = arith.addf %501, %502 : vector<8x128xf32>
    %504 = math.tanh %503 : vector<8x128xf32>
    %505 = arith.mulf %500, %504 : vector<8x128xf32>
    %506 = arith.index_cast %474 : i32 to index
    %c0_163 = arith.constant 0 : index
    %c0_164 = arith.constant 0 : index
    %507 = vector.load %arg17[%506, %c0_163, %c0_164] : memref<8x8x128xf32, #tpu.memory_space<vmem>>, vector<1x8x128xf32>
    %508 = vector.shape_cast %507 : vector<1x8x128xf32> to vector<8x128xf32>
    %509 = vector.shape_cast %505 : vector<8x128xf32> to vector<1x8x128xf32>
    tpu.vector_store %arg17[%506, %c0_163, %c0_164], %509 {strides = array<i32>} : memref<8x8x128xf32, #tpu.memory_space<vmem>>, vector<1x8x128xf32>,
    %c6_i32_165 = arith.constant 6 : i32
    %c7_i32_166 = arith.constant 7 : i32
    %510 = arith.subi %c7_i32_166, %c6_i32_165 : i32
    %511 = arith.index_cast %510 : i32 to index
    %c0_167 = arith.constant 0 : index
    %c0_168 = arith.constant 0 : index
    %512 = vector.load %arg15[%511, %c0_167, %c0_168] : memref<8x8x512xf32, #tpu.memory_space<vmem>>, vector<1x8x512xf32>
    %513 = vector.shape_cast %512 : vector<1x8x512xf32> to vector<8x512xf32>
    %c0_169 = arith.constant 0 : index
    %c0_170 = arith.constant 0 : index
    %514 = vector.load %arg3[%c0_169, %c0_170] : memref<128x512xf32, #tpu.memory_space<vmem>>, vector<128x512xf32>
    %cst_171 = arith.constant dense<0.000000e+00> : vector<8x512xf32>
    %515 = tpu.matmul %505, %514, %cst_171 {dimension_numbers = #tpu.dot_dimension_numbers<[1], [0], [0], [1], [0, 0, 1, 1], [], []>} : vector<8x128xf32>, vector<128x512xf32>, vector<8x512xf32> -> vector<8x512xf32>
    %516 = arith.addf %513, %515 : vector<8x512xf32>
    %517 = vector.extract_strided_slice %516 {offsets = [0, 0], sizes = [8, 128], strides = [1, 1]} : vector<8x512xf32> to vector<8x128xf32>
    %518 = arith.negf %517 : vector<8x128xf32>
    %519 = math.exp %518 : vector<8x128xf32>
    %cst_172 = arith.constant 1.000000e+00 : f32
    %520 = vector.broadcast %cst_172 : f32 to vector<8x128xf32>
    %521 = arith.addf %520, %519 : vector<8x128xf32>
    %522 = arith.divf %520, %521 : vector<8x128xf32>
    %523 = vector.extract_strided_slice %516 {offsets = [0, 128], sizes = [8, 128], strides = [1, 1]} : vector<8x512xf32> to vector<8x128xf32>
    %524 = arith.negf %523 : vector<8x128xf32>
    %525 = math.exp %524 : vector<8x128xf32>
    %cst_173 = arith.constant 1.000000e+00 : f32
    %526 = vector.broadcast %cst_173 : f32 to vector<8x128xf32>
    %527 = arith.addf %526, %525 : vector<8x128xf32>
    %528 = arith.divf %526, %527 : vector<8x128xf32>
    %529 = vector.extract_strided_slice %516 {offsets = [0, 256], sizes = [8, 128], strides = [1, 1]} : vector<8x512xf32> to vector<8x128xf32>
    %530 = math.tanh %529 : vector<8x128xf32>
    %531 = vector.extract_strided_slice %516 {offsets = [0, 384], sizes = [8, 128], strides = [1, 1]} : vector<8x512xf32> to vector<8x128xf32>
    %532 = arith.negf %531 : vector<8x128xf32>
    %533 = math.exp %532 : vector<8x128xf32>
    %cst_174 = arith.constant 1.000000e+00 : f32
    %534 = vector.broadcast %cst_174 : f32 to vector<8x128xf32>
    %535 = arith.addf %534, %533 : vector<8x128xf32>
    %536 = arith.divf %534, %535 : vector<8x128xf32>
    %537 = arith.mulf %528, %503 : vector<8x128xf32>
    %538 = arith.mulf %522, %530 : vector<8x128xf32>
    %539 = arith.addf %537, %538 : vector<8x128xf32>
    %540 = math.tanh %539 : vector<8x128xf32>
    %541 = arith.mulf %536, %540 : vector<8x128xf32>
    %542 = arith.index_cast %510 : i32 to index
    %c0_175 = arith.constant 0 : index
    %c0_176 = arith.constant 0 : index
    %543 = vector.load %arg17[%542, %c0_175, %c0_176] : memref<8x8x128xf32, #tpu.memory_space<vmem>>, vector<1x8x128xf32>
    %544 = vector.shape_cast %543 : vector<1x8x128xf32> to vector<8x128xf32>
    %545 = vector.shape_cast %541 : vector<8x128xf32> to vector<1x8x128xf32>
    tpu.vector_store %arg17[%542, %c0_175, %c0_176], %545 {strides = array<i32>} : memref<8x8x128xf32, #tpu.memory_space<vmem>>, vector<1x8x128xf32>,
    %c7_i32_177 = arith.constant 7 : i32
    %c7_i32_178 = arith.constant 7 : i32
    %546 = arith.subi %c7_i32_178, %c7_i32_177 : i32
    %547 = arith.index_cast %546 : i32 to index
    %c0_179 = arith.constant 0 : index
    %c0_180 = arith.constant 0 : index
    %548 = vector.load %arg15[%547, %c0_179, %c0_180] : memref<8x8x512xf32, #tpu.memory_space<vmem>>, vector<1x8x512xf32>
    %549 = vector.shape_cast %548 : vector<1x8x512xf32> to vector<8x512xf32>
    %c0_181 = arith.constant 0 : index
    %c0_182 = arith.constant 0 : index
    %550 = vector.load %arg3[%c0_181, %c0_182] : memref<128x512xf32, #tpu.memory_space<vmem>>, vector<128x512xf32>
    %cst_183 = arith.constant dense<0.000000e+00> : vector<8x512xf32>
    %551 = tpu.matmul %541, %550, %cst_183 {dimension_numbers = #tpu.dot_dimension_numbers<[1], [0], [0], [1], [0, 0, 1, 1], [], []>} : vector<8x128xf32>, vector<128x512xf32>, vector<8x512xf32> -> vector<8x512xf32>
    %552 = arith.addf %549, %551 : vector<8x512xf32>
    %553 = vector.extract_strided_slice %552 {offsets = [0, 0], sizes = [8, 128], strides = [1, 1]} : vector<8x512xf32> to vector<8x128xf32>
    %554 = arith.negf %553 : vector<8x128xf32>
    %555 = math.exp %554 : vector<8x128xf32>
    %cst_184 = arith.constant 1.000000e+00 : f32
    %556 = vector.broadcast %cst_184 : f32 to vector<8x128xf32>
    %557 = arith.addf %556, %555 : vector<8x128xf32>
    %558 = arith.divf %556, %557 : vector<8x128xf32>
    %559 = vector.extract_strided_slice %552 {offsets = [0, 128], sizes = [8, 128], strides = [1, 1]} : vector<8x512xf32> to vector<8x128xf32>
    %560 = arith.negf %559 : vector<8x128xf32>
    %561 = math.exp %560 : vector<8x128xf32>
    %cst_185 = arith.constant 1.000000e+00 : f32
    %562 = vector.broadcast %cst_185 : f32 to vector<8x128xf32>
    %563 = arith.addf %562, %561 : vector<8x128xf32>
    %564 = arith.divf %562, %563 : vector<8x128xf32>
    %565 = vector.extract_strided_slice %552 {offsets = [0, 256], sizes = [8, 128], strides = [1, 1]} : vector<8x512xf32> to vector<8x128xf32>
    %566 = math.tanh %565 : vector<8x128xf32>
    %567 = vector.extract_strided_slice %552 {offsets = [0, 384], sizes = [8, 128], strides = [1, 1]} : vector<8x512xf32> to vector<8x128xf32>
    %568 = arith.negf %567 : vector<8x128xf32>
    %569 = math.exp %568 : vector<8x128xf32>
    %cst_186 = arith.constant 1.000000e+00 : f32
    %570 = vector.broadcast %cst_186 : f32 to vector<8x128xf32>
    %571 = arith.addf %570, %569 : vector<8x128xf32>
    %572 = arith.divf %570, %571 : vector<8x128xf32>
    %573 = arith.mulf %564, %539 : vector<8x128xf32>
    %574 = arith.mulf %558, %566 : vector<8x128xf32>
    %575 = arith.addf %573, %574 : vector<8x128xf32>
    %576 = math.tanh %575 : vector<8x128xf32>
    %577 = arith.mulf %572, %576 : vector<8x128xf32>
    %578 = arith.index_cast %546 : i32 to index
    %c0_187 = arith.constant 0 : index
    %c0_188 = arith.constant 0 : index
    %579 = vector.load %arg17[%578, %c0_187, %c0_188] : memref<8x8x128xf32, #tpu.memory_space<vmem>>, vector<1x8x128xf32>
    %580 = vector.shape_cast %579 : vector<1x8x128xf32> to vector<8x128xf32>
    %581 = vector.shape_cast %577 : vector<8x128xf32> to vector<1x8x128xf32>
    tpu.vector_store %arg17[%578, %c0_187, %c0_188], %581 {strides = array<i32>} : memref<8x8x128xf32, #tpu.memory_space<vmem>>, vector<1x8x128xf32>,
    %c8_i32_189 = arith.constant 8 : i32
    %c0_190 = arith.constant 0 : index
    %c0_191 = arith.constant 0 : index
    %c0_192 = arith.constant 0 : index
    %582 = vector.load %arg16[%c0_190, %c0_191, %c0_192] : memref<8x8x128xf32, #tpu.memory_space<vmem>>, vector<8x8x128xf32>
    %583 = vector.shape_cast %582 : vector<8x8x128xf32> to vector<64x128xf32>
    %c0_193 = arith.constant 0 : index
    %c0_194 = arith.constant 0 : index
    %c0_195 = arith.constant 0 : index
    %584 = vector.load %arg17[%c0_193, %c0_194, %c0_195] : memref<8x8x128xf32, #tpu.memory_space<vmem>>, vector<8x8x128xf32>
    %585 = vector.shape_cast %584 : vector<8x8x128xf32> to vector<64x128xf32>
    %c0_196 = arith.constant 0 : index
    %c0_197 = arith.constant 0 : index
    %586 = vector.load %arg5[%c0_196, %c0_197] : memref<256x512xf32, #tpu.memory_space<vmem>>, vector<128x512xf32>
    %cst_198 = arith.constant dense<0.000000e+00> : vector<64x512xf32>
    %587 = tpu.matmul %583, %586, %cst_198 {dimension_numbers = #tpu.dot_dimension_numbers<[1], [0], [0], [1], [0, 0, 1, 1], [], []>} : vector<64x128xf32>, vector<128x512xf32>, vector<64x512xf32> -> vector<64x512xf32>
    %c128 = arith.constant 128 : index
    %c0_199 = arith.constant 0 : index
    %588 = vector.load %arg5[%c128, %c0_199] : memref<256x512xf32, #tpu.memory_space<vmem>>, vector<128x512xf32>
    %cst_200 = arith.constant dense<0.000000e+00> : vector<64x512xf32>
    %589 = tpu.matmul %585, %588, %cst_200 {dimension_numbers = #tpu.dot_dimension_numbers<[1], [0], [0], [1], [0, 0, 1, 1], [], []>} : vector<64x128xf32>, vector<128x512xf32>, vector<64x512xf32> -> vector<64x512xf32>
    %590 = arith.addf %587, %589 : vector<64x512xf32>
    %c0_201 = arith.constant 0 : index
    %c0_202 = arith.constant 0 : index
    %591 = vector.load %arg9[%c0_201, %c0_202] : memref<1x512xf32, #tpu.memory_space<vmem>>, vector<1x512xf32>
    %592 = vector.broadcast %591 : vector<1x512xf32> to vector<64x512xf32>
    %593 = arith.addf %590, %592 : vector<64x512xf32>
    %594 = vector.shape_cast %593 : vector<64x512xf32> to vector<8x8x512xf32>
    %c0_203 = arith.constant 0 : index
    %c0_204 = arith.constant 0 : index
    %c0_205 = arith.constant 0 : index
    %595 = vector.load %arg18[%c0_203, %c0_204, %c0_205] : memref<8x8x512xf32, #tpu.memory_space<vmem>>, vector<8x8x512xf32>
    tpu.vector_store %arg18[%c0_203, %c0_204, %c0_205], %594 {strides = array<i32>} : memref<8x8x512xf32, #tpu.memory_space<vmem>>, vector<8x8x512xf32>,
    %c0_i32_206 = arith.constant 0 : i32
    %596 = arith.index_cast %c0_i32_206 : i32 to index
    %c0_207 = arith.constant 0 : index
    %c0_208 = arith.constant 0 : index
    %597 = vector.load %arg18[%596, %c0_207, %c0_208] : memref<8x8x512xf32, #tpu.memory_space<vmem>>, vector<1x8x512xf32>
    %598 = vector.shape_cast %597 : vector<1x8x512xf32> to vector<8x512xf32>
    %c0_209 = arith.constant 0 : index
    %c0_210 = arith.constant 0 : index
    %599 = vector.load %arg7[%c0_209, %c0_210] : memref<128x512xf32, #tpu.memory_space<vmem>>, vector<128x512xf32>
    %cst_211 = arith.constant dense<0.000000e+00> : vector<8x512xf32>
    %600 = tpu.matmul %13, %599, %cst_211 {dimension_numbers = #tpu.dot_dimension_numbers<[1], [0], [0], [1], [0, 0, 1, 1], [], []>} : vector<8x128xf32>, vector<128x512xf32>, vector<8x512xf32> -> vector<8x512xf32>
    %601 = arith.addf %598, %600 : vector<8x512xf32>
    %602 = vector.extract_strided_slice %601 {offsets = [0, 0], sizes = [8, 128], strides = [1, 1]} : vector<8x512xf32> to vector<8x128xf32>
    %603 = arith.negf %602 : vector<8x128xf32>
    %604 = math.exp %603 : vector<8x128xf32>
    %cst_212 = arith.constant 1.000000e+00 : f32
    %605 = vector.broadcast %cst_212 : f32 to vector<8x128xf32>
    %606 = arith.addf %605, %604 : vector<8x128xf32>
    %607 = arith.divf %605, %606 : vector<8x128xf32>
    %608 = vector.extract_strided_slice %601 {offsets = [0, 128], sizes = [8, 128], strides = [1, 1]} : vector<8x512xf32> to vector<8x128xf32>
    %609 = arith.negf %608 : vector<8x128xf32>
    %610 = math.exp %609 : vector<8x128xf32>
    %cst_213 = arith.constant 1.000000e+00 : f32
    %611 = vector.broadcast %cst_213 : f32 to vector<8x128xf32>
    %612 = arith.addf %611, %610 : vector<8x128xf32>
    %613 = arith.divf %611, %612 : vector<8x128xf32>
    %614 = vector.extract_strided_slice %601 {offsets = [0, 256], sizes = [8, 128], strides = [1, 1]} : vector<8x512xf32> to vector<8x128xf32>
    %615 = math.tanh %614 : vector<8x128xf32>
    %616 = vector.extract_strided_slice %601 {offsets = [0, 384], sizes = [8, 128], strides = [1, 1]} : vector<8x512xf32> to vector<8x128xf32>
    %617 = arith.negf %616 : vector<8x128xf32>
    %618 = math.exp %617 : vector<8x128xf32>
    %cst_214 = arith.constant 1.000000e+00 : f32
    %619 = vector.broadcast %cst_214 : f32 to vector<8x128xf32>
    %620 = arith.addf %619, %618 : vector<8x128xf32>
    %621 = arith.divf %619, %620 : vector<8x128xf32>
    %622 = arith.mulf %613, %13 : vector<8x128xf32>
    %623 = arith.mulf %607, %615 : vector<8x128xf32>
    %624 = arith.addf %622, %623 : vector<8x128xf32>
    %625 = math.tanh %624 : vector<8x128xf32>
    %626 = arith.mulf %621, %625 : vector<8x128xf32>
    %c1_i32_215 = arith.constant 1 : i32
    %627 = arith.index_cast %c1_i32_215 : i32 to index
    %c0_216 = arith.constant 0 : index
    %c0_217 = arith.constant 0 : index
    %628 = vector.load %arg18[%627, %c0_216, %c0_217] : memref<8x8x512xf32, #tpu.memory_space<vmem>>, vector<1x8x512xf32>
    %629 = vector.shape_cast %628 : vector<1x8x512xf32> to vector<8x512xf32>
    %c0_218 = arith.constant 0 : index
    %c0_219 = arith.constant 0 : index
    %630 = vector.load %arg7[%c0_218, %c0_219] : memref<128x512xf32, #tpu.memory_space<vmem>>, vector<128x512xf32>
    %cst_220 = arith.constant dense<0.000000e+00> : vector<8x512xf32>
    %631 = tpu.matmul %626, %630, %cst_220 {dimension_numbers = #tpu.dot_dimension_numbers<[1], [0], [0], [1], [0, 0, 1, 1], [], []>} : vector<8x128xf32>, vector<128x512xf32>, vector<8x512xf32> -> vector<8x512xf32>
    %632 = arith.addf %629, %631 : vector<8x512xf32>
    %633 = vector.extract_strided_slice %632 {offsets = [0, 0], sizes = [8, 128], strides = [1, 1]} : vector<8x512xf32> to vector<8x128xf32>
    %634 = arith.negf %633 : vector<8x128xf32>
    %635 = math.exp %634 : vector<8x128xf32>
    %cst_221 = arith.constant 1.000000e+00 : f32
    %636 = vector.broadcast %cst_221 : f32 to vector<8x128xf32>
    %637 = arith.addf %636, %635 : vector<8x128xf32>
    %638 = arith.divf %636, %637 : vector<8x128xf32>
    %639 = vector.extract_strided_slice %632 {offsets = [0, 128], sizes = [8, 128], strides = [1, 1]} : vector<8x512xf32> to vector<8x128xf32>
    %640 = arith.negf %639 : vector<8x128xf32>
    %641 = math.exp %640 : vector<8x128xf32>
    %cst_222 = arith.constant 1.000000e+00 : f32
    %642 = vector.broadcast %cst_222 : f32 to vector<8x128xf32>
    %643 = arith.addf %642, %641 : vector<8x128xf32>
    %644 = arith.divf %642, %643 : vector<8x128xf32>
    %645 = vector.extract_strided_slice %632 {offsets = [0, 256], sizes = [8, 128], strides = [1, 1]} : vector<8x512xf32> to vector<8x128xf32>
    %646 = math.tanh %645 : vector<8x128xf32>
    %647 = vector.extract_strided_slice %632 {offsets = [0, 384], sizes = [8, 128], strides = [1, 1]} : vector<8x512xf32> to vector<8x128xf32>
    %648 = arith.negf %647 : vector<8x128xf32>
    %649 = math.exp %648 : vector<8x128xf32>
    %cst_223 = arith.constant 1.000000e+00 : f32
    %650 = vector.broadcast %cst_223 : f32 to vector<8x128xf32>
    %651 = arith.addf %650, %649 : vector<8x128xf32>
    %652 = arith.divf %650, %651 : vector<8x128xf32>
    %653 = arith.mulf %644, %624 : vector<8x128xf32>
    %654 = arith.mulf %638, %646 : vector<8x128xf32>
    %655 = arith.addf %653, %654 : vector<8x128xf32>
    %656 = math.tanh %655 : vector<8x128xf32>
    %657 = arith.mulf %652, %656 : vector<8x128xf32>
    %c2_i32_224 = arith.constant 2 : i32
    %658 = arith.index_cast %c2_i32_224 : i32 to index
    %c0_225 = arith.constant 0 : index
    %c0_226 = arith.constant 0 : index
    %659 = vector.load %arg18[%658, %c0_225, %c0_226] : memref<8x8x512xf32, #tpu.memory_space<vmem>>, vector<1x8x512xf32>
    %660 = vector.shape_cast %659 : vector<1x8x512xf32> to vector<8x512xf32>
    %c0_227 = arith.constant 0 : index
    %c0_228 = arith.constant 0 : index
    %661 = vector.load %arg7[%c0_227, %c0_228] : memref<128x512xf32, #tpu.memory_space<vmem>>, vector<128x512xf32>
    %cst_229 = arith.constant dense<0.000000e+00> : vector<8x512xf32>
    %662 = tpu.matmul %657, %661, %cst_229 {dimension_numbers = #tpu.dot_dimension_numbers<[1], [0], [0], [1], [0, 0, 1, 1], [], []>} : vector<8x128xf32>, vector<128x512xf32>, vector<8x512xf32> -> vector<8x512xf32>
    %663 = arith.addf %660, %662 : vector<8x512xf32>
    %664 = vector.extract_strided_slice %663 {offsets = [0, 0], sizes = [8, 128], strides = [1, 1]} : vector<8x512xf32> to vector<8x128xf32>
    %665 = arith.negf %664 : vector<8x128xf32>
    %666 = math.exp %665 : vector<8x128xf32>
    %cst_230 = arith.constant 1.000000e+00 : f32
    %667 = vector.broadcast %cst_230 : f32 to vector<8x128xf32>
    %668 = arith.addf %667, %666 : vector<8x128xf32>
    %669 = arith.divf %667, %668 : vector<8x128xf32>
    %670 = vector.extract_strided_slice %663 {offsets = [0, 128], sizes = [8, 128], strides = [1, 1]} : vector<8x512xf32> to vector<8x128xf32>
    %671 = arith.negf %670 : vector<8x128xf32>
    %672 = math.exp %671 : vector<8x128xf32>
    %cst_231 = arith.constant 1.000000e+00 : f32
    %673 = vector.broadcast %cst_231 : f32 to vector<8x128xf32>
    %674 = arith.addf %673, %672 : vector<8x128xf32>
    %675 = arith.divf %673, %674 : vector<8x128xf32>
    %676 = vector.extract_strided_slice %663 {offsets = [0, 256], sizes = [8, 128], strides = [1, 1]} : vector<8x512xf32> to vector<8x128xf32>
    %677 = math.tanh %676 : vector<8x128xf32>
    %678 = vector.extract_strided_slice %663 {offsets = [0, 384], sizes = [8, 128], strides = [1, 1]} : vector<8x512xf32> to vector<8x128xf32>
    %679 = arith.negf %678 : vector<8x128xf32>
    %680 = math.exp %679 : vector<8x128xf32>
    %cst_232 = arith.constant 1.000000e+00 : f32
    %681 = vector.broadcast %cst_232 : f32 to vector<8x128xf32>
    %682 = arith.addf %681, %680 : vector<8x128xf32>
    %683 = arith.divf %681, %682 : vector<8x128xf32>
    %684 = arith.mulf %675, %655 : vector<8x128xf32>
    %685 = arith.mulf %669, %677 : vector<8x128xf32>
    %686 = arith.addf %684, %685 : vector<8x128xf32>
    %687 = math.tanh %686 : vector<8x128xf32>
    %688 = arith.mulf %683, %687 : vector<8x128xf32>
    %c3_i32_233 = arith.constant 3 : i32
    %689 = arith.index_cast %c3_i32_233 : i32 to index
    %c0_234 = arith.constant 0 : index
    %c0_235 = arith.constant 0 : index
    %690 = vector.load %arg18[%689, %c0_234, %c0_235] : memref<8x8x512xf32, #tpu.memory_space<vmem>>, vector<1x8x512xf32>
    %691 = vector.shape_cast %690 : vector<1x8x512xf32> to vector<8x512xf32>
    %c0_236 = arith.constant 0 : index
    %c0_237 = arith.constant 0 : index
    %692 = vector.load %arg7[%c0_236, %c0_237] : memref<128x512xf32, #tpu.memory_space<vmem>>, vector<128x512xf32>
    %cst_238 = arith.constant dense<0.000000e+00> : vector<8x512xf32>
    %693 = tpu.matmul %688, %692, %cst_238 {dimension_numbers = #tpu.dot_dimension_numbers<[1], [0], [0], [1], [0, 0, 1, 1], [], []>} : vector<8x128xf32>, vector<128x512xf32>, vector<8x512xf32> -> vector<8x512xf32>
    %694 = arith.addf %691, %693 : vector<8x512xf32>
    %695 = vector.extract_strided_slice %694 {offsets = [0, 0], sizes = [8, 128], strides = [1, 1]} : vector<8x512xf32> to vector<8x128xf32>
    %696 = arith.negf %695 : vector<8x128xf32>
    %697 = math.exp %696 : vector<8x128xf32>
    %cst_239 = arith.constant 1.000000e+00 : f32
    %698 = vector.broadcast %cst_239 : f32 to vector<8x128xf32>
    %699 = arith.addf %698, %697 : vector<8x128xf32>
    %700 = arith.divf %698, %699 : vector<8x128xf32>
    %701 = vector.extract_strided_slice %694 {offsets = [0, 128], sizes = [8, 128], strides = [1, 1]} : vector<8x512xf32> to vector<8x128xf32>
    %702 = arith.negf %701 : vector<8x128xf32>
    %703 = math.exp %702 : vector<8x128xf32>
    %cst_240 = arith.constant 1.000000e+00 : f32
    %704 = vector.broadcast %cst_240 : f32 to vector<8x128xf32>
    %705 = arith.addf %704, %703 : vector<8x128xf32>
    %706 = arith.divf %704, %705 : vector<8x128xf32>
    %707 = vector.extract_strided_slice %694 {offsets = [0, 256], sizes = [8, 128], strides = [1, 1]} : vector<8x512xf32> to vector<8x128xf32>
    %708 = math.tanh %707 : vector<8x128xf32>
    %709 = vector.extract_strided_slice %694 {offsets = [0, 384], sizes = [8, 128], strides = [1, 1]} : vector<8x512xf32> to vector<8x128xf32>
    %710 = arith.negf %709 : vector<8x128xf32>
    %711 = math.exp %710 : vector<8x128xf32>
    %cst_241 = arith.constant 1.000000e+00 : f32
    %712 = vector.broadcast %cst_241 : f32 to vector<8x128xf32>
    %713 = arith.addf %712, %711 : vector<8x128xf32>
    %714 = arith.divf %712, %713 : vector<8x128xf32>
    %715 = arith.mulf %706, %686 : vector<8x128xf32>
    %716 = arith.mulf %700, %708 : vector<8x128xf32>
    %717 = arith.addf %715, %716 : vector<8x128xf32>
    %718 = math.tanh %717 : vector<8x128xf32>
    %719 = arith.mulf %714, %718 : vector<8x128xf32>
    %c4_i32_242 = arith.constant 4 : i32
    %720 = arith.index_cast %c4_i32_242 : i32 to index
    %c0_243 = arith.constant 0 : index
    %c0_244 = arith.constant 0 : index
    %721 = vector.load %arg18[%720, %c0_243, %c0_244] : memref<8x8x512xf32, #tpu.memory_space<vmem>>, vector<1x8x512xf32>
    %722 = vector.shape_cast %721 : vector<1x8x512xf32> to vector<8x512xf32>
    %c0_245 = arith.constant 0 : index
    %c0_246 = arith.constant 0 : index
    %723 = vector.load %arg7[%c0_245, %c0_246] : memref<128x512xf32, #tpu.memory_space<vmem>>, vector<128x512xf32>
    %cst_247 = arith.constant dense<0.000000e+00> : vector<8x512xf32>
    %724 = tpu.matmul %719, %723, %cst_247 {dimension_numbers = #tpu.dot_dimension_numbers<[1], [0], [0], [1], [0, 0, 1, 1], [], []>} : vector<8x128xf32>, vector<128x512xf32>, vector<8x512xf32> -> vector<8x512xf32>
    %725 = arith.addf %722, %724 : vector<8x512xf32>
    %726 = vector.extract_strided_slice %725 {offsets = [0, 0], sizes = [8, 128], strides = [1, 1]} : vector<8x512xf32> to vector<8x128xf32>
    %727 = arith.negf %726 : vector<8x128xf32>
    %728 = math.exp %727 : vector<8x128xf32>
    %cst_248 = arith.constant 1.000000e+00 : f32
    %729 = vector.broadcast %cst_248 : f32 to vector<8x128xf32>
    %730 = arith.addf %729, %728 : vector<8x128xf32>
    %731 = arith.divf %729, %730 : vector<8x128xf32>
    %732 = vector.extract_strided_slice %725 {offsets = [0, 128], sizes = [8, 128], strides = [1, 1]} : vector<8x512xf32> to vector<8x128xf32>
    %733 = arith.negf %732 : vector<8x128xf32>
    %734 = math.exp %733 : vector<8x128xf32>
    %cst_249 = arith.constant 1.000000e+00 : f32
    %735 = vector.broadcast %cst_249 : f32 to vector<8x128xf32>
    %736 = arith.addf %735, %734 : vector<8x128xf32>
    %737 = arith.divf %735, %736 : vector<8x128xf32>
    %738 = vector.extract_strided_slice %725 {offsets = [0, 256], sizes = [8, 128], strides = [1, 1]} : vector<8x512xf32> to vector<8x128xf32>
    %739 = math.tanh %738 : vector<8x128xf32>
    %740 = vector.extract_strided_slice %725 {offsets = [0, 384], sizes = [8, 128], strides = [1, 1]} : vector<8x512xf32> to vector<8x128xf32>
    %741 = arith.negf %740 : vector<8x128xf32>
    %742 = math.exp %741 : vector<8x128xf32>
    %cst_250 = arith.constant 1.000000e+00 : f32
    %743 = vector.broadcast %cst_250 : f32 to vector<8x128xf32>
    %744 = arith.addf %743, %742 : vector<8x128xf32>
    %745 = arith.divf %743, %744 : vector<8x128xf32>
    %746 = arith.mulf %737, %717 : vector<8x128xf32>
    %747 = arith.mulf %731, %739 : vector<8x128xf32>
    %748 = arith.addf %746, %747 : vector<8x128xf32>
    %749 = math.tanh %748 : vector<8x128xf32>
    %750 = arith.mulf %745, %749 : vector<8x128xf32>
    %c5_i32_251 = arith.constant 5 : i32
    %751 = arith.index_cast %c5_i32_251 : i32 to index
    %c0_252 = arith.constant 0 : index
    %c0_253 = arith.constant 0 : index
    %752 = vector.load %arg18[%751, %c0_252, %c0_253] : memref<8x8x512xf32, #tpu.memory_space<vmem>>, vector<1x8x512xf32>
    %753 = vector.shape_cast %752 : vector<1x8x512xf32> to vector<8x512xf32>
    %c0_254 = arith.constant 0 : index
    %c0_255 = arith.constant 0 : index
    %754 = vector.load %arg7[%c0_254, %c0_255] : memref<128x512xf32, #tpu.memory_space<vmem>>, vector<128x512xf32>
    %cst_256 = arith.constant dense<0.000000e+00> : vector<8x512xf32>
    %755 = tpu.matmul %750, %754, %cst_256 {dimension_numbers = #tpu.dot_dimension_numbers<[1], [0], [0], [1], [0, 0, 1, 1], [], []>} : vector<8x128xf32>, vector<128x512xf32>, vector<8x512xf32> -> vector<8x512xf32>
    %756 = arith.addf %753, %755 : vector<8x512xf32>
    %757 = vector.extract_strided_slice %756 {offsets = [0, 0], sizes = [8, 128], strides = [1, 1]} : vector<8x512xf32> to vector<8x128xf32>
    %758 = arith.negf %757 : vector<8x128xf32>
    %759 = math.exp %758 : vector<8x128xf32>
    %cst_257 = arith.constant 1.000000e+00 : f32
    %760 = vector.broadcast %cst_257 : f32 to vector<8x128xf32>
    %761 = arith.addf %760, %759 : vector<8x128xf32>
    %762 = arith.divf %760, %761 : vector<8x128xf32>
    %763 = vector.extract_strided_slice %756 {offsets = [0, 128], sizes = [8, 128], strides = [1, 1]} : vector<8x512xf32> to vector<8x128xf32>
    %764 = arith.negf %763 : vector<8x128xf32>
    %765 = math.exp %764 : vector<8x128xf32>
    %cst_258 = arith.constant 1.000000e+00 : f32
    %766 = vector.broadcast %cst_258 : f32 to vector<8x128xf32>
    %767 = arith.addf %766, %765 : vector<8x128xf32>
    %768 = arith.divf %766, %767 : vector<8x128xf32>
    %769 = vector.extract_strided_slice %756 {offsets = [0, 256], sizes = [8, 128], strides = [1, 1]} : vector<8x512xf32> to vector<8x128xf32>
    %770 = math.tanh %769 : vector<8x128xf32>
    %771 = vector.extract_strided_slice %756 {offsets = [0, 384], sizes = [8, 128], strides = [1, 1]} : vector<8x512xf32> to vector<8x128xf32>
    %772 = arith.negf %771 : vector<8x128xf32>
    %773 = math.exp %772 : vector<8x128xf32>
    %cst_259 = arith.constant 1.000000e+00 : f32
    %774 = vector.broadcast %cst_259 : f32 to vector<8x128xf32>
    %775 = arith.addf %774, %773 : vector<8x128xf32>
    %776 = arith.divf %774, %775 : vector<8x128xf32>
    %777 = arith.mulf %768, %748 : vector<8x128xf32>
    %778 = arith.mulf %762, %770 : vector<8x128xf32>
    %779 = arith.addf %777, %778 : vector<8x128xf32>
    %780 = math.tanh %779 : vector<8x128xf32>
    %781 = arith.mulf %776, %780 : vector<8x128xf32>
    %c6_i32_260 = arith.constant 6 : i32
    %782 = arith.index_cast %c6_i32_260 : i32 to index
    %c0_261 = arith.constant 0 : index
    %c0_262 = arith.constant 0 : index
    %783 = vector.load %arg18[%782, %c0_261, %c0_262] : memref<8x8x512xf32, #tpu.memory_space<vmem>>, vector<1x8x512xf32>
    %784 = vector.shape_cast %783 : vector<1x8x512xf32> to vector<8x512xf32>
    %c0_263 = arith.constant 0 : index
    %c0_264 = arith.constant 0 : index
    %785 = vector.load %arg7[%c0_263, %c0_264] : memref<128x512xf32, #tpu.memory_space<vmem>>, vector<128x512xf32>
    %cst_265 = arith.constant dense<0.000000e+00> : vector<8x512xf32>
    %786 = tpu.matmul %781, %785, %cst_265 {dimension_numbers = #tpu.dot_dimension_numbers<[1], [0], [0], [1], [0, 0, 1, 1], [], []>} : vector<8x128xf32>, vector<128x512xf32>, vector<8x512xf32> -> vector<8x512xf32>
    %787 = arith.addf %784, %786 : vector<8x512xf32>
    %788 = vector.extract_strided_slice %787 {offsets = [0, 0], sizes = [8, 128], strides = [1, 1]} : vector<8x512xf32> to vector<8x128xf32>
    %789 = arith.negf %788 : vector<8x128xf32>
    %790 = math.exp %789 : vector<8x128xf32>
    %cst_266 = arith.constant 1.000000e+00 : f32
    %791 = vector.broadcast %cst_266 : f32 to vector<8x128xf32>
    %792 = arith.addf %791, %790 : vector<8x128xf32>
    %793 = arith.divf %791, %792 : vector<8x128xf32>
    %794 = vector.extract_strided_slice %787 {offsets = [0, 128], sizes = [8, 128], strides = [1, 1]} : vector<8x512xf32> to vector<8x128xf32>
    %795 = arith.negf %794 : vector<8x128xf32>
    %796 = math.exp %795 : vector<8x128xf32>
    %cst_267 = arith.constant 1.000000e+00 : f32
    %797 = vector.broadcast %cst_267 : f32 to vector<8x128xf32>
    %798 = arith.addf %797, %796 : vector<8x128xf32>
    %799 = arith.divf %797, %798 : vector<8x128xf32>
    %800 = vector.extract_strided_slice %787 {offsets = [0, 256], sizes = [8, 128], strides = [1, 1]} : vector<8x512xf32> to vector<8x128xf32>
    %801 = math.tanh %800 : vector<8x128xf32>
    %802 = vector.extract_strided_slice %787 {offsets = [0, 384], sizes = [8, 128], strides = [1, 1]} : vector<8x512xf32> to vector<8x128xf32>
    %803 = arith.negf %802 : vector<8x128xf32>
    %804 = math.exp %803 : vector<8x128xf32>
    %cst_268 = arith.constant 1.000000e+00 : f32
    %805 = vector.broadcast %cst_268 : f32 to vector<8x128xf32>
    %806 = arith.addf %805, %804 : vector<8x128xf32>
    %807 = arith.divf %805, %806 : vector<8x128xf32>
    %808 = arith.mulf %799, %779 : vector<8x128xf32>
    %809 = arith.mulf %793, %801 : vector<8x128xf32>
    %810 = arith.addf %808, %809 : vector<8x128xf32>
    %811 = math.tanh %810 : vector<8x128xf32>
    %812 = arith.mulf %807, %811 : vector<8x128xf32>
    %c7_i32_269 = arith.constant 7 : i32
    %813 = arith.index_cast %c7_i32_269 : i32 to index
    %c0_270 = arith.constant 0 : index
    %c0_271 = arith.constant 0 : index
    %814 = vector.load %arg18[%813, %c0_270, %c0_271] : memref<8x8x512xf32, #tpu.memory_space<vmem>>, vector<1x8x512xf32>
    %815 = vector.shape_cast %814 : vector<1x8x512xf32> to vector<8x512xf32>
    %c0_272 = arith.constant 0 : index
    %c0_273 = arith.constant 0 : index
    %816 = vector.load %arg7[%c0_272, %c0_273] : memref<128x512xf32, #tpu.memory_space<vmem>>, vector<128x512xf32>
    %cst_274 = arith.constant dense<0.000000e+00> : vector<8x512xf32>
    %817 = tpu.matmul %812, %816, %cst_274 {dimension_numbers = #tpu.dot_dimension_numbers<[1], [0], [0], [1], [0, 0, 1, 1], [], []>} : vector<8x128xf32>, vector<128x512xf32>, vector<8x512xf32> -> vector<8x512xf32>
    %818 = arith.addf %815, %817 : vector<8x512xf32>
    %819 = vector.extract_strided_slice %818 {offsets = [0, 0], sizes = [8, 128], strides = [1, 1]} : vector<8x512xf32> to vector<8x128xf32>
    %820 = arith.negf %819 : vector<8x128xf32>
    %821 = math.exp %820 : vector<8x128xf32>
    %cst_275 = arith.constant 1.000000e+00 : f32
    %822 = vector.broadcast %cst_275 : f32 to vector<8x128xf32>
    %823 = arith.addf %822, %821 : vector<8x128xf32>
    %824 = arith.divf %822, %823 : vector<8x128xf32>
    %825 = vector.extract_strided_slice %818 {offsets = [0, 128], sizes = [8, 128], strides = [1, 1]} : vector<8x512xf32> to vector<8x128xf32>
    %826 = arith.negf %825 : vector<8x128xf32>
    %827 = math.exp %826 : vector<8x128xf32>
    %cst_276 = arith.constant 1.000000e+00 : f32
    %828 = vector.broadcast %cst_276 : f32 to vector<8x128xf32>
    %829 = arith.addf %828, %827 : vector<8x128xf32>
    %830 = arith.divf %828, %829 : vector<8x128xf32>
    %831 = vector.extract_strided_slice %818 {offsets = [0, 256], sizes = [8, 128], strides = [1, 1]} : vector<8x512xf32> to vector<8x128xf32>
    %832 = math.tanh %831 : vector<8x128xf32>
    %833 = vector.extract_strided_slice %818 {offsets = [0, 384], sizes = [8, 128], strides = [1, 1]} : vector<8x512xf32> to vector<8x128xf32>
    %834 = arith.negf %833 : vector<8x128xf32>
    %835 = math.exp %834 : vector<8x128xf32>
    %cst_277 = arith.constant 1.000000e+00 : f32
    %836 = vector.broadcast %cst_277 : f32 to vector<8x128xf32>
    %837 = arith.addf %836, %835 : vector<8x128xf32>
    %838 = arith.divf %836, %837 : vector<8x128xf32>
    %839 = arith.mulf %830, %810 : vector<8x128xf32>
    %840 = arith.mulf %824, %832 : vector<8x128xf32>
    %841 = arith.addf %839, %840 : vector<8x128xf32>
    %842 = math.tanh %841 : vector<8x128xf32>
    %843 = arith.mulf %838, %842 : vector<8x128xf32>
    %c8_i32_278 = arith.constant 8 : i32
    %c7 = arith.constant 7 : index
    %c0_279 = arith.constant 0 : index
    %c0_280 = arith.constant 0 : index
    %844 = vector.load %arg16[%c7, %c0_279, %c0_280] : memref<8x8x128xf32, #tpu.memory_space<vmem>>, vector<1x8x128xf32>
    %845 = vector.shape_cast %844 : vector<1x8x128xf32> to vector<8x128xf32>
    %c0_281 = arith.constant 0 : index
    %c0_282 = arith.constant 0 : index
    %846 = vector.load %arg6[%c0_281, %c0_282] : memref<256x512xf32, #tpu.memory_space<vmem>>, vector<128x512xf32>
    %cst_283 = arith.constant dense<0.000000e+00> : vector<8x512xf32>
    %847 = tpu.matmul %845, %846, %cst_283 {dimension_numbers = #tpu.dot_dimension_numbers<[1], [0], [0], [1], [0, 0, 1, 1], [], []>} : vector<8x128xf32>, vector<128x512xf32>, vector<8x512xf32> -> vector<8x512xf32>
    %c7_284 = arith.constant 7 : index
    %c0_285 = arith.constant 0 : index
    %c0_286 = arith.constant 0 : index
    %848 = vector.load %arg17[%c7_284, %c0_285, %c0_286] : memref<8x8x128xf32, #tpu.memory_space<vmem>>, vector<1x8x128xf32>
    %849 = vector.shape_cast %848 : vector<1x8x128xf32> to vector<8x128xf32>
    %c128_287 = arith.constant 128 : index
    %c0_288 = arith.constant 0 : index
    %850 = vector.load %arg6[%c128_287, %c0_288] : memref<256x512xf32, #tpu.memory_space<vmem>>, vector<128x512xf32>
    %cst_289 = arith.constant dense<0.000000e+00> : vector<8x512xf32>
    %851 = tpu.matmul %849, %850, %cst_289 {dimension_numbers = #tpu.dot_dimension_numbers<[1], [0], [0], [1], [0, 0, 1, 1], [], []>} : vector<8x128xf32>, vector<128x512xf32>, vector<8x512xf32> -> vector<8x512xf32>
    %852 = arith.addf %847, %851 : vector<8x512xf32>
    %c0_290 = arith.constant 0 : index
    %c0_291 = arith.constant 0 : index
    %853 = vector.load %arg10[%c0_290, %c0_291] : memref<1x512xf32, #tpu.memory_space<vmem>>, vector<1x512xf32>
    %854 = vector.broadcast %853 : vector<1x512xf32> to vector<8x512xf32>
    %855 = arith.addf %852, %854 : vector<8x512xf32>
    %c0_292 = arith.constant 0 : index
    %c0_293 = arith.constant 0 : index
    %856 = vector.load %arg8[%c0_292, %c0_293] : memref<128x512xf32, #tpu.memory_space<vmem>>, vector<128x512xf32>
    %cst_294 = arith.constant dense<0.000000e+00> : vector<8x512xf32>
    %857 = tpu.matmul %13, %856, %cst_294 {dimension_numbers = #tpu.dot_dimension_numbers<[1], [0], [0], [1], [0, 0, 1, 1], [], []>} : vector<8x128xf32>, vector<128x512xf32>, vector<8x512xf32> -> vector<8x512xf32>
    %858 = arith.addf %855, %857 : vector<8x512xf32>
    %859 = vector.extract_strided_slice %858 {offsets = [0, 0], sizes = [8, 128], strides = [1, 1]} : vector<8x512xf32> to vector<8x128xf32>
    %860 = arith.negf %859 : vector<8x128xf32>
    %861 = math.exp %860 : vector<8x128xf32>
    %cst_295 = arith.constant 1.000000e+00 : f32
    %862 = vector.broadcast %cst_295 : f32 to vector<8x128xf32>
    %863 = arith.addf %862, %861 : vector<8x128xf32>
    %864 = arith.divf %862, %863 : vector<8x128xf32>
    %865 = vector.extract_strided_slice %858 {offsets = [0, 128], sizes = [8, 128], strides = [1, 1]} : vector<8x512xf32> to vector<8x128xf32>
    %866 = arith.negf %865 : vector<8x128xf32>
    %867 = math.exp %866 : vector<8x128xf32>
    %cst_296 = arith.constant 1.000000e+00 : f32
    %868 = vector.broadcast %cst_296 : f32 to vector<8x128xf32>
    %869 = arith.addf %868, %867 : vector<8x128xf32>
    %870 = arith.divf %868, %869 : vector<8x128xf32>
    %871 = vector.extract_strided_slice %858 {offsets = [0, 256], sizes = [8, 128], strides = [1, 1]} : vector<8x512xf32> to vector<8x128xf32>
    %872 = math.tanh %871 : vector<8x128xf32>
    %873 = vector.extract_strided_slice %858 {offsets = [0, 384], sizes = [8, 128], strides = [1, 1]} : vector<8x512xf32> to vector<8x128xf32>
    %874 = arith.negf %873 : vector<8x128xf32>
    %875 = math.exp %874 : vector<8x128xf32>
    %cst_297 = arith.constant 1.000000e+00 : f32
    %876 = vector.broadcast %cst_297 : f32 to vector<8x128xf32>
    %877 = arith.addf %876, %875 : vector<8x128xf32>
    %878 = arith.divf %876, %877 : vector<8x128xf32>
    %879 = arith.mulf %870, %13 : vector<8x128xf32>
    %880 = arith.mulf %864, %872 : vector<8x128xf32>
    %881 = arith.addf %879, %880 : vector<8x128xf32>
    %882 = math.tanh %881 : vector<8x128xf32>
    %883 = arith.mulf %878, %882 : vector<8x128xf32>
    %c0_298 = arith.constant 0 : index
    %c0_299 = arith.constant 0 : index
    %884 = vector.load %arg11[%c0_298, %c0_299] : memref<256x5xf32, #tpu.memory_space<vmem>>, vector<128x5xf32>
    %cst_300 = arith.constant dense<0.000000e+00> : vector<8x5xf32>
    %885 = tpu.matmul %843, %884, %cst_300 {dimension_numbers = #tpu.dot_dimension_numbers<[1], [0], [0], [1], [0, 0, 1, 1], [], []>} : vector<8x128xf32>, vector<128x5xf32>, vector<8x5xf32> -> vector<8x5xf32>
    %c128_301 = arith.constant 128 : index
    %c0_302 = arith.constant 0 : index
    %886 = vector.load %arg11[%c128_301, %c0_302] : memref<256x5xf32, #tpu.memory_space<vmem>>, vector<128x5xf32>
    %cst_303 = arith.constant dense<0.000000e+00> : vector<8x5xf32>
    %887 = tpu.matmul %883, %886, %cst_303 {dimension_numbers = #tpu.dot_dimension_numbers<[1], [0], [0], [1], [0, 0, 1, 1], [], []>} : vector<8x128xf32>, vector<128x5xf32>, vector<8x5xf32> -> vector<8x5xf32>
    %888 = arith.addf %885, %887 : vector<8x5xf32>
    %c0_304 = arith.constant 0 : index
    %c0_305 = arith.constant 0 : index
    %889 = vector.load %arg12[%c0_304, %c0_305] : memref<1x5xf32, #tpu.memory_space<vmem>>, vector<1x5xf32>
    %890 = vector.broadcast %889 : vector<1x5xf32> to vector<8x5xf32>
    %891 = arith.addf %888, %890 : vector<8x5xf32>
    %c0_306 = arith.constant 0 : index
    %c0_307 = arith.constant 0 : index
    %892 = vector.load %arg13[%c0_306, %c0_307] : memref<8x5xf32, #tpu.memory_space<vmem>>, vector<8x5xf32>
    tpu.vector_store %arg13[%c0_306, %c0_307], %891 {strides = array<i32>} : memref<8x5xf32, #tpu.memory_space<vmem>>, vector<8x5xf32>,
    return
  }
}

</mosaic_0001>

<llo_original>
// kernel: net_forward.1
$region0: #{net_forward.1}
  #allocation0 [shape = 'u32[]', space=smem, size = 0x4, offset = 0x4, fixed_abs, tag = 'smem constant byte address 0x4 - core index']
  #allocation1 [shape = 'u32[144,128]{1,0:T(1,128)}', space=vmem, size = 0x12000, scoped, tag = 'internal scratch']
  #allocation2 [shape = 'f32[8,8,512]{2,1,0:T(8,128)}', space=vmem, size = 0x20000, scoped, tag = 'scratch operand']
  #allocation3 [shape = 'f32[8,8,512]{2,1,0:T(8,128)}', space=vmem, size = 0x20000, scoped, tag = 'scratch operand']
  #allocation4 [shape = 'f32[8,8,128]{2,1,0:T(8,128)}', space=vmem, size = 0x8000, scoped, tag = 'scratch operand']
  #allocation5 [shape = 'f32[8,8,128]{2,1,0:T(8,128)}', space=vmem, size = 0x8000, scoped, tag = 'scratch operand']
  #allocation6 [shape = 'f32[8,8,512]{2,1,0:T(8,128)}', space=vmem, size = 0x20000, scoped, tag = 'scratch operand']
  %s0 = inlined_call_operand.vmem [shape: f32[8,8,256], index: 0, kind: input, shape index: {}]
  %s1 = inlined_call_operand.hbm [shape: f32[256,1024], index: 1, kind: input, shape index: {}]
  %s2 = inlined_call_operand.vmem [shape: f32[128,512], index: 2, kind: input, shape index: {}]
  %s3 = inlined_call_operand.hbm [shape: f32[128,512], index: 3, kind: input, shape index: {}]
  %s4 = inlined_call_operand.vmem [shape: f32[1,1024], index: 4, kind: input, shape index: {}]
  %s5 = inlined_call_operand.vmem [shape: f32[256,512], index: 5, kind: input, shape index: {}]
  %s6 = inlined_call_operand.hbm [shape: f32[256,512], index: 6, kind: input, shape index: {}]
  %s7 = inlined_call_operand.hbm [shape: f32[128,512], index: 7, kind: input, shape index: {}]
  %s8 = inlined_call_operand.hbm [shape: f32[128,512], index: 8, kind: input, shape index: {}]
  %s9 = inlined_call_operand.vmem [shape: f32[1,512], index: 9, kind: input, shape index: {}]
  %s10 = inlined_call_operand.vmem [shape: f32[1,512], index: 10, kind: input, shape index: {}]
  %s11 = inlined_call_operand.vmem [shape: f32[256,5], index: 11, kind: input, shape index: {}]
  %s12 = inlined_call_operand.vmem [shape: f32[1,5], index: 12, kind: input, shape index: {}]
  %s13 = inlined_call_operand.vmem [shape: f32[8,5], index: 13, kind: output, shape index: {}]
  %s14 = sld [smem:[#allocation0]]
  $region82: #{net_forward.1} parent=0
    _
  %s16 = ssub.s32 1, %s14
  %s17 = scalar_select 0, %s16, %s14
  $region1: #{net_forward.1} parent=0
    #allocation7 [shape = 'u8[1048576]{0}', space=vmem, size = 0x100000, scoped, tag = 'input window, operand 1, single buffered']
    #allocation8 [shape = 's32[1]{0}', space=sflag, size = 0x4, scoped, tag = 'scoped memory for net_forward.1']
    #allocation9 [shape = 'u8[262144]{0}', space=vmem, size = 0x40000, scoped, tag = 'input window, operand 3, single buffered']
    #allocation10 [shape = 's32[1]{0}', space=sflag, size = 0x4, scoped, tag = 'scoped memory for net_forward.1']
    #allocation11 [shape = 'u8[524288]{0}', space=vmem, size = 0x80000, scoped, tag = 'input window, operand 6, single buffered']
    #allocation12 [shape = 'u8[262144]{0}', space=vmem, size = 0x40000, scoped, tag = 'input window, operand 7, single buffered']
    #allocation13 [shape = 's32[1]{0}', space=sflag, size = 0x4, scoped, tag = 'scoped memory for net_forward.1']
    #allocation14 [shape = 'u8[262144]{0}', space=vmem, size = 0x40000, scoped, tag = 'input window, operand 8, single buffered']
    %18 = vsyncpa [#allocation8], 0
    %19 = vsyncpa [#allocation10], 0
    %20 = vsyncpa [#allocation13], 0
    // Predicated region
    $region2: #{net_forward.1} parent=1 // pred_check
      _
    $region3: #{net_forward.1} parent=1 // pred_check_branch
      %22 = sbr.rel (0) target = $region5
    $region4: #{net_forward.1} parent=1 // pred_region
      _
    $region5: #{net_forward.1} parent=1 // pred_fallthru
      _
    // Predicated region
    $region6: #{net_forward.1} parent=1 // pred_check
      _
    $region7: #{net_forward.1} parent=1 // pred_check_branch
      %24 = sbr.rel (0) target = $region9
    $region8: #{net_forward.1} parent=1 // pred_region
      %s26 = ssub.s32 32768, 32768
      %27 = vsyncadd [#allocation8], %s26
      %s28 = sshll.u32 [#allocation7], 4
      %s29 = int_to_ptr.vmem [resolvable:$true] %s28
      %34 = dma.hbm_to_vmem [thread:$0]  %s1, 32768, %s29, [#allocation8], 1024, 1024, 64
    $region9: #{net_forward.1} parent=1 // pred_fallthru
      _
    // Predicated region
    $region10: #{net_forward.1} parent=1 // pred_check
      _
    $region11: #{net_forward.1} parent=1 // pred_check_branch
      %36 = sbr.rel (0) target = $region13
    $region12: #{net_forward.1} parent=1 // pred_region
      _
    $region13: #{net_forward.1} parent=1 // pred_fallthru
      _
    // Predicated region
    $region14: #{net_forward.1} parent=1 // pred_check
      _
    $region15: #{net_forward.1} parent=1 // pred_check_branch
      %38 = sbr.rel (0) target = $region17
    $region16: #{net_forward.1} parent=1 // pred_region
      %s40 = ssub.s32 8192, 8192
      %41 = vsyncadd [#allocation10], %s40
      %s42 = sshll.u32 [#allocation9], 4
      %s43 = int_to_ptr.vmem [resolvable:$true] %s42
      %48 = dma.hbm_to_vmem [thread:$0]  %s3, 8192, %s43, [#allocation10], 512, 512, 32
    $region17: #{net_forward.1} parent=1 // pred_fallthru
      _
    // Predicated region
    $region18: #{net_forward.1} parent=1 // pred_check
      _
    $region19: #{net_forward.1} parent=1 // pred_check_branch
      %50 = sbr.rel (0) target = $region21
    $region20: #{net_forward.1} parent=1 // pred_region
      _
    $region21: #{net_forward.1} parent=1 // pred_fallthru
      _
    // Predicated region
    $region22: #{net_forward.1} parent=1 // pred_check
      _
    $region23: #{net_forward.1} parent=1 // pred_check_branch
      %52 = sbr.rel (0) target = $region25
    $region24: #{net_forward.1} parent=1 // pred_region
      _
    $region25: #{net_forward.1} parent=1 // pred_fallthru
      _
    // Predicated region
    $region26: #{net_forward.1} parent=1 // pred_check
      _
    $region27: #{net_forward.1} parent=1 // pred_check_branch
      %54 = sbr.rel (0) target = $region29
    $region28: #{net_forward.1} parent=1 // pred_region
      %s56 = ssub.s32 16384, 16384
      %57 = vsyncadd [#allocation10], %s56
      %s58 = sshll.u32 [#allocation11], 4
      %s59 = int_to_ptr.vmem [resolvable:$true] %s58
      %64 = dma.hbm_to_vmem [thread:$0]  %s6, 16384, %s59, [#allocation10], 512, 512, 32
    $region29: #{net_forward.1} parent=1 // pred_fallthru
      _
    // Predicated region
    $region30: #{net_forward.1} parent=1 // pred_check
      _
    $region31: #{net_forward.1} parent=1 // pred_check_branch
      %66 = sbr.rel (0) target = $region33
    $region32: #{net_forward.1} parent=1 // pred_region
      %s68 = ssub.s32 8192, 8192
      %69 = vsyncadd [#allocation13], %s68
      %s70 = sshll.u32 [#allocation12], 4
      %s71 = int_to_ptr.vmem [resolvable:$true] %s70
      %76 = dma.hbm_to_vmem [thread:$0]  %s7, 8192, %s71, [#allocation13], 512, 512, 32
    $region33: #{net_forward.1} parent=1 // pred_fallthru
      _
    // Predicated region
    $region34: #{net_forward.1} parent=1 // pred_check
      _
    $region35: #{net_forward.1} parent=1 // pred_check_branch
      %78 = sbr.rel (0) target = $region37
    $region36: #{net_forward.1} parent=1 // pred_region
      %s80 = ssub.s32 8192, 8192
      %81 = vsyncadd [#allocation13], %s80
      %s82 = sshll.u32 [#allocation14], 4
      %s83 = int_to_ptr.vmem [resolvable:$true] %s82
      %88 = dma.hbm_to_vmem [thread:$0]  %s8, 8192, %s83, [#allocation13], 512, 512, 32
    $region37: #{net_forward.1} parent=1 // pred_fallthru
      _
    // Predicated region
    $region38: #{net_forward.1} parent=1 // pred_check
      _
    $region39: #{net_forward.1} parent=1 // pred_check_branch
      %90 = sbr.rel (0) target = $region41
    $region40: #{net_forward.1} parent=1 // pred_region
      _
    $region41: #{net_forward.1} parent=1 // pred_fallthru
      _
    // Predicated region
    $region42: #{net_forward.1} parent=1 // pred_check
      _
    $region43: #{net_forward.1} parent=1 // pred_check_branch
      %92 = sbr.rel (0) target = $region45
    $region44: #{net_forward.1} parent=1 // pred_region
      _
    $region45: #{net_forward.1} parent=1 // pred_fallthru
      _
    // Predicated region
    $region46: #{net_forward.1} parent=1 // pred_check
      _
    $region47: #{net_forward.1} parent=1 // pred_check_branch
      %94 = sbr.rel (0) target = $region49
    $region48: #{net_forward.1} parent=1 // pred_region
      _
    $region49: #{net_forward.1} parent=1 // pred_fallthru
      _
    // Predicated region
    $region50: #{net_forward.1} parent=1 // pred_check
      _
    $region51: #{net_forward.1} parent=1 // pred_check_branch
      %96 = sbr.rel (0) target = $region53
    $region52: #{net_forward.1} parent=1 // pred_region
      _
    $region53: #{net_forward.1} parent=1 // pred_fallthru
      _
    // Predicated region
    $region54: #{net_forward.1} parent=1 // pred_check
      _
    $region55: #{net_forward.1} parent=1 // pred_check_branch
      %98 = sbr.rel (0) target = $region57
    $region56: #{net_forward.1} parent=1 // pred_region
      %99 = dma.done [#allocation8], 32768
    $region57: #{net_forward.1} parent=1 // pred_fallthru
      _
    // Predicated region
    $region58: #{net_forward.1} parent=1 // pred_check
      _
    $region59: #{net_forward.1} parent=1 // pred_check_branch
      %101 = sbr.rel (0) target = $region61
    $region60: #{net_forward.1} parent=1 // pred_region
      %102 = dma.done [#allocation10], 8192
    $region61: #{net_forward.1} parent=1 // pred_fallthru
      _
    // Predicated region
    $region62: #{net_forward.1} parent=1 // pred_check
      _
    $region63: #{net_forward.1} parent=1 // pred_check_branch
      %104 = sbr.rel (0) target = $region65
    $region64: #{net_forward.1} parent=1 // pred_region
      %105 = dma.done [#allocation10], 16384
    $region65: #{net_forward.1} parent=1 // pred_fallthru
      _
    // Predicated region
    $region66: #{net_forward.1} parent=1 // pred_check
      _
    $region67: #{net_forward.1} parent=1 // pred_check_branch
      %107 = sbr.rel (0) target = $region69
    $region68: #{net_forward.1} parent=1 // pred_region
      %108 = dma.done [#allocation13], 8192
    $region69: #{net_forward.1} parent=1 // pred_fallthru
      _
    // Predicated region
    $region70: #{net_forward.1} parent=1 // pred_check
      _
    $region71: #{net_forward.1} parent=1 // pred_check_branch
      %110 = sbr.rel (0) target = $region73
    $region72: #{net_forward.1} parent=1 // pred_region
      %111 = dma.done [#allocation13], 8192
    $region73: #{net_forward.1} parent=1 // pred_fallthru
      _
    %v112 = vld [vmem:[%s0] sm:$0xff]
    %v113 = vld [vmem:[%s0 + $0x8] sm:$0xff]
    %v114 = vld [vmem:[%s0 + $0x10] sm:$0xff]
    %v115 = vld [vmem:[%s0 + $0x18] sm:$0xff]
    %v116 = vld [vmem:[%s0 + $0x20] sm:$0xff]
    %v117 = vld [vmem:[%s0 + $0x28] sm:$0xff]
    %v118 = vld [vmem:[%s0 + $0x30] sm:$0xff]
    %v119 = vld [vmem:[%s0 + $0x38] sm:$0xff]
    %v120 = vld [vmem:[%s0 + $0x40] sm:$0xff]
    %v121 = vld [vmem:[%s0 + $0x48] sm:$0xff]
    %v122 = vld [vmem:[%s0 + $0x50] sm:$0xff]
    %v123 = vld [vmem:[%s0 + $0x58] sm:$0xff]
    %v124 = vld [vmem:[%s0 + $0x60] sm:$0xff]
    %v125 = vld [vmem:[%s0 + $0x68] sm:$0xff]
    %v126 = vld [vmem:[%s0 + $0x70] sm:$0xff]
    %v127 = vld [vmem:[%s0 + $0x78] sm:$0xff]
    %v128 = vld [vmem:[#allocation7] sm:$0xff]
    %v129 = vld [vmem:[#allocation7 + $0x8] sm:$0xff]
    %v130 = vld [vmem:[#allocation7 + $0x10] sm:$0xff]
    %v131 = vld [vmem:[#allocation7 + $0x18] sm:$0xff]
    %v132 = vld [vmem:[#allocation7 + $0x20] sm:$0xff]
    %v133 = vld [vmem:[#allocation7 + $0x28] sm:$0xff]
    %v134 = vld [vmem:[#allocation7 + $0x30] sm:$0xff]
    %v135 = vld [vmem:[#allocation7 + $0x38] sm:$0xff]
    %v136 = vld [vmem:[#allocation7 + $0x40] sm:$0xff]
    %v137 = vld [vmem:[#allocation7 + $0x48] sm:$0xff]
    %v138 = vld [vmem:[#allocation7 + $0x50] sm:$0xff]
    %v139 = vld [vmem:[#allocation7 + $0x58] sm:$0xff]
    %v140 = vld [vmem:[#allocation7 + $0x60] sm:$0xff]
    %v141 = vld [vmem:[#allocation7 + $0x68] sm:$0xff]
    %v142 = vld [vmem:[#allocation7 + $0x70] sm:$0xff]
    %v143 = vld [vmem:[#allocation7 + $0x78] sm:$0xff]
    %v144 = vld [vmem:[#allocation7 + $0x80] sm:$0xff]
    %v145 = vld [vmem:[#allocation7 + $0x88] sm:$0xff]
    %v146 = vld [vmem:[#allocation7 + $0x90] sm:$0xff]
    %v147 = vld [vmem:[#allocation7 + $0x98] sm:$0xff]
    %v148 = vld [vmem:[#allocation7 + $0xa0] sm:$0xff]
    %v149 = vld [vmem:[#allocation7 + $0xa8] sm:$0xff]
    %v150 = vld [vmem:[#allocation7 + $0xb0] sm:$0xff]
    %v151 = vld [vmem:[#allocation7 + $0xb8] sm:$0xff]
    %v152 = vld [vmem:[#allocation7 + $0xc0] sm:$0xff]
    %v153 = vld [vmem:[#allocation7 + $0xc8] sm:$0xff]
    %v154 = vld [vmem:[#allocation7 + $0xd0] sm:$0xff]
    %v155 = vld [vmem:[#allocation7 + $0xd8] sm:$0xff]
    %v156 = vld [vmem:[#allocation7 + $0xe0] sm:$0xff]
    %v157 = vld [vmem:[#allocation7 + $0xe8] sm:$0xff]
    %v158 = vld [vmem:[#allocation7 + $0xf0] sm:$0xff]
    %v159 = vld [vmem:[#allocation7 + $0xf8] sm:$0xff]
    %v160 = vld [vmem:[#allocation7 + $0x100] sm:$0xff]
    %v161 = vld [vmem:[#allocation7 + $0x108] sm:$0xff]
    %v162 = vld [vmem:[#allocation7 + $0x110] sm:$0xff]
    %v163 = vld [vmem:[#allocation7 + $0x118] sm:$0xff]
    %v164 = vld [vmem:[#allocation7 + $0x120] sm:$0xff]
    %v165 = vld [vmem:[#allocation7 + $0x128] sm:$0xff]
    %v166 = vld [vmem:[#allocation7 + $0x130] sm:$0xff]
    %v167 = vld [vmem:[#allocation7 + $0x138] sm:$0xff]
    %v168 = vld [vmem:[#allocation7 + $0x140] sm:$0xff]
    %v169 = vld [vmem:[#allocation7 + $0x148] sm:$0xff]
    %v170 = vld [vmem:[#allocation7 + $0x150] sm:$0xff]
    %v171 = vld [vmem:[#allocation7 + $0x158] sm:$0xff]
    %v172 = vld [vmem:[#allocation7 + $0x160] sm:$0xff]
    %v173 = vld [vmem:[#allocation7 + $0x168] sm:$0xff]
    %v174 = vld [vmem:[#allocation7 + $0x170] sm:$0xff]
    %v175 = vld [vmem:[#allocation7 + $0x178] sm:$0xff]
    %v176 = vld [vmem:[#allocation7 + $0x180] sm:$0xff]
    %v177 = vld [vmem:[#allocation7 + $0x188] sm:$0xff]
    %v178 = vld [vmem:[#allocation7 + $0x190] sm:$0xff]
    %v179 = vld [vmem:[#allocation7 + $0x198] sm:$0xff]
    %v180 = vld [vmem:[#allocation7 + $0x1a0] sm:$0xff]
    %v181 = vld [vmem:[#allocation7 + $0x1a8] sm:$0xff]
    %v182 = vld [vmem:[#allocation7 + $0x1b0] sm:$0xff]
    %v183 = vld [vmem:[#allocation7 + $0x1b8] sm:$0xff]
    %v184 = vld [vmem:[#allocation7 + $0x1c0] sm:$0xff]
    %v185 = vld [vmem:[#allocation7 + $0x1c8] sm:$0xff]
    %v186 = vld [vmem:[#allocation7 + $0x1d0] sm:$0xff]
    %v187 = vld [vmem:[#allocation7 + $0x1d8] sm:$0xff]
    %v188 = vld [vmem:[#allocation7 + $0x1e0] sm:$0xff]
    %v189 = vld [vmem:[#allocation7 + $0x1e8] sm:$0xff]
    %v190 = vld [vmem:[#allocation7 + $0x1f0] sm:$0xff]
    %v191 = vld [vmem:[#allocation7 + $0x1f8] sm:$0xff]
    %v192 = vld [vmem:[#allocation7 + $0x200] sm:$0xff]
    %v193 = vld [vmem:[#allocation7 + $0x208] sm:$0xff]
    %v194 = vld [vmem:[#allocation7 + $0x210] sm:$0xff]
    %v195 = vld [vmem:[#allocation7 + $0x218] sm:$0xff]
    %v196 = vld [vmem:[#allocation7 + $0x220] sm:$0xff]
    %v197 = vld [vmem:[#allocation7 + $0x228] sm:$0xff]
    %v198 = vld [vmem:[#allocation7 + $0x230] sm:$0xff]
    %v199 = vld [vmem:[#allocation7 + $0x238] sm:$0xff]
    %v200 = vld [vmem:[#allocation7 + $0x240] sm:$0xff]
    %v201 = vld [vmem:[#allocation7 + $0x248] sm:$0xff]
    %v202 = vld [vmem:[#allocation7 + $0x250] sm:$0xff]
    %v203 = vld [vmem:[#allocation7 + $0x258] sm:$0xff]
    %v204 = vld [vmem:[#allocation7 + $0x260] sm:$0xff]
    %v205 = vld [vmem:[#allocation7 + $0x268] sm:$0xff]
    %v206 = vld [vmem:[#allocation7 + $0x270] sm:$0xff]
    %v207 = vld [vmem:[#allocation7 + $0x278] sm:$0xff]
    %v208 = vld [vmem:[#allocation7 + $0x280] sm:$0xff]
    %v209 = vld [vmem:[#allocation7 + $0x288] sm:$0xff]
    %v210 = vld [vmem:[#allocation7 + $0x290] sm:$0xff]
    %v211 = vld [vmem:[#allocation7 + $0x298] sm:$0xff]
    %v212 = vld [vmem:[#allocation7 + $0x2a0] sm:$0xff]
    %v213 = vld [vmem:[#allocation7 + $0x2a8] sm:$0xff]
    %v214 = vld [vmem:[#allocation7 + $0x2b0] sm:$0xff]
    %v215 = vld [vmem:[#allocation7 + $0x2b8] sm:$0xff]
    %v216 = vld [vmem:[#allocation7 + $0x2c0] sm:$0xff]
    %v217 = vld [vmem:[#allocation7 + $0x2c8] sm:$0xff]
    %v218 = vld [vmem:[#allocation7 + $0x2d0] sm:$0xff]
    %v219 = vld [vmem:[#allocation7 + $0x2d8] sm:$0xff]
    %v220 = vld [vmem:[#allocation7 + $0x2e0] sm:$0xff]
    %v221 = vld [vmem:[#allocation7 + $0x2e8] sm:$0xff]
    %v222 = vld [vmem:[#allocation7 + $0x2f0] sm:$0xff]
    %v223 = vld [vmem:[#allocation7 + $0x2f8] sm:$0xff]
    %v224 = vld [vmem:[#allocation7 + $0x300] sm:$0xff]
    %v225 = vld [vmem:[#allocation7 + $0x308] sm:$0xff]
    %v226 = vld [vmem:[#allocation7 + $0x310] sm:$0xff]
    %v227 = vld [vmem:[#allocation7 + $0x318] sm:$0xff]
    %v228 = vld [vmem:[#allocation7 + $0x320] sm:$0xff]
    %v229 = vld [vmem:[#allocation7 + $0x328] sm:$0xff]
    %v230 = vld [vmem:[#allocation7 + $0x330] sm:$0xff]
    %v231 = vld [vmem:[#allocation7 + $0x338] sm:$0xff]
    %v232 = vld [vmem:[#allocation7 + $0x340] sm:$0xff]
    %v233 = vld [vmem:[#allocation7 + $0x348] sm:$0xff]
    %v234 = vld [vmem:[#allocation7 + $0x350] sm:$0xff]
    %v235 = vld [vmem:[#allocation7 + $0x358] sm:$0xff]
    %v236 = vld [vmem:[#allocation7 + $0x360] sm:$0xff]
    %v237 = vld [vmem:[#allocation7 + $0x368] sm:$0xff]
    %v238 = vld [vmem:[#allocation7 + $0x370] sm:$0xff]
    %v239 = vld [vmem:[#allocation7 + $0x378] sm:$0xff]
    %v240 = vld [vmem:[#allocation7 + $0x380] sm:$0xff]
    %v241 = vld [vmem:[#allocation7 + $0x388] sm:$0xff]
    %v242 = vld [vmem:[#allocation7 + $0x390] sm:$0xff]
    %v243 = vld [vmem:[#allocation7 + $0x398] sm:$0xff]
    %v244 = vld [vmem:[#allocation7 + $0x3a0] sm:$0xff]
    %v245 = vld [vmem:[#allocation7 + $0x3a8] sm:$0xff]
    %v246 = vld [vmem:[#allocation7 + $0x3b0] sm:$0xff]
    %v247 = vld [vmem:[#allocation7 + $0x3b8] sm:$0xff]
    %v248 = vld [vmem:[#allocation7 + $0x3c0] sm:$0xff]
    %v249 = vld [vmem:[#allocation7 + $0x3c8] sm:$0xff]
    %v250 = vld [vmem:[#allocation7 + $0x3d0] sm:$0xff]
    %v251 = vld [vmem:[#allocation7 + $0x3d8] sm:$0xff]
    %v252 = vld [vmem:[#allocation7 + $0x3e0] sm:$0xff]
    %v253 = vld [vmem:[#allocation7 + $0x3e8] sm:$0xff]
    %v254 = vld [vmem:[#allocation7 + $0x3f0] sm:$0xff]
    %v255 = vld [vmem:[#allocation7 + $0x3f8] sm:$0xff]
    %v256 = vld [vmem:[#allocation7 + $0x400] sm:$0xff]
    %v257 = vld [vmem:[#allocation7 + $0x408] sm:$0xff]
    %v258 = vld [vmem:[#allocation7 + $0x410] sm:$0xff]
    %v259 = vld [vmem:[#allocation7 + $0x418] sm:$0xff]
    %v260 = vld [vmem:[#allocation7 + $0x420] sm:$0xff]
    %v261 = vld [vmem:[#allocation7 + $0x428] sm:$0xff]
    %v262 = vld [vmem:[#allocation7 + $0x430] sm:$0xff]
    %v263 = vld [vmem:[#allocation7 + $0x438] sm:$0xff]
    %v264 = vld [vmem:[#allocation7 + $0x440] sm:$0xff]
    %v265 = vld [vmem:[#allocation7 + $0x448] sm:$0xff]
    %v266 = vld [vmem:[#allocation7 + $0x450] sm:$0xff]
    %v267 = vld [vmem:[#allocation7 + $0x458] sm:$0xff]
    %v268 = vld [vmem:[#allocation7 + $0x460] sm:$0xff]
    %v269 = vld [vmem:[#allocation7 + $0x468] sm:$0xff]
    %v270 = vld [vmem:[#allocation7 + $0x470] sm:$0xff]
    %v271 = vld [vmem:[#allocation7 + $0x478] sm:$0xff]
    %v272 = vld [vmem:[#allocation7 + $0x480] sm:$0xff]
    %v273 = vld [vmem:[#allocation7 + $0x488] sm:$0xff]
    %v274 = vld [vmem:[#allocation7 + $0x490] sm:$0xff]
    %v275 = vld [vmem:[#allocation7 + $0x498] sm:$0xff]
    %v276 = vld [vmem:[#allocation7 + $0x4a0] sm:$0xff]
    %v277 = vld [vmem:[#allocation7 + $0x4a8] sm:$0xff]
    %v278 = vld [vmem:[#allocation7 + $0x4b0] sm:$0xff]
    %v279 = vld [vmem:[#allocation7 + $0x4b8] sm:$0xff]
    %v280 = vld [vmem:[#allocation7 + $0x4c0] sm:$0xff]
    %v281 = vld [vmem:[#allocation7 + $0x4c8] sm:$0xff]
    %v282 = vld [vmem:[#allocation7 + $0x4d0] sm:$0xff]
    %v283 = vld [vmem:[#allocation7 + $0x4d8] sm:$0xff]
    %v284 = vld [vmem:[#allocation7 + $0x4e0] sm:$0xff]
    %v285 = vld [vmem:[#allocation7 + $0x4e8] sm:$0xff]
    %v286 = vld [vmem:[#allocation7 + $0x4f0] sm:$0xff]
    %v287 = vld [vmem:[#allocation7 + $0x4f8] sm:$0xff]
    %v288 = vld [vmem:[#allocation7 + $0x500] sm:$0xff]
    %v289 = vld [vmem:[#allocation7 + $0x508] sm:$0xff]
    %v290 = vld [vmem:[#allocation7 + $0x510] sm:$0xff]
    %v291 = vld [vmem:[#allocation7 + $0x518] sm:$0xff]
    %v292 = vld [vmem:[#allocation7 + $0x520] sm:$0xff]
    %v293 = vld [vmem:[#allocation7 + $0x528] sm:$0xff]
    %v294 = vld [vmem:[#allocation7 + $0x530] sm:$0xff]
    %v295 = vld [vmem:[#allocation7 + $0x538] sm:$0xff]
    %v296 = vld [vmem:[#allocation7 + $0x540] sm:$0xff]
    %v297 = vld [vmem:[#allocation7 + $0x548] sm:$0xff]
    %v298 = vld [vmem:[#allocation7 + $0x550] sm:$0xff]
    %v299 = vld [vmem:[#allocation7 + $0x558] sm:$0xff]
    %v300 = vld [vmem:[#allocation7 + $0x560] sm:$0xff]
    %v301 = vld [vmem:[#allocation7 + $0x568] sm:$0xff]
    %v302 = vld [vmem:[#allocation7 + $0x570] sm:$0xff]
    %v303 = vld [vmem:[#allocation7 + $0x578] sm:$0xff]
    %v304 = vld [vmem:[#allocation7 + $0x580] sm:$0xff]
    %v305 = vld [vmem:[#allocation7 + $0x588] sm:$0xff]
    %v306 = vld [vmem:[#allocation7 + $0x590] sm:$0xff]
    %v307 = vld [vmem:[#allocation7 + $0x598] sm:$0xff]
    %v308 = vld [vmem:[#allocation7 + $0x5a0] sm:$0xff]
    %v309 = vld [vmem:[#allocation7 + $0x5a8] sm:$0xff]
    %v310 = vld [vmem:[#allocation7 + $0x5b0] sm:$0xff]
    %v311 = vld [vmem:[#allocation7 + $0x5b8] sm:$0xff]
    %v312 = vld [vmem:[#allocation7 + $0x5c0] sm:$0xff]
    %v313 = vld [vmem:[#allocation7 + $0x5c8] sm:$0xff]
    %v314 = vld [vmem:[#allocation7 + $0x5d0] sm:$0xff]
    %v315 = vld [vmem:[#allocation7 + $0x5d8] sm:$0xff]
    %v316 = vld [vmem:[#allocation7 + $0x5e0] sm:$0xff]
    %v317 = vld [vmem:[#allocation7 + $0x5e8] sm:$0xff]
    %v318 = vld [vmem:[#allocation7 + $0x5f0] sm:$0xff]
    %v319 = vld [vmem:[#allocation7 + $0x5f8] sm:$0xff]
    %v320 = vld [vmem:[#allocation7 + $0x600] sm:$0xff]
    %v321 = vld [vmem:[#allocation7 + $0x608] sm:$0xff]
    %v322 = vld [vmem:[#allocation7 + $0x610] sm:$0xff]
    %v323 = vld [vmem:[#allocation7 + $0x618] sm:$0xff]
    %v324 = vld [vmem:[#allocation7 + $0x620] sm:$0xff]
    %v325 = vld [vmem:[#allocation7 + $0x628] sm:$0xff]
    %v326 = vld [vmem:[#allocation7 + $0x630] sm:$0xff]
    %v327 = vld [vmem:[#allocation7 + $0x638] sm:$0xff]
    %v328 = vld [vmem:[#allocation7 + $0x640] sm:$0xff]
    %v329 = vld [vmem:[#allocation7 + $0x648] sm:$0xff]
    %v330 = vld [vmem:[#allocation7 + $0x650] sm:$0xff]
    %v331 = vld [vmem:[#allocation7 + $0x658] sm:$0xff]
    %v332 = vld [vmem:[#allocation7 + $0x660] sm:$0xff]
    %v333 = vld [vmem:[#allocation7 + $0x668] sm:$0xff]
    %v334 = vld [vmem:[#allocation7 + $0x670] sm:$0xff]
    %v335 = vld [vmem:[#allocation7 + $0x678] sm:$0xff]
    %v336 = vld [vmem:[#allocation7 + $0x680] sm:$0xff]
    %v337 = vld [vmem:[#allocation7 + $0x688] sm:$0xff]
    %v338 = vld [vmem:[#allocation7 + $0x690] sm:$0xff]
    %v339 = vld [vmem:[#allocation7 + $0x698] sm:$0xff]
    %v340 = vld [vmem:[#allocation7 + $0x6a0] sm:$0xff]
    %v341 = vld [vmem:[#allocation7 + $0x6a8] sm:$0xff]
    %v342 = vld [vmem:[#allocation7 + $0x6b0] sm:$0xff]
    %v343 = vld [vmem:[#allocation7 + $0x6b8] sm:$0xff]
    %v344 = vld [vmem:[#allocation7 + $0x6c0] sm:$0xff]
    %v345 = vld [vmem:[#allocation7 + $0x6c8] sm:$0xff]
    %v346 = vld [vmem:[#allocation7 + $0x6d0] sm:$0xff]
    %v347 = vld [vmem:[#allocation7 + $0x6d8] sm:$0xff]
    %v348 = vld [vmem:[#allocation7 + $0x6e0] sm:$0xff]
    %v349 = vld [vmem:[#allocation7 + $0x6e8] sm:$0xff]
    %v350 = vld [vmem:[#allocation7 + $0x6f0] sm:$0xff]
    %v351 = vld [vmem:[#allocation7 + $0x6f8] sm:$0xff]
    %v352 = vld [vmem:[#allocation7 + $0x700] sm:$0xff]
    %v353 = vld [vmem:[#allocation7 + $0x708] sm:$0xff]
    %v354 = vld [vmem:[#allocation7 + $0x710] sm:$0xff]
    %v355 = vld [vmem:[#allocation7 + $0x718] sm:$0xff]
    %v356 = vld [vmem:[#allocation7 + $0x720] sm:$0xff]
    %v357 = vld [vmem:[#allocation7 + $0x728] sm:$0xff]
    %v358 = vld [vmem:[#allocation7 + $0x730] sm:$0xff]
    %v359 = vld [vmem:[#allocation7 + $0x738] sm:$0xff]
    %v360 = vld [vmem:[#allocation7 + $0x740] sm:$0xff]
    %v361 = vld [vmem:[#allocation7 + $0x748] sm:$0xff]
    %v362 = vld [vmem:[#allocation7 + $0x750] sm:$0xff]
    %v363 = vld [vmem:[#allocation7 + $0x758] sm:$0xff]
    %v364 = vld [vmem:[#allocation7 + $0x760] sm:$0xff]
    %v365 = vld [vmem:[#allocation7 + $0x768] sm:$0xff]
    %v366 = vld [vmem:[#allocation7 + $0x770] sm:$0xff]
    %v367 = vld [vmem:[#allocation7 + $0x778] sm:$0xff]
    %v368 = vld [vmem:[#allocation7 + $0x780] sm:$0xff]
    %v369 = vld [vmem:[#allocation7 + $0x788] sm:$0xff]
    %v370 = vld [vmem:[#allocation7 + $0x790] sm:$0xff]
    %v371 = vld [vmem:[#allocation7 + $0x798] sm:$0xff]
    %v372 = vld [vmem:[#allocation7 + $0x7a0] sm:$0xff]
    %v373 = vld [vmem:[#allocation7 + $0x7a8] sm:$0xff]
    %v374 = vld [vmem:[#allocation7 + $0x7b0] sm:$0xff]
    %v375 = vld [vmem:[#allocation7 + $0x7b8] sm:$0xff]
    %v376 = vld [vmem:[#allocation7 + $0x7c0] sm:$0xff]
    %v377 = vld [vmem:[#allocation7 + $0x7c8] sm:$0xff]
    %v378 = vld [vmem:[#allocation7 + $0x7d0] sm:$0xff]
    %v379 = vld [vmem:[#allocation7 + $0x7d8] sm:$0xff]
    %v380 = vld [vmem:[#allocation7 + $0x7e0] sm:$0xff]
    %v381 = vld [vmem:[#allocation7 + $0x7e8] sm:$0xff]
    %v382 = vld [vmem:[#allocation7 + $0x7f0] sm:$0xff]
    %v383 = vld [vmem:[#allocation7 + $0x7f8] sm:$0xff]
    %v384 = vld [vmem:[%s4] sm:$0xff]
    %v386 = vlaneseq
    %v387 = vshrl.u32 %v386, 7
    %v388 = vsub.s32 0, %v387
    %v389 = vrot.slane %v384, %v388
    %v390 = vlaneseq
    %v391 = vshrl.u32 %v390, 7
    %v392 = vsub.s32 1, %v391
    %v393 = vrot.slane %v384, %v392
    %v394 = vlaneseq
    %v395 = vshrl.u32 %v394, 7
    %v396 = vsub.s32 2, %v395
    %v397 = vrot.slane %v384, %v396
    %v398 = vlaneseq
    %v399 = vshrl.u32 %v398, 7
    %v400 = vsub.s32 3, %v399
    %v401 = vrot.slane %v384, %v400
    %v402 = vlaneseq
    %v403 = vshrl.u32 %v402, 7
    %v404 = vsub.s32 4, %v403
    %v405 = vrot.slane %v384, %v404
    %v406 = vlaneseq
    %v407 = vshrl.u32 %v406, 7
    %v408 = vsub.s32 5, %v407
    %v409 = vrot.slane %v384, %v408
    %v410 = vlaneseq
    %v411 = vshrl.u32 %v410, 7
    %v412 = vsub.s32 6, %v411
    %v413 = vrot.slane %v384, %v412
    %v414 = vlaneseq
    %v415 = vshrl.u32 %v414, 7
    %v416 = vsub.s32 7, %v415
    %v417 = vrot.slane %v384, %v416
    %426 = vmatprep.subr.mxu0 %v129
    %427 = vmatpush1.msra.mxu0 %v128
    %428 = vmatprep.subr.mxu0 %v137
    %429 = vmatpush1.msra.mxu0 %v136
    %430 = vmatprep.subr.mxu0 %v145
    %431 = vmatpush1.msra.mxu0 %v144
    %432 = vmatprep.subr.mxu0 %v153
    %433 = vmatpush1.msra.mxu0 %v152
    %434 = vmatprep.subr.mxu0 %v161
    %435 = vmatpush1.msra.mxu0 %v160
    %436 = vmatprep.subr.mxu0 %v169
    %437 = vmatpush1.msra.mxu0 %v168
    %438 = vmatprep.subr.mxu0 %v177
    %439 = vmatpush1.msra.mxu0 %v176
    %440 = vmatprep.subr.mxu0 %v185
    %441 = vmatpush1.msra.mxu0 %v184
    %442 = vmatprep.subr.mxu0 %v193
    %443 = vmatpush1.msra.mxu0 %v192
    %444 = vmatprep.subr.mxu0 %v201
    %445 = vmatpush1.msra.mxu0 %v200
    %446 = vmatprep.subr.mxu0 %v209
    %447 = vmatpush1.msra.mxu0 %v208
    %448 = vmatprep.subr.mxu0 %v217
    %449 = vmatpush1.msra.mxu0 %v216
    %450 = vmatprep.subr.mxu0 %v225
    %451 = vmatpush1.msra.mxu0 %v224
    %452 = vmatprep.subr.mxu0 %v233
    %453 = vmatpush1.msra.mxu0 %v232
    %454 = vmatprep.subr.mxu0 %v241
    %455 = vmatpush1.msra.mxu0 %v240
    %456 = vmatprep.subr.mxu0 %v249
    %457 = vmatpush1.msra.mxu0 %v248
    %458 = vmatprep.subr.mxu0 %v257
    %459 = vmatpush1.msra.mxu0 %v256
    %460 = vmatprep.subr.mxu0 %v265
    %461 = vmatpush1.msra.mxu0 %v264
    %462 = vmatprep.subr.mxu0 %v273
    %463 = vmatpush1.msra.mxu0 %v272
    %464 = vmatprep.subr.mxu0 %v281
    %465 = vmatpush1.msra.mxu0 %v280
    %466 = vmatprep.subr.mxu0 %v289
    %467 = vmatpush1.msra.mxu0 %v288
    %468 = vmatprep.subr.mxu0 %v297
    %469 = vmatpush1.msra.mxu0 %v296
    %470 = vmatprep.subr.mxu0 %v305
    %471 = vmatpush1.msra.mxu0 %v304
    %472 = vmatprep.subr.mxu0 %v313
    %473 = vmatpush1.msra.mxu0 %v312
    %474 = vmatprep.subr.mxu0 %v321
    %475 = vmatpush1.msra.mxu0 %v320
    %476 = vmatprep.subr.mxu0 %v329
    %477 = vmatpush1.msra.mxu0 %v328
    %478 = vmatprep.subr.mxu0 %v337
    %479 = vmatpush1.msra.mxu0 %v336
    %480 = vmatprep.subr.mxu0 %v345
    %481 = vmatpush1.msra.mxu0 %v344
    %482 = vmatprep.subr.mxu0 %v353
    %483 = vmatpush1.msra.mxu0 %v352
    %484 = vmatprep.subr.mxu0 %v361
    %485 = vmatpush1.msra.mxu0 %v360
    %486 = vmatprep.subr.mxu0 %v369
    %487 = vmatpush1.msra.mxu0 %v368
    %488 = vmatprep.subr.mxu0 %v377
    %489 = vmatpush1.msra.mxu0 %v376
    %490 = vmatprep.mubr.f32.mxu0 %v113
    %491 = vmatmul.mubr.f32.gmra.mrb[0].mxu0 %v112
    %v492 = vpop.f32.mrb[0].mxu0
    %v493 = vadd.f32 %v389, %v492
    %v494 = vpop.f32.mrb[0].mxu0
    %v495 = vadd.f32 %v393, %v494
    %496 = vmatprep.mubr.f32.mxu0 %v115
    %497 = vmatmul.mubr.f32.gmra.mrb[0].mxu0 %v114
    %v498 = vpop.f32.mrb[0].mxu0
    %v499 = vadd.f32 %v389, %v498
    %v500 = vpop.f32.mrb[0].mxu0
    %v501 = vadd.f32 %v393, %v500
    %502 = vmatprep.mubr.f32.mxu0 %v117
    %503 = vmatmul.mubr.f32.gmra.mrb[0].mxu0 %v116
    %v504 = vpop.f32.mrb[0].mxu0
    %v505 = vadd.f32 %v389, %v504
    %v506 = vpop.f32.mrb[0].mxu0
    %v507 = vadd.f32 %v393, %v506
    %508 = vmatprep.mubr.f32.mxu0 %v119
    %509 = vmatmul.mubr.f32.gmra.mrb[0].mxu0 %v118
    %v510 = vpop.f32.mrb[0].mxu0
    %v511 = vadd.f32 %v389, %v510
    %v512 = vpop.f32.mrb[0].mxu0
    %v513 = vadd.f32 %v393, %v512
    %514 = vmatprep.mubr.f32.mxu0 %v121
    %515 = vmatmul.mubr.f32.gmra.mrb[0].mxu0 %v120
    %v516 = vpop.f32.mrb[0].mxu0
    %v517 = vadd.f32 %v389, %v516
    %v518 = vpop.f32.mrb[0].mxu0
    %v519 = vadd.f32 %v393, %v518
    %520 = vmatprep.mubr.f32.mxu0 %v123
    %521 = vmatmul.mubr.f32.gmra.mrb[0].mxu0 %v122
    %v522 = vpop.f32.mrb[0].mxu0
    %v523 = vadd.f32 %v389, %v522
    %v524 = vpop.f32.mrb[0].mxu0
    %v525 = vadd.f32 %v393, %v524
    %526 = vmatprep.mubr.f32.mxu0 %v125
    %527 = vmatmul.mubr.f32.gmra.mrb[0].mxu0 %v124
    %v528 = vpop.f32.mrb[0].mxu0
    %v529 = vadd.f32 %v389, %v528
    %v530 = vpop.f32.mrb[0].mxu0
    %v531 = vadd.f32 %v393, %v530
    %532 = vmatprep.mubr.f32.mxu0 %v127
    %533 = vmatmul.mubr.f32.gmra.mrb[0].mxu0 %v126
    %v534 = vpop.f32.mrb[0].mxu0
    %v535 = vadd.f32 %v389, %v534
    %v536 = vpop.f32.mrb[0].mxu0
    %v537 = vadd.f32 %v393, %v536
    %538 = vdwg.mxu0
    %539 = vmatprep.subr.mxu0 %v131
    %540 = vmatpush1.msra.mxu0 %v130
    %541 = vmatprep.subr.mxu0 %v139
    %542 = vmatpush1.msra.mxu0 %v138
    %543 = vmatprep.subr.mxu0 %v147
    %544 = vmatpush1.msra.mxu0 %v146
    %545 = vmatprep.subr.mxu0 %v155
    %546 = vmatpush1.msra.mxu0 %v154
    %547 = vmatprep.subr.mxu0 %v163
    %548 = vmatpush1.msra.mxu0 %v162
    %549 = vmatprep.subr.mxu0 %v171
    %550 = vmatpush1.msra.mxu0 %v170
    %551 = vmatprep.subr.mxu0 %v179
    %552 = vmatpush1.msra.mxu0 %v178
    %553 = vmatprep.subr.mxu0 %v187
    %554 = vmatpush1.msra.mxu0 %v186
    %555 = vmatprep.subr.mxu0 %v195
    %556 = vmatpush1.msra.mxu0 %v194
    %557 = vmatprep.subr.mxu0 %v203
    %558 = vmatpush1.msra.mxu0 %v202
    %559 = vmatprep.subr.mxu0 %v211
    %560 = vmatpush1.msra.mxu0 %v210
    %561 = vmatprep.subr.mxu0 %v219
    %562 = vmatpush1.msra.mxu0 %v218
    %563 = vmatprep.subr.mxu0 %v227
    %564 = vmatpush1.msra.mxu0 %v226
    %565 = vmatprep.subr.mxu0 %v235
    %566 = vmatpush1.msra.mxu0 %v234
    %567 = vmatprep.subr.mxu0 %v243
    %568 = vmatpush1.msra.mxu0 %v242
    %569 = vmatprep.subr.mxu0 %v251
    %570 = vmatpush1.msra.mxu0 %v250
    %571 = vmatprep.subr.mxu0 %v259
    %572 = vmatpush1.msra.mxu0 %v258
    %573 = vmatprep.subr.mxu0 %v267
    %574 = vmatpush1.msra.mxu0 %v266
    %575 = vmatprep.subr.mxu0 %v275
    %576 = vmatpush1.msra.mxu0 %v274
    %577 = vmatprep.subr.mxu0 %v283
    %578 = vmatpush1.msra.mxu0 %v282
    %579 = vmatprep.subr.mxu0 %v291
    %580 = vmatpush1.msra.mxu0 %v290
    %581 = vmatprep.subr.mxu0 %v299
    %582 = vmatpush1.msra.mxu0 %v298
    %583 = vmatprep.subr.mxu0 %v307
    %584 = vmatpush1.msra.mxu0 %v306
    %585 = vmatprep.subr.mxu0 %v315
    %586 = vmatpush1.msra.mxu0 %v314
    %587 = vmatprep.subr.mxu0 %v323
    %588 = vmatpush1.msra.mxu0 %v322
    %589 = vmatprep.subr.mxu0 %v331
    %590 = vmatpush1.msra.mxu0 %v330
    %591 = vmatprep.subr.mxu0 %v339
    %592 = vmatpush1.msra.mxu0 %v338
    %593 = vmatprep.subr.mxu0 %v347
    %594 = vmatpush1.msra.mxu0 %v346
    %595 = vmatprep.subr.mxu0 %v355
    %596 = vmatpush1.msra.mxu0 %v354
    %597 = vmatprep.subr.mxu0 %v363
    %598 = vmatpush1.msra.mxu0 %v362
    %599 = vmatprep.subr.mxu0 %v371
    %600 = vmatpush1.msra.mxu0 %v370
    %601 = vmatprep.subr.mxu0 %v379
    %602 = vmatpush1.msra.mxu0 %v378
    %603 = vmatprep.mubr.f32.mxu0 %v113
    %604 = vmatmul.mubr.f32.gmra.mrb[0].mxu0 %v112
    %v605 = vpop.f32.mrb[0].mxu0
    %v606 = vadd.f32 %v397, %v605
    %v607 = vpop.f32.mrb[0].mxu0
    %v608 = vadd.f32 %v401, %v607
    %609 = vmatprep.mubr.f32.mxu0 %v115
    %610 = vmatmul.mubr.f32.gmra.mrb[0].mxu0 %v114
    %v611 = vpop.f32.mrb[0].mxu0
    %v612 = vadd.f32 %v397, %v611
    %v613 = vpop.f32.mrb[0].mxu0
    %v614 = vadd.f32 %v401, %v613
    %615 = vmatprep.mubr.f32.mxu0 %v117
    %616 = vmatmul.mubr.f32.gmra.mrb[0].mxu0 %v116
    %v617 = vpop.f32.mrb[0].mxu0
    %v618 = vadd.f32 %v397, %v617
    %v619 = vpop.f32.mrb[0].mxu0
    %v620 = vadd.f32 %v401, %v619
    %621 = vmatprep.mubr.f32.mxu0 %v119
    %622 = vmatmul.mubr.f32.gmra.mrb[0].mxu0 %v118
    %v623 = vpop.f32.mrb[0].mxu0
    %v624 = vadd.f32 %v397, %v623
    %v625 = vpop.f32.mrb[0].mxu0
    %v626 = vadd.f32 %v401, %v625
    %627 = vmatprep.mubr.f32.mxu0 %v121
    %628 = vmatmul.mubr.f32.gmra.mrb[0].mxu0 %v120
    %v629 = vpop.f32.mrb[0].mxu0
    %v630 = vadd.f32 %v397, %v629
    %v631 = vpop.f32.mrb[0].mxu0
    %v632 = vadd.f32 %v401, %v631
    %633 = vmatprep.mubr.f32.mxu0 %v123
    %634 = vmatmul.mubr.f32.gmra.mrb[0].mxu0 %v122
    %v635 = vpop.f32.mrb[0].mxu0
    %v636 = vadd.f32 %v397, %v635
    %v637 = vpop.f32.mrb[0].mxu0
    %v638 = vadd.f32 %v401, %v637
    %639 = vmatprep.mubr.f32.mxu0 %v125
    %640 = vmatmul.mubr.f32.gmra.mrb[0].mxu0 %v124
    %v641 = vpop.f32.mrb[0].mxu0
    %v642 = vadd.f32 %v397, %v641
    %v643 = vpop.f32.mrb[0].mxu0
    %v644 = vadd.f32 %v401, %v643
    %645 = vmatprep.mubr.f32.mxu0 %v127
    %646 = vmatmul.mubr.f32.gmra.mrb[0].mxu0 %v126
    %v647 = vpop.f32.mrb[0].mxu0
    %v648 = vadd.f32 %v397, %v647
    %v649 = vpop.f32.mrb[0].mxu0
    %v650 = vadd.f32 %v401, %v649
    %651 = vdwg.mxu0
    %652 = vmatprep.subr.mxu0 %v133
    %653 = vmatpush1.msra.mxu0 %v132
    %654 = vmatprep.subr.mxu0 %v141
    %655 = vmatpush1.msra.mxu0 %v140
    %656 = vmatprep.subr.mxu0 %v149
    %657 = vmatpush1.msra.mxu0 %v148
    %658 = vmatprep.subr.mxu0 %v157
    %659 = vmatpush1.msra.mxu0 %v156
    %660 = vmatprep.subr.mxu0 %v165
    %661 = vmatpush1.msra.mxu0 %v164
    %662 = vmatprep.subr.mxu0 %v173
    %663 = vmatpush1.msra.mxu0 %v172
    %664 = vmatprep.subr.mxu0 %v181
    %665 = vmatpush1.msra.mxu0 %v180
    %666 = vmatprep.subr.mxu0 %v189
    %667 = vmatpush1.msra.mxu0 %v188
    %668 = vmatprep.subr.mxu0 %v197
    %669 = vmatpush1.msra.mxu0 %v196
    %670 = vmatprep.subr.mxu0 %v205
    %671 = vmatpush1.msra.mxu0 %v204
    %672 = vmatprep.subr.mxu0 %v213
    %673 = vmatpush1.msra.mxu0 %v212
    %674 = vmatprep.subr.mxu0 %v221
    %675 = vmatpush1.msra.mxu0 %v220
    %676 = vmatprep.subr.mxu0 %v229
    %677 = vmatpush1.msra.mxu0 %v228
    %678 = vmatprep.subr.mxu0 %v237
    %679 = vmatpush1.msra.mxu0 %v236
    %680 = vmatprep.subr.mxu0 %v245
    %681 = vmatpush1.msra.mxu0 %v244
    %682 = vmatprep.subr.mxu0 %v253
    %683 = vmatpush1.msra.mxu0 %v252
    %684 = vmatprep.subr.mxu0 %v261
    %685 = vmatpush1.msra.mxu0 %v260
    %686 = vmatprep.subr.mxu0 %v269
    %687 = vmatpush1.msra.mxu0 %v268
    %688 = vmatprep.subr.mxu0 %v277
    %689 = vmatpush1.msra.mxu0 %v276
    %690 = vmatprep.subr.mxu0 %v285
    %691 = vmatpush1.msra.mxu0 %v284
    %692 = vmatprep.subr.mxu0 %v293
    %693 = vmatpush1.msra.mxu0 %v292
    %694 = vmatprep.subr.mxu0 %v301
    %695 = vmatpush1.msra.mxu0 %v300
    %696 = vmatprep.subr.mxu0 %v309
    %697 = vmatpush1.msra.mxu0 %v308
    %698 = vmatprep.subr.mxu0 %v317
    %699 = vmatpush1.msra.mxu0 %v316
    %700 = vmatprep.subr.mxu0 %v325
    %701 = vmatpush1.msra.mxu0 %v324
    %702 = vmatprep.subr.mxu0 %v333
    %703 = vmatpush1.msra.mxu0 %v332
    %704 = vmatprep.subr.mxu0 %v341
    %705 = vmatpush1.msra.mxu0 %v340
    %706 = vmatprep.subr.mxu0 %v349
    %707 = vmatpush1.msra.mxu0 %v348
    %708 = vmatprep.subr.mxu0 %v357
    %709 = vmatpush1.msra.mxu0 %v356
    %710 = vmatprep.subr.mxu0 %v365
    %711 = vmatpush1.msra.mxu0 %v364
    %712 = vmatprep.subr.mxu0 %v373
    %713 = vmatpush1.msra.mxu0 %v372
    %714 = vmatprep.subr.mxu0 %v381
    %715 = vmatpush1.msra.mxu0 %v380
    %716 = vmatprep.mubr.f32.mxu0 %v113
    %717 = vmatmul.mubr.f32.gmra.mrb[0].mxu0 %v112
    %v718 = vpop.f32.mrb[0].mxu0
    %v719 = vadd.f32 %v405, %v718
    %v720 = vpop.f32.mrb[0].mxu0
    %v721 = vadd.f32 %v409, %v720
    %722 = vmatprep.mubr.f32.mxu0 %v115
    %723 = vmatmul.mubr.f32.gmra.mrb[0].mxu0 %v114
    %v724 = vpop.f32.mrb[0].mxu0
    %v725 = vadd.f32 %v405, %v724
    %v726 = vpop.f32.mrb[0].mxu0
    %v727 = vadd.f32 %v409, %v726
    %728 = vmatprep.mubr.f32.mxu0 %v117
    %729 = vmatmul.mubr.f32.gmra.mrb[0].mxu0 %v116
    %v730 = vpop.f32.mrb[0].mxu0
    %v731 = vadd.f32 %v405, %v730
    %v732 = vpop.f32.mrb[0].mxu0
    %v733 = vadd.f32 %v409, %v732
    %734 = vmatprep.mubr.f32.mxu0 %v119
    %735 = vmatmul.mubr.f32.gmra.mrb[0].mxu0 %v118
    %v736 = vpop.f32.mrb[0].mxu0
    %v737 = vadd.f32 %v405, %v736
    %v738 = vpop.f32.mrb[0].mxu0
    %v739 = vadd.f32 %v409, %v738
    %740 = vmatprep.mubr.f32.mxu0 %v121
    %741 = vmatmul.mubr.f32.gmra.mrb[0].mxu0 %v120
    %v742 = vpop.f32.mrb[0].mxu0
    %v743 = vadd.f32 %v405, %v742
    %v744 = vpop.f32.mrb[0].mxu0
    %v745 = vadd.f32 %v409, %v744
    %746 = vmatprep.mubr.f32.mxu0 %v123
    %747 = vmatmul.mubr.f32.gmra.mrb[0].mxu0 %v122
    %v748 = vpop.f32.mrb[0].mxu0
    %v749 = vadd.f32 %v405, %v748
    %v750 = vpop.f32.mrb[0].mxu0
    %v751 = vadd.f32 %v409, %v750
    %752 = vmatprep.mubr.f32.mxu0 %v125
    %753 = vmatmul.mubr.f32.gmra.mrb[0].mxu0 %v124
    %v754 = vpop.f32.mrb[0].mxu0
    %v755 = vadd.f32 %v405, %v754
    %v756 = vpop.f32.mrb[0].mxu0
    %v757 = vadd.f32 %v409, %v756
    %758 = vmatprep.mubr.f32.mxu0 %v127
    %759 = vmatmul.mubr.f32.gmra.mrb[0].mxu0 %v126
    %v760 = vpop.f32.mrb[0].mxu0
    %v761 = vadd.f32 %v405, %v760
    %v762 = vpop.f32.mrb[0].mxu0
    %v763 = vadd.f32 %v409, %v762
    %764 = vdwg.mxu0
    %765 = vmatprep.subr.mxu0 %v135
    %766 = vmatpush1.msra.mxu0 %v134
    %767 = vmatprep.subr.mxu0 %v143
    %768 = vmatpush1.msra.mxu0 %v142
    %769 = vmatprep.subr.mxu0 %v151
    %770 = vmatpush1.msra.mxu0 %v150
    %771 = vmatprep.subr.mxu0 %v159
    %772 = vmatpush1.msra.mxu0 %v158
    %773 = vmatprep.subr.mxu0 %v167
    %774 = vmatpush1.msra.mxu0 %v166
    %775 = vmatprep.subr.mxu0 %v175
    %776 = vmatpush1.msra.mxu0 %v174
    %777 = vmatprep.subr.mxu0 %v183
    %778 = vmatpush1.msra.mxu0 %v182
    %779 = vmatprep.subr.mxu0 %v191
    %780 = vmatpush1.msra.mxu0 %v190
    %781 = vmatprep.subr.mxu0 %v199
    %782 = vmatpush1.msra.mxu0 %v198
    %783 = vmatprep.subr.mxu0 %v207
    %784 = vmatpush1.msra.mxu0 %v206
    %785 = vmatprep.subr.mxu0 %v215
    %786 = vmatpush1.msra.mxu0 %v214
    %787 = vmatprep.subr.mxu0 %v223
    %788 = vmatpush1.msra.mxu0 %v222
    %789 = vmatprep.subr.mxu0 %v231
    %790 = vmatpush1.msra.mxu0 %v230
    %791 = vmatprep.subr.mxu0 %v239
    %792 = vmatpush1.msra.mxu0 %v238
    %793 = vmatprep.subr.mxu0 %v247
    %794 = vmatpush1.msra.mxu0 %v246
    %795 = vmatprep.subr.mxu0 %v255
    %796 = vmatpush1.msra.mxu0 %v254
    %797 = vmatprep.subr.mxu0 %v263
    %798 = vmatpush1.msra.mxu0 %v262
    %799 = vmatprep.subr.mxu0 %v271
    %800 = vmatpush1.msra.mxu0 %v270
    %801 = vmatprep.subr.mxu0 %v279
    %802 = vmatpush1.msra.mxu0 %v278
    %803 = vmatprep.subr.mxu0 %v287
    %804 = vmatpush1.msra.mxu0 %v286
    %805 = vmatprep.subr.mxu0 %v295
    %806 = vmatpush1.msra.mxu0 %v294
    %807 = vmatprep.subr.mxu0 %v303
    %808 = vmatpush1.msra.mxu0 %v302
    %809 = vmatprep.subr.mxu0 %v311
    %810 = vmatpush1.msra.mxu0 %v310
    %811 = vmatprep.subr.mxu0 %v319
    %812 = vmatpush1.msra.mxu0 %v318
    %813 = vmatprep.subr.mxu0 %v327
    %814 = vmatpush1.msra.mxu0 %v326
    %815 = vmatprep.subr.mxu0 %v335
    %816 = vmatpush1.msra.mxu0 %v334
    %817 = vmatprep.subr.mxu0 %v343
    %818 = vmatpush1.msra.mxu0 %v342
    %819 = vmatprep.subr.mxu0 %v351
    %820 = vmatpush1.msra.mxu0 %v350
    %821 = vmatprep.subr.mxu0 %v359
    %822 = vmatpush1.msra.mxu0 %v358
    %823 = vmatprep.subr.mxu0 %v367
    %824 = vmatpush1.msra.mxu0 %v366
    %825 = vmatprep.subr.mxu0 %v375
    %826 = vmatpush1.msra.mxu0 %v374
    %827 = vmatprep.subr.mxu0 %v383
    %828 = vmatpush1.msra.mxu0 %v382
    %829 = vmatprep.mubr.f32.mxu0 %v113
    %830 = vmatmul.mubr.f32.gmra.mrb[0].mxu0 %v112
    %v831 = vpop.f32.mrb[0].mxu0
    %v832 = vadd.f32 %v413, %v831
    %v833 = vpop.f32.mrb[0].mxu0
    %v834 = vadd.f32 %v417, %v833
    %835 = vmatprep.mubr.f32.mxu0 %v115
    %836 = vmatmul.mubr.f32.gmra.mrb[0].mxu0 %v114
    %v837 = vpop.f32.mrb[0].mxu0
    %v838 = vadd.f32 %v413, %v837
    %v839 = vpop.f32.mrb[0].mxu0
    %v840 = vadd.f32 %v417, %v839
    %841 = vmatprep.mubr.f32.mxu0 %v117
    %842 = vmatmul.mubr.f32.gmra.mrb[0].mxu0 %v116
    %v843 = vpop.f32.mrb[0].mxu0
    %v844 = vadd.f32 %v413, %v843
    %v845 = vpop.f32.mrb[0].mxu0
    %v846 = vadd.f32 %v417, %v845
    %847 = vmatprep.mubr.f32.mxu0 %v119
    %848 = vmatmul.mubr.f32.gmra.mrb[0].mxu0 %v118
    %v849 = vpop.f32.mrb[0].mxu0
    %v850 = vadd.f32 %v413, %v849
    %v851 = vpop.f32.mrb[0].mxu0
    %v852 = vadd.f32 %v417, %v851
    %853 = vmatprep.mubr.f32.mxu0 %v121
    %854 = vmatmul.mubr.f32.gmra.mrb[0].mxu0 %v120
    %v855 = vpop.f32.mrb[0].mxu0
    %v856 = vadd.f32 %v413, %v855
    %v857 = vpop.f32.mrb[0].mxu0
    %v858 = vadd.f32 %v417, %v857
    %859 = vmatprep.mubr.f32.mxu0 %v123
    %860 = vmatmul.mubr.f32.gmra.mrb[0].mxu0 %v122
    %v861 = vpop.f32.mrb[0].mxu0
    %v862 = vadd.f32 %v413, %v861
    %v863 = vpop.f32.mrb[0].mxu0
    %v864 = vadd.f32 %v417, %v863
    %865 = vmatprep.mubr.f32.mxu0 %v125
    %866 = vmatmul.mubr.f32.gmra.mrb[0].mxu0 %v124
    %v867 = vpop.f32.mrb[0].mxu0
    %v868 = vadd.f32 %v413, %v867
    %v869 = vpop.f32.mrb[0].mxu0
    %v870 = vadd.f32 %v417, %v869
    %871 = vmatprep.mubr.f32.mxu0 %v127
    %872 = vmatmul.mubr.f32.gmra.mrb[0].mxu0 %v126
    %v873 = vpop.f32.mrb[0].mxu0
    %v874 = vadd.f32 %v413, %v873
    %v875 = vpop.f32.mrb[0].mxu0
    %v876 = vadd.f32 %v417, %v875
    %877 = vdwg.mxu0
    %878 = vst [vmem:[#allocation2] sm:$0xff] %v493
    %879 = vst [vmem:[#allocation2 + $0x8] sm:$0xff] %v495
    %880 = vst [vmem:[#allocation2 + $0x10] sm:$0xff] %v606
    %881 = vst [vmem:[#allocation2 + $0x18] sm:$0xff] %v608
    %882 = vst [vmem:[#allocation2 + $0x20] sm:$0xff] %v499
    %883 = vst [vmem:[#allocation2 + $0x28] sm:$0xff] %v501
    %884 = vst [vmem:[#allocation2 + $0x30] sm:$0xff] %v612
    %885 = vst [vmem:[#allocation2 + $0x38] sm:$0xff] %v614
    %886 = vst [vmem:[#allocation2 + $0x40] sm:$0xff] %v505
    %887 = vst [vmem:[#allocation2 + $0x48] sm:$0xff] %v507
    %888 = vst [vmem:[#allocation2 + $0x50] sm:$0xff] %v618
    %889 = vst [vmem:[#allocation2 + $0x58] sm:$0xff] %v620
    %890 = vst [vmem:[#allocation2 + $0x60] sm:$0xff] %v511
    %891 = vst [vmem:[#allocation2 + $0x68] sm:$0xff] %v513
    %892 = vst [vmem:[#allocation2 + $0x70] sm:$0xff] %v624
    %893 = vst [vmem:[#allocation2 + $0x78] sm:$0xff] %v626
    %894 = vst [vmem:[#allocation2 + $0x80] sm:$0xff] %v517
    %895 = vst [vmem:[#allocation2 + $0x88] sm:$0xff] %v519
    %896 = vst [vmem:[#allocation2 + $0x90] sm:$0xff] %v630
    %897 = vst [vmem:[#allocation2 + $0x98] sm:$0xff] %v632
    %898 = vst [vmem:[#allocation2 + $0xa0] sm:$0xff] %v523
    %899 = vst [vmem:[#allocation2 + $0xa8] sm:$0xff] %v525
    %900 = vst [vmem:[#allocation2 + $0xb0] sm:$0xff] %v636
    %901 = vst [vmem:[#allocation2 + $0xb8] sm:$0xff] %v638
    %902 = vst [vmem:[#allocation2 + $0xc0] sm:$0xff] %v529
    %903 = vst [vmem:[#allocation2 + $0xc8] sm:$0xff] %v531
    %904 = vst [vmem:[#allocation2 + $0xd0] sm:$0xff] %v642
    %905 = vst [vmem:[#allocation2 + $0xd8] sm:$0xff] %v644
    %906 = vst [vmem:[#allocation2 + $0xe0] sm:$0xff] %v535
    %907 = vst [vmem:[#allocation2 + $0xe8] sm:$0xff] %v537
    %908 = vst [vmem:[#allocation2 + $0xf0] sm:$0xff] %v648
    %909 = vst [vmem:[#allocation2 + $0xf8] sm:$0xff] %v650
    %910 = vst [vmem:[#allocation3] sm:$0xff] %v719
    %911 = vst [vmem:[#allocation3 + $0x8] sm:$0xff] %v721
    %912 = vst [vmem:[#allocation3 + $0x10] sm:$0xff] %v832
    %913 = vst [vmem:[#allocation3 + $0x18] sm:$0xff] %v834
    %914 = vst [vmem:[#allocation3 + $0x20] sm:$0xff] %v725
    %915 = vst [vmem:[#allocation3 + $0x28] sm:$0xff] %v727
    %916 = vst [vmem:[#allocation3 + $0x30] sm:$0xff] %v838
    %917 = vst [vmem:[#allocation3 + $0x38] sm:$0xff] %v840
    %918 = vst [vmem:[#allocation3 + $0x40] sm:$0xff] %v731
    %919 = vst [vmem:[#allocation3 + $0x48] sm:$0xff] %v733
    %920 = vst [vmem:[#allocation3 + $0x50] sm:$0xff] %v844
    %921 = vst [vmem:[#allocation3 + $0x58] sm:$0xff] %v846
    %922 = vst [vmem:[#allocation3 + $0x60] sm:$0xff] %v737
    %923 = vst [vmem:[#allocation3 + $0x68] sm:$0xff] %v739
    %924 = vst [vmem:[#allocation3 + $0x70] sm:$0xff] %v850
    %925 = vst [vmem:[#allocation3 + $0x78] sm:$0xff] %v852
    %926 = vst [vmem:[#allocation3 + $0x80] sm:$0xff] %v743
    %927 = vst [vmem:[#allocation3 + $0x88] sm:$0xff] %v745
    %928 = vst [vmem:[#allocation3 + $0x90] sm:$0xff] %v856
    %929 = vst [vmem:[#allocation3 + $0x98] sm:$0xff] %v858
    %930 = vst [vmem:[#allocation3 + $0xa0] sm:$0xff] %v749
    %931 = vst [vmem:[#allocation3 + $0xa8] sm:$0xff] %v751
    %932 = vst [vmem:[#allocation3 + $0xb0] sm:$0xff] %v862
    %933 = vst [vmem:[#allocation3 + $0xb8] sm:$0xff] %v864
    %934 = vst [vmem:[#allocation3 + $0xc0] sm:$0xff] %v755
    %935 = vst [vmem:[#allocation3 + $0xc8] sm:$0xff] %v757
    %936 = vst [vmem:[#allocation3 + $0xd0] sm:$0xff] %v868
    %937 = vst [vmem:[#allocation3 + $0xd8] sm:$0xff] %v870
    %938 = vst [vmem:[#allocation3 + $0xe0] sm:$0xff] %v761
    %939 = vst [vmem:[#allocation3 + $0xe8] sm:$0xff] %v763
    %940 = vst [vmem:[#allocation3 + $0xf0] sm:$0xff] %v874
    %941 = vst [vmem:[#allocation3 + $0xf8] sm:$0xff] %v876
    %v942 = vld [vmem:[#allocation2] sm:$0xff]
    %v943 = vld [vmem:[#allocation2 + $0x8] sm:$0xff]
    %v944 = vld [vmem:[#allocation2 + $0x10] sm:$0xff]
    %v945 = vld [vmem:[#allocation2 + $0x18] sm:$0xff]
    %v946 = vld [vmem:[%s2] sm:$0xff]
    %v947 = vld [vmem:[%s2 + $0x8] sm:$0xff]
    %v948 = vld [vmem:[%s2 + $0x10] sm:$0xff]
    %v949 = vld [vmem:[%s2 + $0x18] sm:$0xff]
    %v950 = vld [vmem:[%s2 + $0x20] sm:$0xff]
    %v951 = vld [vmem:[%s2 + $0x28] sm:$0xff]
    %v952 = vld [vmem:[%s2 + $0x30] sm:$0xff]
    %v953 = vld [vmem:[%s2 + $0x38] sm:$0xff]
    %v954 = vld [vmem:[%s2 + $0x40] sm:$0xff]
    %v955 = vld [vmem:[%s2 + $0x48] sm:$0xff]
    %v956 = vld [vmem:[%s2 + $0x50] sm:$0xff]
    %v957 = vld [vmem:[%s2 + $0x58] sm:$0xff]
    %v958 = vld [vmem:[%s2 + $0x60] sm:$0xff]
    %v959 = vld [vmem:[%s2 + $0x68] sm:$0xff]
    %v960 = vld [vmem:[%s2 + $0x70] sm:$0xff]
    %v961 = vld [vmem:[%s2 + $0x78] sm:$0xff]
    %v962 = vld [vmem:[%s2 + $0x80] sm:$0xff]
    %v963 = vld [vmem:[%s2 + $0x88] sm:$0xff]
    %v964 = vld [vmem:[%s2 + $0x90] sm:$0xff]
    %v965 = vld [vmem:[%s2 + $0x98] sm:$0xff]
    %v966 = vld [vmem:[%s2 + $0xa0] sm:$0xff]
    %v967 = vld [vmem:[%s2 + $0xa8] sm:$0xff]
    %v968 = vld [vmem:[%s2 + $0xb0] sm:$0xff]
    %v969 = vld [vmem:[%s2 + $0xb8] sm:$0xff]
    %v970 = vld [vmem:[%s2 + $0xc0] sm:$0xff]
    %v971 = vld [vmem:[%s2 + $0xc8] sm:$0xff]
    %v972 = vld [vmem:[%s2 + $0xd0] sm:$0xff]
    %v973 = vld [vmem:[%s2 + $0xd8] sm:$0xff]
    %v974 = vld [vmem:[%s2 + $0xe0] sm:$0xff]
    %v975 = vld [vmem:[%s2 + $0xe8] sm:$0xff]
    %v976 = vld [vmem:[%s2 + $0xf0] sm:$0xff]
    %v977 = vld [vmem:[%s2 + $0xf8] sm:$0xff]
    %v978 = vld [vmem:[%s2 + $0x100] sm:$0xff]
    %v979 = vld [vmem:[%s2 + $0x108] sm:$0xff]
    %v980 = vld [vmem:[%s2 + $0x110] sm:$0xff]
    %v981 = vld [vmem:[%s2 + $0x118] sm:$0xff]
    %v982 = vld [vmem:[%s2 + $0x120] sm:$0xff]
    %v983 = vld [vmem:[%s2 + $0x128] sm:$0xff]
    %v984 = vld [vmem:[%s2 + $0x130] sm:$0xff]
    %v985 = vld [vmem:[%s2 + $0x138] sm:$0xff]
    %v986 = vld [vmem:[%s2 + $0x140] sm:$0xff]
    %v987 = vld [vmem:[%s2 + $0x148] sm:$0xff]
    %v988 = vld [vmem:[%s2 + $0x150] sm:$0xff]
    %v989 = vld [vmem:[%s2 + $0x158] sm:$0xff]
    %v990 = vld [vmem:[%s2 + $0x160] sm:$0xff]
    %v991 = vld [vmem:[%s2 + $0x168] sm:$0xff]
    %v992 = vld [vmem:[%s2 + $0x170] sm:$0xff]
    %v993 = vld [vmem:[%s2 + $0x178] sm:$0xff]
    %v994 = vld [vmem:[%s2 + $0x180] sm:$0xff]
    %v995 = vld [vmem:[%s2 + $0x188] sm:$0xff]
    %v996 = vld [vmem:[%s2 + $0x190] sm:$0xff]
    %v997 = vld [vmem:[%s2 + $0x198] sm:$0xff]
    %v998 = vld [vmem:[%s2 + $0x1a0] sm:$0xff]
    %v999 = vld [vmem:[%s2 + $0x1a8] sm:$0xff]
    %v1000 = vld [vmem:[%s2 + $0x1b0] sm:$0xff]
    %v1001 = vld [vmem:[%s2 + $0x1b8] sm:$0xff]
    %v1002 = vld [vmem:[%s2 + $0x1c0] sm:$0xff]
    %v1003 = vld [vmem:[%s2 + $0x1c8] sm:$0xff]
    %v1004 = vld [vmem:[%s2 + $0x1d0] sm:$0xff]
    %v1005 = vld [vmem:[%s2 + $0x1d8] sm:$0xff]
    %v1006 = vld [vmem:[%s2 + $0x1e0] sm:$0xff]
    %v1007 = vld [vmem:[%s2 + $0x1e8] sm:$0xff]
    %v1008 = vld [vmem:[%s2 + $0x1f0] sm:$0xff]
    %v1009 = vld [vmem:[%s2 + $0x1f8] sm:$0xff]
    %1010 = vmatprep.subr.mxu0 %v947
    %1011 = vmatpush1.msra.mxu0 %v946
    %1012 = vmatprep.subr.mxu0 %v951
    %1013 = vmatpush1.msra.mxu0 %v950
    %1014 = vmatprep.subr.mxu0 %v955
    %1015 = vmatpush1.msra.mxu0 %v954
    %1016 = vmatprep.subr.mxu0 %v959
    %1017 = vmatpush1.msra.mxu0 %v958
    %1018 = vmatprep.subr.mxu0 %v963
    %1019 = vmatpush1.msra.mxu0 %v962
    %1020 = vmatprep.subr.mxu0 %v967
    %1021 = vmatpush1.msra.mxu0 %v966
    %1022 = vmatprep.subr.mxu0 %v971
    %1023 = vmatpush1.msra.mxu0 %v970
    %1024 = vmatprep.subr.mxu0 %v975
    %1025 = vmatpush1.msra.mxu0 %v974
    %1026 = vmatprep.subr.mxu0 %v979
    %1027 = vmatpush1.msra.mxu0 %v978
    %1028 = vmatprep.subr.mxu0 %v983
    %1029 = vmatpush1.msra.mxu0 %v982
    %1030 = vmatprep.subr.mxu0 %v987
    %1031 = vmatpush1.msra.mxu0 %v986
    %1032 = vmatprep.subr.mxu0 %v991
    %1033 = vmatpush1.msra.mxu0 %v990
    %1034 = vmatprep.subr.mxu0 %v995
    %1035 = vmatpush1.msra.mxu0 %v994
    %1036 = vmatprep.subr.mxu0 %v999
    %1037 = vmatpush1.msra.mxu0 %v998
    %1038 = vmatprep.subr.mxu0 %v1003
    %1039 = vmatpush1.msra.mxu0 %v1002
    %1040 = vmatprep.subr.mxu0 %v1007
    %1041 = vmatpush1.msra.mxu0 %v1006
    %1042 = vmatprep.subr.mxu0 0.0
    %1043 = vmatpush1.msra.mxu0 0.0
    %1044 = vmatprep.subr.mxu0 0.0
    %1045 = vmatpush1.msra.mxu0 0.0
    %1046 = vmatprep.subr.mxu0 0.0
    %1047 = vmatpush1.msra.mxu0 0.0
    %1048 = vmatprep.subr.mxu0 0.0
    %1049 = vmatpush1.msra.mxu0 0.0
    %1050 = vmatprep.subr.mxu0 0.0
    %1051 = vmatpush1.msra.mxu0 0.0
    %1052 = vmatprep.subr.mxu0 0.0
    %1053 = vmatpush1.msra.mxu0 0.0
    %1054 = vmatprep.subr.mxu0 0.0
    %1055 = vmatpush1.msra.mxu0 0.0
    %1056 = vmatprep.subr.mxu0 0.0
    %1057 = vmatpush1.msra.mxu0 0.0
    %1058 = vmatprep.subr.mxu0 0.0
    %1059 = vmatpush1.msra.mxu0 0.0
    %1060 = vmatprep.subr.mxu0 0.0
    %1061 = vmatpush1.msra.mxu0 0.0
    %1062 = vmatprep.subr.mxu0 0.0
    %1063 = vmatpush1.msra.mxu0 0.0
    %1064 = vmatprep.subr.mxu0 0.0
    %1065 = vmatpush1.msra.mxu0 0.0
    %1066 = vmatprep.subr.mxu0 0.0
    %1067 = vmatpush1.msra.mxu0 0.0
    %1068 = vmatprep.subr.mxu0 0.0
    %1069 = vmatpush1.msra.mxu0 0.0
    %1070 = vmatprep.subr.mxu0 0.0
    %1071 = vmatpush1.msra.mxu0 0.0
    %1072 = vmatprep.subr.mxu0 0.0
    %1073 = vmatpush1.msra.mxu0 0.0
    %1074 = vmatprep.mubr.f32.mxu0 0.0
    %1075 = vmatmul.mubr.f32.gmra.mrb[0].mxu0 0.0
    %v1076 = vpop.f32.mrb[0].mxu0
    %v1077 = vadd.f32 0.0, %v1076
    %v1078 = vpop.f32.mrb[0].mxu0
    %v1079 = vadd.f32 0.0, %v1078
    %1080 = vdwg.mxu0
    %1081 = vmatprep.subr.mxu0 %v949
    %1082 = vmatpush1.msra.mxu0 %v948
    %1083 = vmatprep.subr.mxu0 %v953
    %1084 = vmatpush1.msra.mxu0 %v952
    %1085 = vmatprep.subr.mxu0 %v957
    %1086 = vmatpush1.msra.mxu0 %v956
    %1087 = vmatprep.subr.mxu0 %v961
    %1088 = vmatpush1.msra.mxu0 %v960
    %1089 = vmatprep.subr.mxu0 %v965
    %1090 = vmatpush1.msra.mxu0 %v964
    %1091 = vmatprep.subr.mxu0 %v969
    %1092 = vmatpush1.msra.mxu0 %v968
    %1093 = vmatprep.subr.mxu0 %v973
    %1094 = vmatpush1.msra.mxu0 %v972
    %1095 = vmatprep.subr.mxu0 %v977
    %1096 = vmatpush1.msra.mxu0 %v976
    %1097 = vmatprep.subr.mxu0 %v981
    %1098 = vmatpush1.msra.mxu0 %v980
    %1099 = vmatprep.subr.mxu0 %v985
    %1100 = vmatpush1.msra.mxu0 %v984
    %1101 = vmatprep.subr.mxu0 %v989
    %1102 = vmatpush1.msra.mxu0 %v988
    %1103 = vmatprep.subr.mxu0 %v993
    %1104 = vmatpush1.msra.mxu0 %v992
    %1105 = vmatprep.subr.mxu0 %v997
    %1106 = vmatpush1.msra.mxu0 %v996
    %1107 = vmatprep.subr.mxu0 %v1001
    %1108 = vmatpush1.msra.mxu0 %v1000
    %1109 = vmatprep.subr.mxu0 %v1005
    %1110 = vmatpush1.msra.mxu0 %v1004
    %1111 = vmatprep.subr.mxu0 %v1009
    %1112 = vmatpush1.msra.mxu0 %v1008
    %1113 = vmatprep.subr.mxu0 0.0
    %1114 = vmatpush1.msra.mxu0 0.0
    %1115 = vmatprep.subr.mxu0 0.0
    %1116 = vmatpush1.msra.mxu0 0.0
    %1117 = vmatprep.subr.mxu0 0.0
    %1118 = vmatpush1.msra.mxu0 0.0
    %1119 = vmatprep.subr.mxu0 0.0
    %1120 = vmatpush1.msra.mxu0 0.0
    %1121 = vmatprep.subr.mxu0 0.0
    %1122 = vmatpush1.msra.mxu0 0.0
    %1123 = vmatprep.subr.mxu0 0.0
    %1124 = vmatpush1.msra.mxu0 0.0
    %1125 = vmatprep.subr.mxu0 0.0
    %1126 = vmatpush1.msra.mxu0 0.0
    %1127 = vmatprep.subr.mxu0 0.0
    %1128 = vmatpush1.msra.mxu0 0.0
    %1129 = vmatprep.subr.mxu0 0.0
    %1130 = vmatpush1.msra.mxu0 0.0
    %1131 = vmatprep.subr.mxu0 0.0
    %1132 = vmatpush1.msra.mxu0 0.0
    %1133 = vmatprep.subr.mxu0 0.0
    %1134 = vmatpush1.msra.mxu0 0.0
    %1135 = vmatprep.subr.mxu0 0.0
    %1136 = vmatpush1.msra.mxu0 0.0
    %1137 = vmatprep.subr.mxu0 0.0
    %1138 = vmatpush1.msra.mxu0 0.0
    %1139 = vmatprep.subr.mxu0 0.0
    %1140 = vmatpush1.msra.mxu0 0.0
    %1141 = vmatprep.subr.mxu0 0.0
    %1142 = vmatpush1.msra.mxu0 0.0
    %1143 = vmatprep.subr.mxu0 0.0
    %1144 = vmatpush1.msra.mxu0 0.0
    %1145 = vmatprep.mubr.f32.mxu0 0.0
    %1146 = vmatmul.mubr.f32.gmra.mrb[0].mxu0 0.0
    %v1147 = vpop.f32.mrb[0].mxu0
    %v1148 = vadd.f32 0.0, %v1147
    %v1149 = vpop.f32.mrb[0].mxu0
    %v1150 = vadd.f32 0.0, %v1149
    %1151 = vdwg.mxu0
    %v1152 = vadd.f32 %v942, %v1077
    %v1153 = vadd.f32 %v943, %v1079
    %v1154 = vadd.f32 %v944, %v1148
    %v1155 = vadd.f32 %v945, %v1150
    %v1156 = vxor.u32 %v1152, 2147483648
    %v1157 = vmul.f32 %v1156, 1.442695
    %v1158 = vpow.pop %v1157
    %v1159 = vadd.f32 %v1158, 1.0
    %v1160 = vrcp.pop %v1159
    %v1161 = vmul.f32 1.0, %v1160
    %v1162 = vxor.u32 %v1153, 2147483648
    %v1163 = vmul.f32 %v1162, 1.442695
    %v1164 = vpow.pop %v1163
    %v1165 = vadd.f32 %v1164, 1.0
    %v1166 = vrcp.pop %v1165
    %v1167 = vmul.f32 1.0, %v1166
    %v1168 = vtanh.pop %v1154
    %v1169 = vxor.u32 %v1155, 2147483648
    %v1170 = vmul.f32 %v1169, 1.442695
    %v1171 = vpow.pop %v1170
    %v1172 = vadd.f32 %v1171, 1.0
    %v1173 = vrcp.pop %v1172
    %v1174 = vmul.f32 1.0, %v1173
    %v1175 = vmul.f32 %v1167, 0.0
    %v1176 = vmul.f32 %v1161, %v1168
    %v1177 = vadd.f32 %v1175, %v1176
    %v1178 = vtanh.pop %v1177
    %v1179 = vmul.f32 %v1174, %v1178
    %1180 = vst [vmem:[#allocation4] sm:$0xff] %v1179
    %s1181 = scalar_lea.vmem [#allocation2], 32
    %v1182 = vld [vmem:[%s1181] sm:$0xff]
    %v1183 = vld [vmem:[%s1181 + $0x8] sm:$0xff]
    %v1184 = vld [vmem:[%s1181 + $0x10] sm:$0xff]
    %v1185 = vld [vmem:[%s1181 + $0x18] sm:$0xff]
    %v1186 = vld [vmem:[%s2] sm:$0xff]
    %v1187 = vld [vmem:[%s2 + $0x8] sm:$0xff]
    %v1188 = vld [vmem:[%s2 + $0x10] sm:$0xff]
    %v1189 = vld [vmem:[%s2 + $0x18] sm:$0xff]
    %v1190 = vld [vmem:[%s2 + $0x20] sm:$0xff]
    %v1191 = vld [vmem:[%s2 + $0x28] sm:$0xff]
    %v1192 = vld [vmem:[%s2 + $0x30] sm:$0xff]
    %v1193 = vld [vmem:[%s2 + $0x38] sm:$0xff]
    %v1194 = vld [vmem:[%s2 + $0x40] sm:$0xff]
    %v1195 = vld [vmem:[%s2 + $0x48] sm:$0xff]
    %v1196 = vld [vmem:[%s2 + $0x50] sm:$0xff]
    %v1197 = vld [vmem:[%s2 + $0x58] sm:$0xff]
    %v1198 = vld [vmem:[%s2 + $0x60] sm:$0xff]
    %v1199 = vld [vmem:[%s2 + $0x68] sm:$0xff]
    %v1200 = vld [vmem:[%s2 + $0x70] sm:$0xff]
    %v1201 = vld [vmem:[%s2 + $0x78] sm:$0xff]
    %v1202 = vld [vmem:[%s2 + $0x80] sm:$0xff]
    %v1203 = vld [vmem:[%s2 + $0x88] sm:$0xff]
    %v1204 = vld [vmem:[%s2 + $0x90] sm:$0xff]
    %v1205 = vld [vmem:[%s2 + $0x98] sm:$0xff]
    %v1206 = vld [vmem:[%s2 + $0xa0] sm:$0xff]
    %v1207 = vld [vmem:[%s2 + $0xa8] sm:$0xff]
    %v1208 = vld [vmem:[%s2 + $0xb0] sm:$0xff]
    %v1209 = vld [vmem:[%s2 + $0xb8] sm:$0xff]
    %v1210 = vld [vmem:[%s2 + $0xc0] sm:$0xff]
    %v1211 = vld [vmem:[%s2 + $0xc8] sm:$0xff]
    %v1212 = vld [vmem:[%s2 + $0xd0] sm:$0xff]
    %v1213 = vld [vmem:[%s2 + $0xd8] sm:$0xff]
    %v1214 = vld [vmem:[%s2 + $0xe0] sm:$0xff]
    %v1215 = vld [vmem:[%s2 + $0xe8] sm:$0xff]
    %v1216 = vld [vmem:[%s2 + $0xf0] sm:$0xff]
    %v1217 = vld [vmem:[%s2 + $0xf8] sm:$0xff]
    %v1218 = vld [vmem:[%s2 + $0x100] sm:$0xff]
    %v1219 = vld [vmem:[%s2 + $0x108] sm:$0xff]
    %v1220 = vld [vmem:[%s2 + $0x110] sm:$0xff]
    %v1221 = vld [vmem:[%s2 + $0x118] sm:$0xff]
    %v1222 = vld [vmem:[%s2 + $0x120] sm:$0xff]
    %v1223 = vld [vmem:[%s2 + $0x128] sm:$0xff]
    %v1224 = vld [vmem:[%s2 + $0x130] sm:$0xff]
    %v1225 = vld [vmem:[%s2 + $0x138] sm:$0xff]
    %v1226 = vld [vmem:[%s2 + $0x140] sm:$0xff]
    %v1227 = vld [vmem:[%s2 + $0x148] sm:$0xff]
    %v1228 = vld [vmem:[%s2 + $0x150] sm:$0xff]
    %v1229 = vld [vmem:[%s2 + $0x158] sm:$0xff]
    %v1230 = vld [vmem:[%s2 + $0x160] sm:$0xff]
    %v1231 = vld [vmem:[%s2 + $0x168] sm:$0xff]
    %v1232 = vld [vmem:[%s2 + $0x170] sm:$0xff]
    %v1233 = vld [vmem:[%s2 + $0x178] sm:$0xff]
    %v1234 = vld [vmem:[%s2 + $0x180] sm:$0xff]
    %v1235 = vld [vmem:[%s2 + $0x188] sm:$0xff]
    %v1236 = vld [vmem:[%s2 + $0x190] sm:$0xff]
    %v1237 = vld [vmem:[%s2 + $0x198] sm:$0xff]
    %v1238 = vld [vmem:[%s2 + $0x1a0] sm:$0xff]
    %v1239 = vld [vmem:[%s2 + $0x1a8] sm:$0xff]
    %v1240 = vld [vmem:[%s2 + $0x1b0] sm:$0xff]
    %v1241 = vld [vmem:[%s2 + $0x1b8] sm:$0xff]
    %v1242 = vld [vmem:[%s2 + $0x1c0] sm:$0xff]
    %v1243 = vld [vmem:[%s2 + $0x1c8] sm:$0xff]
    %v1244 = vld [vmem:[%s2 + $0x1d0] sm:$0xff]
    %v1245 = vld [vmem:[%s2 + $0x1d8] sm:$0xff]
    %v1246 = vld [vmem:[%s2 + $0x1e0] sm:$0xff]
    %v1247 = vld [vmem:[%s2 + $0x1e8] sm:$0xff]
    %v1248 = vld [vmem:[%s2 + $0x1f0] sm:$0xff]
    %v1249 = vld [vmem:[%s2 + $0x1f8] sm:$0xff]
    %1250 = vmatprep.subr.mxu0 %v1187
    %1251 = vmatpush1.msra.mxu0 %v1186
    %1252 = vmatprep.subr.mxu0 %v1191
    %1253 = vmatpush1.msra.mxu0 %v1190
    %1254 = vmatprep.subr.mxu0 %v1195
    %1255 = vmatpush1.msra.mxu0 %v1194
    %1256 = vmatprep.subr.mxu0 %v1199
    %1257 = vmatpush1.msra.mxu0 %v1198
    %1258 = vmatprep.subr.mxu0 %v1203
    %1259 = vmatpush1.msra.mxu0 %v1202
    %1260 = vmatprep.subr.mxu0 %v1207
    %1261 = vmatpush1.msra.mxu0 %v1206
    %1262 = vmatprep.subr.mxu0 %v1211
    %1263 = vmatpush1.msra.mxu0 %v1210
    %1264 = vmatprep.subr.mxu0 %v1215
    %1265 = vmatpush1.msra.mxu0 %v1214
    %1266 = vmatprep.subr.mxu0 %v1219
    %1267 = vmatpush1.msra.mxu0 %v1218
    %1268 = vmatprep.subr.mxu0 %v1223
    %1269 = vmatpush1.msra.mxu0 %v1222
    %1270 = vmatprep.subr.mxu0 %v1227
    %1271 = vmatpush1.msra.mxu0 %v1226
    %1272 = vmatprep.subr.mxu0 %v1231
    %1273 = vmatpush1.msra.mxu0 %v1230
    %1274 = vmatprep.subr.mxu0 %v1235
    %1275 = vmatpush1.msra.mxu0 %v1234
    %1276 = vmatprep.subr.mxu0 %v1239
    %1277 = vmatpush1.msra.mxu0 %v1238
    %1278 = vmatprep.subr.mxu0 %v1243
    %1279 = vmatpush1.msra.mxu0 %v1242
    %1280 = vmatprep.subr.mxu0 %v1247
    %1281 = vmatpush1.msra.mxu0 %v1246
    %1282 = vmatprep.subr.mxu0 0.0
    %1283 = vmatpush1.msra.mxu0 0.0
    %1284 = vmatprep.subr.mxu0 0.0
    %1285 = vmatpush1.msra.mxu0 0.0
    %1286 = vmatprep.subr.mxu0 0.0
    %1287 = vmatpush1.msra.mxu0 0.0
    %1288 = vmatprep.subr.mxu0 0.0
    %1289 = vmatpush1.msra.mxu0 0.0
    %1290 = vmatprep.subr.mxu0 0.0
    %1291 = vmatpush1.msra.mxu0 0.0
    %1292 = vmatprep.subr.mxu0 0.0
    %1293 = vmatpush1.msra.mxu0 0.0
    %1294 = vmatprep.subr.mxu0 0.0
    %1295 = vmatpush1.msra.mxu0 0.0
    %1296 = vmatprep.subr.mxu0 0.0
    %1297 = vmatpush1.msra.mxu0 0.0
    %1298 = vmatprep.subr.mxu0 0.0
    %1299 = vmatpush1.msra.mxu0 0.0
    %1300 = vmatprep.subr.mxu0 0.0
    %1301 = vmatpush1.msra.mxu0 0.0
    %1302 = vmatprep.subr.mxu0 0.0
    %1303 = vmatpush1.msra.mxu0 0.0
    %1304 = vmatprep.subr.mxu0 0.0
    %1305 = vmatpush1.msra.mxu0 0.0
    %1306 = vmatprep.subr.mxu0 0.0
    %1307 = vmatpush1.msra.mxu0 0.0
    %1308 = vmatprep.subr.mxu0 0.0
    %1309 = vmatpush1.msra.mxu0 0.0
    %1310 = vmatprep.subr.mxu0 0.0
    %1311 = vmatpush1.msra.mxu0 0.0
    %1312 = vmatprep.subr.mxu0 0.0
    %1313 = vmatpush1.msra.mxu0 0.0
    %1314 = vmatprep.mubr.f32.mxu0 0.0
    %1315 = vmatmul.mubr.f32.gmra.mrb[0].mxu0 %v1179
    %v1316 = vpop.f32.mrb[0].mxu0
    %v1317 = vadd.f32 0.0, %v1316
    %v1318 = vpop.f32.mrb[0].mxu0
    %v1319 = vadd.f32 0.0, %v1318
    %1320 = vdwg.mxu0
    %1321 = vmatprep.subr.mxu0 %v1189
    %1322 = vmatpush1.msra.mxu0 %v1188
    %1323 = vmatprep.subr.mxu0 %v1193
    %1324 = vmatpush1.msra.mxu0 %v1192
    %1325 = vmatprep.subr.mxu0 %v1197
    %1326 = vmatpush1.msra.mxu0 %v1196
    %1327 = vmatprep.subr.mxu0 %v1201
    %1328 = vmatpush1.msra.mxu0 %v1200
    %1329 = vmatprep.subr.mxu0 %v1205
    %1330 = vmatpush1.msra.mxu0 %v1204
    %1331 = vmatprep.subr.mxu0 %v1209
    %1332 = vmatpush1.msra.mxu0 %v1208
    %1333 = vmatprep.subr.mxu0 %v1213
    %1334 = vmatpush1.msra.mxu0 %v1212
    %1335 = vmatprep.subr.mxu0 %v1217
    %1336 = vmatpush1.msra.mxu0 %v1216
    %1337 = vmatprep.subr.mxu0 %v1221
    %1338 = vmatpush1.msra.mxu0 %v1220
    %1339 = vmatprep.subr.mxu0 %v1225
    %1340 = vmatpush1.msra.mxu0 %v1224
    %1341 = vmatprep.subr.mxu0 %v1229
    %1342 = vmatpush1.msra.mxu0 %v1228
    %1343 = vmatprep.subr.mxu0 %v1233
    %1344 = vmatpush1.msra.mxu0 %v1232
    %1345 = vmatprep.subr.mxu0 %v1237
    %1346 = vmatpush1.msra.mxu0 %v1236
    %1347 = vmatprep.subr.mxu0 %v1241
    %1348 = vmatpush1.msra.mxu0 %v1240
    %1349 = vmatprep.subr.mxu0 %v1245
    %1350 = vmatpush1.msra.mxu0 %v1244
    %1351 = vmatprep.subr.mxu0 %v1249
    %1352 = vmatpush1.msra.mxu0 %v1248
    %1353 = vmatprep.subr.mxu0 0.0
    %1354 = vmatpush1.msra.mxu0 0.0
    %1355 = vmatprep.subr.mxu0 0.0
    %1356 = vmatpush1.msra.mxu0 0.0
    %1357 = vmatprep.subr.mxu0 0.0
    %1358 = vmatpush1.msra.mxu0 0.0
    %1359 = vmatprep.subr.mxu0 0.0
    %1360 = vmatpush1.msra.mxu0 0.0
    %1361 = vmatprep.subr.mxu0 0.0
    %1362 = vmatpush1.msra.mxu0 0.0
    %1363 = vmatprep.subr.mxu0 0.0
    %1364 = vmatpush1.msra.mxu0 0.0
    %1365 = vmatprep.subr.mxu0 0.0
    %1366 = vmatpush1.msra.mxu0 0.0
    %1367 = vmatprep.subr.mxu0 0.0
    %1368 = vmatpush1.msra.mxu0 0.0
    %1369 = vmatprep.subr.mxu0 0.0
    %1370 = vmatpush1.msra.mxu0 0.0
    %1371 = vmatprep.subr.mxu0 0.0
    %1372 = vmatpush1.msra.mxu0 0.0
    %1373 = vmatprep.subr.mxu0 0.0
    %1374 = vmatpush1.msra.mxu0 0.0
    %1375 = vmatprep.subr.mxu0 0.0
    %1376 = vmatpush1.msra.mxu0 0.0
    %1377 = vmatprep.subr.mxu0 0.0
    %1378 = vmatpush1.msra.mxu0 0.0
    %1379 = vmatprep.subr.mxu0 0.0
    %1380 = vmatpush1.msra.mxu0 0.0
    %1381 = vmatprep.subr.mxu0 0.0
    %1382 = vmatpush1.msra.mxu0 0.0
    %1383 = vmatprep.subr.mxu0 0.0
    %1384 = vmatpush1.msra.mxu0 0.0
    %1385 = vmatprep.mubr.f32.mxu0 0.0
    %1386 = vmatmul.mubr.f32.gmra.mrb[0].mxu0 %v1179
    %v1387 = vpop.f32.mrb[0].mxu0
    %v1388 = vadd.f32 0.0, %v1387
    %v1389 = vpop.f32.mrb[0].mxu0
    %v1390 = vadd.f32 0.0, %v1389
    %1391 = vdwg.mxu0
    %v1392 = vadd.f32 %v1182, %v1317
    %v1393 = vadd.f32 %v1183, %v1319
    %v1394 = vadd.f32 %v1184, %v1388
    %v1395 = vadd.f32 %v1185, %v1390
    %v1396 = vxor.u32 %v1392, 2147483648
    %v1397 = vmul.f32 %v1396, 1.442695
    %v1398 = vpow.pop %v1397
    %v1399 = vadd.f32 %v1398, 1.0
    %v1400 = vrcp.pop %v1399
    %v1401 = vmul.f32 1.0, %v1400
    %v1402 = vxor.u32 %v1393, 2147483648
    %v1403 = vmul.f32 %v1402, 1.442695
    %v1404 = vpow.pop %v1403
    %v1405 = vadd.f32 %v1404, 1.0
    %v1406 = vrcp.pop %v1405
    %v1407 = vmul.f32 1.0, %v1406
    %v1408 = vtanh.pop %v1394
    %v1409 = vxor.u32 %v1395, 2147483648
    %v1410 = vmul.f32 %v1409, 1.442695
    %v1411 = vpow.pop %v1410
    %v1412 = vadd.f32 %v1411, 1.0
    %v1413 = vrcp.pop %v1412
    %v1414 = vmul.f32 1.0, %v1413
    %v1415 = vmul.f32 %v1407, %v1177
    %v1416 = vmul.f32 %v1401, %v1408
    %v1417 = vadd.f32 %v1415, %v1416
    %v1418 = vtanh.pop %v1417
    %v1419 = vmul.f32 %v1414, %v1418
    %s1420 = scalar_lea.vmem [#allocation4], 8
    %1421 = vst [vmem:[%s1420] sm:$0xff] %v1419
    %s1422 = scalar_lea.vmem [#allocation2], 64
    %v1423 = vld [vmem:[%s1422] sm:$0xff]
    %v1424 = vld [vmem:[%s1422 + $0x8] sm:$0xff]
    %v1425 = vld [vmem:[%s1422 + $0x10] sm:$0xff]
    %v1426 = vld [vmem:[%s1422 + $0x18] sm:$0xff]
    %v1427 = vld [vmem:[%s2] sm:$0xff]
    %v1428 = vld [vmem:[%s2 + $0x8] sm:$0xff]
    %v1429 = vld [vmem:[%s2 + $0x10] sm:$0xff]
    %v1430 = vld [vmem:[%s2 + $0x18] sm:$0xff]
    %v1431 = vld [vmem:[%s2 + $0x20] sm:$0xff]
    %v1432 = vld [vmem:[%s2 + $0x28] sm:$0xff]
    %v1433 = vld [vmem:[%s2 + $0x30] sm:$0xff]
    %v1434 = vld [vmem:[%s2 + $0x38] sm:$0xff]
    %v1435 = vld [vmem:[%s2 + $0x40] sm:$0xff]
    %v1436 = vld [vmem:[%s2 + $0x48] sm:$0xff]
    %v1437 = vld [vmem:[%s2 + $0x50] sm:$0xff]
    %v1438 = vld [vmem:[%s2 + $0x58] sm:$0xff]
    %v1439 = vld [vmem:[%s2 + $0x60] sm:$0xff]
    %v1440 = vld [vmem:[%s2 + $0x68] sm:$0xff]
    %v1441 = vld [vmem:[%s2 + $0x70] sm:$0xff]
    %v1442 = vld [vmem:[%s2 + $0x78] sm:$0xff]
    %v1443 = vld [vmem:[%s2 + $0x80] sm:$0xff]
    %v1444 = vld [vmem:[%s2 + $0x88] sm:$0xff]
    %v1445 = vld [vmem:[%s2 + $0x90] sm:$0xff]
    %v1446 = vld [vmem:[%s2 + $0x98] sm:$0xff]
    %v1447 = vld [vmem:[%s2 + $0xa0] sm:$0xff]
    %v1448 = vld [vmem:[%s2 + $0xa8] sm:$0xff]
    %v1449 = vld [vmem:[%s2 + $0xb0] sm:$0xff]
    %v1450 = vld [vmem:[%s2 + $0xb8] sm:$0xff]
    %v1451 = vld [vmem:[%s2 + $0xc0] sm:$0xff]
    %v1452 = vld [vmem:[%s2 + $0xc8] sm:$0xff]
    %v1453 = vld [vmem:[%s2 + $0xd0] sm:$0xff]
    %v1454 = vld [vmem:[%s2 + $0xd8] sm:$0xff]
    %v1455 = vld [vmem:[%s2 + $0xe0] sm:$0xff]
    %v1456 = vld [vmem:[%s2 + $0xe8] sm:$0xff]
    %v1457 = vld [vmem:[%s2 + $0xf0] sm:$0xff]
    %v1458 = vld [vmem:[%s2 + $0xf8] sm:$0xff]
    %v1459 = vld [vmem:[%s2 + $0x100] sm:$0xff]
    %v1460 = vld [vmem:[%s2 + $0x108] sm:$0xff]
    %v1461 = vld [vmem:[%s2 + $0x110] sm:$0xff]
    %v1462 = vld [vmem:[%s2 + $0x118] sm:$0xff]
    %v1463 = vld [vmem:[%s2 + $0x120] sm:$0xff]
    %v1464 = vld [vmem:[%s2 + $0x128] sm:$0xff]
    %v1465 = vld [vmem:[%s2 + $0x130] sm:$0xff]
    %v1466 = vld [vmem:[%s2 + $0x138] sm:$0xff]
    %v1467 = vld [vmem:[%s2 + $0x140] sm:$0xff]
    %v1468 = vld [vmem:[%s2 + $0x148] sm:$0xff]
    %v1469 = vld [vmem:[%s2 + $0x150] sm:$0xff]
    %v1470 = vld [vmem:[%s2 + $0x158] sm:$0xff]
    %v1471 = vld [vmem:[%s2 + $0x160] sm:$0xff]
    %v1472 = vld [vmem:[%s2 + $0x168] sm:$0xff]
    %v1473 = vld [vmem:[%s2 + $0x170] sm:$0xff]
    %v1474 = vld [vmem:[%s2 + $0x178] sm:$0xff]
    %v1475 = vld [vmem:[%s2 + $0x180] sm:$0xff]
    %v1476 = vld [vmem:[%s2 + $0x188] sm:$0xff]
    %v1477 = vld [vmem:[%s2 + $0x190] sm:$0xff]
    %v1478 = vld [vmem:[%s2 + $0x198] sm:$0xff]
    %v1479 = vld [vmem:[%s2 + $0x1a0] sm:$0xff]
    %v1480 = vld [vmem:[%s2 + $0x1a8] sm:$0xff]
    %v1481 = vld [vmem:[%s2 + $0x1b0] sm:$0xff]
    %v1482 = vld [vmem:[%s2 + $0x1b8] sm:$0xff]
    %v1483 = vld [vmem:[%s2 + $0x1c0] sm:$0xff]
    %v1484 = vld [vmem:[%s2 + $0x1c8] sm:$0xff]
    %v1485 = vld [vmem:[%s2 + $0x1d0] sm:$0xff]
    %v1486 = vld [vmem:[%s2 + $0x1d8] sm:$0xff]
    %v1487 = vld [vmem:[%s2 + $0x1e0] sm:$0xff]
    %v1488 = vld [vmem:[%s2 + $0x1e8] sm:$0xff]
    %v1489 = vld [vmem:[%s2 + $0x1f0] sm:$0xff]
    %v1490 = vld [vmem:[%s2 + $0x1f8] sm:$0xff]
    %1491 = vmatprep.subr.mxu0 %v1428
    %1492 = vmatpush1.msra.mxu0 %v1427
    %1493 = vmatprep.subr.mxu0 %v1432
    %1494 = vmatpush1.msra.mxu0 %v1431
    %1495 = vmatprep.subr.mxu0 %v1436
    %1496 = vmatpush1.msra.mxu0 %v1435
    %1497 = vmatprep.subr.mxu0 %v1440
    %1498 = vmatpush1.msra.mxu0 %v1439
    %1499 = vmatprep.subr.mxu0 %v1444
    %1500 = vmatpush1.msra.mxu0 %v1443
    %1501 = vmatprep.subr.mxu0 %v1448
    %1502 = vmatpush1.msra.mxu0 %v1447
    %1503 = vmatprep.subr.mxu0 %v1452
    %1504 = vmatpush1.msra.mxu0 %v1451
    %1505 = vmatprep.subr.mxu0 %v1456
    %1506 = vmatpush1.msra.mxu0 %v1455
    %1507 = vmatprep.subr.mxu0 %v1460
    %1508 = vmatpush1.msra.mxu0 %v1459
    %1509 = vmatprep.subr.mxu0 %v1464
    %1510 = vmatpush1.msra.mxu0 %v1463
    %1511 = vmatprep.subr.mxu0 %v1468
    %1512 = vmatpush1.msra.mxu0 %v1467
    %1513 = vmatprep.subr.mxu0 %v1472
    %1514 = vmatpush1.msra.mxu0 %v1471
    %1515 = vmatprep.subr.mxu0 %v1476
    %1516 = vmatpush1.msra.mxu0 %v1475
    %1517 = vmatprep.subr.mxu0 %v1480
    %1518 = vmatpush1.msra.mxu0 %v1479
    %1519 = vmatprep.subr.mxu0 %v1484
    %1520 = vmatpush1.msra.mxu0 %v1483
    %1521 = vmatprep.subr.mxu0 %v1488
    %1522 = vmatpush1.msra.mxu0 %v1487
    %1523 = vmatprep.subr.mxu0 0.0
    %1524 = vmatpush1.msra.mxu0 0.0
    %1525 = vmatprep.subr.mxu0 0.0
    %1526 = vmatpush1.msra.mxu0 0.0
    %1527 = vmatprep.subr.mxu0 0.0
    %1528 = vmatpush1.msra.mxu0 0.0
    %1529 = vmatprep.subr.mxu0 0.0
    %1530 = vmatpush1.msra.mxu0 0.0
    %1531 = vmatprep.subr.mxu0 0.0
    %1532 = vmatpush1.msra.mxu0 0.0
    %1533 = vmatprep.subr.mxu0 0.0
    %1534 = vmatpush1.msra.mxu0 0.0
    %1535 = vmatprep.subr.mxu0 0.0
    %1536 = vmatpush1.msra.mxu0 0.0
    %1537 = vmatprep.subr.mxu0 0.0
    %1538 = vmatpush1.msra.mxu0 0.0
    %1539 = vmatprep.subr.mxu0 0.0
    %1540 = vmatpush1.msra.mxu0 0.0
    %1541 = vmatprep.subr.mxu0 0.0
    %1542 = vmatpush1.msra.mxu0 0.0
    %1543 = vmatprep.subr.mxu0 0.0
    %1544 = vmatpush1.msra.mxu0 0.0
    %1545 = vmatprep.subr.mxu0 0.0
    %1546 = vmatpush1.msra.mxu0 0.0
    %1547 = vmatprep.subr.mxu0 0.0
    %1548 = vmatpush1.msra.mxu0 0.0
    %1549 = vmatprep.subr.mxu0 0.0
    %1550 = vmatpush1.msra.mxu0 0.0
    %1551 = vmatprep.subr.mxu0 0.0
    %1552 = vmatpush1.msra.mxu0 0.0
    %1553 = vmatprep.subr.mxu0 0.0
    %1554 = vmatpush1.msra.mxu0 0.0
    %1555 = vmatprep.mubr.f32.mxu0 0.0
    %1556 = vmatmul.mubr.f32.gmra.mrb[0].mxu0 %v1419
    %v1557 = vpop.f32.mrb[0].mxu0
    %v1558 = vadd.f32 0.0, %v1557
    %v1559 = vpop.f32.mrb[0].mxu0
    %v1560 = vadd.f32 0.0, %v1559
    %1561 = vdwg.mxu0
    %1562 = vmatprep.subr.mxu0 %v1430
    %1563 = vmatpush1.msra.mxu0 %v1429
    %1564 = vmatprep.subr.mxu0 %v1434
    %1565 = vmatpush1.msra.mxu0 %v1433
    %1566 = vmatprep.subr.mxu0 %v1438
    %1567 = vmatpush1.msra.mxu0 %v1437
    %1568 = vmatprep.subr.mxu0 %v1442
    %1569 = vmatpush1.msra.mxu0 %v1441
    %1570 = vmatprep.subr.mxu0 %v1446
    %1571 = vmatpush1.msra.mxu0 %v1445
    %1572 = vmatprep.subr.mxu0 %v1450
    %1573 = vmatpush1.msra.mxu0 %v1449
    %1574 = vmatprep.subr.mxu0 %v1454
    %1575 = vmatpush1.msra.mxu0 %v1453
    %1576 = vmatprep.subr.mxu0 %v1458
    %1577 = vmatpush1.msra.mxu0 %v1457
    %1578 = vmatprep.subr.mxu0 %v1462
    %1579 = vmatpush1.msra.mxu0 %v1461
    %1580 = vmatprep.subr.mxu0 %v1466
    %1581 = vmatpush1.msra.mxu0 %v1465
    %1582 = vmatprep.subr.mxu0 %v1470
    %1583 = vmatpush1.msra.mxu0 %v1469
    %1584 = vmatprep.subr.mxu0 %v1474
    %1585 = vmatpush1.msra.mxu0 %v1473
    %1586 = vmatprep.subr.mxu0 %v1478
    %1587 = vmatpush1.msra.mxu0 %v1477
    %1588 = vmatprep.subr.mxu0 %v1482
    %1589 = vmatpush1.msra.mxu0 %v1481
    %1590 = vmatprep.subr.mxu0 %v1486
    %1591 = vmatpush1.msra.mxu0 %v1485
    %1592 = vmatprep.subr.mxu0 %v1490
    %1593 = vmatpush1.msra.mxu0 %v1489
    %1594 = vmatprep.subr.mxu0 0.0
    %1595 = vmatpush1.msra.mxu0 0.0
    %1596 = vmatprep.subr.mxu0 0.0
    %1597 = vmatpush1.msra.mxu0 0.0
    %1598 = vmatprep.subr.mxu0 0.0
    %1599 = vmatpush1.msra.mxu0 0.0
    %1600 = vmatprep.subr.mxu0 0.0
    %1601 = vmatpush1.msra.mxu0 0.0
    %1602 = vmatprep.subr.mxu0 0.0
    %1603 = vmatpush1.msra.mxu0 0.0
    %1604 = vmatprep.subr.mxu0 0.0
    %1605 = vmatpush1.msra.mxu0 0.0
    %1606 = vmatprep.subr.mxu0 0.0
    %1607 = vmatpush1.msra.mxu0 0.0
    %1608 = vmatprep.subr.mxu0 0.0
    %1609 = vmatpush1.msra.mxu0 0.0
    %1610 = vmatprep.subr.mxu0 0.0
    %1611 = vmatpush1.msra.mxu0 0.0
    %1612 = vmatprep.subr.mxu0 0.0
    %1613 = vmatpush1.msra.mxu0 0.0
    %1614 = vmatprep.subr.mxu0 0.0
    %1615 = vmatpush1.msra.mxu0 0.0
    %1616 = vmatprep.subr.mxu0 0.0
    %1617 = vmatpush1.msra.mxu0 0.0
    %1618 = vmatprep.subr.mxu0 0.0
    %1619 = vmatpush1.msra.mxu0 0.0
    %1620 = vmatprep.subr.mxu0 0.0
    %1621 = vmatpush1.msra.mxu0 0.0
    %1622 = vmatprep.subr.mxu0 0.0
    %1623 = vmatpush1.msra.mxu0 0.0
    %1624 = vmatprep.subr.mxu0 0.0
    %1625 = vmatpush1.msra.mxu0 0.0
    %1626 = vmatprep.mubr.f32.mxu0 0.0
    %1627 = vmatmul.mubr.f32.gmra.mrb[0].mxu0 %v1419
    %v1628 = vpop.f32.mrb[0].mxu0
    %v1629 = vadd.f32 0.0, %v1628
    %v1630 = vpop.f32.mrb[0].mxu0
    %v1631 = vadd.f32 0.0, %v1630
    %1632 = vdwg.mxu0
    %v1633 = vadd.f32 %v1423, %v1558
    %v1634 = vadd.f32 %v1424, %v1560
    %v1635 = vadd.f32 %v1425, %v1629
    %v1636 = vadd.f32 %v1426, %v1631
    %v1637 = vxor.u32 %v1633, 2147483648
    %v1638 = vmul.f32 %v1637, 1.442695
    %v1639 = vpow.pop %v1638
    %v1640 = vadd.f32 %v1639, 1.0
    %v1641 = vrcp.pop %v1640
    %v1642 = vmul.f32 1.0, %v1641
    %v1643 = vxor.u32 %v1634, 2147483648
    %v1644 = vmul.f32 %v1643, 1.442695
    %v1645 = vpow.pop %v1644
    %v1646 = vadd.f32 %v1645, 1.0
    %v1647 = vrcp.pop %v1646
    %v1648 = vmul.f32 1.0, %v1647
    %v1649 = vtanh.pop %v1635
    %v1650 = vxor.u32 %v1636, 2147483648
    %v1651 = vmul.f32 %v1650, 1.442695
    %v1652 = vpow.pop %v1651
    %v1653 = vadd.f32 %v1652, 1.0
    %v1654 = vrcp.pop %v1653
    %v1655 = vmul.f32 1.0, %v1654
    %v1656 = vmul.f32 %v1648, %v1417
    %v1657 = vmul.f32 %v1642, %v1649
    %v1658 = vadd.f32 %v1656, %v1657
    %v1659 = vtanh.pop %v1658
    %v1660 = vmul.f32 %v1655, %v1659
    %s1661 = scalar_lea.vmem [#allocation4], 16
    %1662 = vst [vmem:[%s1661] sm:$0xff] %v1660
    %s1663 = scalar_lea.vmem [#allocation2], 96
    %v1664 = vld [vmem:[%s1663] sm:$0xff]
    %v1665 = vld [vmem:[%s1663 + $0x8] sm:$0xff]
    %v1666 = vld [vmem:[%s1663 + $0x10] sm:$0xff]
    %v1667 = vld [vmem:[%s1663 + $0x18] sm:$0xff]
    %v1668 = vld [vmem:[%s2] sm:$0xff]
    %v1669 = vld [vmem:[%s2 + $0x8] sm:$0xff]
    %v1670 = vld [vmem:[%s2 + $0x10] sm:$0xff]
    %v1671 = vld [vmem:[%s2 + $0x18] sm:$0xff]
    %v1672 = vld [vmem:[%s2 + $0x20] sm:$0xff]
    %v1673 = vld [vmem:[%s2 + $0x28] sm:$0xff]
    %v1674 = vld [vmem:[%s2 + $0x30] sm:$0xff]
    %v1675 = vld [vmem:[%s2 + $0x38] sm:$0xff]
    %v1676 = vld [vmem:[%s2 + $0x40] sm:$0xff]
    %v1677 = vld [vmem:[%s2 + $0x48] sm:$0xff]
    %v1678 = vld [vmem:[%s2 + $0x50] sm:$0xff]
    %v1679 = vld [vmem:[%s2 + $0x58] sm:$0xff]
    %v1680 = vld [vmem:[%s2 + $0x60] sm:$0xff]
    %v1681 = vld [vmem:[%s2 + $0x68] sm:$0xff]
    %v1682 = vld [vmem:[%s2 + $0x70] sm:$0xff]
    %v1683 = vld [vmem:[%s2 + $0x78] sm:$0xff]
    %v1684 = vld [vmem:[%s2 + $0x80] sm:$0xff]
    %v1685 = vld [vmem:[%s2 + $0x88] sm:$0xff]
    %v1686 = vld [vmem:[%s2 + $0x90] sm:$0xff]
    %v1687 = vld [vmem:[%s2 + $0x98] sm:$0xff]
    %v1688 = vld [vmem:[%s2 + $0xa0] sm:$0xff]
    %v1689 = vld [vmem:[%s2 + $0xa8] sm:$0xff]
    %v1690 = vld [vmem:[%s2 + $0xb0] sm:$0xff]
    %v1691 = vld [vmem:[%s2 + $0xb8] sm:$0xff]
    %v1692 = vld [vmem:[%s2 + $0xc0] sm:$0xff]
    %v1693 = vld [vmem:[%s2 + $0xc8] sm:$0xff]
    %v1694 = vld [vmem:[%s2 + $0xd0] sm:$0xff]
    %v1695 = vld [vmem:[%s2 + $0xd8] sm:$0xff]
    %v1696 = vld [vmem:[%s2 + $0xe0] sm:$0xff]
    %v1697 = vld [vmem:[%s2 + $0xe8] sm:$0xff]
    %v1698 = vld [vmem:[%s2 + $0xf0] sm:$0xff]
    %v1699 = vld [vmem:[%s2 + $0xf8] sm:$0xff]
    %v1700 = vld [vmem:[%s2 + $0x100] sm:$0xff]
    %v1701 = vld [vmem:[%s2 + $0x108] sm:$0xff]
    %v1702 = vld [vmem:[%s2 + $0x110] sm:$0xff]
    %v1703 = vld [vmem:[%s2 + $0x118] sm:$0xff]
    %v1704 = vld [vmem:[%s2 + $0x120] sm:$0xff]
    %v1705 = vld [vmem:[%s2 + $0x128] sm:$0xff]
    %v1706 = vld [vmem:[%s2 + $0x130] sm:$0xff]
    %v1707 = vld [vmem:[%s2 + $0x138] sm:$0xff]
    %v1708 = vld [vmem:[%s2 + $0x140] sm:$0xff]
    %v1709 = vld [vmem:[%s2 + $0x148] sm:$0xff]
    %v1710 = vld [vmem:[%s2 + $0x150] sm:$0xff]
    %v1711 = vld [vmem:[%s2 + $0x158] sm:$0xff]
    %v1712 = vld [vmem:[%s2 + $0x160] sm:$0xff]
    %v1713 = vld [vmem:[%s2 + $0x168] sm:$0xff]
    %v1714 = vld [vmem:[%s2 + $0x170] sm:$0xff]
    %v1715 = vld [vmem:[%s2 + $0x178] sm:$0xff]
    %v1716 = vld [vmem:[%s2 + $0x180] sm:$0xff]
    %v1717 = vld [vmem:[%s2 + $0x188] sm:$0xff]
    %v1718 = vld [vmem:[%s2 + $0x190] sm:$0xff]
    %v1719 = vld [vmem:[%s2 + $0x198] sm:$0xff]
    %v1720 = vld [vmem:[%s2 + $0x1a0] sm:$0xff]
    %v1721 = vld [vmem:[%s2 + $0x1a8] sm:$0xff]
    %v1722 = vld [vmem:[%s2 + $0x1b0] sm:$0xff]
    %v1723 = vld [vmem:[%s2 + $0x1b8] sm:$0xff]
    %v1724 = vld [vmem:[%s2 + $0x1c0] sm:$0xff]
    %v1725 = vld [vmem:[%s2 + $0x1c8] sm:$0xff]
    %v1726 = vld [vmem:[%s2 + $0x1d0] sm:$0xff]
    %v1727 = vld [vmem:[%s2 + $0x1d8] sm:$0xff]
    %v1728 = vld [vmem:[%s2 + $0x1e0] sm:$0xff]
    %v1729 = vld [vmem:[%s2 + $0x1e8] sm:$0xff]
    %v1730 = vld [vmem:[%s2 + $0x1f0] sm:$0xff]
    %v1731 = vld [vmem:[%s2 + $0x1f8] sm:$0xff]
    %1732 = vmatprep.subr.mxu0 %v1669
    %1733 = vmatpush1.msra.mxu0 %v1668
    %1734 = vmatprep.subr.mxu0 %v1673
    %1735 = vmatpush1.msra.mxu0 %v1672
    %1736 = vmatprep.subr.mxu0 %v1677
    %1737 = vmatpush1.msra.mxu0 %v1676
    %1738 = vmatprep.subr.mxu0 %v1681
    %1739 = vmatpush1.msra.mxu0 %v1680
    %1740 = vmatprep.subr.mxu0 %v1685
    %1741 = vmatpush1.msra.mxu0 %v1684
    %1742 = vmatprep.subr.mxu0 %v1689
    %1743 = vmatpush1.msra.mxu0 %v1688
    %1744 = vmatprep.subr.mxu0 %v1693
    %1745 = vmatpush1.msra.mxu0 %v1692
    %1746 = vmatprep.subr.mxu0 %v1697
    %1747 = vmatpush1.msra.mxu0 %v1696
    %1748 = vmatprep.subr.mxu0 %v1701
    %1749 = vmatpush1.msra.mxu0 %v1700
    %1750 = vmatprep.subr.mxu0 %v1705
    %1751 = vmatpush1.msra.mxu0 %v1704
    %1752 = vmatprep.subr.mxu0 %v1709
    %1753 = vmatpush1.msra.mxu0 %v1708
    %1754 = vmatprep.subr.mxu0 %v1713
    %1755 = vmatpush1.msra.mxu0 %v1712
    %1756 = vmatprep.subr.mxu0 %v1717
    %1757 = vmatpush1.msra.mxu0 %v1716
    %1758 = vmatprep.subr.mxu0 %v1721
    %1759 = vmatpush1.msra.mxu0 %v1720
    %1760 = vmatprep.subr.mxu0 %v1725
    %1761 = vmatpush1.msra.mxu0 %v1724
    %1762 = vmatprep.subr.mxu0 %v1729
    %1763 = vmatpush1.msra.mxu0 %v1728
    %1764 = vmatprep.subr.mxu0 0.0
    %1765 = vmatpush1.msra.mxu0 0.0
    %1766 = vmatprep.subr.mxu0 0.0
    %1767 = vmatpush1.msra.mxu0 0.0
    %1768 = vmatprep.subr.mxu0 0.0
    %1769 = vmatpush1.msra.mxu0 0.0
    %1770 = vmatprep.subr.mxu0 0.0
    %1771 = vmatpush1.msra.mxu0 0.0
    %1772 = vmatprep.subr.mxu0 0.0
    %1773 = vmatpush1.msra.mxu0 0.0
    %1774 = vmatprep.subr.mxu0 0.0
    %1775 = vmatpush1.msra.mxu0 0.0
    %1776 = vmatprep.subr.mxu0 0.0
    %1777 = vmatpush1.msra.mxu0 0.0
    %1778 = vmatprep.subr.mxu0 0.0
    %1779 = vmatpush1.msra.mxu0 0.0
    %1780 = vmatprep.subr.mxu0 0.0
    %1781 = vmatpush1.msra.mxu0 0.0
    %1782 = vmatprep.subr.mxu0 0.0
    %1783 = vmatpush1.msra.mxu0 0.0
    %1784 = vmatprep.subr.mxu0 0.0
    %1785 = vmatpush1.msra.mxu0 0.0
    %1786 = vmatprep.subr.mxu0 0.0
    %1787 = vmatpush1.msra.mxu0 0.0
    %1788 = vmatprep.subr.mxu0 0.0
    %1789 = vmatpush1.msra.mxu0 0.0
    %1790 = vmatprep.subr.mxu0 0.0
    %1791 = vmatpush1.msra.mxu0 0.0
    %1792 = vmatprep.subr.mxu0 0.0
    %1793 = vmatpush1.msra.mxu0 0.0
    %1794 = vmatprep.subr.mxu0 0.0
    %1795 = vmatpush1.msra.mxu0 0.0
    %1796 = vmatprep.mubr.f32.mxu0 0.0
    %1797 = vmatmul.mubr.f32.gmra.mrb[0].mxu0 %v1660
    %v1798 = vpop.f32.mrb[0].mxu0
    %v1799 = vadd.f32 0.0, %v1798
    %v1800 = vpop.f32.mrb[0].mxu0
    %v1801 = vadd.f32 0.0, %v1800
    %1802 = vdwg.mxu0
    %1803 = vmatprep.subr.mxu0 %v1671
    %1804 = vmatpush1.msra.mxu0 %v1670
    %1805 = vmatprep.subr.mxu0 %v1675
    %1806 = vmatpush1.msra.mxu0 %v1674
    %1807 = vmatprep.subr.mxu0 %v1679
    %1808 = vmatpush1.msra.mxu0 %v1678
    %1809 = vmatprep.subr.mxu0 %v1683
    %1810 = vmatpush1.msra.mxu0 %v1682
    %1811 = vmatprep.subr.mxu0 %v1687
    %1812 = vmatpush1.msra.mxu0 %v1686
    %1813 = vmatprep.subr.mxu0 %v1691
    %1814 = vmatpush1.msra.mxu0 %v1690
    %1815 = vmatprep.subr.mxu0 %v1695
    %1816 = vmatpush1.msra.mxu0 %v1694
    %1817 = vmatprep.subr.mxu0 %v1699
    %1818 = vmatpush1.msra.mxu0 %v1698
    %1819 = vmatprep.subr.mxu0 %v1703
    %1820 = vmatpush1.msra.mxu0 %v1702
    %1821 = vmatprep.subr.mxu0 %v1707
    %1822 = vmatpush1.msra.mxu0 %v1706
    %1823 = vmatprep.subr.mxu0 %v1711
    %1824 = vmatpush1.msra.mxu0 %v1710
    %1825 = vmatprep.subr.mxu0 %v1715
    %1826 = vmatpush1.msra.mxu0 %v1714
    %1827 = vmatprep.subr.mxu0 %v1719
    %1828 = vmatpush1.msra.mxu0 %v1718
    %1829 = vmatprep.subr.mxu0 %v1723
    %1830 = vmatpush1.msra.mxu0 %v1722
    %1831 = vmatprep.subr.mxu0 %v1727
    %1832 = vmatpush1.msra.mxu0 %v1726
    %1833 = vmatprep.subr.mxu0 %v1731
    %1834 = vmatpush1.msra.mxu0 %v1730
    %1835 = vmatprep.subr.mxu0 0.0
    %1836 = vmatpush1.msra.mxu0 0.0
    %1837 = vmatprep.subr.mxu0 0.0
    %1838 = vmatpush1.msra.mxu0 0.0
    %1839 = vmatprep.subr.mxu0 0.0
    %1840 = vmatpush1.msra.mxu0 0.0
    %1841 = vmatprep.subr.mxu0 0.0
    %1842 = vmatpush1.msra.mxu0 0.0
    %1843 = vmatprep.subr.mxu0 0.0
    %1844 = vmatpush1.msra.mxu0 0.0
    %1845 = vmatprep.subr.mxu0 0.0
    %1846 = vmatpush1.msra.mxu0 0.0
    %1847 = vmatprep.subr.mxu0 0.0
    %1848 = vmatpush1.msra.mxu0 0.0
    %1849 = vmatprep.subr.mxu0 0.0
    %1850 = vmatpush1.msra.mxu0 0.0
    %1851 = vmatprep.subr.mxu0 0.0
    %1852 = vmatpush1.msra.mxu0 0.0
    %1853 = vmatprep.subr.mxu0 0.0
    %1854 = vmatpush1.msra.mxu0 0.0
    %1855 = vmatprep.subr.mxu0 0.0
    %1856 = vmatpush1.msra.mxu0 0.0
    %1857 = vmatprep.subr.mxu0 0.0
    %1858 = vmatpush1.msra.mxu0 0.0
    %1859 = vmatprep.subr.mxu0 0.0
    %1860 = vmatpush1.msra.mxu0 0.0
    %1861 = vmatprep.subr.mxu0 0.0
    %1862 = vmatpush1.msra.mxu0 0.0
    %1863 = vmatprep.subr.mxu0 0.0
    %1864 = vmatpush1.msra.mxu0 0.0
    %1865 = vmatprep.subr.mxu0 0.0
    %1866 = vmatpush1.msra.mxu0 0.0
    %1867 = vmatprep.mubr.f32.mxu0 0.0
    %1868 = vmatmul.mubr.f32.gmra.mrb[0].mxu0 %v1660
    %v1869 = vpop.f32.mrb[0].mxu0
    %v1870 = vadd.f32 0.0, %v1869
    %v1871 = vpop.f32.mrb[0].mxu0
    %v1872 = vadd.f32 0.0, %v1871
    %1873 = vdwg.mxu0
    %v1874 = vadd.f32 %v1664, %v1799
    %v1875 = vadd.f32 %v1665, %v1801
    %v1876 = vadd.f32 %v1666, %v1870
    %v1877 = vadd.f32 %v1667, %v1872
    %v1878 = vxor.u32 %v1874, 2147483648
    %v1879 = vmul.f32 %v1878, 1.442695
    %v1880 = vpow.pop %v1879
    %v1881 = vadd.f32 %v1880, 1.0
    %v1882 = vrcp.pop %v1881
    %v1883 = vmul.f32 1.0, %v1882
    %v1884 = vxor.u32 %v1875, 2147483648
    %v1885 = vmul.f32 %v1884, 1.442695
    %v1886 = vpow.pop %v1885
    %v1887 = vadd.f32 %v1886, 1.0
    %v1888 = vrcp.pop %v1887
    %v1889 = vmul.f32 1.0, %v1888
    %v1890 = vtanh.pop %v1876
    %v1891 = vxor.u32 %v1877, 2147483648
    %v1892 = vmul.f32 %v1891, 1.442695
    %v1893 = vpow.pop %v1892
    %v1894 = vadd.f32 %v1893, 1.0
    %v1895 = vrcp.pop %v1894
    %v1896 = vmul.f32 1.0, %v1895
    %v1897 = vmul.f32 %v1889, %v1658
    %v1898 = vmul.f32 %v1883, %v1890
    %v1899 = vadd.f32 %v1897, %v1898
    %v1900 = vtanh.pop %v1899
    %v1901 = vmul.f32 %v1896, %v1900
    %s1902 = scalar_lea.vmem [#allocation4], 24
    %1903 = vst [vmem:[%s1902] sm:$0xff] %v1901
    %s1904 = scalar_lea.vmem [#allocation2], 128
    %v1905 = vld [vmem:[%s1904] sm:$0xff]
    %v1906 = vld [vmem:[%s1904 + $0x8] sm:$0xff]
    %v1907 = vld [vmem:[%s1904 + $0x10] sm:$0xff]
    %v1908 = vld [vmem:[%s1904 + $0x18] sm:$0xff]
    %v1909 = vld [vmem:[%s2] sm:$0xff]
    %v1910 = vld [vmem:[%s2 + $0x8] sm:$0xff]
    %v1911 = vld [vmem:[%s2 + $0x10] sm:$0xff]
    %v1912 = vld [vmem:[%s2 + $0x18] sm:$0xff]
    %v1913 = vld [vmem:[%s2 + $0x20] sm:$0xff]
    %v1914 = vld [vmem:[%s2 + $0x28] sm:$0xff]
    %v1915 = vld [vmem:[%s2 + $0x30] sm:$0xff]
    %v1916 = vld [vmem:[%s2 + $0x38] sm:$0xff]
    %v1917 = vld [vmem:[%s2 + $0x40] sm:$0xff]
    %v1918 = vld [vmem:[%s2 + $0x48] sm:$0xff]
    %v1919 = vld [vmem:[%s2 + $0x50] sm:$0xff]
    %v1920 = vld [vmem:[%s2 + $0x58] sm:$0xff]
    %v1921 = vld [vmem:[%s2 + $0x60] sm:$0xff]
    %v1922 = vld [vmem:[%s2 + $0x68] sm:$0xff]
    %v1923 = vld [vmem:[%s2 + $0x70] sm:$0xff]
    %v1924 = vld [vmem:[%s2 + $0x78] sm:$0xff]
    %v1925 = vld [vmem:[%s2 + $0x80] sm:$0xff]
    %v1926 = vld [vmem:[%s2 + $0x88] sm:$0xff]
    %v1927 = vld [vmem:[%s2 + $0x90] sm:$0xff]
    %v1928 = vld [vmem:[%s2 + $0x98] sm:$0xff]
    %v1929 = vld [vmem:[%s2 + $0xa0] sm:$0xff]
    %v1930 = vld [vmem:[%s2 + $0xa8] sm:$0xff]
    %v1931 = vld [vmem:[%s2 + $0xb0] sm:$0xff]
    %v1932 = vld [vmem:[%s2 + $0xb8] sm:$0xff]
    %v1933 = vld [vmem:[%s2 + $0xc0] sm:$0xff]
    %v1934 = vld [vmem:[%s2 + $0xc8] sm:$0xff]
    %v1935 = vld [vmem:[%s2 + $0xd0] sm:$0xff]
    %v1936 = vld [vmem:[%s2 + $0xd8] sm:$0xff]
    %v1937 = vld [vmem:[%s2 + $0xe0] sm:$0xff]
    %v1938 = vld [vmem:[%s2 + $0xe8] sm:$0xff]
    %v1939 = vld [vmem:[%s2 + $0xf0] sm:$0xff]
    %v1940 = vld [vmem:[%s2 + $0xf8] sm:$0xff]
    %v1941 = vld [vmem:[%s2 + $0x100] sm:$0xff]
    %v1942 = vld [vmem:[%s2 + $0x108] sm:$0xff]
    %v1943 = vld [vmem:[%s2 + $0x110] sm:$0xff]
    %v1944 = vld [vmem:[%s2 + $0x118] sm:$0xff]
    %v1945 = vld [vmem:[%s2 + $0x120] sm:$0xff]
    %v1946 = vld [vmem:[%s2 + $0x128] sm:$0xff]
    %v1947 = vld [vmem:[%s2 + $0x130] sm:$0xff]
    %v1948 = vld [vmem:[%s2 + $0x138] sm:$0xff]
    %v1949 = vld [vmem:[%s2 + $0x140] sm:$0xff]
    %v1950 = vld [vmem:[%s2 + $0x148] sm:$0xff]
    %v1951 = vld [vmem:[%s2 + $0x150] sm:$0xff]
    %v1952 = vld [vmem:[%s2 + $0x158] sm:$0xff]
    %v1953 = vld [vmem:[%s2 + $0x160] sm:$0xff]
    %v1954 = vld [vmem:[%s2 + $0x168] sm:$0xff]
    %v1955 = vld [vmem:[%s2 + $0x170] sm:$0xff]
    %v1956 = vld [vmem:[%s2 + $0x178] sm:$0xff]
    %v1957 = vld [vmem:[%s2 + $0x180] sm:$0xff]
    %v1958 = vld [vmem:[%s2 + $0x188] sm:$0xff]
    %v1959 = vld [vmem:[%s2 + $0x190] sm:$0xff]
    %v1960 = vld [vmem:[%s2 + $0x198] sm:$0xff]
    %v1961 = vld [vmem:[%s2 + $0x1a0] sm:$0xff]
    %v1962 = vld [vmem:[%s2 + $0x1a8] sm:$0xff]
    %v1963 = vld [vmem:[%s2 + $0x1b0] sm:$0xff]
    %v1964 = vld [vmem:[%s2 + $0x1b8] sm:$0xff]
    %v1965 = vld [vmem:[%s2 + $0x1c0] sm:$0xff]
    %v1966 = vld [vmem:[%s2 + $0x1c8] sm:$0xff]
    %v1967 = vld [vmem:[%s2 + $0x1d0] sm:$0xff]
    %v1968 = vld [vmem:[%s2 + $0x1d8] sm:$0xff]
    %v1969 = vld [vmem:[%s2 + $0x1e0] sm:$0xff]
    %v1970 = vld [vmem:[%s2 + $0x1e8] sm:$0xff]
    %v1971 = vld [vmem:[%s2 + $0x1f0] sm:$0xff]
    %v1972 = vld [vmem:[%s2 + $0x1f8] sm:$0xff]
    %1973 = vmatprep.subr.mxu0 %v1910
    %1974 = vmatpush1.msra.mxu0 %v1909
    %1975 = vmatprep.subr.mxu0 %v1914
    %1976 = vmatpush1.msra.mxu0 %v1913
    %1977 = vmatprep.subr.mxu0 %v1918
    %1978 = vmatpush1.msra.mxu0 %v1917
    %1979 = vmatprep.subr.mxu0 %v1922
    %1980 = vmatpush1.msra.mxu0 %v1921
    %1981 = vmatprep.subr.mxu0 %v1926
    %1982 = vmatpush1.msra.mxu0 %v1925
    %1983 = vmatprep.subr.mxu0 %v1930
    %1984 = vmatpush1.msra.mxu0 %v1929
    %1985 = vmatprep.subr.mxu0 %v1934
    %1986 = vmatpush1.msra.mxu0 %v1933
    %1987 = vmatprep.subr.mxu0 %v1938
    %1988 = vmatpush1.msra.mxu0 %v1937
    %1989 = vmatprep.subr.mxu0 %v1942
    %1990 = vmatpush1.msra.mxu0 %v1941
    %1991 = vmatprep.subr.mxu0 %v1946
    %1992 = vmatpush1.msra.mxu0 %v1945
    %1993 = vmatprep.subr.mxu0 %v1950
    %1994 = vmatpush1.msra.mxu0 %v1949
    %1995 = vmatprep.subr.mxu0 %v1954
    %1996 = vmatpush1.msra.mxu0 %v1953
    %1997 = vmatprep.subr.mxu0 %v1958
    %1998 = vmatpush1.msra.mxu0 %v1957
    %1999 = vmatprep.subr.mxu0 %v1962
    %2000 = vmatpush1.msra.mxu0 %v1961
    %2001 = vmatprep.subr.mxu0 %v1966
    %2002 = vmatpush1.msra.mxu0 %v1965
    %2003 = vmatprep.subr.mxu0 %v1970
    %2004 = vmatpush1.msra.mxu0 %v1969
    %2005 = vmatprep.subr.mxu0 0.0
    %2006 = vmatpush1.msra.mxu0 0.0
    %2007 = vmatprep.subr.mxu0 0.0
    %2008 = vmatpush1.msra.mxu0 0.0
    %2009 = vmatprep.subr.mxu0 0.0
    %2010 = vmatpush1.msra.mxu0 0.0
    %2011 = vmatprep.subr.mxu0 0.0
    %2012 = vmatpush1.msra.mxu0 0.0
    %2013 = vmatprep.subr.mxu0 0.0
    %2014 = vmatpush1.msra.mxu0 0.0
    %2015 = vmatprep.subr.mxu0 0.0
    %2016 = vmatpush1.msra.mxu0 0.0
    %2017 = vmatprep.subr.mxu0 0.0
    %2018 = vmatpush1.msra.mxu0 0.0
    %2019 = vmatprep.subr.mxu0 0.0
    %2020 = vmatpush1.msra.mxu0 0.0
    %2021 = vmatprep.subr.mxu0 0.0
    %2022 = vmatpush1.msra.mxu0 0.0
    %2023 = vmatprep.subr.mxu0 0.0
    %2024 = vmatpush1.msra.mxu0 0.0
    %2025 = vmatprep.subr.mxu0 0.0
    %2026 = vmatpush1.msra.mxu0 0.0
    %2027 = vmatprep.subr.mxu0 0.0
    %2028 = vmatpush1.msra.mxu0 0.0
    %2029 = vmatprep.subr.mxu0 0.0
    %2030 = vmatpush1.msra.mxu0 0.0
    %2031 = vmatprep.subr.mxu0 0.0
    %2032 = vmatpush1.msra.mxu0 0.0
    %2033 = vmatprep.subr.mxu0 0.0
    %2034 = vmatpush1.msra.mxu0 0.0
    %2035 = vmatprep.subr.mxu0 0.0
    %2036 = vmatpush1.msra.mxu0 0.0
    %2037 = vmatprep.mubr.f32.mxu0 0.0
    %2038 = vmatmul.mubr.f32.gmra.mrb[0].mxu0 %v1901
    %v2039 = vpop.f32.mrb[0].mxu0
    %v2040 = vadd.f32 0.0, %v2039
    %v2041 = vpop.f32.mrb[0].mxu0
    %v2042 = vadd.f32 0.0, %v2041
    %2043 = vdwg.mxu0
    %2044 = vmatprep.subr.mxu0 %v1912
    %2045 = vmatpush1.msra.mxu0 %v1911
    %2046 = vmatprep.subr.mxu0 %v1916
    %2047 = vmatpush1.msra.mxu0 %v1915
    %2048 = vmatprep.subr.mxu0 %v1920
    %2049 = vmatpush1.msra.mxu0 %v1919
    %2050 = vmatprep.subr.mxu0 %v1924
    %2051 = vmatpush1.msra.mxu0 %v1923
    %2052 = vmatprep.subr.mxu0 %v1928
    %2053 = vmatpush1.msra.mxu0 %v1927
    %2054 = vmatprep.subr.mxu0 %v1932
    %2055 = vmatpush1.msra.mxu0 %v1931
    %2056 = vmatprep.subr.mxu0 %v1936
    %2057 = vmatpush1.msra.mxu0 %v1935
    %2058 = vmatprep.subr.mxu0 %v1940
    %2059 = vmatpush1.msra.mxu0 %v1939
    %2060 = vmatprep.subr.mxu0 %v1944
    %2061 = vmatpush1.msra.mxu0 %v1943
    %2062 = vmatprep.subr.mxu0 %v1948
    %2063 = vmatpush1.msra.mxu0 %v1947
    %2064 = vmatprep.subr.mxu0 %v1952
    %2065 = vmatpush1.msra.mxu0 %v1951
    %2066 = vmatprep.subr.mxu0 %v1956
    %2067 = vmatpush1.msra.mxu0 %v1955
    %2068 = vmatprep.subr.mxu0 %v1960
    %2069 = vmatpush1.msra.mxu0 %v1959
    %2070 = vmatprep.subr.mxu0 %v1964
    %2071 = vmatpush1.msra.mxu0 %v1963
    %2072 = vmatprep.subr.mxu0 %v1968
    %2073 = vmatpush1.msra.mxu0 %v1967
    %2074 = vmatprep.subr.mxu0 %v1972
    %2075 = vmatpush1.msra.mxu0 %v1971
    %2076 = vmatprep.subr.mxu0 0.0
    %2077 = vmatpush1.msra.mxu0 0.0
    %2078 = vmatprep.subr.mxu0 0.0
    %2079 = vmatpush1.msra.mxu0 0.0
    %2080 = vmatprep.subr.mxu0 0.0
    %2081 = vmatpush1.msra.mxu0 0.0
    %2082 = vmatprep.subr.mxu0 0.0
    %2083 = vmatpush1.msra.mxu0 0.0
    %2084 = vmatprep.subr.mxu0 0.0
    %2085 = vmatpush1.msra.mxu0 0.0
    %2086 = vmatprep.subr.mxu0 0.0
    %2087 = vmatpush1.msra.mxu0 0.0
    %2088 = vmatprep.subr.mxu0 0.0
    %2089 = vmatpush1.msra.mxu0 0.0
    %2090 = vmatprep.subr.mxu0 0.0
    %2091 = vmatpush1.msra.mxu0 0.0
    %2092 = vmatprep.subr.mxu0 0.0
    %2093 = vmatpush1.msra.mxu0 0.0
    %2094 = vmatprep.subr.mxu0 0.0
    %2095 = vmatpush1.msra.mxu0 0.0
    %2096 = vmatprep.subr.mxu0 0.0
    %2097 = vmatpush1.msra.mxu0 0.0
    %2098 = vmatprep.subr.mxu0 0.0
    %2099 = vmatpush1.msra.mxu0 0.0
    %2100 = vmatprep.subr.mxu0 0.0
    %2101 = vmatpush1.msra.mxu0 0.0
    %2102 = vmatprep.subr.mxu0 0.0
    %2103 = vmatpush1.msra.mxu0 0.0
    %2104 = vmatprep.subr.mxu0 0.0
    %2105 = vmatpush1.msra.mxu0 0.0
    %2106 = vmatprep.subr.mxu0 0.0
    %2107 = vmatpush1.msra.mxu0 0.0
    %2108 = vmatprep.mubr.f32.mxu0 0.0
    %2109 = vmatmul.mubr.f32.gmra.mrb[0].mxu0 %v1901
    %v2110 = vpop.f32.mrb[0].mxu0
    %v2111 = vadd.f32 0.0, %v2110
    %v2112 = vpop.f32.mrb[0].mxu0
    %v2113 = vadd.f32 0.0, %v2112
    %2114 = vdwg.mxu0
    %v2115 = vadd.f32 %v1905, %v2040
    %v2116 = vadd.f32 %v1906, %v2042
    %v2117 = vadd.f32 %v1907, %v2111
    %v2118 = vadd.f32 %v1908, %v2113
    %v2119 = vxor.u32 %v2115, 2147483648
    %v2120 = vmul.f32 %v2119, 1.442695
    %v2121 = vpow.pop %v2120
    %v2122 = vadd.f32 %v2121, 1.0
    %v2123 = vrcp.pop %v2122
    %v2124 = vmul.f32 1.0, %v2123
    %v2125 = vxor.u32 %v2116, 2147483648
    %v2126 = vmul.f32 %v2125, 1.442695
    %v2127 = vpow.pop %v2126
    %v2128 = vadd.f32 %v2127, 1.0
    %v2129 = vrcp.pop %v2128
    %v2130 = vmul.f32 1.0, %v2129
    %v2131 = vtanh.pop %v2117
    %v2132 = vxor.u32 %v2118, 2147483648
    %v2133 = vmul.f32 %v2132, 1.442695
    %v2134 = vpow.pop %v2133
    %v2135 = vadd.f32 %v2134, 1.0
    %v2136 = vrcp.pop %v2135
    %v2137 = vmul.f32 1.0, %v2136
    %v2138 = vmul.f32 %v2130, %v1899
    %v2139 = vmul.f32 %v2124, %v2131
    %v2140 = vadd.f32 %v2138, %v2139
    %v2141 = vtanh.pop %v2140
    %v2142 = vmul.f32 %v2137, %v2141
    %s2143 = scalar_lea.vmem [#allocation4], 32
    %2144 = vst [vmem:[%s2143] sm:$0xff] %v2142
    %s2145 = scalar_lea.vmem [#allocation2], 160
    %v2146 = vld [vmem:[%s2145] sm:$0xff]
    %v2147 = vld [vmem:[%s2145 + $0x8] sm:$0xff]
    %v2148 = vld [vmem:[%s2145 + $0x10] sm:$0xff]
    %v2149 = vld [vmem:[%s2145 + $0x18] sm:$0xff]
    %v2150 = vld [vmem:[%s2] sm:$0xff]
    %v2151 = vld [vmem:[%s2 + $0x8] sm:$0xff]
    %v2152 = vld [vmem:[%s2 + $0x10] sm:$0xff]
    %v2153 = vld [vmem:[%s2 + $0x18] sm:$0xff]
    %v2154 = vld [vmem:[%s2 + $0x20] sm:$0xff]
    %v2155 = vld [vmem:[%s2 + $0x28] sm:$0xff]
    %v2156 = vld [vmem:[%s2 + $0x30] sm:$0xff]
    %v2157 = vld [vmem:[%s2 + $0x38] sm:$0xff]
    %v2158 = vld [vmem:[%s2 + $0x40] sm:$0xff]
    %v2159 = vld [vmem:[%s2 + $0x48] sm:$0xff]
    %v2160 = vld [vmem:[%s2 + $0x50] sm:$0xff]
    %v2161 = vld [vmem:[%s2 + $0x58] sm:$0xff]
    %v2162 = vld [vmem:[%s2 + $0x60] sm:$0xff]
    %v2163 = vld [vmem:[%s2 + $0x68] sm:$0xff]
    %v2164 = vld [vmem:[%s2 + $0x70] sm:$0xff]
    %v2165 = vld [vmem:[%s2 + $0x78] sm:$0xff]
    %v2166 = vld [vmem:[%s2 + $0x80] sm:$0xff]
    %v2167 = vld [vmem:[%s2 + $0x88] sm:$0xff]
    %v2168 = vld [vmem:[%s2 + $0x90] sm:$0xff]
    %v2169 = vld [vmem:[%s2 + $0x98] sm:$0xff]
    %v2170 = vld [vmem:[%s2 + $0xa0] sm:$0xff]
    %v2171 = vld [vmem:[%s2 + $0xa8] sm:$0xff]
    %v2172 = vld [vmem:[%s2 + $0xb0] sm:$0xff]
    %v2173 = vld [vmem:[%s2 + $0xb8] sm:$0xff]
    %v2174 = vld [vmem:[%s2 + $0xc0] sm:$0xff]
    %v2175 = vld [vmem:[%s2 + $0xc8] sm:$0xff]
    %v2176 = vld [vmem:[%s2 + $0xd0] sm:$0xff]
    %v2177 = vld [vmem:[%s2 + $0xd8] sm:$0xff]
    %v2178 = vld [vmem:[%s2 + $0xe0] sm:$0xff]
    %v2179 = vld [vmem:[%s2 + $0xe8] sm:$0xff]
    %v2180 = vld [vmem:[%s2 + $0xf0] sm:$0xff]
    %v2181 = vld [vmem:[%s2 + $0xf8] sm:$0xff]
    %v2182 = vld [vmem:[%s2 + $0x100] sm:$0xff]
    %v2183 = vld [vmem:[%s2 + $0x108] sm:$0xff]
    %v2184 = vld [vmem:[%s2 + $0x110] sm:$0xff]
    %v2185 = vld [vmem:[%s2 + $0x118] sm:$0xff]
    %v2186 = vld [vmem:[%s2 + $0x120] sm:$0xff]
    %v2187 = vld [vmem:[%s2 + $0x128] sm:$0xff]
    %v2188 = vld [vmem:[%s2 + $0x130] sm:$0xff]
    %v2189 = vld [vmem:[%s2 + $0x138] sm:$0xff]
    %v2190 = vld [vmem:[%s2 + $0x140] sm:$0xff]
    %v2191 = vld [vmem:[%s2 + $0x148] sm:$0xff]
    %v2192 = vld [vmem:[%s2 + $0x150] sm:$0xff]
    %v2193 = vld [vmem:[%s2 + $0x158] sm:$0xff]
    %v2194 = vld [vmem:[%s2 + $0x160] sm:$0xff]
    %v2195 = vld [vmem:[%s2 + $0x168] sm:$0xff]
    %v2196 = vld [vmem:[%s2 + $0x170] sm:$0xff]
    %v2197 = vld [vmem:[%s2 + $0x178] sm:$0xff]
    %v2198 = vld [vmem:[%s2 + $0x180] sm:$0xff]
    %v2199 = vld [vmem:[%s2 + $0x188] sm:$0xff]
    %v2200 = vld [vmem:[%s2 + $0x190] sm:$0xff]
    %v2201 = vld [vmem:[%s2 + $0x198] sm:$0xff]
    %v2202 = vld [vmem:[%s2 + $0x1a0] sm:$0xff]
    %v2203 = vld [vmem:[%s2 + $0x1a8] sm:$0xff]
    %v2204 = vld [vmem:[%s2 + $0x1b0] sm:$0xff]
    %v2205 = vld [vmem:[%s2 + $0x1b8] sm:$0xff]
    %v2206 = vld [vmem:[%s2 + $0x1c0] sm:$0xff]
    %v2207 = vld [vmem:[%s2 + $0x1c8] sm:$0xff]
    %v2208 = vld [vmem:[%s2 + $0x1d0] sm:$0xff]
    %v2209 = vld [vmem:[%s2 + $0x1d8] sm:$0xff]
    %v2210 = vld [vmem:[%s2 + $0x1e0] sm:$0xff]
    %v2211 = vld [vmem:[%s2 + $0x1e8] sm:$0xff]
    %v2212 = vld [vmem:[%s2 + $0x1f0] sm:$0xff]
    %v2213 = vld [vmem:[%s2 + $0x1f8] sm:$0xff]
    %2214 = vmatprep.subr.mxu0 %v2151
    %2215 = vmatpush1.msra.mxu0 %v2150
    %2216 = vmatprep.subr.mxu0 %v2155
    %2217 = vmatpush1.msra.mxu0 %v2154
    %2218 = vmatprep.subr.mxu0 %v2159
    %2219 = vmatpush1.msra.mxu0 %v2158
    %2220 = vmatprep.subr.mxu0 %v2163
    %2221 = vmatpush1.msra.mxu0 %v2162
    %2222 = vmatprep.subr.mxu0 %v2167
    %2223 = vmatpush1.msra.mxu0 %v2166
    %2224 = vmatprep.subr.mxu0 %v2171
    %2225 = vmatpush1.msra.mxu0 %v2170
    %2226 = vmatprep.subr.mxu0 %v2175
    %2227 = vmatpush1.msra.mxu0 %v2174
    %2228 = vmatprep.subr.mxu0 %v2179
    %2229 = vmatpush1.msra.mxu0 %v2178
    %2230 = vmatprep.subr.mxu0 %v2183
    %2231 = vmatpush1.msra.mxu0 %v2182
    %2232 = vmatprep.subr.mxu0 %v2187
    %2233 = vmatpush1.msra.mxu0 %v2186
    %2234 = vmatprep.subr.mxu0 %v2191
    %2235 = vmatpush1.msra.mxu0 %v2190
    %2236 = vmatprep.subr.mxu0 %v2195
    %2237 = vmatpush1.msra.mxu0 %v2194
    %2238 = vmatprep.subr.mxu0 %v2199
    %2239 = vmatpush1.msra.mxu0 %v2198
    %2240 = vmatprep.subr.mxu0 %v2203
    %2241 = vmatpush1.msra.mxu0 %v2202
    %2242 = vmatprep.subr.mxu0 %v2207
    %2243 = vmatpush1.msra.mxu0 %v2206
    %2244 = vmatprep.subr.mxu0 %v2211
    %2245 = vmatpush1.msra.mxu0 %v2210
    %2246 = vmatprep.subr.mxu0 0.0
    %2247 = vmatpush1.msra.mxu0 0.0
    %2248 = vmatprep.subr.mxu0 0.0
    %2249 = vmatpush1.msra.mxu0 0.0
    %2250 = vmatprep.subr.mxu0 0.0
    %2251 = vmatpush1.msra.mxu0 0.0
    %2252 = vmatprep.subr.mxu0 0.0
    %2253 = vmatpush1.msra.mxu0 0.0
    %2254 = vmatprep.subr.mxu0 0.0
    %2255 = vmatpush1.msra.mxu0 0.0
    %2256 = vmatprep.subr.mxu0 0.0
    %2257 = vmatpush1.msra.mxu0 0.0
    %2258 = vmatprep.subr.mxu0 0.0
    %2259 = vmatpush1.msra.mxu0 0.0
    %2260 = vmatprep.subr.mxu0 0.0
    %2261 = vmatpush1.msra.mxu0 0.0
    %2262 = vmatprep.subr.mxu0 0.0
    %2263 = vmatpush1.msra.mxu0 0.0
    %2264 = vmatprep.subr.mxu0 0.0
    %2265 = vmatpush1.msra.mxu0 0.0
    %2266 = vmatprep.subr.mxu0 0.0
    %2267 = vmatpush1.msra.mxu0 0.0
    %2268 = vmatprep.subr.mxu0 0.0
    %2269 = vmatpush1.msra.mxu0 0.0
    %2270 = vmatprep.subr.mxu0 0.0
    %2271 = vmatpush1.msra.mxu0 0.0
    %2272 = vmatprep.subr.mxu0 0.0
    %2273 = vmatpush1.msra.mxu0 0.0
    %2274 = vmatprep.subr.mxu0 0.0
    %2275 = vmatpush1.msra.mxu0 0.0
    %2276 = vmatprep.subr.mxu0 0.0
    %2277 = vmatpush1.msra.mxu0 0.0
    %2278 = vmatprep.mubr.f32.mxu0 0.0
    %2279 = vmatmul.mubr.f32.gmra.mrb[0].mxu0 %v2142
    %v2280 = vpop.f32.mrb[0].mxu0
    %v2281 = vadd.f32 0.0, %v2280
    %v2282 = vpop.f32.mrb[0].mxu0
    %v2283 = vadd.f32 0.0, %v2282
    %2284 = vdwg.mxu0
    %2285 = vmatprep.subr.mxu0 %v2153
    %2286 = vmatpush1.msra.mxu0 %v2152
    %2287 = vmatprep.subr.mxu0 %v2157
    %2288 = vmatpush1.msra.mxu0 %v2156
    %2289 = vmatprep.subr.mxu0 %v2161
    %2290 = vmatpush1.msra.mxu0 %v2160
    %2291 = vmatprep.subr.mxu0 %v2165
    %2292 = vmatpush1.msra.mxu0 %v2164
    %2293 = vmatprep.subr.mxu0 %v2169
    %2294 = vmatpush1.msra.mxu0 %v2168
    %2295 = vmatprep.subr.mxu0 %v2173
    %2296 = vmatpush1.msra.mxu0 %v2172
    %2297 = vmatprep.subr.mxu0 %v2177
    %2298 = vmatpush1.msra.mxu0 %v2176
    %2299 = vmatprep.subr.mxu0 %v2181
    %2300 = vmatpush1.msra.mxu0 %v2180
    %2301 = vmatprep.subr.mxu0 %v2185
    %2302 = vmatpush1.msra.mxu0 %v2184
    %2303 = vmatprep.subr.mxu0 %v2189
    %2304 = vmatpush1.msra.mxu0 %v2188
    %2305 = vmatprep.subr.mxu0 %v2193
    %2306 = vmatpush1.msra.mxu0 %v2192
    %2307 = vmatprep.subr.mxu0 %v2197
    %2308 = vmatpush1.msra.mxu0 %v2196
    %2309 = vmatprep.subr.mxu0 %v2201
    %2310 = vmatpush1.msra.mxu0 %v2200
    %2311 = vmatprep.subr.mxu0 %v2205
    %2312 = vmatpush1.msra.mxu0 %v2204
    %2313 = vmatprep.subr.mxu0 %v2209
    %2314 = vmatpush1.msra.mxu0 %v2208
    %2315 = vmatprep.subr.mxu0 %v2213
    %2316 = vmatpush1.msra.mxu0 %v2212
    %2317 = vmatprep.subr.mxu0 0.0
    %2318 = vmatpush1.msra.mxu0 0.0
    %2319 = vmatprep.subr.mxu0 0.0
    %2320 = vmatpush1.msra.mxu0 0.0
    %2321 = vmatprep.subr.mxu0 0.0
    %2322 = vmatpush1.msra.mxu0 0.0
    %2323 = vmatprep.subr.mxu0 0.0
    %2324 = vmatpush1.msra.mxu0 0.0
    %2325 = vmatprep.subr.mxu0 0.0
    %2326 = vmatpush1.msra.mxu0 0.0
    %2327 = vmatprep.subr.mxu0 0.0
    %2328 = vmatpush1.msra.mxu0 0.0
    %2329 = vmatprep.subr.mxu0 0.0
    %2330 = vmatpush1.msra.mxu0 0.0
    %2331 = vmatprep.subr.mxu0 0.0
    %2332 = vmatpush1.msra.mxu0 0.0
    %2333 = vmatprep.subr.mxu0 0.0
    %2334 = vmatpush1.msra.mxu0 0.0
    %2335 = vmatprep.subr.mxu0 0.0
    %2336 = vmatpush1.msra.mxu0 0.0
    %2337 = vmatprep.subr.mxu0 0.0
    %2338 = vmatpush1.msra.mxu0 0.0
    %2339 = vmatprep.subr.mxu0 0.0
    %2340 = vmatpush1.msra.mxu0 0.0
    %2341 = vmatprep.subr.mxu0 0.0
    %2342 = vmatpush1.msra.mxu0 0.0
    %2343 = vmatprep.subr.mxu0 0.0
    %2344 = vmatpush1.msra.mxu0 0.0
    %2345 = vmatprep.subr.mxu0 0.0
    %2346 = vmatpush1.msra.mxu0 0.0
    %2347 = vmatprep.subr.mxu0 0.0
    %2348 = vmatpush1.msra.mxu0 0.0
    %2349 = vmatprep.mubr.f32.mxu0 0.0
    %2350 = vmatmul.mubr.f32.gmra.mrb[0].mxu0 %v2142
    %v2351 = vpop.f32.mrb[0].mxu0
    %v2352 = vadd.f32 0.0, %v2351
    %v2353 = vpop.f32.mrb[0].mxu0
    %v2354 = vadd.f32 0.0, %v2353
    %2355 = vdwg.mxu0
    %v2356 = vadd.f32 %v2146, %v2281
    %v2357 = vadd.f32 %v2147, %v2283
    %v2358 = vadd.f32 %v2148, %v2352
    %v2359 = vadd.f32 %v2149, %v2354
    %v2360 = vxor.u32 %v2356, 2147483648
    %v2361 = vmul.f32 %v2360, 1.442695
    %v2362 = vpow.pop %v2361
    %v2363 = vadd.f32 %v2362, 1.0
    %v2364 = vrcp.pop %v2363
    %v2365 = vmul.f32 1.0, %v2364
    %v2366 = vxor.u32 %v2357, 2147483648
    %v2367 = vmul.f32 %v2366, 1.442695
    %v2368 = vpow.pop %v2367
    %v2369 = vadd.f32 %v2368, 1.0
    %v2370 = vrcp.pop %v2369
    %v2371 = vmul.f32 1.0, %v2370
    %v2372 = vtanh.pop %v2358
    %v2373 = vxor.u32 %v2359, 2147483648
    %v2374 = vmul.f32 %v2373, 1.442695
    %v2375 = vpow.pop %v2374
    %v2376 = vadd.f32 %v2375, 1.0
    %v2377 = vrcp.pop %v2376
    %v2378 = vmul.f32 1.0, %v2377
    %v2379 = vmul.f32 %v2371, %v2140
    %v2380 = vmul.f32 %v2365, %v2372
    %v2381 = vadd.f32 %v2379, %v2380
    %v2382 = vtanh.pop %v2381
    %v2383 = vmul.f32 %v2378, %v2382
    %s2384 = scalar_lea.vmem [#allocation4], 40
    %2385 = vst [vmem:[%s2384] sm:$0xff] %v2383
    %s2386 = scalar_lea.vmem [#allocation2], 192
    %v2387 = vld [vmem:[%s2386] sm:$0xff]
    %v2388 = vld [vmem:[%s2386 + $0x8] sm:$0xff]
    %v2389 = vld [vmem:[%s2386 + $0x10] sm:$0xff]
    %v2390 = vld [vmem:[%s2386 + $0x18] sm:$0xff]
    %v2391 = vld [vmem:[%s2] sm:$0xff]
    %v2392 = vld [vmem:[%s2 + $0x8] sm:$0xff]
    %v2393 = vld [vmem:[%s2 + $0x10] sm:$0xff]
    %v2394 = vld [vmem:[%s2 + $0x18] sm:$0xff]
    %v2395 = vld [vmem:[%s2 + $0x20] sm:$0xff]
    %v2396 = vld [vmem:[%s2 + $0x28] sm:$0xff]
    %v2397 = vld [vmem:[%s2 + $0x30] sm:$0xff]
    %v2398 = vld [vmem:[%s2 + $0x38] sm:$0xff]
    %v2399 = vld [vmem:[%s2 + $0x40] sm:$0xff]
    %v2400 = vld [vmem:[%s2 + $0x48] sm:$0xff]
    %v2401 = vld [vmem:[%s2 + $0x50] sm:$0xff]
    %v2402 = vld [vmem:[%s2 + $0x58] sm:$0xff]
    %v2403 = vld [vmem:[%s2 + $0x60] sm:$0xff]
    %v2404 = vld [vmem:[%s2 + $0x68] sm:$0xff]
    %v2405 = vld [vmem:[%s2 + $0x70] sm:$0xff]
    %v2406 = vld [vmem:[%s2 + $0x78] sm:$0xff]
    %v2407 = vld [vmem:[%s2 + $0x80] sm:$0xff]
    %v2408 = vld [vmem:[%s2 + $0x88] sm:$0xff]
    %v2409 = vld [vmem:[%s2 + $0x90] sm:$0xff]
    %v2410 = vld [vmem:[%s2 + $0x98] sm:$0xff]
    %v2411 = vld [vmem:[%s2 + $0xa0] sm:$0xff]
    %v2412 = vld [vmem:[%s2 + $0xa8] sm:$0xff]
    %v2413 = vld [vmem:[%s2 + $0xb0] sm:$0xff]
    %v2414 = vld [vmem:[%s2 + $0xb8] sm:$0xff]
    %v2415 = vld [vmem:[%s2 + $0xc0] sm:$0xff]
    %v2416 = vld [vmem:[%s2 + $0xc8] sm:$0xff]
    %v2417 = vld [vmem:[%s2 + $0xd0] sm:$0xff]
    %v2418 = vld [vmem:[%s2 + $0xd8] sm:$0xff]
    %v2419 = vld [vmem:[%s2 + $0xe0] sm:$0xff]
    %v2420 = vld [vmem:[%s2 + $0xe8] sm:$0xff]
    %v2421 = vld [vmem:[%s2 + $0xf0] sm:$0xff]
    %v2422 = vld [vmem:[%s2 + $0xf8] sm:$0xff]
    %v2423 = vld [vmem:[%s2 + $0x100] sm:$0xff]
    %v2424 = vld [vmem:[%s2 + $0x108] sm:$0xff]
    %v2425 = vld [vmem:[%s2 + $0x110] sm:$0xff]
    %v2426 = vld [vmem:[%s2 + $0x118] sm:$0xff]
    %v2427 = vld [vmem:[%s2 + $0x120] sm:$0xff]
    %v2428 = vld [vmem:[%s2 + $0x128] sm:$0xff]
    %v2429 = vld [vmem:[%s2 + $0x130] sm:$0xff]
    %v2430 = vld [vmem:[%s2 + $0x138] sm:$0xff]
    %v2431 = vld [vmem:[%s2 + $0x140] sm:$0xff]
    %v2432 = vld [vmem:[%s2 + $0x148] sm:$0xff]
    %v2433 = vld [vmem:[%s2 + $0x150] sm:$0xff]
    %v2434 = vld [vmem:[%s2 + $0x158] sm:$0xff]
    %v2435 = vld [vmem:[%s2 + $0x160] sm:$0xff]
    %v2436 = vld [vmem:[%s2 + $0x168] sm:$0xff]
    %v2437 = vld [vmem:[%s2 + $0x170] sm:$0xff]
    %v2438 = vld [vmem:[%s2 + $0x178] sm:$0xff]
    %v2439 = vld [vmem:[%s2 + $0x180] sm:$0xff]
    %v2440 = vld [vmem:[%s2 + $0x188] sm:$0xff]
    %v2441 = vld [vmem:[%s2 + $0x190] sm:$0xff]
    %v2442 = vld [vmem:[%s2 + $0x198] sm:$0xff]
    %v2443 = vld [vmem:[%s2 + $0x1a0] sm:$0xff]
    %v2444 = vld [vmem:[%s2 + $0x1a8] sm:$0xff]
    %v2445 = vld [vmem:[%s2 + $0x1b0] sm:$0xff]
    %v2446 = vld [vmem:[%s2 + $0x1b8] sm:$0xff]
    %v2447 = vld [vmem:[%s2 + $0x1c0] sm:$0xff]
    %v2448 = vld [vmem:[%s2 + $0x1c8] sm:$0xff]
    %v2449 = vld [vmem:[%s2 + $0x1d0] sm:$0xff]
    %v2450 = vld [vmem:[%s2 + $0x1d8] sm:$0xff]
    %v2451 = vld [vmem:[%s2 + $0x1e0] sm:$0xff]
    %v2452 = vld [vmem:[%s2 + $0x1e8] sm:$0xff]
    %v2453 = vld [vmem:[%s2 + $0x1f0] sm:$0xff]
    %v2454 = vld [vmem:[%s2 + $0x1f8] sm:$0xff]
    %2455 = vmatprep.subr.mxu0 %v2392
    %2456 = vmatpush1.msra.mxu0 %v2391
    %2457 = vmatprep.subr.mxu0 %v2396
    %2458 = vmatpush1.msra.mxu0 %v2395
    %2459 = vmatprep.subr.mxu0 %v2400
    %2460 = vmatpush1.msra.mxu0 %v2399
    %2461 = vmatprep.subr.mxu0 %v2404
    %2462 = vmatpush1.msra.mxu0 %v2403
    %2463 = vmatprep.subr.mxu0 %v2408
    %2464 = vmatpush1.msra.mxu0 %v2407
    %2465 = vmatprep.subr.mxu0 %v2412
    %2466 = vmatpush1.msra.mxu0 %v2411
    %2467 = vmatprep.subr.mxu0 %v2416
    %2468 = vmatpush1.msra.mxu0 %v2415
    %2469 = vmatprep.subr.mxu0 %v2420
    %2470 = vmatpush1.msra.mxu0 %v2419
    %2471 = vmatprep.subr.mxu0 %v2424
    %2472 = vmatpush1.msra.mxu0 %v2423
    %2473 = vmatprep.subr.mxu0 %v2428
    %2474 = vmatpush1.msra.mxu0 %v2427
    %2475 = vmatprep.subr.mxu0 %v2432
    %2476 = vmatpush1.msra.mxu0 %v2431
    %2477 = vmatprep.subr.mxu0 %v2436
    %2478 = vmatpush1.msra.mxu0 %v2435
    %2479 = vmatprep.subr.mxu0 %v2440
    %2480 = vmatpush1.msra.mxu0 %v2439
    %2481 = vmatprep.subr.mxu0 %v2444
    %2482 = vmatpush1.msra.mxu0 %v2443
    %2483 = vmatprep.subr.mxu0 %v2448
    %2484 = vmatpush1.msra.mxu0 %v2447
    %2485 = vmatprep.subr.mxu0 %v2452
    %2486 = vmatpush1.msra.mxu0 %v2451
    %2487 = vmatprep.subr.mxu0 0.0
    %2488 = vmatpush1.msra.mxu0 0.0
    %2489 = vmatprep.subr.mxu0 0.0
    %2490 = vmatpush1.msra.mxu0 0.0
    %2491 = vmatprep.subr.mxu0 0.0
    %2492 = vmatpush1.msra.mxu0 0.0
    %2493 = vmatprep.subr.mxu0 0.0
    %2494 = vmatpush1.msra.mxu0 0.0
    %2495 = vmatprep.subr.mxu0 0.0
    %2496 = vmatpush1.msra.mxu0 0.0
    %2497 = vmatprep.subr.mxu0 0.0
    %2498 = vmatpush1.msra.mxu0 0.0
    %2499 = vmatprep.subr.mxu0 0.0
    %2500 = vmatpush1.msra.mxu0 0.0
    %2501 = vmatprep.subr.mxu0 0.0
    %2502 = vmatpush1.msra.mxu0 0.0
    %2503 = vmatprep.subr.mxu0 0.0
    %2504 = vmatpush1.msra.mxu0 0.0
    %2505 = vmatprep.subr.mxu0 0.0
    %2506 = vmatpush1.msra.mxu0 0.0
    %2507 = vmatprep.subr.mxu0 0.0
    %2508 = vmatpush1.msra.mxu0 0.0
    %2509 = vmatprep.subr.mxu0 0.0
    %2510 = vmatpush1.msra.mxu0 0.0
    %2511 = vmatprep.subr.mxu0 0.0
    %2512 = vmatpush1.msra.mxu0 0.0
    %2513 = vmatprep.subr.mxu0 0.0
    %2514 = vmatpush1.msra.mxu0 0.0
    %2515 = vmatprep.subr.mxu0 0.0
    %2516 = vmatpush1.msra.mxu0 0.0
    %2517 = vmatprep.subr.mxu0 0.0
    %2518 = vmatpush1.msra.mxu0 0.0
    %2519 = vmatprep.mubr.f32.mxu0 0.0
    %2520 = vmatmul.mubr.f32.gmra.mrb[0].mxu0 %v2383
    %v2521 = vpop.f32.mrb[0].mxu0
    %v2522 = vadd.f32 0.0, %v2521
    %v2523 = vpop.f32.mrb[0].mxu0
    %v2524 = vadd.f32 0.0, %v2523
    %2525 = vdwg.mxu0
    %2526 = vmatprep.subr.mxu0 %v2394
    %2527 = vmatpush1.msra.mxu0 %v2393
    %2528 = vmatprep.subr.mxu0 %v2398
    %2529 = vmatpush1.msra.mxu0 %v2397
    %2530 = vmatprep.subr.mxu0 %v2402
    %2531 = vmatpush1.msra.mxu0 %v2401
    %2532 = vmatprep.subr.mxu0 %v2406
    %2533 = vmatpush1.msra.mxu0 %v2405
    %2534 = vmatprep.subr.mxu0 %v2410
    %2535 = vmatpush1.msra.mxu0 %v2409
    %2536 = vmatprep.subr.mxu0 %v2414
    %2537 = vmatpush1.msra.mxu0 %v2413
    %2538 = vmatprep.subr.mxu0 %v2418
    %2539 = vmatpush1.msra.mxu0 %v2417
    %2540 = vmatprep.subr.mxu0 %v2422
    %2541 = vmatpush1.msra.mxu0 %v2421
    %2542 = vmatprep.subr.mxu0 %v2426
    %2543 = vmatpush1.msra.mxu0 %v2425
    %2544 = vmatprep.subr.mxu0 %v2430
    %2545 = vmatpush1.msra.mxu0 %v2429
    %2546 = vmatprep.subr.mxu0 %v2434
    %2547 = vmatpush1.msra.mxu0 %v2433
    %2548 = vmatprep.subr.mxu0 %v2438
    %2549 = vmatpush1.msra.mxu0 %v2437
    %2550 = vmatprep.subr.mxu0 %v2442
    %2551 = vmatpush1.msra.mxu0 %v2441
    %2552 = vmatprep.subr.mxu0 %v2446
    %2553 = vmatpush1.msra.mxu0 %v2445
    %2554 = vmatprep.subr.mxu0 %v2450
    %2555 = vmatpush1.msra.mxu0 %v2449
    %2556 = vmatprep.subr.mxu0 %v2454
    %2557 = vmatpush1.msra.mxu0 %v2453
    %2558 = vmatprep.subr.mxu0 0.0
    %2559 = vmatpush1.msra.mxu0 0.0
    %2560 = vmatprep.subr.mxu0 0.0
    %2561 = vmatpush1.msra.mxu0 0.0
    %2562 = vmatprep.subr.mxu0 0.0
    %2563 = vmatpush1.msra.mxu0 0.0
    %2564 = vmatprep.subr.mxu0 0.0
    %2565 = vmatpush1.msra.mxu0 0.0
    %2566 = vmatprep.subr.mxu0 0.0
    %2567 = vmatpush1.msra.mxu0 0.0
    %2568 = vmatprep.subr.mxu0 0.0
    %2569 = vmatpush1.msra.mxu0 0.0
    %2570 = vmatprep.subr.mxu0 0.0
    %2571 = vmatpush1.msra.mxu0 0.0
    %2572 = vmatprep.subr.mxu0 0.0
    %2573 = vmatpush1.msra.mxu0 0.0
    %2574 = vmatprep.subr.mxu0 0.0
    %2575 = vmatpush1.msra.mxu0 0.0
    %2576 = vmatprep.subr.mxu0 0.0
    %2577 = vmatpush1.msra.mxu0 0.0
    %2578 = vmatprep.subr.mxu0 0.0
    %2579 = vmatpush1.msra.mxu0 0.0
    %2580 = vmatprep.subr.mxu0 0.0
    %2581 = vmatpush1.msra.mxu0 0.0
    %2582 = vmatprep.subr.mxu0 0.0
    %2583 = vmatpush1.msra.mxu0 0.0
    %2584 = vmatprep.subr.mxu0 0.0
    %2585 = vmatpush1.msra.mxu0 0.0
    %2586 = vmatprep.subr.mxu0 0.0
    %2587 = vmatpush1.msra.mxu0 0.0
    %2588 = vmatprep.subr.mxu0 0.0
    %2589 = vmatpush1.msra.mxu0 0.0
    %2590 = vmatprep.mubr.f32.mxu0 0.0
    %2591 = vmatmul.mubr.f32.gmra.mrb[0].mxu0 %v2383
    %v2592 = vpop.f32.mrb[0].mxu0
    %v2593 = vadd.f32 0.0, %v2592
    %v2594 = vpop.f32.mrb[0].mxu0
    %v2595 = vadd.f32 0.0, %v2594
    %2596 = vdwg.mxu0
    %v2597 = vadd.f32 %v2387, %v2522
    %v2598 = vadd.f32 %v2388, %v2524
    %v2599 = vadd.f32 %v2389, %v2593
    %v2600 = vadd.f32 %v2390, %v2595
    %v2601 = vxor.u32 %v2597, 2147483648
    %v2602 = vmul.f32 %v2601, 1.442695
    %v2603 = vpow.pop %v2602
    %v2604 = vadd.f32 %v2603, 1.0
    %v2605 = vrcp.pop %v2604
    %v2606 = vmul.f32 1.0, %v2605
    %v2607 = vxor.u32 %v2598, 2147483648
    %v2608 = vmul.f32 %v2607, 1.442695
    %v2609 = vpow.pop %v2608
    %v2610 = vadd.f32 %v2609, 1.0
    %v2611 = vrcp.pop %v2610
    %v2612 = vmul.f32 1.0, %v2611
    %v2613 = vtanh.pop %v2599
    %v2614 = vxor.u32 %v2600, 2147483648
    %v2615 = vmul.f32 %v2614, 1.442695
    %v2616 = vpow.pop %v2615
    %v2617 = vadd.f32 %v2616, 1.0
    %v2618 = vrcp.pop %v2617
    %v2619 = vmul.f32 1.0, %v2618
    %v2620 = vmul.f32 %v2612, %v2381
    %v2621 = vmul.f32 %v2606, %v2613
    %v2622 = vadd.f32 %v2620, %v2621
    %v2623 = vtanh.pop %v2622
    %v2624 = vmul.f32 %v2619, %v2623
    %s2625 = scalar_lea.vmem [#allocation4], 48
    %2626 = vst [vmem:[%s2625] sm:$0xff] %v2624
    %s2627 = scalar_lea.vmem [#allocation2], 224
    %v2628 = vld [vmem:[%s2627] sm:$0xff]
    %v2629 = vld [vmem:[%s2627 + $0x8] sm:$0xff]
    %v2630 = vld [vmem:[%s2627 + $0x10] sm:$0xff]
    %v2631 = vld [vmem:[%s2627 + $0x18] sm:$0xff]
    %v2632 = vld [vmem:[%s2] sm:$0xff]
    %v2633 = vld [vmem:[%s2 + $0x8] sm:$0xff]
    %v2634 = vld [vmem:[%s2 + $0x10] sm:$0xff]
    %v2635 = vld [vmem:[%s2 + $0x18] sm:$0xff]
    %v2636 = vld [vmem:[%s2 + $0x20] sm:$0xff]
    %v2637 = vld [vmem:[%s2 + $0x28] sm:$0xff]
    %v2638 = vld [vmem:[%s2 + $0x30] sm:$0xff]
    %v2639 = vld [vmem:[%s2 + $0x38] sm:$0xff]
    %v2640 = vld [vmem:[%s2 + $0x40] sm:$0xff]
    %v2641 = vld [vmem:[%s2 + $0x48] sm:$0xff]
    %v2642 = vld [vmem:[%s2 + $0x50] sm:$0xff]
    %v2643 = vld [vmem:[%s2 + $0x58] sm:$0xff]
    %v2644 = vld [vmem:[%s2 + $0x60] sm:$0xff]
    %v2645 = vld [vmem:[%s2 + $0x68] sm:$0xff]
    %v2646 = vld [vmem:[%s2 + $0x70] sm:$0xff]
    %v2647 = vld [vmem:[%s2 + $0x78] sm:$0xff]
    %v2648 = vld [vmem:[%s2 + $0x80] sm:$0xff]
    %v2649 = vld [vmem:[%s2 + $0x88] sm:$0xff]
    %v2650 = vld [vmem:[%s2 + $0x90] sm:$0xff]
    %v2651 = vld [vmem:[%s2 + $0x98] sm:$0xff]
    %v2652 = vld [vmem:[%s2 + $0xa0] sm:$0xff]
    %v2653 = vld [vmem:[%s2 + $0xa8] sm:$0xff]
    %v2654 = vld [vmem:[%s2 + $0xb0] sm:$0xff]
    %v2655 = vld [vmem:[%s2 + $0xb8] sm:$0xff]
    %v2656 = vld [vmem:[%s2 + $0xc0] sm:$0xff]
    %v2657 = vld [vmem:[%s2 + $0xc8] sm:$0xff]
    %v2658 = vld [vmem:[%s2 + $0xd0] sm:$0xff]
    %v2659 = vld [vmem:[%s2 + $0xd8] sm:$0xff]
    %v2660 = vld [vmem:[%s2 + $0xe0] sm:$0xff]
    %v2661 = vld [vmem:[%s2 + $0xe8] sm:$0xff]
    %v2662 = vld [vmem:[%s2 + $0xf0] sm:$0xff]
    %v2663 = vld [vmem:[%s2 + $0xf8] sm:$0xff]
    %v2664 = vld [vmem:[%s2 + $0x100] sm:$0xff]
    %v2665 = vld [vmem:[%s2 + $0x108] sm:$0xff]
    %v2666 = vld [vmem:[%s2 + $0x110] sm:$0xff]
    %v2667 = vld [vmem:[%s2 + $0x118] sm:$0xff]
    %v2668 = vld [vmem:[%s2 + $0x120] sm:$0xff]
    %v2669 = vld [vmem:[%s2 + $0x128] sm:$0xff]
    %v2670 = vld [vmem:[%s2 + $0x130] sm:$0xff]
    %v2671 = vld [vmem:[%s2 + $0x138] sm:$0xff]
    %v2672 = vld [vmem:[%s2 + $0x140] sm:$0xff]
    %v2673 = vld [vmem:[%s2 + $0x148] sm:$0xff]
    %v2674 = vld [vmem:[%s2 + $0x150] sm:$0xff]
    %v2675 = vld [vmem:[%s2 + $0x158] sm:$0xff]
    %v2676 = vld [vmem:[%s2 + $0x160] sm:$0xff]
    %v2677 = vld [vmem:[%s2 + $0x168] sm:$0xff]
    %v2678 = vld [vmem:[%s2 + $0x170] sm:$0xff]
    %v2679 = vld [vmem:[%s2 + $0x178] sm:$0xff]
    %v2680 = vld [vmem:[%s2 + $0x180] sm:$0xff]
    %v2681 = vld [vmem:[%s2 + $0x188] sm:$0xff]
    %v2682 = vld [vmem:[%s2 + $0x190] sm:$0xff]
    %v2683 = vld [vmem:[%s2 + $0x198] sm:$0xff]
    %v2684 = vld [vmem:[%s2 + $0x1a0] sm:$0xff]
    %v2685 = vld [vmem:[%s2 + $0x1a8] sm:$0xff]
    %v2686 = vld [vmem:[%s2 + $0x1b0] sm:$0xff]
    %v2687 = vld [vmem:[%s2 + $0x1b8] sm:$0xff]
    %v2688 = vld [vmem:[%s2 + $0x1c0] sm:$0xff]
    %v2689 = vld [vmem:[%s2 + $0x1c8] sm:$0xff]
    %v2690 = vld [vmem:[%s2 + $0x1d0] sm:$0xff]
    %v2691 = vld [vmem:[%s2 + $0x1d8] sm:$0xff]
    %v2692 = vld [vmem:[%s2 + $0x1e0] sm:$0xff]
    %v2693 = vld [vmem:[%s2 + $0x1e8] sm:$0xff]
    %v2694 = vld [vmem:[%s2 + $0x1f0] sm:$0xff]
    %v2695 = vld [vmem:[%s2 + $0x1f8] sm:$0xff]
    %2696 = vmatprep.subr.mxu0 %v2633
    %2697 = vmatpush1.msra.mxu0 %v2632
    %2698 = vmatprep.subr.mxu0 %v2637
    %2699 = vmatpush1.msra.mxu0 %v2636
    %2700 = vmatprep.subr.mxu0 %v2641
    %2701 = vmatpush1.msra.mxu0 %v2640
    %2702 = vmatprep.subr.mxu0 %v2645
    %2703 = vmatpush1.msra.mxu0 %v2644
    %2704 = vmatprep.subr.mxu0 %v2649
    %2705 = vmatpush1.msra.mxu0 %v2648
    %2706 = vmatprep.subr.mxu0 %v2653
    %2707 = vmatpush1.msra.mxu0 %v2652
    %2708 = vmatprep.subr.mxu0 %v2657
    %2709 = vmatpush1.msra.mxu0 %v2656
    %2710 = vmatprep.subr.mxu0 %v2661
    %2711 = vmatpush1.msra.mxu0 %v2660
    %2712 = vmatprep.subr.mxu0 %v2665
    %2713 = vmatpush1.msra.mxu0 %v2664
    %2714 = vmatprep.subr.mxu0 %v2669
    %2715 = vmatpush1.msra.mxu0 %v2668
    %2716 = vmatprep.subr.mxu0 %v2673
    %2717 = vmatpush1.msra.mxu0 %v2672
    %2718 = vmatprep.subr.mxu0 %v2677
    %2719 = vmatpush1.msra.mxu0 %v2676
    %2720 = vmatprep.subr.mxu0 %v2681
    %2721 = vmatpush1.msra.mxu0 %v2680
    %2722 = vmatprep.subr.mxu0 %v2685
    %2723 = vmatpush1.msra.mxu0 %v2684
    %2724 = vmatprep.subr.mxu0 %v2689
    %2725 = vmatpush1.msra.mxu0 %v2688
    %2726 = vmatprep.subr.mxu0 %v2693
    %2727 = vmatpush1.msra.mxu0 %v2692
    %2728 = vmatprep.subr.mxu0 0.0
    %2729 = vmatpush1.msra.mxu0 0.0
    %2730 = vmatprep.subr.mxu0 0.0
    %2731 = vmatpush1.msra.mxu0 0.0
    %2732 = vmatprep.subr.mxu0 0.0
    %2733 = vmatpush1.msra.mxu0 0.0
    %2734 = vmatprep.subr.mxu0 0.0
    %2735 = vmatpush1.msra.mxu0 0.0
    %2736 = vmatprep.subr.mxu0 0.0
    %2737 = vmatpush1.msra.mxu0 0.0
    %2738 = vmatprep.subr.mxu0 0.0
    %2739 = vmatpush1.msra.mxu0 0.0
    %2740 = vmatprep.subr.mxu0 0.0
    %2741 = vmatpush1.msra.mxu0 0.0
    %2742 = vmatprep.subr.mxu0 0.0
    %2743 = vmatpush1.msra.mxu0 0.0
    %2744 = vmatprep.subr.mxu0 0.0
    %2745 = vmatpush1.msra.mxu0 0.0
    %2746 = vmatprep.subr.mxu0 0.0
    %2747 = vmatpush1.msra.mxu0 0.0
    %2748 = vmatprep.subr.mxu0 0.0
    %2749 = vmatpush1.msra.mxu0 0.0
    %2750 = vmatprep.subr.mxu0 0.0
    %2751 = vmatpush1.msra.mxu0 0.0
    %2752 = vmatprep.subr.mxu0 0.0
    %2753 = vmatpush1.msra.mxu0 0.0
    %2754 = vmatprep.subr.mxu0 0.0
    %2755 = vmatpush1.msra.mxu0 0.0
    %2756 = vmatprep.subr.mxu0 0.0
    %2757 = vmatpush1.msra.mxu0 0.0
    %2758 = vmatprep.subr.mxu0 0.0
    %2759 = vmatpush1.msra.mxu0 0.0
    %2760 = vmatprep.mubr.f32.mxu0 0.0
    %2761 = vmatmul.mubr.f32.gmra.mrb[0].mxu0 %v2624
    %v2762 = vpop.f32.mrb[0].mxu0
    %v2763 = vadd.f32 0.0, %v2762
    %v2764 = vpop.f32.mrb[0].mxu0
    %v2765 = vadd.f32 0.0, %v2764
    %2766 = vdwg.mxu0
    %2767 = vmatprep.subr.mxu0 %v2635
    %2768 = vmatpush1.msra.mxu0 %v2634
    %2769 = vmatprep.subr.mxu0 %v2639
    %2770 = vmatpush1.msra.mxu0 %v2638
    %2771 = vmatprep.subr.mxu0 %v2643
    %2772 = vmatpush1.msra.mxu0 %v2642
    %2773 = vmatprep.subr.mxu0 %v2647
    %2774 = vmatpush1.msra.mxu0 %v2646
    %2775 = vmatprep.subr.mxu0 %v2651
    %2776 = vmatpush1.msra.mxu0 %v2650
    %2777 = vmatprep.subr.mxu0 %v2655
    %2778 = vmatpush1.msra.mxu0 %v2654
    %2779 = vmatprep.subr.mxu0 %v2659
    %2780 = vmatpush1.msra.mxu0 %v2658
    %2781 = vmatprep.subr.mxu0 %v2663
    %2782 = vmatpush1.msra.mxu0 %v2662
    %2783 = vmatprep.subr.mxu0 %v2667
    %2784 = vmatpush1.msra.mxu0 %v2666
    %2785 = vmatprep.subr.mxu0 %v2671
    %2786 = vmatpush1.msra.mxu0 %v2670
    %2787 = vmatprep.subr.mxu0 %v2675
    %2788 = vmatpush1.msra.mxu0 %v2674
    %2789 = vmatprep.subr.mxu0 %v2679
    %2790 = vmatpush1.msra.mxu0 %v2678
    %2791 = vmatprep.subr.mxu0 %v2683
    %2792 = vmatpush1.msra.mxu0 %v2682
    %2793 = vmatprep.subr.mxu0 %v2687
    %2794 = vmatpush1.msra.mxu0 %v2686
    %2795 = vmatprep.subr.mxu0 %v2691
    %2796 = vmatpush1.msra.mxu0 %v2690
    %2797 = vmatprep.subr.mxu0 %v2695
    %2798 = vmatpush1.msra.mxu0 %v2694
    %2799 = vmatprep.subr.mxu0 0.0
    %2800 = vmatpush1.msra.mxu0 0.0
    %2801 = vmatprep.subr.mxu0 0.0
    %2802 = vmatpush1.msra.mxu0 0.0
    %2803 = vmatprep.subr.mxu0 0.0
    %2804 = vmatpush1.msra.mxu0 0.0
    %2805 = vmatprep.subr.mxu0 0.0
    %2806 = vmatpush1.msra.mxu0 0.0
    %2807 = vmatprep.subr.mxu0 0.0
    %2808 = vmatpush1.msra.mxu0 0.0
    %2809 = vmatprep.subr.mxu0 0.0
    %2810 = vmatpush1.msra.mxu0 0.0
    %2811 = vmatprep.subr.mxu0 0.0
    %2812 = vmatpush1.msra.mxu0 0.0
    %2813 = vmatprep.subr.mxu0 0.0
    %2814 = vmatpush1.msra.mxu0 0.0
    %2815 = vmatprep.subr.mxu0 0.0
    %2816 = vmatpush1.msra.mxu0 0.0
    %2817 = vmatprep.subr.mxu0 0.0
    %2818 = vmatpush1.msra.mxu0 0.0
    %2819 = vmatprep.subr.mxu0 0.0
    %2820 = vmatpush1.msra.mxu0 0.0
    %2821 = vmatprep.subr.mxu0 0.0
    %2822 = vmatpush1.msra.mxu0 0.0
    %2823 = vmatprep.subr.mxu0 0.0
    %2824 = vmatpush1.msra.mxu0 0.0
    %2825 = vmatprep.subr.mxu0 0.0
    %2826 = vmatpush1.msra.mxu0 0.0
    %2827 = vmatprep.subr.mxu0 0.0
    %2828 = vmatpush1.msra.mxu0 0.0
    %2829 = vmatprep.subr.mxu0 0.0
    %2830 = vmatpush1.msra.mxu0 0.0
    %2831 = vmatprep.mubr.f32.mxu0 0.0
    %2832 = vmatmul.mubr.f32.gmra.mrb[0].mxu0 %v2624
    %v2833 = vpop.f32.mrb[0].mxu0
    %v2834 = vadd.f32 0.0, %v2833
    %v2835 = vpop.f32.mrb[0].mxu0
    %v2836 = vadd.f32 0.0, %v2835
    %2837 = vdwg.mxu0
    %v2838 = vadd.f32 %v2628, %v2763
    %v2839 = vadd.f32 %v2629, %v2765
    %v2840 = vadd.f32 %v2630, %v2834
    %v2841 = vadd.f32 %v2631, %v2836
    %v2842 = vxor.u32 %v2838, 2147483648
    %v2843 = vmul.f32 %v2842, 1.442695
    %v2844 = vpow.pop %v2843
    %v2845 = vadd.f32 %v2844, 1.0
    %v2846 = vrcp.pop %v2845
    %v2847 = vmul.f32 1.0, %v2846
    %v2848 = vxor.u32 %v2839, 2147483648
    %v2849 = vmul.f32 %v2848, 1.442695
    %v2850 = vpow.pop %v2849
    %v2851 = vadd.f32 %v2850, 1.0
    %v2852 = vrcp.pop %v2851
    %v2853 = vmul.f32 1.0, %v2852
    %v2854 = vtanh.pop %v2840
    %v2855 = vxor.u32 %v2841, 2147483648
    %v2856 = vmul.f32 %v2855, 1.442695
    %v2857 = vpow.pop %v2856
    %v2858 = vadd.f32 %v2857, 1.0
    %v2859 = vrcp.pop %v2858
    %v2860 = vmul.f32 1.0, %v2859
    %v2861 = vmul.f32 %v2853, %v2622
    %v2862 = vmul.f32 %v2847, %v2854
    %v2863 = vadd.f32 %v2861, %v2862
    %v2864 = vtanh.pop %v2863
    %v2865 = vmul.f32 %v2860, %v2864
    %s2866 = scalar_lea.vmem [#allocation4], 56
    %2867 = vst [vmem:[%s2866] sm:$0xff] %v2865
    %s2868 = scalar_lea.vmem [#allocation3], 224
    %v2869 = vld [vmem:[%s2868] sm:$0xff]
    %v2870 = vld [vmem:[%s2868 + $0x8] sm:$0xff]
    %v2871 = vld [vmem:[%s2868 + $0x10] sm:$0xff]
    %v2872 = vld [vmem:[%s2868 + $0x18] sm:$0xff]
    %v2873 = vld [vmem:[#allocation9] sm:$0xff]
    %v2874 = vld [vmem:[#allocation9 + $0x8] sm:$0xff]
    %v2875 = vld [vmem:[#allocation9 + $0x10] sm:$0xff]
    %v2876 = vld [vmem:[#allocation9 + $0x18] sm:$0xff]
    %v2877 = vld [vmem:[#allocation9 + $0x20] sm:$0xff]
    %v2878 = vld [vmem:[#allocation9 + $0x28] sm:$0xff]
    %v2879 = vld [vmem:[#allocation9 + $0x30] sm:$0xff]
    %v2880 = vld [vmem:[#allocation9 + $0x38] sm:$0xff]
    %v2881 = vld [vmem:[#allocation9 + $0x40] sm:$0xff]
    %v2882 = vld [vmem:[#allocation9 + $0x48] sm:$0xff]
    %v2883 = vld [vmem:[#allocation9 + $0x50] sm:$0xff]
    %v2884 = vld [vmem:[#allocation9 + $0x58] sm:$0xff]
    %v2885 = vld [vmem:[#allocation9 + $0x60] sm:$0xff]
    %v2886 = vld [vmem:[#allocation9 + $0x68] sm:$0xff]
    %v2887 = vld [vmem:[#allocation9 + $0x70] sm:$0xff]
    %v2888 = vld [vmem:[#allocation9 + $0x78] sm:$0xff]
    %v2889 = vld [vmem:[#allocation9 + $0x80] sm:$0xff]
    %v2890 = vld [vmem:[#allocation9 + $0x88] sm:$0xff]
    %v2891 = vld [vmem:[#allocation9 + $0x90] sm:$0xff]
    %v2892 = vld [vmem:[#allocation9 + $0x98] sm:$0xff]
    %v2893 = vld [vmem:[#allocation9 + $0xa0] sm:$0xff]
    %v2894 = vld [vmem:[#allocation9 + $0xa8] sm:$0xff]
    %v2895 = vld [vmem:[#allocation9 + $0xb0] sm:$0xff]
    %v2896 = vld [vmem:[#allocation9 + $0xb8] sm:$0xff]
    %v2897 = vld [vmem:[#allocation9 + $0xc0] sm:$0xff]
    %v2898 = vld [vmem:[#allocation9 + $0xc8] sm:$0xff]
    %v2899 = vld [vmem:[#allocation9 + $0xd0] sm:$0xff]
    %v2900 = vld [vmem:[#allocation9 + $0xd8] sm:$0xff]
    %v2901 = vld [vmem:[#allocation9 + $0xe0] sm:$0xff]
    %v2902 = vld [vmem:[#allocation9 + $0xe8] sm:$0xff]
    %v2903 = vld [vmem:[#allocation9 + $0xf0] sm:$0xff]
    %v2904 = vld [vmem:[#allocation9 + $0xf8] sm:$0xff]
    %v2905 = vld [vmem:[#allocation9 + $0x100] sm:$0xff]
    %v2906 = vld [vmem:[#allocation9 + $0x108] sm:$0xff]
    %v2907 = vld [vmem:[#allocation9 + $0x110] sm:$0xff]
    %v2908 = vld [vmem:[#allocation9 + $0x118] sm:$0xff]
    %v2909 = vld [vmem:[#allocation9 + $0x120] sm:$0xff]
    %v2910 = vld [vmem:[#allocation9 + $0x128] sm:$0xff]
    %v2911 = vld [vmem:[#allocation9 + $0x130] sm:$0xff]
    %v2912 = vld [vmem:[#allocation9 + $0x138] sm:$0xff]
    %v2913 = vld [vmem:[#allocation9 + $0x140] sm:$0xff]
    %v2914 = vld [vmem:[#allocation9 + $0x148] sm:$0xff]
    %v2915 = vld [vmem:[#allocation9 + $0x150] sm:$0xff]
    %v2916 = vld [vmem:[#allocation9 + $0x158] sm:$0xff]
    %v2917 = vld [vmem:[#allocation9 + $0x160] sm:$0xff]
    %v2918 = vld [vmem:[#allocation9 + $0x168] sm:$0xff]
    %v2919 = vld [vmem:[#allocation9 + $0x170] sm:$0xff]
    %v2920 = vld [vmem:[#allocation9 + $0x178] sm:$0xff]
    %v2921 = vld [vmem:[#allocation9 + $0x180] sm:$0xff]
    %v2922 = vld [vmem:[#allocation9 + $0x188] sm:$0xff]
    %v2923 = vld [vmem:[#allocation9 + $0x190] sm:$0xff]
    %v2924 = vld [vmem:[#allocation9 + $0x198] sm:$0xff]
    %v2925 = vld [vmem:[#allocation9 + $0x1a0] sm:$0xff]
    %v2926 = vld [vmem:[#allocation9 + $0x1a8] sm:$0xff]
    %v2927 = vld [vmem:[#allocation9 + $0x1b0] sm:$0xff]
    %v2928 = vld [vmem:[#allocation9 + $0x1b8] sm:$0xff]
    %v2929 = vld [vmem:[#allocation9 + $0x1c0] sm:$0xff]
    %v2930 = vld [vmem:[#allocation9 + $0x1c8] sm:$0xff]
    %v2931 = vld [vmem:[#allocation9 + $0x1d0] sm:$0xff]
    %v2932 = vld [vmem:[#allocation9 + $0x1d8] sm:$0xff]
    %v2933 = vld [vmem:[#allocation9 + $0x1e0] sm:$0xff]
    %v2934 = vld [vmem:[#allocation9 + $0x1e8] sm:$0xff]
    %v2935 = vld [vmem:[#allocation9 + $0x1f0] sm:$0xff]
    %v2936 = vld [vmem:[#allocation9 + $0x1f8] sm:$0xff]
    %2937 = vmatprep.subr.mxu0 %v2874
    %2938 = vmatpush1.msra.mxu0 %v2873
    %2939 = vmatprep.subr.mxu0 %v2878
    %2940 = vmatpush1.msra.mxu0 %v2877
    %2941 = vmatprep.subr.mxu0 %v2882
    %2942 = vmatpush1.msra.mxu0 %v2881
    %2943 = vmatprep.subr.mxu0 %v2886
    %2944 = vmatpush1.msra.mxu0 %v2885
    %2945 = vmatprep.subr.mxu0 %v2890
    %2946 = vmatpush1.msra.mxu0 %v2889
    %2947 = vmatprep.subr.mxu0 %v2894
    %2948 = vmatpush1.msra.mxu0 %v2893
    %2949 = vmatprep.subr.mxu0 %v2898
    %2950 = vmatpush1.msra.mxu0 %v2897
    %2951 = vmatprep.subr.mxu0 %v2902
    %2952 = vmatpush1.msra.mxu0 %v2901
    %2953 = vmatprep.subr.mxu0 %v2906
    %2954 = vmatpush1.msra.mxu0 %v2905
    %2955 = vmatprep.subr.mxu0 %v2910
    %2956 = vmatpush1.msra.mxu0 %v2909
    %2957 = vmatprep.subr.mxu0 %v2914
    %2958 = vmatpush1.msra.mxu0 %v2913
    %2959 = vmatprep.subr.mxu0 %v2918
    %2960 = vmatpush1.msra.mxu0 %v2917
    %2961 = vmatprep.subr.mxu0 %v2922
    %2962 = vmatpush1.msra.mxu0 %v2921
    %2963 = vmatprep.subr.mxu0 %v2926
    %2964 = vmatpush1.msra.mxu0 %v2925
    %2965 = vmatprep.subr.mxu0 %v2930
    %2966 = vmatpush1.msra.mxu0 %v2929
    %2967 = vmatprep.subr.mxu0 %v2934
    %2968 = vmatpush1.msra.mxu0 %v2933
    %2969 = vmatprep.subr.mxu0 0.0
    %2970 = vmatpush1.msra.mxu0 0.0
    %2971 = vmatprep.subr.mxu0 0.0
    %2972 = vmatpush1.msra.mxu0 0.0
    %2973 = vmatprep.subr.mxu0 0.0
    %2974 = vmatpush1.msra.mxu0 0.0
    %2975 = vmatprep.subr.mxu0 0.0
    %2976 = vmatpush1.msra.mxu0 0.0
    %2977 = vmatprep.subr.mxu0 0.0
    %2978 = vmatpush1.msra.mxu0 0.0
    %2979 = vmatprep.subr.mxu0 0.0
    %2980 = vmatpush1.msra.mxu0 0.0
    %2981 = vmatprep.subr.mxu0 0.0
    %2982 = vmatpush1.msra.mxu0 0.0
    %2983 = vmatprep.subr.mxu0 0.0
    %2984 = vmatpush1.msra.mxu0 0.0
    %2985 = vmatprep.subr.mxu0 0.0
    %2986 = vmatpush1.msra.mxu0 0.0
    %2987 = vmatprep.subr.mxu0 0.0
    %2988 = vmatpush1.msra.mxu0 0.0
    %2989 = vmatprep.subr.mxu0 0.0
    %2990 = vmatpush1.msra.mxu0 0.0
    %2991 = vmatprep.subr.mxu0 0.0
    %2992 = vmatpush1.msra.mxu0 0.0
    %2993 = vmatprep.subr.mxu0 0.0
    %2994 = vmatpush1.msra.mxu0 0.0
    %2995 = vmatprep.subr.mxu0 0.0
    %2996 = vmatpush1.msra.mxu0 0.0
    %2997 = vmatprep.subr.mxu0 0.0
    %2998 = vmatpush1.msra.mxu0 0.0
    %2999 = vmatprep.subr.mxu0 0.0
    %3000 = vmatpush1.msra.mxu0 0.0
    %3001 = vmatprep.mubr.f32.mxu0 0.0
    %3002 = vmatmul.mubr.f32.gmra.mrb[0].mxu0 0.0
    %v3003 = vpop.f32.mrb[0].mxu0
    %v3004 = vadd.f32 0.0, %v3003
    %v3005 = vpop.f32.mrb[0].mxu0
    %v3006 = vadd.f32 0.0, %v3005
    %3007 = vdwg.mxu0
    %3008 = vmatprep.subr.mxu0 %v2876
    %3009 = vmatpush1.msra.mxu0 %v2875
    %3010 = vmatprep.subr.mxu0 %v2880
    %3011 = vmatpush1.msra.mxu0 %v2879
    %3012 = vmatprep.subr.mxu0 %v2884
    %3013 = vmatpush1.msra.mxu0 %v2883
    %3014 = vmatprep.subr.mxu0 %v2888
    %3015 = vmatpush1.msra.mxu0 %v2887
    %3016 = vmatprep.subr.mxu0 %v2892
    %3017 = vmatpush1.msra.mxu0 %v2891
    %3018 = vmatprep.subr.mxu0 %v2896
    %3019 = vmatpush1.msra.mxu0 %v2895
    %3020 = vmatprep.subr.mxu0 %v2900
    %3021 = vmatpush1.msra.mxu0 %v2899
    %3022 = vmatprep.subr.mxu0 %v2904
    %3023 = vmatpush1.msra.mxu0 %v2903
    %3024 = vmatprep.subr.mxu0 %v2908
    %3025 = vmatpush1.msra.mxu0 %v2907
    %3026 = vmatprep.subr.mxu0 %v2912
    %3027 = vmatpush1.msra.mxu0 %v2911
    %3028 = vmatprep.subr.mxu0 %v2916
    %3029 = vmatpush1.msra.mxu0 %v2915
    %3030 = vmatprep.subr.mxu0 %v2920
    %3031 = vmatpush1.msra.mxu0 %v2919
    %3032 = vmatprep.subr.mxu0 %v2924
    %3033 = vmatpush1.msra.mxu0 %v2923
    %3034 = vmatprep.subr.mxu0 %v2928
    %3035 = vmatpush1.msra.mxu0 %v2927
    %3036 = vmatprep.subr.mxu0 %v2932
    %3037 = vmatpush1.msra.mxu0 %v2931
    %3038 = vmatprep.subr.mxu0 %v2936
    %3039 = vmatpush1.msra.mxu0 %v2935
    %3040 = vmatprep.subr.mxu0 0.0
    %3041 = vmatpush1.msra.mxu0 0.0
    %3042 = vmatprep.subr.mxu0 0.0
    %3043 = vmatpush1.msra.mxu0 0.0
    %3044 = vmatprep.subr.mxu0 0.0
    %3045 = vmatpush1.msra.mxu0 0.0
    %3046 = vmatprep.subr.mxu0 0.0
    %3047 = vmatpush1.msra.mxu0 0.0
    %3048 = vmatprep.subr.mxu0 0.0
    %3049 = vmatpush1.msra.mxu0 0.0
    %3050 = vmatprep.subr.mxu0 0.0
    %3051 = vmatpush1.msra.mxu0 0.0
    %3052 = vmatprep.subr.mxu0 0.0
    %3053 = vmatpush1.msra.mxu0 0.0
    %3054 = vmatprep.subr.mxu0 0.0
    %3055 = vmatpush1.msra.mxu0 0.0
    %3056 = vmatprep.subr.mxu0 0.0
    %3057 = vmatpush1.msra.mxu0 0.0
    %3058 = vmatprep.subr.mxu0 0.0
    %3059 = vmatpush1.msra.mxu0 0.0
    %3060 = vmatprep.subr.mxu0 0.0
    %3061 = vmatpush1.msra.mxu0 0.0
    %3062 = vmatprep.subr.mxu0 0.0
    %3063 = vmatpush1.msra.mxu0 0.0
    %3064 = vmatprep.subr.mxu0 0.0
    %3065 = vmatpush1.msra.mxu0 0.0
    %3066 = vmatprep.subr.mxu0 0.0
    %3067 = vmatpush1.msra.mxu0 0.0
    %3068 = vmatprep.subr.mxu0 0.0
    %3069 = vmatpush1.msra.mxu0 0.0
    %3070 = vmatprep.subr.mxu0 0.0
    %3071 = vmatpush1.msra.mxu0 0.0
    %3072 = vmatprep.mubr.f32.mxu0 0.0
    %3073 = vmatmul.mubr.f32.gmra.mrb[0].mxu0 0.0
    %v3074 = vpop.f32.mrb[0].mxu0
    %v3075 = vadd.f32 0.0, %v3074
    %v3076 = vpop.f32.mrb[0].mxu0
    %v3077 = vadd.f32 0.0, %v3076
    %3078 = vdwg.mxu0
    %v3079 = vadd.f32 %v2869, %v3004
    %v3080 = vadd.f32 %v2870, %v3006
    %v3081 = vadd.f32 %v2871, %v3075
    %v3082 = vadd.f32 %v2872, %v3077
    %v3083 = vxor.u32 %v3079, 2147483648
    %v3084 = vmul.f32 %v3083, 1.442695
    %v3085 = vpow.pop %v3084
    %v3086 = vadd.f32 %v3085, 1.0
    %v3087 = vrcp.pop %v3086
    %v3088 = vmul.f32 1.0, %v3087
    %v3089 = vxor.u32 %v3080, 2147483648
    %v3090 = vmul.f32 %v3089, 1.442695
    %v3091 = vpow.pop %v3090
    %v3092 = vadd.f32 %v3091, 1.0
    %v3093 = vrcp.pop %v3092
    %v3094 = vmul.f32 1.0, %v3093
    %v3095 = vtanh.pop %v3081
    %v3096 = vxor.u32 %v3082, 2147483648
    %v3097 = vmul.f32 %v3096, 1.442695
    %v3098 = vpow.pop %v3097
    %v3099 = vadd.f32 %v3098, 1.0
    %v3100 = vrcp.pop %v3099
    %v3101 = vmul.f32 1.0, %v3100
    %v3102 = vmul.f32 %v3094, 0.0
    %v3103 = vmul.f32 %v3088, %v3095
    %v3104 = vadd.f32 %v3102, %v3103
    %v3105 = vtanh.pop %v3104
    %v3106 = vmul.f32 %v3101, %v3105
    %s3107 = scalar_lea.vmem [#allocation5], 56
    %3108 = vst [vmem:[%s3107] sm:$0xff] %v3106
    %s3109 = scalar_lea.vmem [#allocation3], 192
    %v3110 = vld [vmem:[%s3109] sm:$0xff]
    %v3111 = vld [vmem:[%s3109 + $0x8] sm:$0xff]
    %v3112 = vld [vmem:[%s3109 + $0x10] sm:$0xff]
    %v3113 = vld [vmem:[%s3109 + $0x18] sm:$0xff]
    %v3114 = vld [vmem:[#allocation9] sm:$0xff]
    %v3115 = vld [vmem:[#allocation9 + $0x8] sm:$0xff]
    %v3116 = vld [vmem:[#allocation9 + $0x10] sm:$0xff]
    %v3117 = vld [vmem:[#allocation9 + $0x18] sm:$0xff]
    %v3118 = vld [vmem:[#allocation9 + $0x20] sm:$0xff]
    %v3119 = vld [vmem:[#allocation9 + $0x28] sm:$0xff]
    %v3120 = vld [vmem:[#allocation9 + $0x30] sm:$0xff]
    %v3121 = vld [vmem:[#allocation9 + $0x38] sm:$0xff]
    %v3122 = vld [vmem:[#allocation9 + $0x40] sm:$0xff]
    %v3123 = vld [vmem:[#allocation9 + $0x48] sm:$0xff]
    %v3124 = vld [vmem:[#allocation9 + $0x50] sm:$0xff]
    %v3125 = vld [vmem:[#allocation9 + $0x58] sm:$0xff]
    %v3126 = vld [vmem:[#allocation9 + $0x60] sm:$0xff]
    %v3127 = vld [vmem:[#allocation9 + $0x68] sm:$0xff]
    %v3128 = vld [vmem:[#allocation9 + $0x70] sm:$0xff]
    %v3129 = vld [vmem:[#allocation9 + $0x78] sm:$0xff]
    %v3130 = vld [vmem:[#allocation9 + $0x80] sm:$0xff]
    %v3131 = vld [vmem:[#allocation9 + $0x88] sm:$0xff]
    %v3132 = vld [vmem:[#allocation9 + $0x90] sm:$0xff]
    %v3133 = vld [vmem:[#allocation9 + $0x98] sm:$0xff]
    %v3134 = vld [vmem:[#allocation9 + $0xa0] sm:$0xff]
    %v3135 = vld [vmem:[#allocation9 + $0xa8] sm:$0xff]
    %v3136 = vld [vmem:[#allocation9 + $0xb0] sm:$0xff]
    %v3137 = vld [vmem:[#allocation9 + $0xb8] sm:$0xff]
    %v3138 = vld [vmem:[#allocation9 + $0xc0] sm:$0xff]
    %v3139 = vld [vmem:[#allocation9 + $0xc8] sm:$0xff]
    %v3140 = vld [vmem:[#allocation9 + $0xd0] sm:$0xff]
    %v3141 = vld [vmem:[#allocation9 + $0xd8] sm:$0xff]
    %v3142 = vld [vmem:[#allocation9 + $0xe0] sm:$0xff]
    %v3143 = vld [vmem:[#allocation9 + $0xe8] sm:$0xff]
    %v3144 = vld [vmem:[#allocation9 + $0xf0] sm:$0xff]
    %v3145 = vld [vmem:[#allocation9 + $0xf8] sm:$0xff]
    %v3146 = vld [vmem:[#allocation9 + $0x100] sm:$0xff]
    %v3147 = vld [vmem:[#allocation9 + $0x108] sm:$0xff]
    %v3148 = vld [vmem:[#allocation9 + $0x110] sm:$0xff]
    %v3149 = vld [vmem:[#allocation9 + $0x118] sm:$0xff]
    %v3150 = vld [vmem:[#allocation9 + $0x120] sm:$0xff]
    %v3151 = vld [vmem:[#allocation9 + $0x128] sm:$0xff]
    %v3152 = vld [vmem:[#allocation9 + $0x130] sm:$0xff]
    %v3153 = vld [vmem:[#allocation9 + $0x138] sm:$0xff]
    %v3154 = vld [vmem:[#allocation9 + $0x140] sm:$0xff]
    %v3155 = vld [vmem:[#allocation9 + $0x148] sm:$0xff]
    %v3156 = vld [vmem:[#allocation9 + $0x150] sm:$0xff]
    %v3157 = vld [vmem:[#allocation9 + $0x158] sm:$0xff]
    %v3158 = vld [vmem:[#allocation9 + $0x160] sm:$0xff]
    %v3159 = vld [vmem:[#allocation9 + $0x168] sm:$0xff]
    %v3160 = vld [vmem:[#allocation9 + $0x170] sm:$0xff]
    %v3161 = vld [vmem:[#allocation9 + $0x178] sm:$0xff]
    %v3162 = vld [vmem:[#allocation9 + $0x180] sm:$0xff]
    %v3163 = vld [vmem:[#allocation9 + $0x188] sm:$0xff]
    %v3164 = vld [vmem:[#allocation9 + $0x190] sm:$0xff]
    %v3165 = vld [vmem:[#allocation9 + $0x198] sm:$0xff]
    %v3166 = vld [vmem:[#allocation9 + $0x1a0] sm:$0xff]
    %v3167 = vld [vmem:[#allocation9 + $0x1a8] sm:$0xff]
    %v3168 = vld [vmem:[#allocation9 + $0x1b0] sm:$0xff]
    %v3169 = vld [vmem:[#allocation9 + $0x1b8] sm:$0xff]
    %v3170 = vld [vmem:[#allocation9 + $0x1c0] sm:$0xff]
    %v3171 = vld [vmem:[#allocation9 + $0x1c8] sm:$0xff]
    %v3172 = vld [vmem:[#allocation9 + $0x1d0] sm:$0xff]
    %v3173 = vld [vmem:[#allocation9 + $0x1d8] sm:$0xff]
    %v3174 = vld [vmem:[#allocation9 + $0x1e0] sm:$0xff]
    %v3175 = vld [vmem:[#allocation9 + $0x1e8] sm:$0xff]
    %v3176 = vld [vmem:[#allocation9 + $0x1f0] sm:$0xff]
    %v3177 = vld [vmem:[#allocation9 + $0x1f8] sm:$0xff]
    %3178 = vmatprep.subr.mxu0 %v3115
    %3179 = vmatpush1.msra.mxu0 %v3114
    %3180 = vmatprep.subr.mxu0 %v3119
    %3181 = vmatpush1.msra.mxu0 %v3118
    %3182 = vmatprep.subr.mxu0 %v3123
    %3183 = vmatpush1.msra.mxu0 %v3122
    %3184 = vmatprep.subr.mxu0 %v3127
    %3185 = vmatpush1.msra.mxu0 %v3126
    %3186 = vmatprep.subr.mxu0 %v3131
    %3187 = vmatpush1.msra.mxu0 %v3130
    %3188 = vmatprep.subr.mxu0 %v3135
    %3189 = vmatpush1.msra.mxu0 %v3134
    %3190 = vmatprep.subr.mxu0 %v3139
    %3191 = vmatpush1.msra.mxu0 %v3138
    %3192 = vmatprep.subr.mxu0 %v3143
    %3193 = vmatpush1.msra.mxu0 %v3142
    %3194 = vmatprep.subr.mxu0 %v3147
    %3195 = vmatpush1.msra.mxu0 %v3146
    %3196 = vmatprep.subr.mxu0 %v3151
    %3197 = vmatpush1.msra.mxu0 %v3150
    %3198 = vmatprep.subr.mxu0 %v3155
    %3199 = vmatpush1.msra.mxu0 %v3154
    %3200 = vmatprep.subr.mxu0 %v3159
    %3201 = vmatpush1.msra.mxu0 %v3158
    %3202 = vmatprep.subr.mxu0 %v3163
    %3203 = vmatpush1.msra.mxu0 %v3162
    %3204 = vmatprep.subr.mxu0 %v3167
    %3205 = vmatpush1.msra.mxu0 %v3166
    %3206 = vmatprep.subr.mxu0 %v3171
    %3207 = vmatpush1.msra.mxu0 %v3170
    %3208 = vmatprep.subr.mxu0 %v3175
    %3209 = vmatpush1.msra.mxu0 %v3174
    %3210 = vmatprep.subr.mxu0 0.0
    %3211 = vmatpush1.msra.mxu0 0.0
    %3212 = vmatprep.subr.mxu0 0.0
    %3213 = vmatpush1.msra.mxu0 0.0
    %3214 = vmatprep.subr.mxu0 0.0
    %3215 = vmatpush1.msra.mxu0 0.0
    %3216 = vmatprep.subr.mxu0 0.0
    %3217 = vmatpush1.msra.mxu0 0.0
    %3218 = vmatprep.subr.mxu0 0.0
    %3219 = vmatpush1.msra.mxu0 0.0
    %3220 = vmatprep.subr.mxu0 0.0
    %3221 = vmatpush1.msra.mxu0 0.0
    %3222 = vmatprep.subr.mxu0 0.0
    %3223 = vmatpush1.msra.mxu0 0.0
    %3224 = vmatprep.subr.mxu0 0.0
    %3225 = vmatpush1.msra.mxu0 0.0
    %3226 = vmatprep.subr.mxu0 0.0
    %3227 = vmatpush1.msra.mxu0 0.0
    %3228 = vmatprep.subr.mxu0 0.0
    %3229 = vmatpush1.msra.mxu0 0.0
    %3230 = vmatprep.subr.mxu0 0.0
    %3231 = vmatpush1.msra.mxu0 0.0
    %3232 = vmatprep.subr.mxu0 0.0
    %3233 = vmatpush1.msra.mxu0 0.0
    %3234 = vmatprep.subr.mxu0 0.0
    %3235 = vmatpush1.msra.mxu0 0.0
    %3236 = vmatprep.subr.mxu0 0.0
    %3237 = vmatpush1.msra.mxu0 0.0
    %3238 = vmatprep.subr.mxu0 0.0
    %3239 = vmatpush1.msra.mxu0 0.0
    %3240 = vmatprep.subr.mxu0 0.0
    %3241 = vmatpush1.msra.mxu0 0.0
    %3242 = vmatprep.mubr.f32.mxu0 0.0
    %3243 = vmatmul.mubr.f32.gmra.mrb[0].mxu0 %v3106
    %v3244 = vpop.f32.mrb[0].mxu0
    %v3245 = vadd.f32 0.0, %v3244
    %v3246 = vpop.f32.mrb[0].mxu0
    %v3247 = vadd.f32 0.0, %v3246
    %3248 = vdwg.mxu0
    %3249 = vmatprep.subr.mxu0 %v3117
    %3250 = vmatpush1.msra.mxu0 %v3116
    %3251 = vmatprep.subr.mxu0 %v3121
    %3252 = vmatpush1.msra.mxu0 %v3120
    %3253 = vmatprep.subr.mxu0 %v3125
    %3254 = vmatpush1.msra.mxu0 %v3124
    %3255 = vmatprep.subr.mxu0 %v3129
    %3256 = vmatpush1.msra.mxu0 %v3128
    %3257 = vmatprep.subr.mxu0 %v3133
    %3258 = vmatpush1.msra.mxu0 %v3132
    %3259 = vmatprep.subr.mxu0 %v3137
    %3260 = vmatpush1.msra.mxu0 %v3136
    %3261 = vmatprep.subr.mxu0 %v3141
    %3262 = vmatpush1.msra.mxu0 %v3140
    %3263 = vmatprep.subr.mxu0 %v3145
    %3264 = vmatpush1.msra.mxu0 %v3144
    %3265 = vmatprep.subr.mxu0 %v3149
    %3266 = vmatpush1.msra.mxu0 %v3148
    %3267 = vmatprep.subr.mxu0 %v3153
    %3268 = vmatpush1.msra.mxu0 %v3152
    %3269 = vmatprep.subr.mxu0 %v3157
    %3270 = vmatpush1.msra.mxu0 %v3156
    %3271 = vmatprep.subr.mxu0 %v3161
    %3272 = vmatpush1.msra.mxu0 %v3160
    %3273 = vmatprep.subr.mxu0 %v3165
    %3274 = vmatpush1.msra.mxu0 %v3164
    %3275 = vmatprep.subr.mxu0 %v3169
    %3276 = vmatpush1.msra.mxu0 %v3168
    %3277 = vmatprep.subr.mxu0 %v3173
    %3278 = vmatpush1.msra.mxu0 %v3172
    %3279 = vmatprep.subr.mxu0 %v3177
    %3280 = vmatpush1.msra.mxu0 %v3176
    %3281 = vmatprep.subr.mxu0 0.0
    %3282 = vmatpush1.msra.mxu0 0.0
    %3283 = vmatprep.subr.mxu0 0.0
    %3284 = vmatpush1.msra.mxu0 0.0
    %3285 = vmatprep.subr.mxu0 0.0
    %3286 = vmatpush1.msra.mxu0 0.0
    %3287 = vmatprep.subr.mxu0 0.0
    %3288 = vmatpush1.msra.mxu0 0.0
    %3289 = vmatprep.subr.mxu0 0.0
    %3290 = vmatpush1.msra.mxu0 0.0
    %3291 = vmatprep.subr.mxu0 0.0
    %3292 = vmatpush1.msra.mxu0 0.0
    %3293 = vmatprep.subr.mxu0 0.0
    %3294 = vmatpush1.msra.mxu0 0.0
    %3295 = vmatprep.subr.mxu0 0.0
    %3296 = vmatpush1.msra.mxu0 0.0
    %3297 = vmatprep.subr.mxu0 0.0
    %3298 = vmatpush1.msra.mxu0 0.0
    %3299 = vmatprep.subr.mxu0 0.0
    %3300 = vmatpush1.msra.mxu0 0.0
    %3301 = vmatprep.subr.mxu0 0.0
    %3302 = vmatpush1.msra.mxu0 0.0
    %3303 = vmatprep.subr.mxu0 0.0
    %3304 = vmatpush1.msra.mxu0 0.0
    %3305 = vmatprep.subr.mxu0 0.0
    %3306 = vmatpush1.msra.mxu0 0.0
    %3307 = vmatprep.subr.mxu0 0.0
    %3308 = vmatpush1.msra.mxu0 0.0
    %3309 = vmatprep.subr.mxu0 0.0
    %3310 = vmatpush1.msra.mxu0 0.0
    %3311 = vmatprep.subr.mxu0 0.0
    %3312 = vmatpush1.msra.mxu0 0.0
    %3313 = vmatprep.mubr.f32.mxu0 0.0
    %3314 = vmatmul.mubr.f32.gmra.mrb[0].mxu0 %v3106
    %v3315 = vpop.f32.mrb[0].mxu0
    %v3316 = vadd.f32 0.0, %v3315
    %v3317 = vpop.f32.mrb[0].mxu0
    %v3318 = vadd.f32 0.0, %v3317
    %3319 = vdwg.mxu0
    %v3320 = vadd.f32 %v3110, %v3245
    %v3321 = vadd.f32 %v3111, %v3247
    %v3322 = vadd.f32 %v3112, %v3316
    %v3323 = vadd.f32 %v3113, %v3318
    %v3324 = vxor.u32 %v3320, 2147483648
    %v3325 = vmul.f32 %v3324, 1.442695
    %v3326 = vpow.pop %v3325
    %v3327 = vadd.f32 %v3326, 1.0
    %v3328 = vrcp.pop %v3327
    %v3329 = vmul.f32 1.0, %v3328
    %v3330 = vxor.u32 %v3321, 2147483648
    %v3331 = vmul.f32 %v3330, 1.442695
    %v3332 = vpow.pop %v3331
    %v3333 = vadd.f32 %v3332, 1.0
    %v3334 = vrcp.pop %v3333
    %v3335 = vmul.f32 1.0, %v3334
    %v3336 = vtanh.pop %v3322
    %v3337 = vxor.u32 %v3323, 2147483648
    %v3338 = vmul.f32 %v3337, 1.442695
    %v3339 = vpow.pop %v3338
    %v3340 = vadd.f32 %v3339, 1.0
    %v3341 = vrcp.pop %v3340
    %v3342 = vmul.f32 1.0, %v3341
    %v3343 = vmul.f32 %v3335, %v3104
    %v3344 = vmul.f32 %v3329, %v3336
    %v3345 = vadd.f32 %v3343, %v3344
    %v3346 = vtanh.pop %v3345
    %v3347 = vmul.f32 %v3342, %v3346
    %s3348 = scalar_lea.vmem [#allocation5], 48
    %3349 = vst [vmem:[%s3348] sm:$0xff] %v3347
    %s3350 = scalar_lea.vmem [#allocation3], 160
    %v3351 = vld [vmem:[%s3350] sm:$0xff]
    %v3352 = vld [vmem:[%s3350 + $0x8] sm:$0xff]
    %v3353 = vld [vmem:[%s3350 + $0x10] sm:$0xff]
    %v3354 = vld [vmem:[%s3350 + $0x18] sm:$0xff]
    %v3355 = vld [vmem:[#allocation9] sm:$0xff]
    %v3356 = vld [vmem:[#allocation9 + $0x8] sm:$0xff]
    %v3357 = vld [vmem:[#allocation9 + $0x10] sm:$0xff]
    %v3358 = vld [vmem:[#allocation9 + $0x18] sm:$0xff]
    %v3359 = vld [vmem:[#allocation9 + $0x20] sm:$0xff]
    %v3360 = vld [vmem:[#allocation9 + $0x28] sm:$0xff]
    %v3361 = vld [vmem:[#allocation9 + $0x30] sm:$0xff]
    %v3362 = vld [vmem:[#allocation9 + $0x38] sm:$0xff]
    %v3363 = vld [vmem:[#allocation9 + $0x40] sm:$0xff]
    %v3364 = vld [vmem:[#allocation9 + $0x48] sm:$0xff]
    %v3365 = vld [vmem:[#allocation9 + $0x50] sm:$0xff]
    %v3366 = vld [vmem:[#allocation9 + $0x58] sm:$0xff]
    %v3367 = vld [vmem:[#allocation9 + $0x60] sm:$0xff]
    %v3368 = vld [vmem:[#allocation9 + $0x68] sm:$0xff]
    %v3369 = vld [vmem:[#allocation9 + $0x70] sm:$0xff]
    %v3370 = vld [vmem:[#allocation9 + $0x78] sm:$0xff]
    %v3371 = vld [vmem:[#allocation9 + $0x80] sm:$0xff]
    %v3372 = vld [vmem:[#allocation9 + $0x88] sm:$0xff]
    %v3373 = vld [vmem:[#allocation9 + $0x90] sm:$0xff]
    %v3374 = vld [vmem:[#allocation9 + $0x98] sm:$0xff]
    %v3375 = vld [vmem:[#allocation9 + $0xa0] sm:$0xff]
    %v3376 = vld [vmem:[#allocation9 + $0xa8] sm:$0xff]
    %v3377 = vld [vmem:[#allocation9 + $0xb0] sm:$0xff]
    %v3378 = vld [vmem:[#allocation9 + $0xb8] sm:$0xff]
    %v3379 = vld [vmem:[#allocation9 + $0xc0] sm:$0xff]
    %v3380 = vld [vmem:[#allocation9 + $0xc8] sm:$0xff]
    %v3381 = vld [vmem:[#allocation9 + $0xd0] sm:$0xff]
    %v3382 = vld [vmem:[#allocation9 + $0xd8] sm:$0xff]
    %v3383 = vld [vmem:[#allocation9 + $0xe0] sm:$0xff]
    %v3384 = vld [vmem:[#allocation9 + $0xe8] sm:$0xff]
    %v3385 = vld [vmem:[#allocation9 + $0xf0] sm:$0xff]
    %v3386 = vld [vmem:[#allocation9 + $0xf8] sm:$0xff]
    %v3387 = vld [vmem:[#allocation9 + $0x100] sm:$0xff]
    %v3388 = vld [vmem:[#allocation9 + $0x108] sm:$0xff]
    %v3389 = vld [vmem:[#allocation9 + $0x110] sm:$0xff]
    %v3390 = vld [vmem:[#allocation9 + $0x118] sm:$0xff]
    %v3391 = vld [vmem:[#allocation9 + $0x120] sm:$0xff]
    %v3392 = vld [vmem:[#allocation9 + $0x128] sm:$0xff]
    %v3393 = vld [vmem:[#allocation9 + $0x130] sm:$0xff]
    %v3394 = vld [vmem:[#allocation9 + $0x138] sm:$0xff]
    %v3395 = vld [vmem:[#allocation9 + $0x140] sm:$0xff]
    %v3396 = vld [vmem:[#allocation9 + $0x148] sm:$0xff]
    %v3397 = vld [vmem:[#allocation9 + $0x150] sm:$0xff]
    %v3398 = vld [vmem:[#allocation9 + $0x158] sm:$0xff]
    %v3399 = vld [vmem:[#allocation9 + $0x160] sm:$0xff]
    %v3400 = vld [vmem:[#allocation9 + $0x168] sm:$0xff]
    %v3401 = vld [vmem:[#allocation9 + $0x170] sm:$0xff]
    %v3402 = vld [vmem:[#allocation9 + $0x178] sm:$0xff]
    %v3403 = vld [vmem:[#allocation9 + $0x180] sm:$0xff]
    %v3404 = vld [vmem:[#allocation9 + $0x188] sm:$0xff]
    %v3405 = vld [vmem:[#allocation9 + $0x190] sm:$0xff]
    %v3406 = vld [vmem:[#allocation9 + $0x198] sm:$0xff]
    %v3407 = vld [vmem:[#allocation9 + $0x1a0] sm:$0xff]
    %v3408 = vld [vmem:[#allocation9 + $0x1a8] sm:$0xff]
    %v3409 = vld [vmem:[#allocation9 + $0x1b0] sm:$0xff]
    %v3410 = vld [vmem:[#allocation9 + $0x1b8] sm:$0xff]
    %v3411 = vld [vmem:[#allocation9 + $0x1c0] sm:$0xff]
    %v3412 = vld [vmem:[#allocation9 + $0x1c8] sm:$0xff]
    %v3413 = vld [vmem:[#allocation9 + $0x1d0] sm:$0xff]
    %v3414 = vld [vmem:[#allocation9 + $0x1d8] sm:$0xff]
    %v3415 = vld [vmem:[#allocation9 + $0x1e0] sm:$0xff]
    %v3416 = vld [vmem:[#allocation9 + $0x1e8] sm:$0xff]
    %v3417 = vld [vmem:[#allocation9 + $0x1f0] sm:$0xff]
    %v3418 = vld [vmem:[#allocation9 + $0x1f8] sm:$0xff]
    %3419 = vmatprep.subr.mxu0 %v3356
    %3420 = vmatpush1.msra.mxu0 %v3355
    %3421 = vmatprep.subr.mxu0 %v3360
    %3422 = vmatpush1.msra.mxu0 %v3359
    %3423 = vmatprep.subr.mxu0 %v3364
    %3424 = vmatpush1.msra.mxu0 %v3363
    %3425 = vmatprep.subr.mxu0 %v3368
    %3426 = vmatpush1.msra.mxu0 %v3367
    %3427 = vmatprep.subr.mxu0 %v3372
    %3428 = vmatpush1.msra.mxu0 %v3371
    %3429 = vmatprep.subr.mxu0 %v3376
    %3430 = vmatpush1.msra.mxu0 %v3375
    %3431 = vmatprep.subr.mxu0 %v3380
    %3432 = vmatpush1.msra.mxu0 %v3379
    %3433 = vmatprep.subr.mxu0 %v3384
    %3434 = vmatpush1.msra.mxu0 %v3383
    %3435 = vmatprep.subr.mxu0 %v3388
    %3436 = vmatpush1.msra.mxu0 %v3387
    %3437 = vmatprep.subr.mxu0 %v3392
    %3438 = vmatpush1.msra.mxu0 %v3391
    %3439 = vmatprep.subr.mxu0 %v3396
    %3440 = vmatpush1.msra.mxu0 %v3395
    %3441 = vmatprep.subr.mxu0 %v3400
    %3442 = vmatpush1.msra.mxu0 %v3399
    %3443 = vmatprep.subr.mxu0 %v3404
    %3444 = vmatpush1.msra.mxu0 %v3403
    %3445 = vmatprep.subr.mxu0 %v3408
    %3446 = vmatpush1.msra.mxu0 %v3407
    %3447 = vmatprep.subr.mxu0 %v3412
    %3448 = vmatpush1.msra.mxu0 %v3411
    %3449 = vmatprep.subr.mxu0 %v3416
    %3450 = vmatpush1.msra.mxu0 %v3415
    %3451 = vmatprep.subr.mxu0 0.0
    %3452 = vmatpush1.msra.mxu0 0.0
    %3453 = vmatprep.subr.mxu0 0.0
    %3454 = vmatpush1.msra.mxu0 0.0
    %3455 = vmatprep.subr.mxu0 0.0
    %3456 = vmatpush1.msra.mxu0 0.0
    %3457 = vmatprep.subr.mxu0 0.0
    %3458 = vmatpush1.msra.mxu0 0.0
    %3459 = vmatprep.subr.mxu0 0.0
    %3460 = vmatpush1.msra.mxu0 0.0
    %3461 = vmatprep.subr.mxu0 0.0
    %3462 = vmatpush1.msra.mxu0 0.0
    %3463 = vmatprep.subr.mxu0 0.0
    %3464 = vmatpush1.msra.mxu0 0.0
    %3465 = vmatprep.subr.mxu0 0.0
    %3466 = vmatpush1.msra.mxu0 0.0
    %3467 = vmatprep.subr.mxu0 0.0
    %3468 = vmatpush1.msra.mxu0 0.0
    %3469 = vmatprep.subr.mxu0 0.0
    %3470 = vmatpush1.msra.mxu0 0.0
    %3471 = vmatprep.subr.mxu0 0.0
    %3472 = vmatpush1.msra.mxu0 0.0
    %3473 = vmatprep.subr.mxu0 0.0
    %3474 = vmatpush1.msra.mxu0 0.0
    %3475 = vmatprep.subr.mxu0 0.0
    %3476 = vmatpush1.msra.mxu0 0.0
    %3477 = vmatprep.subr.mxu0 0.0
    %3478 = vmatpush1.msra.mxu0 0.0
    %3479 = vmatprep.subr.mxu0 0.0
    %3480 = vmatpush1.msra.mxu0 0.0
    %3481 = vmatprep.subr.mxu0 0.0
    %3482 = vmatpush1.msra.mxu0 0.0
    %3483 = vmatprep.mubr.f32.mxu0 0.0
    %3484 = vmatmul.mubr.f32.gmra.mrb[0].mxu0 %v3347
    %v3485 = vpop.f32.mrb[0].mxu0
    %v3486 = vadd.f32 0.0, %v3485
    %v3487 = vpop.f32.mrb[0].mxu0
    %v3488 = vadd.f32 0.0, %v3487
    %3489 = vdwg.mxu0
    %3490 = vmatprep.subr.mxu0 %v3358
    %3491 = vmatpush1.msra.mxu0 %v3357
    %3492 = vmatprep.subr.mxu0 %v3362
    %3493 = vmatpush1.msra.mxu0 %v3361
    %3494 = vmatprep.subr.mxu0 %v3366
    %3495 = vmatpush1.msra.mxu0 %v3365
    %3496 = vmatprep.subr.mxu0 %v3370
    %3497 = vmatpush1.msra.mxu0 %v3369
    %3498 = vmatprep.subr.mxu0 %v3374
    %3499 = vmatpush1.msra.mxu0 %v3373
    %3500 = vmatprep.subr.mxu0 %v3378
    %3501 = vmatpush1.msra.mxu0 %v3377
    %3502 = vmatprep.subr.mxu0 %v3382
    %3503 = vmatpush1.msra.mxu0 %v3381
    %3504 = vmatprep.subr.mxu0 %v3386
    %3505 = vmatpush1.msra.mxu0 %v3385
    %3506 = vmatprep.subr.mxu0 %v3390
    %3507 = vmatpush1.msra.mxu0 %v3389
    %3508 = vmatprep.subr.mxu0 %v3394
    %3509 = vmatpush1.msra.mxu0 %v3393
    %3510 = vmatprep.subr.mxu0 %v3398
    %3511 = vmatpush1.msra.mxu0 %v3397
    %3512 = vmatprep.subr.mxu0 %v3402
    %3513 = vmatpush1.msra.mxu0 %v3401
    %3514 = vmatprep.subr.mxu0 %v3406
    %3515 = vmatpush1.msra.mxu0 %v3405
    %3516 = vmatprep.subr.mxu0 %v3410
    %3517 = vmatpush1.msra.mxu0 %v3409
    %3518 = vmatprep.subr.mxu0 %v3414
    %3519 = vmatpush1.msra.mxu0 %v3413
    %3520 = vmatprep.subr.mxu0 %v3418
    %3521 = vmatpush1.msra.mxu0 %v3417
    %3522 = vmatprep.subr.mxu0 0.0
    %3523 = vmatpush1.msra.mxu0 0.0
    %3524 = vmatprep.subr.mxu0 0.0
    %3525 = vmatpush1.msra.mxu0 0.0
    %3526 = vmatprep.subr.mxu0 0.0
    %3527 = vmatpush1.msra.mxu0 0.0
    %3528 = vmatprep.subr.mxu0 0.0
    %3529 = vmatpush1.msra.mxu0 0.0
    %3530 = vmatprep.subr.mxu0 0.0
    %3531 = vmatpush1.msra.mxu0 0.0
    %3532 = vmatprep.subr.mxu0 0.0
    %3533 = vmatpush1.msra.mxu0 0.0
    %3534 = vmatprep.subr.mxu0 0.0
    %3535 = vmatpush1.msra.mxu0 0.0
    %3536 = vmatprep.subr.mxu0 0.0
    %3537 = vmatpush1.msra.mxu0 0.0
    %3538 = vmatprep.subr.mxu0 0.0
    %3539 = vmatpush1.msra.mxu0 0.0
    %3540 = vmatprep.subr.mxu0 0.0
    %3541 = vmatpush1.msra.mxu0 0.0
    %3542 = vmatprep.subr.mxu0 0.0
    %3543 = vmatpush1.msra.mxu0 0.0
    %3544 = vmatprep.subr.mxu0 0.0
    %3545 = vmatpush1.msra.mxu0 0.0
    %3546 = vmatprep.subr.mxu0 0.0
    %3547 = vmatpush1.msra.mxu0 0.0
    %3548 = vmatprep.subr.mxu0 0.0
    %3549 = vmatpush1.msra.mxu0 0.0
    %3550 = vmatprep.subr.mxu0 0.0
    %3551 = vmatpush1.msra.mxu0 0.0
    %3552 = vmatprep.subr.mxu0 0.0
    %3553 = vmatpush1.msra.mxu0 0.0
    %3554 = vmatprep.mubr.f32.mxu0 0.0
    %3555 = vmatmul.mubr.f32.gmra.mrb[0].mxu0 %v3347
    %v3556 = vpop.f32.mrb[0].mxu0
    %v3557 = vadd.f32 0.0, %v3556
    %v3558 = vpop.f32.mrb[0].mxu0
    %v3559 = vadd.f32 0.0, %v3558
    %3560 = vdwg.mxu0
    %v3561 = vadd.f32 %v3351, %v3486
    %v3562 = vadd.f32 %v3352, %v3488
    %v3563 = vadd.f32 %v3353, %v3557
    %v3564 = vadd.f32 %v3354, %v3559
    %v3565 = vxor.u32 %v3561, 2147483648
    %v3566 = vmul.f32 %v3565, 1.442695
    %v3567 = vpow.pop %v3566
    %v3568 = vadd.f32 %v3567, 1.0
    %v3569 = vrcp.pop %v3568
    %v3570 = vmul.f32 1.0, %v3569
    %v3571 = vxor.u32 %v3562, 2147483648
    %v3572 = vmul.f32 %v3571, 1.442695
    %v3573 = vpow.pop %v3572
    %v3574 = vadd.f32 %v3573, 1.0
    %v3575 = vrcp.pop %v3574
    %v3576 = vmul.f32 1.0, %v3575
    %v3577 = vtanh.pop %v3563
    %v3578 = vxor.u32 %v3564, 2147483648
    %v3579 = vmul.f32 %v3578, 1.442695
    %v3580 = vpow.pop %v3579
    %v3581 = vadd.f32 %v3580, 1.0
    %v3582 = vrcp.pop %v3581
    %v3583 = vmul.f32 1.0, %v3582
    %v3584 = vmul.f32 %v3576, %v3345
    %v3585 = vmul.f32 %v3570, %v3577
    %v3586 = vadd.f32 %v3584, %v3585
    %v3587 = vtanh.pop %v3586
    %v3588 = vmul.f32 %v3583, %v3587
    %s3589 = scalar_lea.vmem [#allocation5], 40
    %3590 = vst [vmem:[%s3589] sm:$0xff] %v3588
    %s3591 = scalar_lea.vmem [#allocation3], 128
    %v3592 = vld [vmem:[%s3591] sm:$0xff]
    %v3593 = vld [vmem:[%s3591 + $0x8] sm:$0xff]
    %v3594 = vld [vmem:[%s3591 + $0x10] sm:$0xff]
    %v3595 = vld [vmem:[%s3591 + $0x18] sm:$0xff]
    %v3596 = vld [vmem:[#allocation9] sm:$0xff]
    %v3597 = vld [vmem:[#allocation9 + $0x8] sm:$0xff]
    %v3598 = vld [vmem:[#allocation9 + $0x10] sm:$0xff]
    %v3599 = vld [vmem:[#allocation9 + $0x18] sm:$0xff]
    %v3600 = vld [vmem:[#allocation9 + $0x20] sm:$0xff]
    %v3601 = vld [vmem:[#allocation9 + $0x28] sm:$0xff]
    %v3602 = vld [vmem:[#allocation9 + $0x30] sm:$0xff]
    %v3603 = vld [vmem:[#allocation9 + $0x38] sm:$0xff]
    %v3604 = vld [vmem:[#allocation9 + $0x40] sm:$0xff]
    %v3605 = vld [vmem:[#allocation9 + $0x48] sm:$0xff]
    %v3606 = vld [vmem:[#allocation9 + $0x50] sm:$0xff]
    %v3607 = vld [vmem:[#allocation9 + $0x58] sm:$0xff]
    %v3608 = vld [vmem:[#allocation9 + $0x60] sm:$0xff]
    %v3609 = vld [vmem:[#allocation9 + $0x68] sm:$0xff]
    %v3610 = vld [vmem:[#allocation9 + $0x70] sm:$0xff]
    %v3611 = vld [vmem:[#allocation9 + $0x78] sm:$0xff]
    %v3612 = vld [vmem:[#allocation9 + $0x80] sm:$0xff]
    %v3613 = vld [vmem:[#allocation9 + $0x88] sm:$0xff]
    %v3614 = vld [vmem:[#allocation9 + $0x90] sm:$0xff]
    %v3615 = vld [vmem:[#allocation9 + $0x98] sm:$0xff]
    %v3616 = vld [vmem:[#allocation9 + $0xa0] sm:$0xff]
    %v3617 = vld [vmem:[#allocation9 + $0xa8] sm:$0xff]
    %v3618 = vld [vmem:[#allocation9 + $0xb0] sm:$0xff]
    %v3619 = vld [vmem:[#allocation9 + $0xb8] sm:$0xff]
    %v3620 = vld [vmem:[#allocation9 + $0xc0] sm:$0xff]
    %v3621 = vld [vmem:[#allocation9 + $0xc8] sm:$0xff]
    %v3622 = vld [vmem:[#allocation9 + $0xd0] sm:$0xff]
    %v3623 = vld [vmem:[#allocation9 + $0xd8] sm:$0xff]
    %v3624 = vld [vmem:[#allocation9 + $0xe0] sm:$0xff]
    %v3625 = vld [vmem:[#allocation9 + $0xe8] sm:$0xff]
    %v3626 = vld [vmem:[#allocation9 + $0xf0] sm:$0xff]
    %v3627 = vld [vmem:[#allocation9 + $0xf8] sm:$0xff]
    %v3628 = vld [vmem:[#allocation9 + $0x100] sm:$0xff]
    %v3629 = vld [vmem:[#allocation9 + $0x108] sm:$0xff]
    %v3630 = vld [vmem:[#allocation9 + $0x110] sm:$0xff]
    %v3631 = vld [vmem:[#allocation9 + $0x118] sm:$0xff]
    %v3632 = vld [vmem:[#allocation9 + $0x120] sm:$0xff]
    %v3633 = vld [vmem:[#allocation9 + $0x128] sm:$0xff]
    %v3634 = vld [vmem:[#allocation9 + $0x130] sm:$0xff]
    %v3635 = vld [vmem:[#allocation9 + $0x138] sm:$0xff]
    %v3636 = vld [vmem:[#allocation9 + $0x140] sm:$0xff]
    %v3637 = vld [vmem:[#allocation9 + $0x148] sm:$0xff]
    %v3638 = vld [vmem:[#allocation9 + $0x150] sm:$0xff]
    %v3639 = vld [vmem:[#allocation9 + $0x158] sm:$0xff]
    %v3640 = vld [vmem:[#allocation9 + $0x160] sm:$0xff]
    %v3641 = vld [vmem:[#allocation9 + $0x168] sm:$0xff]
    %v3642 = vld [vmem:[#allocation9 + $0x170] sm:$0xff]
    %v3643 = vld [vmem:[#allocation9 + $0x178] sm:$0xff]
    %v3644 = vld [vmem:[#allocation9 + $0x180] sm:$0xff]
    %v3645 = vld [vmem:[#allocation9 + $0x188] sm:$0xff]
    %v3646 = vld [vmem:[#allocation9 + $0x190] sm:$0xff]
    %v3647 = vld [vmem:[#allocation9 + $0x198] sm:$0xff]
    %v3648 = vld [vmem:[#allocation9 + $0x1a0] sm:$0xff]
    %v3649 = vld [vmem:[#allocation9 + $0x1a8] sm:$0xff]
    %v3650 = vld [vmem:[#allocation9 + $0x1b0] sm:$0xff]
    %v3651 = vld [vmem:[#allocation9 + $0x1b8] sm:$0xff]
    %v3652 = vld [vmem:[#allocation9 + $0x1c0] sm:$0xff]
    %v3653 = vld [vmem:[#allocation9 + $0x1c8] sm:$0xff]
    %v3654 = vld [vmem:[#allocation9 + $0x1d0] sm:$0xff]
    %v3655 = vld [vmem:[#allocation9 + $0x1d8] sm:$0xff]
    %v3656 = vld [vmem:[#allocation9 + $0x1e0] sm:$0xff]
    %v3657 = vld [vmem:[#allocation9 + $0x1e8] sm:$0xff]
    %v3658 = vld [vmem:[#allocation9 + $0x1f0] sm:$0xff]
    %v3659 = vld [vmem:[#allocation9 + $0x1f8] sm:$0xff]
    %3660 = vmatprep.subr.mxu0 %v3597
    %3661 = vmatpush1.msra.mxu0 %v3596
    %3662 = vmatprep.subr.mxu0 %v3601
    %3663 = vmatpush1.msra.mxu0 %v3600
    %3664 = vmatprep.subr.mxu0 %v3605
    %3665 = vmatpush1.msra.mxu0 %v3604
    %3666 = vmatprep.subr.mxu0 %v3609
    %3667 = vmatpush1.msra.mxu0 %v3608
    %3668 = vmatprep.subr.mxu0 %v3613
    %3669 = vmatpush1.msra.mxu0 %v3612
    %3670 = vmatprep.subr.mxu0 %v3617
    %3671 = vmatpush1.msra.mxu0 %v3616
    %3672 = vmatprep.subr.mxu0 %v3621
    %3673 = vmatpush1.msra.mxu0 %v3620
    %3674 = vmatprep.subr.mxu0 %v3625
    %3675 = vmatpush1.msra.mxu0 %v3624
    %3676 = vmatprep.subr.mxu0 %v3629
    %3677 = vmatpush1.msra.mxu0 %v3628
    %3678 = vmatprep.subr.mxu0 %v3633
    %3679 = vmatpush1.msra.mxu0 %v3632
    %3680 = vmatprep.subr.mxu0 %v3637
    %3681 = vmatpush1.msra.mxu0 %v3636
    %3682 = vmatprep.subr.mxu0 %v3641
    %3683 = vmatpush1.msra.mxu0 %v3640
    %3684 = vmatprep.subr.mxu0 %v3645
    %3685 = vmatpush1.msra.mxu0 %v3644
    %3686 = vmatprep.subr.mxu0 %v3649
    %3687 = vmatpush1.msra.mxu0 %v3648
    %3688 = vmatprep.subr.mxu0 %v3653
    %3689 = vmatpush1.msra.mxu0 %v3652
    %3690 = vmatprep.subr.mxu0 %v3657
    %3691 = vmatpush1.msra.mxu0 %v3656
    %3692 = vmatprep.subr.mxu0 0.0
    %3693 = vmatpush1.msra.mxu0 0.0
    %3694 = vmatprep.subr.mxu0 0.0
    %3695 = vmatpush1.msra.mxu0 0.0
    %3696 = vmatprep.subr.mxu0 0.0
    %3697 = vmatpush1.msra.mxu0 0.0
    %3698 = vmatprep.subr.mxu0 0.0
    %3699 = vmatpush1.msra.mxu0 0.0
    %3700 = vmatprep.subr.mxu0 0.0
    %3701 = vmatpush1.msra.mxu0 0.0
    %3702 = vmatprep.subr.mxu0 0.0
    %3703 = vmatpush1.msra.mxu0 0.0
    %3704 = vmatprep.subr.mxu0 0.0
    %3705 = vmatpush1.msra.mxu0 0.0
    %3706 = vmatprep.subr.mxu0 0.0
    %3707 = vmatpush1.msra.mxu0 0.0
    %3708 = vmatprep.subr.mxu0 0.0
    %3709 = vmatpush1.msra.mxu0 0.0
    %3710 = vmatprep.subr.mxu0 0.0
    %3711 = vmatpush1.msra.mxu0 0.0
    %3712 = vmatprep.subr.mxu0 0.0
    %3713 = vmatpush1.msra.mxu0 0.0
    %3714 = vmatprep.subr.mxu0 0.0
    %3715 = vmatpush1.msra.mxu0 0.0
    %3716 = vmatprep.subr.mxu0 0.0
    %3717 = vmatpush1.msra.mxu0 0.0
    %3718 = vmatprep.subr.mxu0 0.0
    %3719 = vmatpush1.msra.mxu0 0.0
    %3720 = vmatprep.subr.mxu0 0.0
    %3721 = vmatpush1.msra.mxu0 0.0
    %3722 = vmatprep.subr.mxu0 0.0
    %3723 = vmatpush1.msra.mxu0 0.0
    %3724 = vmatprep.mubr.f32.mxu0 0.0
    %3725 = vmatmul.mubr.f32.gmra.mrb[0].mxu0 %v3588
    %v3726 = vpop.f32.mrb[0].mxu0
    %v3727 = vadd.f32 0.0, %v3726
    %v3728 = vpop.f32.mrb[0].mxu0
    %v3729 = vadd.f32 0.0, %v3728
    %3730 = vdwg.mxu0
    %3731 = vmatprep.subr.mxu0 %v3599
    %3732 = vmatpush1.msra.mxu0 %v3598
    %3733 = vmatprep.subr.mxu0 %v3603
    %3734 = vmatpush1.msra.mxu0 %v3602
    %3735 = vmatprep.subr.mxu0 %v3607
    %3736 = vmatpush1.msra.mxu0 %v3606
    %3737 = vmatprep.subr.mxu0 %v3611
    %3738 = vmatpush1.msra.mxu0 %v3610
    %3739 = vmatprep.subr.mxu0 %v3615
    %3740 = vmatpush1.msra.mxu0 %v3614
    %3741 = vmatprep.subr.mxu0 %v3619
    %3742 = vmatpush1.msra.mxu0 %v3618
    %3743 = vmatprep.subr.mxu0 %v3623
    %3744 = vmatpush1.msra.mxu0 %v3622
    %3745 = vmatprep.subr.mxu0 %v3627
    %3746 = vmatpush1.msra.mxu0 %v3626
    %3747 = vmatprep.subr.mxu0 %v3631
    %3748 = vmatpush1.msra.mxu0 %v3630
    %3749 = vmatprep.subr.mxu0 %v3635
    %3750 = vmatpush1.msra.mxu0 %v3634
    %3751 = vmatprep.subr.mxu0 %v3639
    %3752 = vmatpush1.msra.mxu0 %v3638
    %3753 = vmatprep.subr.mxu0 %v3643
    %3754 = vmatpush1.msra.mxu0 %v3642
    %3755 = vmatprep.subr.mxu0 %v3647
    %3756 = vmatpush1.msra.mxu0 %v3646
    %3757 = vmatprep.subr.mxu0 %v3651
    %3758 = vmatpush1.msra.mxu0 %v3650
    %3759 = vmatprep.subr.mxu0 %v3655
    %3760 = vmatpush1.msra.mxu0 %v3654
    %3761 = vmatprep.subr.mxu0 %v3659
    %3762 = vmatpush1.msra.mxu0 %v3658
    %3763 = vmatprep.subr.mxu0 0.0
    %3764 = vmatpush1.msra.mxu0 0.0
    %3765 = vmatprep.subr.mxu0 0.0
    %3766 = vmatpush1.msra.mxu0 0.0
    %3767 = vmatprep.subr.mxu0 0.0
    %3768 = vmatpush1.msra.mxu0 0.0
    %3769 = vmatprep.subr.mxu0 0.0
    %3770 = vmatpush1.msra.mxu0 0.0
    %3771 = vmatprep.subr.mxu0 0.0
    %3772 = vmatpush1.msra.mxu0 0.0
    %3773 = vmatprep.subr.mxu0 0.0
    %3774 = vmatpush1.msra.mxu0 0.0
    %3775 = vmatprep.subr.mxu0 0.0
    %3776 = vmatpush1.msra.mxu0 0.0
    %3777 = vmatprep.subr.mxu0 0.0
    %3778 = vmatpush1.msra.mxu0 0.0
    %3779 = vmatprep.subr.mxu0 0.0
    %3780 = vmatpush1.msra.mxu0 0.0
    %3781 = vmatprep.subr.mxu0 0.0
    %3782 = vmatpush1.msra.mxu0 0.0
    %3783 = vmatprep.subr.mxu0 0.0
    %3784 = vmatpush1.msra.mxu0 0.0
    %3785 = vmatprep.subr.mxu0 0.0
    %3786 = vmatpush1.msra.mxu0 0.0
    %3787 = vmatprep.subr.mxu0 0.0
    %3788 = vmatpush1.msra.mxu0 0.0
    %3789 = vmatprep.subr.mxu0 0.0
    %3790 = vmatpush1.msra.mxu0 0.0
    %3791 = vmatprep.subr.mxu0 0.0
    %3792 = vmatpush1.msra.mxu0 0.0
    %3793 = vmatprep.subr.mxu0 0.0
    %3794 = vmatpush1.msra.mxu0 0.0
    %3795 = vmatprep.mubr.f32.mxu0 0.0
    %3796 = vmatmul.mubr.f32.gmra.mrb[0].mxu0 %v3588
    %v3797 = vpop.f32.mrb[0].mxu0
    %v3798 = vadd.f32 0.0, %v3797
    %v3799 = vpop.f32.mrb[0].mxu0
    %v3800 = vadd.f32 0.0, %v3799
    %3801 = vdwg.mxu0
    %v3802 = vadd.f32 %v3592, %v3727
    %v3803 = vadd.f32 %v3593, %v3729
    %v3804 = vadd.f32 %v3594, %v3798
    %v3805 = vadd.f32 %v3595, %v3800
    %v3806 = vxor.u32 %v3802, 2147483648
    %v3807 = vmul.f32 %v3806, 1.442695
    %v3808 = vpow.pop %v3807
    %v3809 = vadd.f32 %v3808, 1.0
    %v3810 = vrcp.pop %v3809
    %v3811 = vmul.f32 1.0, %v3810
    %v3812 = vxor.u32 %v3803, 2147483648
    %v3813 = vmul.f32 %v3812, 1.442695
    %v3814 = vpow.pop %v3813
    %v3815 = vadd.f32 %v3814, 1.0
    %v3816 = vrcp.pop %v3815
    %v3817 = vmul.f32 1.0, %v3816
    %v3818 = vtanh.pop %v3804
    %v3819 = vxor.u32 %v3805, 2147483648
    %v3820 = vmul.f32 %v3819, 1.442695
    %v3821 = vpow.pop %v3820
    %v3822 = vadd.f32 %v3821, 1.0
    %v3823 = vrcp.pop %v3822
    %v3824 = vmul.f32 1.0, %v3823
    %v3825 = vmul.f32 %v3817, %v3586
    %v3826 = vmul.f32 %v3811, %v3818
    %v3827 = vadd.f32 %v3825, %v3826
    %v3828 = vtanh.pop %v3827
    %v3829 = vmul.f32 %v3824, %v3828
    %s3830 = scalar_lea.vmem [#allocation5], 32
    %3831 = vst [vmem:[%s3830] sm:$0xff] %v3829
    %s3832 = scalar_lea.vmem [#allocation3], 96
    %v3833 = vld [vmem:[%s3832] sm:$0xff]
    %v3834 = vld [vmem:[%s3832 + $0x8] sm:$0xff]
    %v3835 = vld [vmem:[%s3832 + $0x10] sm:$0xff]
    %v3836 = vld [vmem:[%s3832 + $0x18] sm:$0xff]
    %v3837 = vld [vmem:[#allocation9] sm:$0xff]
    %v3838 = vld [vmem:[#allocation9 + $0x8] sm:$0xff]
    %v3839 = vld [vmem:[#allocation9 + $0x10] sm:$0xff]
    %v3840 = vld [vmem:[#allocation9 + $0x18] sm:$0xff]
    %v3841 = vld [vmem:[#allocation9 + $0x20] sm:$0xff]
    %v3842 = vld [vmem:[#allocation9 + $0x28] sm:$0xff]
    %v3843 = vld [vmem:[#allocation9 + $0x30] sm:$0xff]
    %v3844 = vld [vmem:[#allocation9 + $0x38] sm:$0xff]
    %v3845 = vld [vmem:[#allocation9 + $0x40] sm:$0xff]
    %v3846 = vld [vmem:[#allocation9 + $0x48] sm:$0xff]
    %v3847 = vld [vmem:[#allocation9 + $0x50] sm:$0xff]
    %v3848 = vld [vmem:[#allocation9 + $0x58] sm:$0xff]
    %v3849 = vld [vmem:[#allocation9 + $0x60] sm:$0xff]
    %v3850 = vld [vmem:[#allocation9 + $0x68] sm:$0xff]
    %v3851 = vld [vmem:[#allocation9 + $0x70] sm:$0xff]
    %v3852 = vld [vmem:[#allocation9 + $0x78] sm:$0xff]
    %v3853 = vld [vmem:[#allocation9 + $0x80] sm:$0xff]
    %v3854 = vld [vmem:[#allocation9 + $0x88] sm:$0xff]
    %v3855 = vld [vmem:[#allocation9 + $0x90] sm:$0xff]
    %v3856 = vld [vmem:[#allocation9 + $0x98] sm:$0xff]
    %v3857 = vld [vmem:[#allocation9 + $0xa0] sm:$0xff]
    %v3858 = vld [vmem:[#allocation9 + $0xa8] sm:$0xff]
    %v3859 = vld [vmem:[#allocation9 + $0xb0] sm:$0xff]
    %v3860 = vld [vmem:[#allocation9 + $0xb8] sm:$0xff]
    %v3861 = vld [vmem:[#allocation9 + $0xc0] sm:$0xff]
    %v3862 = vld [vmem:[#allocation9 + $0xc8] sm:$0xff]
    %v3863 = vld [vmem:[#allocation9 + $0xd0] sm:$0xff]
    %v3864 = vld [vmem:[#allocation9 + $0xd8] sm:$0xff]
    %v3865 = vld [vmem:[#allocation9 + $0xe0] sm:$0xff]
    %v3866 = vld [vmem:[#allocation9 + $0xe8] sm:$0xff]
    %v3867 = vld [vmem:[#allocation9 + $0xf0] sm:$0xff]
    %v3868 = vld [vmem:[#allocation9 + $0xf8] sm:$0xff]
    %v3869 = vld [vmem:[#allocation9 + $0x100] sm:$0xff]
    %v3870 = vld [vmem:[#allocation9 + $0x108] sm:$0xff]
    %v3871 = vld [vmem:[#allocation9 + $0x110] sm:$0xff]
    %v3872 = vld [vmem:[#allocation9 + $0x118] sm:$0xff]
    %v3873 = vld [vmem:[#allocation9 + $0x120] sm:$0xff]
    %v3874 = vld [vmem:[#allocation9 + $0x128] sm:$0xff]
    %v3875 = vld [vmem:[#allocation9 + $0x130] sm:$0xff]
    %v3876 = vld [vmem:[#allocation9 + $0x138] sm:$0xff]
    %v3877 = vld [vmem:[#allocation9 + $0x140] sm:$0xff]
    %v3878 = vld [vmem:[#allocation9 + $0x148] sm:$0xff]
    %v3879 = vld [vmem:[#allocation9 + $0x150] sm:$0xff]
    %v3880 = vld [vmem:[#allocation9 + $0x158] sm:$0xff]
    %v3881 = vld [vmem:[#allocation9 + $0x160] sm:$0xff]
    %v3882 = vld [vmem:[#allocation9 + $0x168] sm:$0xff]
    %v3883 = vld [vmem:[#allocation9 + $0x170] sm:$0xff]
    %v3884 = vld [vmem:[#allocation9 + $0x178] sm:$0xff]
    %v3885 = vld [vmem:[#allocation9 + $0x180] sm:$0xff]
    %v3886 = vld [vmem:[#allocation9 + $0x188] sm:$0xff]
    %v3887 = vld [vmem:[#allocation9 + $0x190] sm:$0xff]
    %v3888 = vld [vmem:[#allocation9 + $0x198] sm:$0xff]
    %v3889 = vld [vmem:[#allocation9 + $0x1a0] sm:$0xff]
    %v3890 = vld [vmem:[#allocation9 + $0x1a8] sm:$0xff]
    %v3891 = vld [vmem:[#allocation9 + $0x1b0] sm:$0xff]
    %v3892 = vld [vmem:[#allocation9 + $0x1b8] sm:$0xff]
    %v3893 = vld [vmem:[#allocation9 + $0x1c0] sm:$0xff]
    %v3894 = vld [vmem:[#allocation9 + $0x1c8] sm:$0xff]
    %v3895 = vld [vmem:[#allocation9 + $0x1d0] sm:$0xff]
    %v3896 = vld [vmem:[#allocation9 + $0x1d8] sm:$0xff]
    %v3897 = vld [vmem:[#allocation9 + $0x1e0] sm:$0xff]
    %v3898 = vld [vmem:[#allocation9 + $0x1e8] sm:$0xff]
    %v3899 = vld [vmem:[#allocation9 + $0x1f0] sm:$0xff]
    %v3900 = vld [vmem:[#allocation9 + $0x1f8] sm:$0xff]
    %3901 = vmatprep.subr.mxu0 %v3838
    %3902 = vmatpush1.msra.mxu0 %v3837
    %3903 = vmatprep.subr.mxu0 %v3842
    %3904 = vmatpush1.msra.mxu0 %v3841
    %3905 = vmatprep.subr.mxu0 %v3846
    %3906 = vmatpush1.msra.mxu0 %v3845
    %3907 = vmatprep.subr.mxu0 %v3850
    %3908 = vmatpush1.msra.mxu0 %v3849
    %3909 = vmatprep.subr.mxu0 %v3854
    %3910 = vmatpush1.msra.mxu0 %v3853
    %3911 = vmatprep.subr.mxu0 %v3858
    %3912 = vmatpush1.msra.mxu0 %v3857
    %3913 = vmatprep.subr.mxu0 %v3862
    %3914 = vmatpush1.msra.mxu0 %v3861
    %3915 = vmatprep.subr.mxu0 %v3866
    %3916 = vmatpush1.msra.mxu0 %v3865
    %3917 = vmatprep.subr.mxu0 %v3870
    %3918 = vmatpush1.msra.mxu0 %v3869
    %3919 = vmatprep.subr.mxu0 %v3874
    %3920 = vmatpush1.msra.mxu0 %v3873
    %3921 = vmatprep.subr.mxu0 %v3878
    %3922 = vmatpush1.msra.mxu0 %v3877
    %3923 = vmatprep.subr.mxu0 %v3882
    %3924 = vmatpush1.msra.mxu0 %v3881
    %3925 = vmatprep.subr.mxu0 %v3886
    %3926 = vmatpush1.msra.mxu0 %v3885
    %3927 = vmatprep.subr.mxu0 %v3890
    %3928 = vmatpush1.msra.mxu0 %v3889
    %3929 = vmatprep.subr.mxu0 %v3894
    %3930 = vmatpush1.msra.mxu0 %v3893
    %3931 = vmatprep.subr.mxu0 %v3898
    %3932 = vmatpush1.msra.mxu0 %v3897
    %3933 = vmatprep.subr.mxu0 0.0
    %3934 = vmatpush1.msra.mxu0 0.0
    %3935 = vmatprep.subr.mxu0 0.0
    %3936 = vmatpush1.msra.mxu0 0.0
    %3937 = vmatprep.subr.mxu0 0.0
    %3938 = vmatpush1.msra.mxu0 0.0
    %3939 = vmatprep.subr.mxu0 0.0
    %3940 = vmatpush1.msra.mxu0 0.0
    %3941 = vmatprep.subr.mxu0 0.0
    %3942 = vmatpush1.msra.mxu0 0.0
    %3943 = vmatprep.subr.mxu0 0.0
    %3944 = vmatpush1.msra.mxu0 0.0
    %3945 = vmatprep.subr.mxu0 0.0
    %3946 = vmatpush1.msra.mxu0 0.0
    %3947 = vmatprep.subr.mxu0 0.0
    %3948 = vmatpush1.msra.mxu0 0.0
    %3949 = vmatprep.subr.mxu0 0.0
    %3950 = vmatpush1.msra.mxu0 0.0
    %3951 = vmatprep.subr.mxu0 0.0
    %3952 = vmatpush1.msra.mxu0 0.0
    %3953 = vmatprep.subr.mxu0 0.0
    %3954 = vmatpush1.msra.mxu0 0.0
    %3955 = vmatprep.subr.mxu0 0.0
    %3956 = vmatpush1.msra.mxu0 0.0
    %3957 = vmatprep.subr.mxu0 0.0
    %3958 = vmatpush1.msra.mxu0 0.0
    %3959 = vmatprep.subr.mxu0 0.0
    %3960 = vmatpush1.msra.mxu0 0.0
    %3961 = vmatprep.subr.mxu0 0.0
    %3962 = vmatpush1.msra.mxu0 0.0
    %3963 = vmatprep.subr.mxu0 0.0
    %3964 = vmatpush1.msra.mxu0 0.0
    %3965 = vmatprep.mubr.f32.mxu0 0.0
    %3966 = vmatmul.mubr.f32.gmra.mrb[0].mxu0 %v3829
    %v3967 = vpop.f32.mrb[0].mxu0
    %v3968 = vadd.f32 0.0, %v3967
    %v3969 = vpop.f32.mrb[0].mxu0
    %v3970 = vadd.f32 0.0, %v3969
    %3971 = vdwg.mxu0
    %3972 = vmatprep.subr.mxu0 %v3840
    %3973 = vmatpush1.msra.mxu0 %v3839
    %3974 = vmatprep.subr.mxu0 %v3844
    %3975 = vmatpush1.msra.mxu0 %v3843
    %3976 = vmatprep.subr.mxu0 %v3848
    %3977 = vmatpush1.msra.mxu0 %v3847
    %3978 = vmatprep.subr.mxu0 %v3852
    %3979 = vmatpush1.msra.mxu0 %v3851
    %3980 = vmatprep.subr.mxu0 %v3856
    %3981 = vmatpush1.msra.mxu0 %v3855
    %3982 = vmatprep.subr.mxu0 %v3860
    %3983 = vmatpush1.msra.mxu0 %v3859
    %3984 = vmatprep.subr.mxu0 %v3864
    %3985 = vmatpush1.msra.mxu0 %v3863
    %3986 = vmatprep.subr.mxu0 %v3868
    %3987 = vmatpush1.msra.mxu0 %v3867
    %3988 = vmatprep.subr.mxu0 %v3872
    %3989 = vmatpush1.msra.mxu0 %v3871
    %3990 = vmatprep.subr.mxu0 %v3876
    %3991 = vmatpush1.msra.mxu0 %v3875
    %3992 = vmatprep.subr.mxu0 %v3880
    %3993 = vmatpush1.msra.mxu0 %v3879
    %3994 = vmatprep.subr.mxu0 %v3884
    %3995 = vmatpush1.msra.mxu0 %v3883
    %3996 = vmatprep.subr.mxu0 %v3888
    %3997 = vmatpush1.msra.mxu0 %v3887
    %3998 = vmatprep.subr.mxu0 %v3892
    %3999 = vmatpush1.msra.mxu0 %v3891
    %4000 = vmatprep.subr.mxu0 %v3896
    %4001 = vmatpush1.msra.mxu0 %v3895
    %4002 = vmatprep.subr.mxu0 %v3900
    %4003 = vmatpush1.msra.mxu0 %v3899
    %4004 = vmatprep.subr.mxu0 0.0
    %4005 = vmatpush1.msra.mxu0 0.0
    %4006 = vmatprep.subr.mxu0 0.0
    %4007 = vmatpush1.msra.mxu0 0.0
    %4008 = vmatprep.subr.mxu0 0.0
    %4009 = vmatpush1.msra.mxu0 0.0
    %4010 = vmatprep.subr.mxu0 0.0
    %4011 = vmatpush1.msra.mxu0 0.0
    %4012 = vmatprep.subr.mxu0 0.0
    %4013 = vmatpush1.msra.mxu0 0.0
    %4014 = vmatprep.subr.mxu0 0.0
    %4015 = vmatpush1.msra.mxu0 0.0
    %4016 = vmatprep.subr.mxu0 0.0
    %4017 = vmatpush1.msra.mxu0 0.0
    %4018 = vmatprep.subr.mxu0 0.0
    %4019 = vmatpush1.msra.mxu0 0.0
    %4020 = vmatprep.subr.mxu0 0.0
    %4021 = vmatpush1.msra.mxu0 0.0
    %4022 = vmatprep.subr.mxu0 0.0
    %4023 = vmatpush1.msra.mxu0 0.0
    %4024 = vmatprep.subr.mxu0 0.0
    %4025 = vmatpush1.msra.mxu0 0.0
    %4026 = vmatprep.subr.mxu0 0.0
    %4027 = vmatpush1.msra.mxu0 0.0
    %4028 = vmatprep.subr.mxu0 0.0
    %4029 = vmatpush1.msra.mxu0 0.0
    %4030 = vmatprep.subr.mxu0 0.0
    %4031 = vmatpush1.msra.mxu0 0.0
    %4032 = vmatprep.subr.mxu0 0.0
    %4033 = vmatpush1.msra.mxu0 0.0
    %4034 = vmatprep.subr.mxu0 0.0
    %4035 = vmatpush1.msra.mxu0 0.0
    %4036 = vmatprep.mubr.f32.mxu0 0.0
    %4037 = vmatmul.mubr.f32.gmra.mrb[0].mxu0 %v3829
    %v4038 = vpop.f32.mrb[0].mxu0
    %v4039 = vadd.f32 0.0, %v4038
    %v4040 = vpop.f32.mrb[0].mxu0
    %v4041 = vadd.f32 0.0, %v4040
    %4042 = vdwg.mxu0
    %v4043 = vadd.f32 %v3833, %v3968
    %v4044 = vadd.f32 %v3834, %v3970
    %v4045 = vadd.f32 %v3835, %v4039
    %v4046 = vadd.f32 %v3836, %v4041
    %v4047 = vxor.u32 %v4043, 2147483648
    %v4048 = vmul.f32 %v4047, 1.442695
    %v4049 = vpow.pop %v4048
    %v4050 = vadd.f32 %v4049, 1.0
    %v4051 = vrcp.pop %v4050
    %v4052 = vmul.f32 1.0, %v4051
    %v4053 = vxor.u32 %v4044, 2147483648
    %v4054 = vmul.f32 %v4053, 1.442695
    %v4055 = vpow.pop %v4054
    %v4056 = vadd.f32 %v4055, 1.0
    %v4057 = vrcp.pop %v4056
    %v4058 = vmul.f32 1.0, %v4057
    %v4059 = vtanh.pop %v4045
    %v4060 = vxor.u32 %v4046, 2147483648
    %v4061 = vmul.f32 %v4060, 1.442695
    %v4062 = vpow.pop %v4061
    %v4063 = vadd.f32 %v4062, 1.0
    %v4064 = vrcp.pop %v4063
    %v4065 = vmul.f32 1.0, %v4064
    %v4066 = vmul.f32 %v4058, %v3827
    %v4067 = vmul.f32 %v4052, %v4059
    %v4068 = vadd.f32 %v4066, %v4067
    %v4069 = vtanh.pop %v4068
    %v4070 = vmul.f32 %v4065, %v4069
    %s4071 = scalar_lea.vmem [#allocation5], 24
    %4072 = vst [vmem:[%s4071] sm:$0xff] %v4070
    %s4073 = scalar_lea.vmem [#allocation3], 64
    %v4074 = vld [vmem:[%s4073] sm:$0xff]
    %v4075 = vld [vmem:[%s4073 + $0x8] sm:$0xff]
    %v4076 = vld [vmem:[%s4073 + $0x10] sm:$0xff]
    %v4077 = vld [vmem:[%s4073 + $0x18] sm:$0xff]
    %v4078 = vld [vmem:[#allocation9] sm:$0xff]
    %v4079 = vld [vmem:[#allocation9 + $0x8] sm:$0xff]
    %v4080 = vld [vmem:[#allocation9 + $0x10] sm:$0xff]
    %v4081 = vld [vmem:[#allocation9 + $0x18] sm:$0xff]
    %v4082 = vld [vmem:[#allocation9 + $0x20] sm:$0xff]
    %v4083 = vld [vmem:[#allocation9 + $0x28] sm:$0xff]
    %v4084 = vld [vmem:[#allocation9 + $0x30] sm:$0xff]
    %v4085 = vld [vmem:[#allocation9 + $0x38] sm:$0xff]
    %v4086 = vld [vmem:[#allocation9 + $0x40] sm:$0xff]
    %v4087 = vld [vmem:[#allocation9 + $0x48] sm:$0xff]
    %v4088 = vld [vmem:[#allocation9 + $0x50] sm:$0xff]
    %v4089 = vld [vmem:[#allocation9 + $0x58] sm:$0xff]
    %v4090 = vld [vmem:[#allocation9 + $0x60] sm:$0xff]
    %v4091 = vld [vmem:[#allocation9 + $0x68] sm:$0xff]
    %v4092 = vld [vmem:[#allocation9 + $0x70] sm:$0xff]
    %v4093 = vld [vmem:[#allocation9 + $0x78] sm:$0xff]
    %v4094 = vld [vmem:[#allocation9 + $0x80] sm:$0xff]
    %v4095 = vld [vmem:[#allocation9 + $0x88] sm:$0xff]
    %v4096 = vld [vmem:[#allocation9 + $0x90] sm:$0xff]
    %v4097 = vld [vmem:[#allocation9 + $0x98] sm:$0xff]
    %v4098 = vld [vmem:[#allocation9 + $0xa0] sm:$0xff]
    %v4099 = vld [vmem:[#allocation9 + $0xa8] sm:$0xff]
    %v4100 = vld [vmem:[#allocation9 + $0xb0] sm:$0xff]
    %v4101 = vld [vmem:[#allocation9 + $0xb8] sm:$0xff]
    %v4102 = vld [vmem:[#allocation9 + $0xc0] sm:$0xff]
    %v4103 = vld [vmem:[#allocation9 + $0xc8] sm:$0xff]
    %v4104 = vld [vmem:[#allocation9 + $0xd0] sm:$0xff]
    %v4105 = vld [vmem:[#allocation9 + $0xd8] sm:$0xff]
    %v4106 = vld [vmem:[#allocation9 + $0xe0] sm:$0xff]
    %v4107 = vld [vmem:[#allocation9 + $0xe8] sm:$0xff]
    %v4108 = vld [vmem:[#allocation9 + $0xf0] sm:$0xff]
    %v4109 = vld [vmem:[#allocation9 + $0xf8] sm:$0xff]
    %v4110 = vld [vmem:[#allocation9 + $0x100] sm:$0xff]
    %v4111 = vld [vmem:[#allocation9 + $0x108] sm:$0xff]
    %v4112 = vld [vmem:[#allocation9 + $0x110] sm:$0xff]
    %v4113 = vld [vmem:[#allocation9 + $0x118] sm:$0xff]
    %v4114 = vld [vmem:[#allocation9 + $0x120] sm:$0xff]
    %v4115 = vld [vmem:[#allocation9 + $0x128] sm:$0xff]
    %v4116 = vld [vmem:[#allocation9 + $0x130] sm:$0xff]
    %v4117 = vld [vmem:[#allocation9 + $0x138] sm:$0xff]
    %v4118 = vld [vmem:[#allocation9 + $0x140] sm:$0xff]
    %v4119 = vld [vmem:[#allocation9 + $0x148] sm:$0xff]
    %v4120 = vld [vmem:[#allocation9 + $0x150] sm:$0xff]
    %v4121 = vld [vmem:[#allocation9 + $0x158] sm:$0xff]
    %v4122 = vld [vmem:[#allocation9 + $0x160] sm:$0xff]
    %v4123 = vld [vmem:[#allocation9 + $0x168] sm:$0xff]
    %v4124 = vld [vmem:[#allocation9 + $0x170] sm:$0xff]
    %v4125 = vld [vmem:[#allocation9 + $0x178] sm:$0xff]
    %v4126 = vld [vmem:[#allocation9 + $0x180] sm:$0xff]
    %v4127 = vld [vmem:[#allocation9 + $0x188] sm:$0xff]
    %v4128 = vld [vmem:[#allocation9 + $0x190] sm:$0xff]
    %v4129 = vld [vmem:[#allocation9 + $0x198] sm:$0xff]
    %v4130 = vld [vmem:[#allocation9 + $0x1a0] sm:$0xff]
    %v4131 = vld [vmem:[#allocation9 + $0x1a8] sm:$0xff]
    %v4132 = vld [vmem:[#allocation9 + $0x1b0] sm:$0xff]
    %v4133 = vld [vmem:[#allocation9 + $0x1b8] sm:$0xff]
    %v4134 = vld [vmem:[#allocation9 + $0x1c0] sm:$0xff]
    %v4135 = vld [vmem:[#allocation9 + $0x1c8] sm:$0xff]
    %v4136 = vld [vmem:[#allocation9 + $0x1d0] sm:$0xff]
    %v4137 = vld [vmem:[#allocation9 + $0x1d8] sm:$0xff]
    %v4138 = vld [vmem:[#allocation9 + $0x1e0] sm:$0xff]
    %v4139 = vld [vmem:[#allocation9 + $0x1e8] sm:$0xff]
    %v4140 = vld [vmem:[#allocation9 + $0x1f0] sm:$0xff]
    %v4141 = vld [vmem:[#allocation9 + $0x1f8] sm:$0xff]
    %4142 = vmatprep.subr.mxu0 %v4079
    %4143 = vmatpush1.msra.mxu0 %v4078
    %4144 = vmatprep.subr.mxu0 %v4083
    %4145 = vmatpush1.msra.mxu0 %v4082
    %4146 = vmatprep.subr.mxu0 %v4087
    %4147 = vmatpush1.msra.mxu0 %v4086
    %4148 = vmatprep.subr.mxu0 %v4091
    %4149 = vmatpush1.msra.mxu0 %v4090
    %4150 = vmatprep.subr.mxu0 %v4095
    %4151 = vmatpush1.msra.mxu0 %v4094
    %4152 = vmatprep.subr.mxu0 %v4099
    %4153 = vmatpush1.msra.mxu0 %v4098
    %4154 = vmatprep.subr.mxu0 %v4103
    %4155 = vmatpush1.msra.mxu0 %v4102
    %4156 = vmatprep.subr.mxu0 %v4107
    %4157 = vmatpush1.msra.mxu0 %v4106
    %4158 = vmatprep.subr.mxu0 %v4111
    %4159 = vmatpush1.msra.mxu0 %v4110
    %4160 = vmatprep.subr.mxu0 %v4115
    %4161 = vmatpush1.msra.mxu0 %v4114
    %4162 = vmatprep.subr.mxu0 %v4119
    %4163 = vmatpush1.msra.mxu0 %v4118
    %4164 = vmatprep.subr.mxu0 %v4123
    %4165 = vmatpush1.msra.mxu0 %v4122
    %4166 = vmatprep.subr.mxu0 %v4127
    %4167 = vmatpush1.msra.mxu0 %v4126
    %4168 = vmatprep.subr.mxu0 %v4131
    %4169 = vmatpush1.msra.mxu0 %v4130
    %4170 = vmatprep.subr.mxu0 %v4135
    %4171 = vmatpush1.msra.mxu0 %v4134
    %4172 = vmatprep.subr.mxu0 %v4139
    %4173 = vmatpush1.msra.mxu0 %v4138
    %4174 = vmatprep.subr.mxu0 0.0
    %4175 = vmatpush1.msra.mxu0 0.0
    %4176 = vmatprep.subr.mxu0 0.0
    %4177 = vmatpush1.msra.mxu0 0.0
    %4178 = vmatprep.subr.mxu0 0.0
    %4179 = vmatpush1.msra.mxu0 0.0
    %4180 = vmatprep.subr.mxu0 0.0
    %4181 = vmatpush1.msra.mxu0 0.0
    %4182 = vmatprep.subr.mxu0 0.0
    %4183 = vmatpush1.msra.mxu0 0.0
    %4184 = vmatprep.subr.mxu0 0.0
    %4185 = vmatpush1.msra.mxu0 0.0
    %4186 = vmatprep.subr.mxu0 0.0
    %4187 = vmatpush1.msra.mxu0 0.0
    %4188 = vmatprep.subr.mxu0 0.0
    %4189 = vmatpush1.msra.mxu0 0.0
    %4190 = vmatprep.subr.mxu0 0.0
    %4191 = vmatpush1.msra.mxu0 0.0
    %4192 = vmatprep.subr.mxu0 0.0
    %4193 = vmatpush1.msra.mxu0 0.0
    %4194 = vmatprep.subr.mxu0 0.0
    %4195 = vmatpush1.msra.mxu0 0.0
    %4196 = vmatprep.subr.mxu0 0.0
    %4197 = vmatpush1.msra.mxu0 0.0
    %4198 = vmatprep.subr.mxu0 0.0
    %4199 = vmatpush1.msra.mxu0 0.0
    %4200 = vmatprep.subr.mxu0 0.0
    %4201 = vmatpush1.msra.mxu0 0.0
    %4202 = vmatprep.subr.mxu0 0.0
    %4203 = vmatpush1.msra.mxu0 0.0
    %4204 = vmatprep.subr.mxu0 0.0
    %4205 = vmatpush1.msra.mxu0 0.0
    %4206 = vmatprep.mubr.f32.mxu0 0.0
    %4207 = vmatmul.mubr.f32.gmra.mrb[0].mxu0 %v4070
    %v4208 = vpop.f32.mrb[0].mxu0
    %v4209 = vadd.f32 0.0, %v4208
    %v4210 = vpop.f32.mrb[0].mxu0
    %v4211 = vadd.f32 0.0, %v4210
    %4212 = vdwg.mxu0
    %4213 = vmatprep.subr.mxu0 %v4081
    %4214 = vmatpush1.msra.mxu0 %v4080
    %4215 = vmatprep.subr.mxu0 %v4085
    %4216 = vmatpush1.msra.mxu0 %v4084
    %4217 = vmatprep.subr.mxu0 %v4089
    %4218 = vmatpush1.msra.mxu0 %v4088
    %4219 = vmatprep.subr.mxu0 %v4093
    %4220 = vmatpush1.msra.mxu0 %v4092
    %4221 = vmatprep.subr.mxu0 %v4097
    %4222 = vmatpush1.msra.mxu0 %v4096
    %4223 = vmatprep.subr.mxu0 %v4101
    %4224 = vmatpush1.msra.mxu0 %v4100
    %4225 = vmatprep.subr.mxu0 %v4105
    %4226 = vmatpush1.msra.mxu0 %v4104
    %4227 = vmatprep.subr.mxu0 %v4109
    %4228 = vmatpush1.msra.mxu0 %v4108
    %4229 = vmatprep.subr.mxu0 %v4113
    %4230 = vmatpush1.msra.mxu0 %v4112
    %4231 = vmatprep.subr.mxu0 %v4117
    %4232 = vmatpush1.msra.mxu0 %v4116
    %4233 = vmatprep.subr.mxu0 %v4121
    %4234 = vmatpush1.msra.mxu0 %v4120
    %4235 = vmatprep.subr.mxu0 %v4125
    %4236 = vmatpush1.msra.mxu0 %v4124
    %4237 = vmatprep.subr.mxu0 %v4129
    %4238 = vmatpush1.msra.mxu0 %v4128
    %4239 = vmatprep.subr.mxu0 %v4133
    %4240 = vmatpush1.msra.mxu0 %v4132
    %4241 = vmatprep.subr.mxu0 %v4137
    %4242 = vmatpush1.msra.mxu0 %v4136
    %4243 = vmatprep.subr.mxu0 %v4141
    %4244 = vmatpush1.msra.mxu0 %v4140
    %4245 = vmatprep.subr.mxu0 0.0
    %4246 = vmatpush1.msra.mxu0 0.0
    %4247 = vmatprep.subr.mxu0 0.0
    %4248 = vmatpush1.msra.mxu0 0.0
    %4249 = vmatprep.subr.mxu0 0.0
    %4250 = vmatpush1.msra.mxu0 0.0
    %4251 = vmatprep.subr.mxu0 0.0
    %4252 = vmatpush1.msra.mxu0 0.0
    %4253 = vmatprep.subr.mxu0 0.0
    %4254 = vmatpush1.msra.mxu0 0.0
    %4255 = vmatprep.subr.mxu0 0.0
    %4256 = vmatpush1.msra.mxu0 0.0
    %4257 = vmatprep.subr.mxu0 0.0
    %4258 = vmatpush1.msra.mxu0 0.0
    %4259 = vmatprep.subr.mxu0 0.0
    %4260 = vmatpush1.msra.mxu0 0.0
    %4261 = vmatprep.subr.mxu0 0.0
    %4262 = vmatpush1.msra.mxu0 0.0
    %4263 = vmatprep.subr.mxu0 0.0
    %4264 = vmatpush1.msra.mxu0 0.0
    %4265 = vmatprep.subr.mxu0 0.0
    %4266 = vmatpush1.msra.mxu0 0.0
    %4267 = vmatprep.subr.mxu0 0.0
    %4268 = vmatpush1.msra.mxu0 0.0
    %4269 = vmatprep.subr.mxu0 0.0
    %4270 = vmatpush1.msra.mxu0 0.0
    %4271 = vmatprep.subr.mxu0 0.0
    %4272 = vmatpush1.msra.mxu0 0.0
    %4273 = vmatprep.subr.mxu0 0.0
    %4274 = vmatpush1.msra.mxu0 0.0
    %4275 = vmatprep.subr.mxu0 0.0
    %4276 = vmatpush1.msra.mxu0 0.0
    %4277 = vmatprep.mubr.f32.mxu0 0.0
    %4278 = vmatmul.mubr.f32.gmra.mrb[0].mxu0 %v4070
    %v4279 = vpop.f32.mrb[0].mxu0
    %v4280 = vadd.f32 0.0, %v4279
    %v4281 = vpop.f32.mrb[0].mxu0
    %v4282 = vadd.f32 0.0, %v4281
    %4283 = vdwg.mxu0
    %v4284 = vadd.f32 %v4074, %v4209
    %v4285 = vadd.f32 %v4075, %v4211
    %v4286 = vadd.f32 %v4076, %v4280
    %v4287 = vadd.f32 %v4077, %v4282
    %v4288 = vxor.u32 %v4284, 2147483648
    %v4289 = vmul.f32 %v4288, 1.442695
    %v4290 = vpow.pop %v4289
    %v4291 = vadd.f32 %v4290, 1.0
    %v4292 = vrcp.pop %v4291
    %v4293 = vmul.f32 1.0, %v4292
    %v4294 = vxor.u32 %v4285, 2147483648
    %v4295 = vmul.f32 %v4294, 1.442695
    %v4296 = vpow.pop %v4295
    %v4297 = vadd.f32 %v4296, 1.0
    %v4298 = vrcp.pop %v4297
    %v4299 = vmul.f32 1.0, %v4298
    %v4300 = vtanh.pop %v4286
    %v4301 = vxor.u32 %v4287, 2147483648
    %v4302 = vmul.f32 %v4301, 1.442695
    %v4303 = vpow.pop %v4302
    %v4304 = vadd.f32 %v4303, 1.0
    %v4305 = vrcp.pop %v4304
    %v4306 = vmul.f32 1.0, %v4305
    %v4307 = vmul.f32 %v4299, %v4068
    %v4308 = vmul.f32 %v4293, %v4300
    %v4309 = vadd.f32 %v4307, %v4308
    %v4310 = vtanh.pop %v4309
    %v4311 = vmul.f32 %v4306, %v4310
    %s4312 = scalar_lea.vmem [#allocation5], 16
    %4313 = vst [vmem:[%s4312] sm:$0xff] %v4311
    %s4314 = scalar_lea.vmem [#allocation3], 32
    %v4315 = vld [vmem:[%s4314] sm:$0xff]
    %v4316 = vld [vmem:[%s4314 + $0x8] sm:$0xff]
    %v4317 = vld [vmem:[%s4314 + $0x10] sm:$0xff]
    %v4318 = vld [vmem:[%s4314 + $0x18] sm:$0xff]
    %v4319 = vld [vmem:[#allocation9] sm:$0xff]
    %v4320 = vld [vmem:[#allocation9 + $0x8] sm:$0xff]
    %v4321 = vld [vmem:[#allocation9 + $0x10] sm:$0xff]
    %v4322 = vld [vmem:[#allocation9 + $0x18] sm:$0xff]
    %v4323 = vld [vmem:[#allocation9 + $0x20] sm:$0xff]
    %v4324 = vld [vmem:[#allocation9 + $0x28] sm:$0xff]
    %v4325 = vld [vmem:[#allocation9 + $0x30] sm:$0xff]
    %v4326 = vld [vmem:[#allocation9 + $0x38] sm:$0xff]
    %v4327 = vld [vmem:[#allocation9 + $0x40] sm:$0xff]
    %v4328 = vld [vmem:[#allocation9 + $0x48] sm:$0xff]
    %v4329 = vld [vmem:[#allocation9 + $0x50] sm:$0xff]
    %v4330 = vld [vmem:[#allocation9 + $0x58] sm:$0xff]
    %v4331 = vld [vmem:[#allocation9 + $0x60] sm:$0xff]
    %v4332 = vld [vmem:[#allocation9 + $0x68] sm:$0xff]
    %v4333 = vld [vmem:[#allocation9 + $0x70] sm:$0xff]
    %v4334 = vld [vmem:[#allocation9 + $0x78] sm:$0xff]
    %v4335 = vld [vmem:[#allocation9 + $0x80] sm:$0xff]
    %v4336 = vld [vmem:[#allocation9 + $0x88] sm:$0xff]
    %v4337 = vld [vmem:[#allocation9 + $0x90] sm:$0xff]
    %v4338 = vld [vmem:[#allocation9 + $0x98] sm:$0xff]
    %v4339 = vld [vmem:[#allocation9 + $0xa0] sm:$0xff]
    %v4340 = vld [vmem:[#allocation9 + $0xa8] sm:$0xff]
    %v4341 = vld [vmem:[#allocation9 + $0xb0] sm:$0xff]
    %v4342 = vld [vmem:[#allocation9 + $0xb8] sm:$0xff]
    %v4343 = vld [vmem:[#allocation9 + $0xc0] sm:$0xff]
    %v4344 = vld [vmem:[#allocation9 + $0xc8] sm:$0xff]
    %v4345 = vld [vmem:[#allocation9 + $0xd0] sm:$0xff]
    %v4346 = vld [vmem:[#allocation9 + $0xd8] sm:$0xff]
    %v4347 = vld [vmem:[#allocation9 + $0xe0] sm:$0xff]
    %v4348 = vld [vmem:[#allocation9 + $0xe8] sm:$0xff]
    %v4349 = vld [vmem:[#allocation9 + $0xf0] sm:$0xff]
    %v4350 = vld [vmem:[#allocation9 + $0xf8] sm:$0xff]
    %v4351 = vld [vmem:[#allocation9 + $0x100] sm:$0xff]
    %v4352 = vld [vmem:[#allocation9 + $0x108] sm:$0xff]
    %v4353 = vld [vmem:[#allocation9 + $0x110] sm:$0xff]
    %v4354 = vld [vmem:[#allocation9 + $0x118] sm:$0xff]
    %v4355 = vld [vmem:[#allocation9 + $0x120] sm:$0xff]
    %v4356 = vld [vmem:[#allocation9 + $0x128] sm:$0xff]
    %v4357 = vld [vmem:[#allocation9 + $0x130] sm:$0xff]
    %v4358 = vld [vmem:[#allocation9 + $0x138] sm:$0xff]
    %v4359 = vld [vmem:[#allocation9 + $0x140] sm:$0xff]
    %v4360 = vld [vmem:[#allocation9 + $0x148] sm:$0xff]
    %v4361 = vld [vmem:[#allocation9 + $0x150] sm:$0xff]
    %v4362 = vld [vmem:[#allocation9 + $0x158] sm:$0xff]
    %v4363 = vld [vmem:[#allocation9 + $0x160] sm:$0xff]
    %v4364 = vld [vmem:[#allocation9 + $0x168] sm:$0xff]
    %v4365 = vld [vmem:[#allocation9 + $0x170] sm:$0xff]
    %v4366 = vld [vmem:[#allocation9 + $0x178] sm:$0xff]
    %v4367 = vld [vmem:[#allocation9 + $0x180] sm:$0xff]
    %v4368 = vld [vmem:[#allocation9 + $0x188] sm:$0xff]
    %v4369 = vld [vmem:[#allocation9 + $0x190] sm:$0xff]
    %v4370 = vld [vmem:[#allocation9 + $0x198] sm:$0xff]
    %v4371 = vld [vmem:[#allocation9 + $0x1a0] sm:$0xff]
    %v4372 = vld [vmem:[#allocation9 + $0x1a8] sm:$0xff]
    %v4373 = vld [vmem:[#allocation9 + $0x1b0] sm:$0xff]
    %v4374 = vld [vmem:[#allocation9 + $0x1b8] sm:$0xff]
    %v4375 = vld [vmem:[#allocation9 + $0x1c0] sm:$0xff]
    %v4376 = vld [vmem:[#allocation9 + $0x1c8] sm:$0xff]
    %v4377 = vld [vmem:[#allocation9 + $0x1d0] sm:$0xff]
    %v4378 = vld [vmem:[#allocation9 + $0x1d8] sm:$0xff]
    %v4379 = vld [vmem:[#allocation9 + $0x1e0] sm:$0xff]
    %v4380 = vld [vmem:[#allocation9 + $0x1e8] sm:$0xff]
    %v4381 = vld [vmem:[#allocation9 + $0x1f0] sm:$0xff]
    %v4382 = vld [vmem:[#allocation9 + $0x1f8] sm:$0xff]
    %4383 = vmatprep.subr.mxu0 %v4320
    %4384 = vmatpush1.msra.mxu0 %v4319
    %4385 = vmatprep.subr.mxu0 %v4324
    %4386 = vmatpush1.msra.mxu0 %v4323
    %4387 = vmatprep.subr.mxu0 %v4328
    %4388 = vmatpush1.msra.mxu0 %v4327
    %4389 = vmatprep.subr.mxu0 %v4332
    %4390 = vmatpush1.msra.mxu0 %v4331
    %4391 = vmatprep.subr.mxu0 %v4336
    %4392 = vmatpush1.msra.mxu0 %v4335
    %4393 = vmatprep.subr.mxu0 %v4340
    %4394 = vmatpush1.msra.mxu0 %v4339
    %4395 = vmatprep.subr.mxu0 %v4344
    %4396 = vmatpush1.msra.mxu0 %v4343
    %4397 = vmatprep.subr.mxu0 %v4348
    %4398 = vmatpush1.msra.mxu0 %v4347
    %4399 = vmatprep.subr.mxu0 %v4352
    %4400 = vmatpush1.msra.mxu0 %v4351
    %4401 = vmatprep.subr.mxu0 %v4356
    %4402 = vmatpush1.msra.mxu0 %v4355
    %4403 = vmatprep.subr.mxu0 %v4360
    %4404 = vmatpush1.msra.mxu0 %v4359
    %4405 = vmatprep.subr.mxu0 %v4364
    %4406 = vmatpush1.msra.mxu0 %v4363
    %4407 = vmatprep.subr.mxu0 %v4368
    %4408 = vmatpush1.msra.mxu0 %v4367
    %4409 = vmatprep.subr.mxu0 %v4372
    %4410 = vmatpush1.msra.mxu0 %v4371
    %4411 = vmatprep.subr.mxu0 %v4376
    %4412 = vmatpush1.msra.mxu0 %v4375
    %4413 = vmatprep.subr.mxu0 %v4380
    %4414 = vmatpush1.msra.mxu0 %v4379
    %4415 = vmatprep.subr.mxu0 0.0
    %4416 = vmatpush1.msra.mxu0 0.0
    %4417 = vmatprep.subr.mxu0 0.0
    %4418 = vmatpush1.msra.mxu0 0.0
    %4419 = vmatprep.subr.mxu0 0.0
    %4420 = vmatpush1.msra.mxu0 0.0
    %4421 = vmatprep.subr.mxu0 0.0
    %4422 = vmatpush1.msra.mxu0 0.0
    %4423 = vmatprep.subr.mxu0 0.0
    %4424 = vmatpush1.msra.mxu0 0.0
    %4425 = vmatprep.subr.mxu0 0.0
    %4426 = vmatpush1.msra.mxu0 0.0
    %4427 = vmatprep.subr.mxu0 0.0
    %4428 = vmatpush1.msra.mxu0 0.0
    %4429 = vmatprep.subr.mxu0 0.0
    %4430 = vmatpush1.msra.mxu0 0.0
    %4431 = vmatprep.subr.mxu0 0.0
    %4432 = vmatpush1.msra.mxu0 0.0
    %4433 = vmatprep.subr.mxu0 0.0
    %4434 = vmatpush1.msra.mxu0 0.0
    %4435 = vmatprep.subr.mxu0 0.0
    %4436 = vmatpush1.msra.mxu0 0.0
    %4437 = vmatprep.subr.mxu0 0.0
    %4438 = vmatpush1.msra.mxu0 0.0
    %4439 = vmatprep.subr.mxu0 0.0
    %4440 = vmatpush1.msra.mxu0 0.0
    %4441 = vmatprep.subr.mxu0 0.0
    %4442 = vmatpush1.msra.mxu0 0.0
    %4443 = vmatprep.subr.mxu0 0.0
    %4444 = vmatpush1.msra.mxu0 0.0
    %4445 = vmatprep.subr.mxu0 0.0
    %4446 = vmatpush1.msra.mxu0 0.0
    %4447 = vmatprep.mubr.f32.mxu0 0.0
    %4448 = vmatmul.mubr.f32.gmra.mrb[0].mxu0 %v4311
    %v4449 = vpop.f32.mrb[0].mxu0
    %v4450 = vadd.f32 0.0, %v4449
    %v4451 = vpop.f32.mrb[0].mxu0
    %v4452 = vadd.f32 0.0, %v4451
    %4453 = vdwg.mxu0
    %4454 = vmatprep.subr.mxu0 %v4322
    %4455 = vmatpush1.msra.mxu0 %v4321
    %4456 = vmatprep.subr.mxu0 %v4326
    %4457 = vmatpush1.msra.mxu0 %v4325
    %4458 = vmatprep.subr.mxu0 %v4330
    %4459 = vmatpush1.msra.mxu0 %v4329
    %4460 = vmatprep.subr.mxu0 %v4334
    %4461 = vmatpush1.msra.mxu0 %v4333
    %4462 = vmatprep.subr.mxu0 %v4338
    %4463 = vmatpush1.msra.mxu0 %v4337
    %4464 = vmatprep.subr.mxu0 %v4342
    %4465 = vmatpush1.msra.mxu0 %v4341
    %4466 = vmatprep.subr.mxu0 %v4346
    %4467 = vmatpush1.msra.mxu0 %v4345
    %4468 = vmatprep.subr.mxu0 %v4350
    %4469 = vmatpush1.msra.mxu0 %v4349
    %4470 = vmatprep.subr.mxu0 %v4354
    %4471 = vmatpush1.msra.mxu0 %v4353
    %4472 = vmatprep.subr.mxu0 %v4358
    %4473 = vmatpush1.msra.mxu0 %v4357
    %4474 = vmatprep.subr.mxu0 %v4362
    %4475 = vmatpush1.msra.mxu0 %v4361
    %4476 = vmatprep.subr.mxu0 %v4366
    %4477 = vmatpush1.msra.mxu0 %v4365
    %4478 = vmatprep.subr.mxu0 %v4370
    %4479 = vmatpush1.msra.mxu0 %v4369
    %4480 = vmatprep.subr.mxu0 %v4374
    %4481 = vmatpush1.msra.mxu0 %v4373
    %4482 = vmatprep.subr.mxu0 %v4378
    %4483 = vmatpush1.msra.mxu0 %v4377
    %4484 = vmatprep.subr.mxu0 %v4382
    %4485 = vmatpush1.msra.mxu0 %v4381
    %4486 = vmatprep.subr.mxu0 0.0
    %4487 = vmatpush1.msra.mxu0 0.0
    %4488 = vmatprep.subr.mxu0 0.0
    %4489 = vmatpush1.msra.mxu0 0.0
    %4490 = vmatprep.subr.mxu0 0.0
    %4491 = vmatpush1.msra.mxu0 0.0
    %4492 = vmatprep.subr.mxu0 0.0
    %4493 = vmatpush1.msra.mxu0 0.0
    %4494 = vmatprep.subr.mxu0 0.0
    %4495 = vmatpush1.msra.mxu0 0.0
    %4496 = vmatprep.subr.mxu0 0.0
    %4497 = vmatpush1.msra.mxu0 0.0
    %4498 = vmatprep.subr.mxu0 0.0
    %4499 = vmatpush1.msra.mxu0 0.0
    %4500 = vmatprep.subr.mxu0 0.0
    %4501 = vmatpush1.msra.mxu0 0.0
    %4502 = vmatprep.subr.mxu0 0.0
    %4503 = vmatpush1.msra.mxu0 0.0
    %4504 = vmatprep.subr.mxu0 0.0
    %4505 = vmatpush1.msra.mxu0 0.0
    %4506 = vmatprep.subr.mxu0 0.0
    %4507 = vmatpush1.msra.mxu0 0.0
    %4508 = vmatprep.subr.mxu0 0.0
    %4509 = vmatpush1.msra.mxu0 0.0
    %4510 = vmatprep.subr.mxu0 0.0
    %4511 = vmatpush1.msra.mxu0 0.0
    %4512 = vmatprep.subr.mxu0 0.0
    %4513 = vmatpush1.msra.mxu0 0.0
    %4514 = vmatprep.subr.mxu0 0.0
    %4515 = vmatpush1.msra.mxu0 0.0
    %4516 = vmatprep.subr.mxu0 0.0
    %4517 = vmatpush1.msra.mxu0 0.0
    %4518 = vmatprep.mubr.f32.mxu0 0.0
    %4519 = vmatmul.mubr.f32.gmra.mrb[0].mxu0 %v4311
    %v4520 = vpop.f32.mrb[0].mxu0
    %v4521 = vadd.f32 0.0, %v4520
    %v4522 = vpop.f32.mrb[0].mxu0
    %v4523 = vadd.f32 0.0, %v4522
    %4524 = vdwg.mxu0
    %v4525 = vadd.f32 %v4315, %v4450
    %v4526 = vadd.f32 %v4316, %v4452
    %v4527 = vadd.f32 %v4317, %v4521
    %v4528 = vadd.f32 %v4318, %v4523
    %v4529 = vxor.u32 %v4525, 2147483648
    %v4530 = vmul.f32 %v4529, 1.442695
    %v4531 = vpow.pop %v4530
    %v4532 = vadd.f32 %v4531, 1.0
    %v4533 = vrcp.pop %v4532
    %v4534 = vmul.f32 1.0, %v4533
    %v4535 = vxor.u32 %v4526, 2147483648
    %v4536 = vmul.f32 %v4535, 1.442695
    %v4537 = vpow.pop %v4536
    %v4538 = vadd.f32 %v4537, 1.0
    %v4539 = vrcp.pop %v4538
    %v4540 = vmul.f32 1.0, %v4539
    %v4541 = vtanh.pop %v4527
    %v4542 = vxor.u32 %v4528, 2147483648
    %v4543 = vmul.f32 %v4542, 1.442695
    %v4544 = vpow.pop %v4543
    %v4545 = vadd.f32 %v4544, 1.0
    %v4546 = vrcp.pop %v4545
    %v4547 = vmul.f32 1.0, %v4546
    %v4548 = vmul.f32 %v4540, %v4309
    %v4549 = vmul.f32 %v4534, %v4541
    %v4550 = vadd.f32 %v4548, %v4549
    %v4551 = vtanh.pop %v4550
    %v4552 = vmul.f32 %v4547, %v4551
    %s4553 = scalar_lea.vmem [#allocation5], 8
    %4554 = vst [vmem:[%s4553] sm:$0xff] %v4552
    %v4555 = vld [vmem:[#allocation3] sm:$0xff]
    %v4556 = vld [vmem:[#allocation3 + $0x8] sm:$0xff]
    %v4557 = vld [vmem:[#allocation3 + $0x10] sm:$0xff]
    %v4558 = vld [vmem:[#allocation3 + $0x18] sm:$0xff]
    %v4559 = vld [vmem:[#allocation9] sm:$0xff]
    %v4560 = vld [vmem:[#allocation9 + $0x8] sm:$0xff]
    %v4561 = vld [vmem:[#allocation9 + $0x10] sm:$0xff]
    %v4562 = vld [vmem:[#allocation9 + $0x18] sm:$0xff]
    %v4563 = vld [vmem:[#allocation9 + $0x20] sm:$0xff]
    %v4564 = vld [vmem:[#allocation9 + $0x28] sm:$0xff]
    %v4565 = vld [vmem:[#allocation9 + $0x30] sm:$0xff]
    %v4566 = vld [vmem:[#allocation9 + $0x38] sm:$0xff]
    %v4567 = vld [vmem:[#allocation9 + $0x40] sm:$0xff]
    %v4568 = vld [vmem:[#allocation9 + $0x48] sm:$0xff]
    %v4569 = vld [vmem:[#allocation9 + $0x50] sm:$0xff]
    %v4570 = vld [vmem:[#allocation9 + $0x58] sm:$0xff]
    %v4571 = vld [vmem:[#allocation9 + $0x60] sm:$0xff]
    %v4572 = vld [vmem:[#allocation9 + $0x68] sm:$0xff]
    %v4573 = vld [vmem:[#allocation9 + $0x70] sm:$0xff]
    %v4574 = vld [vmem:[#allocation9 + $0x78] sm:$0xff]
    %v4575 = vld [vmem:[#allocation9 + $0x80] sm:$0xff]
    %v4576 = vld [vmem:[#allocation9 + $0x88] sm:$0xff]
    %v4577 = vld [vmem:[#allocation9 + $0x90] sm:$0xff]
    %v4578 = vld [vmem:[#allocation9 + $0x98] sm:$0xff]
    %v4579 = vld [vmem:[#allocation9 + $0xa0] sm:$0xff]
    %v4580 = vld [vmem:[#allocation9 + $0xa8] sm:$0xff]
    %v4581 = vld [vmem:[#allocation9 + $0xb0] sm:$0xff]
    %v4582 = vld [vmem:[#allocation9 + $0xb8] sm:$0xff]
    %v4583 = vld [vmem:[#allocation9 + $0xc0] sm:$0xff]
    %v4584 = vld [vmem:[#allocation9 + $0xc8] sm:$0xff]
    %v4585 = vld [vmem:[#allocation9 + $0xd0] sm:$0xff]
    %v4586 = vld [vmem:[#allocation9 + $0xd8] sm:$0xff]
    %v4587 = vld [vmem:[#allocation9 + $0xe0] sm:$0xff]
    %v4588 = vld [vmem:[#allocation9 + $0xe8] sm:$0xff]
    %v4589 = vld [vmem:[#allocation9 + $0xf0] sm:$0xff]
    %v4590 = vld [vmem:[#allocation9 + $0xf8] sm:$0xff]
    %v4591 = vld [vmem:[#allocation9 + $0x100] sm:$0xff]
    %v4592 = vld [vmem:[#allocation9 + $0x108] sm:$0xff]
    %v4593 = vld [vmem:[#allocation9 + $0x110] sm:$0xff]
    %v4594 = vld [vmem:[#allocation9 + $0x118] sm:$0xff]
    %v4595 = vld [vmem:[#allocation9 + $0x120] sm:$0xff]
    %v4596 = vld [vmem:[#allocation9 + $0x128] sm:$0xff]
    %v4597 = vld [vmem:[#allocation9 + $0x130] sm:$0xff]
    %v4598 = vld [vmem:[#allocation9 + $0x138] sm:$0xff]
    %v4599 = vld [vmem:[#allocation9 + $0x140] sm:$0xff]
    %v4600 = vld [vmem:[#allocation9 + $0x148] sm:$0xff]
    %v4601 = vld [vmem:[#allocation9 + $0x150] sm:$0xff]
    %v4602 = vld [vmem:[#allocation9 + $0x158] sm:$0xff]
    %v4603 = vld [vmem:[#allocation9 + $0x160] sm:$0xff]
    %v4604 = vld [vmem:[#allocation9 + $0x168] sm:$0xff]
    %v4605 = vld [vmem:[#allocation9 + $0x170] sm:$0xff]
    %v4606 = vld [vmem:[#allocation9 + $0x178] sm:$0xff]
    %v4607 = vld [vmem:[#allocation9 + $0x180] sm:$0xff]
    %v4608 = vld [vmem:[#allocation9 + $0x188] sm:$0xff]
    %v4609 = vld [vmem:[#allocation9 + $0x190] sm:$0xff]
    %v4610 = vld [vmem:[#allocation9 + $0x198] sm:$0xff]
    %v4611 = vld [vmem:[#allocation9 + $0x1a0] sm:$0xff]
    %v4612 = vld [vmem:[#allocation9 + $0x1a8] sm:$0xff]
    %v4613 = vld [vmem:[#allocation9 + $0x1b0] sm:$0xff]
    %v4614 = vld [vmem:[#allocation9 + $0x1b8] sm:$0xff]
    %v4615 = vld [vmem:[#allocation9 + $0x1c0] sm:$0xff]
    %v4616 = vld [vmem:[#allocation9 + $0x1c8] sm:$0xff]
    %v4617 = vld [vmem:[#allocation9 + $0x1d0] sm:$0xff]
    %v4618 = vld [vmem:[#allocation9 + $0x1d8] sm:$0xff]
    %v4619 = vld [vmem:[#allocation9 + $0x1e0] sm:$0xff]
    %v4620 = vld [vmem:[#allocation9 + $0x1e8] sm:$0xff]
    %v4621 = vld [vmem:[#allocation9 + $0x1f0] sm:$0xff]
    %v4622 = vld [vmem:[#allocation9 + $0x1f8] sm:$0xff]
    %4623 = vmatprep.subr.mxu0 %v4560
    %4624 = vmatpush1.msra.mxu0 %v4559
    %4625 = vmatprep.subr.mxu0 %v4564
    %4626 = vmatpush1.msra.mxu0 %v4563
    %4627 = vmatprep.subr.mxu0 %v4568
    %4628 = vmatpush1.msra.mxu0 %v4567
    %4629 = vmatprep.subr.mxu0 %v4572
    %4630 = vmatpush1.msra.mxu0 %v4571
    %4631 = vmatprep.subr.mxu0 %v4576
    %4632 = vmatpush1.msra.mxu0 %v4575
    %4633 = vmatprep.subr.mxu0 %v4580
    %4634 = vmatpush1.msra.mxu0 %v4579
    %4635 = vmatprep.subr.mxu0 %v4584
    %4636 = vmatpush1.msra.mxu0 %v4583
    %4637 = vmatprep.subr.mxu0 %v4588
    %4638 = vmatpush1.msra.mxu0 %v4587
    %4639 = vmatprep.subr.mxu0 %v4592
    %4640 = vmatpush1.msra.mxu0 %v4591
    %4641 = vmatprep.subr.mxu0 %v4596
    %4642 = vmatpush1.msra.mxu0 %v4595
    %4643 = vmatprep.subr.mxu0 %v4600
    %4644 = vmatpush1.msra.mxu0 %v4599
    %4645 = vmatprep.subr.mxu0 %v4604
    %4646 = vmatpush1.msra.mxu0 %v4603
    %4647 = vmatprep.subr.mxu0 %v4608
    %4648 = vmatpush1.msra.mxu0 %v4607
    %4649 = vmatprep.subr.mxu0 %v4612
    %4650 = vmatpush1.msra.mxu0 %v4611
    %4651 = vmatprep.subr.mxu0 %v4616
    %4652 = vmatpush1.msra.mxu0 %v4615
    %4653 = vmatprep.subr.mxu0 %v4620
    %4654 = vmatpush1.msra.mxu0 %v4619
    %4655 = vmatprep.subr.mxu0 0.0
    %4656 = vmatpush1.msra.mxu0 0.0
    %4657 = vmatprep.subr.mxu0 0.0
    %4658 = vmatpush1.msra.mxu0 0.0
    %4659 = vmatprep.subr.mxu0 0.0
    %4660 = vmatpush1.msra.mxu0 0.0
    %4661 = vmatprep.subr.mxu0 0.0
    %4662 = vmatpush1.msra.mxu0 0.0
    %4663 = vmatprep.subr.mxu0 0.0
    %4664 = vmatpush1.msra.mxu0 0.0
    %4665 = vmatprep.subr.mxu0 0.0
    %4666 = vmatpush1.msra.mxu0 0.0
    %4667 = vmatprep.subr.mxu0 0.0
    %4668 = vmatpush1.msra.mxu0 0.0
    %4669 = vmatprep.subr.mxu0 0.0
    %4670 = vmatpush1.msra.mxu0 0.0
    %4671 = vmatprep.subr.mxu0 0.0
    %4672 = vmatpush1.msra.mxu0 0.0
    %4673 = vmatprep.subr.mxu0 0.0
    %4674 = vmatpush1.msra.mxu0 0.0
    %4675 = vmatprep.subr.mxu0 0.0
    %4676 = vmatpush1.msra.mxu0 0.0
    %4677 = vmatprep.subr.mxu0 0.0
    %4678 = vmatpush1.msra.mxu0 0.0
    %4679 = vmatprep.subr.mxu0 0.0
    %4680 = vmatpush1.msra.mxu0 0.0
    %4681 = vmatprep.subr.mxu0 0.0
    %4682 = vmatpush1.msra.mxu0 0.0
    %4683 = vmatprep.subr.mxu0 0.0
    %4684 = vmatpush1.msra.mxu0 0.0
    %4685 = vmatprep.subr.mxu0 0.0
    %4686 = vmatpush1.msra.mxu0 0.0
    %4687 = vmatprep.mubr.f32.mxu0 0.0
    %4688 = vmatmul.mubr.f32.gmra.mrb[0].mxu0 %v4552
    %v4689 = vpop.f32.mrb[0].mxu0
    %v4690 = vadd.f32 0.0, %v4689
    %v4691 = vpop.f32.mrb[0].mxu0
    %v4692 = vadd.f32 0.0, %v4691
    %4693 = vdwg.mxu0
    %4694 = vmatprep.subr.mxu0 %v4562
    %4695 = vmatpush1.msra.mxu0 %v4561
    %4696 = vmatprep.subr.mxu0 %v4566
    %4697 = vmatpush1.msra.mxu0 %v4565
    %4698 = vmatprep.subr.mxu0 %v4570
    %4699 = vmatpush1.msra.mxu0 %v4569
    %4700 = vmatprep.subr.mxu0 %v4574
    %4701 = vmatpush1.msra.mxu0 %v4573
    %4702 = vmatprep.subr.mxu0 %v4578
    %4703 = vmatpush1.msra.mxu0 %v4577
    %4704 = vmatprep.subr.mxu0 %v4582
    %4705 = vmatpush1.msra.mxu0 %v4581
    %4706 = vmatprep.subr.mxu0 %v4586
    %4707 = vmatpush1.msra.mxu0 %v4585
    %4708 = vmatprep.subr.mxu0 %v4590
    %4709 = vmatpush1.msra.mxu0 %v4589
    %4710 = vmatprep.subr.mxu0 %v4594
    %4711 = vmatpush1.msra.mxu0 %v4593
    %4712 = vmatprep.subr.mxu0 %v4598
    %4713 = vmatpush1.msra.mxu0 %v4597
    %4714 = vmatprep.subr.mxu0 %v4602
    %4715 = vmatpush1.msra.mxu0 %v4601
    %4716 = vmatprep.subr.mxu0 %v4606
    %4717 = vmatpush1.msra.mxu0 %v4605
    %4718 = vmatprep.subr.mxu0 %v4610
    %4719 = vmatpush1.msra.mxu0 %v4609
    %4720 = vmatprep.subr.mxu0 %v4614
    %4721 = vmatpush1.msra.mxu0 %v4613
    %4722 = vmatprep.subr.mxu0 %v4618
    %4723 = vmatpush1.msra.mxu0 %v4617
    %4724 = vmatprep.subr.mxu0 %v4622
    %4725 = vmatpush1.msra.mxu0 %v4621
    %4726 = vmatprep.subr.mxu0 0.0
    %4727 = vmatpush1.msra.mxu0 0.0
    %4728 = vmatprep.subr.mxu0 0.0
    %4729 = vmatpush1.msra.mxu0 0.0
    %4730 = vmatprep.subr.mxu0 0.0
    %4731 = vmatpush1.msra.mxu0 0.0
    %4732 = vmatprep.subr.mxu0 0.0
    %4733 = vmatpush1.msra.mxu0 0.0
    %4734 = vmatprep.subr.mxu0 0.0
    %4735 = vmatpush1.msra.mxu0 0.0
    %4736 = vmatprep.subr.mxu0 0.0
    %4737 = vmatpush1.msra.mxu0 0.0
    %4738 = vmatprep.subr.mxu0 0.0
    %4739 = vmatpush1.msra.mxu0 0.0
    %4740 = vmatprep.subr.mxu0 0.0
    %4741 = vmatpush1.msra.mxu0 0.0
    %4742 = vmatprep.subr.mxu0 0.0
    %4743 = vmatpush1.msra.mxu0 0.0
    %4744 = vmatprep.subr.mxu0 0.0
    %4745 = vmatpush1.msra.mxu0 0.0
    %4746 = vmatprep.subr.mxu0 0.0
    %4747 = vmatpush1.msra.mxu0 0.0
    %4748 = vmatprep.subr.mxu0 0.0
    %4749 = vmatpush1.msra.mxu0 0.0
    %4750 = vmatprep.subr.mxu0 0.0
    %4751 = vmatpush1.msra.mxu0 0.0
    %4752 = vmatprep.subr.mxu0 0.0
    %4753 = vmatpush1.msra.mxu0 0.0
    %4754 = vmatprep.subr.mxu0 0.0
    %4755 = vmatpush1.msra.mxu0 0.0
    %4756 = vmatprep.subr.mxu0 0.0
    %4757 = vmatpush1.msra.mxu0 0.0
    %4758 = vmatprep.mubr.f32.mxu0 0.0
    %4759 = vmatmul.mubr.f32.gmra.mrb[0].mxu0 %v4552
    %v4760 = vpop.f32.mrb[0].mxu0
    %v4761 = vadd.f32 0.0, %v4760
    %v4762 = vpop.f32.mrb[0].mxu0
    %v4763 = vadd.f32 0.0, %v4762
    %4764 = vdwg.mxu0
    %v4765 = vadd.f32 %v4555, %v4690
    %v4766 = vadd.f32 %v4556, %v4692
    %v4767 = vadd.f32 %v4557, %v4761
    %v4768 = vadd.f32 %v4558, %v4763
    %v4769 = vxor.u32 %v4765, 2147483648
    %v4770 = vmul.f32 %v4769, 1.442695
    %v4771 = vpow.pop %v4770
    %v4772 = vadd.f32 %v4771, 1.0
    %v4773 = vrcp.pop %v4772
    %v4774 = vmul.f32 1.0, %v4773
    %v4775 = vxor.u32 %v4766, 2147483648
    %v4776 = vmul.f32 %v4775, 1.442695
    %v4777 = vpow.pop %v4776
    %v4778 = vadd.f32 %v4777, 1.0
    %v4779 = vrcp.pop %v4778
    %v4780 = vmul.f32 1.0, %v4779
    %v4781 = vtanh.pop %v4767
    %v4782 = vxor.u32 %v4768, 2147483648
    %v4783 = vmul.f32 %v4782, 1.442695
    %v4784 = vpow.pop %v4783
    %v4785 = vadd.f32 %v4784, 1.0
    %v4786 = vrcp.pop %v4785
    %v4787 = vmul.f32 1.0, %v4786
    %v4788 = vmul.f32 %v4780, %v4550
    %v4789 = vmul.f32 %v4774, %v4781
    %v4790 = vadd.f32 %v4788, %v4789
    %v4791 = vtanh.pop %v4790
    %v4792 = vmul.f32 %v4787, %v4791
    %4793 = vst [vmem:[#allocation5] sm:$0xff] %v4792
    %v4794 = vld [vmem:[#allocation4] sm:$0xff]
    %v4795 = vld [vmem:[#allocation4 + $0x8] sm:$0xff]
    %v4796 = vld [vmem:[#allocation4 + $0x10] sm:$0xff]
    %v4797 = vld [vmem:[#allocation4 + $0x18] sm:$0xff]
    %v4798 = vld [vmem:[#allocation4 + $0x20] sm:$0xff]
    %v4799 = vld [vmem:[#allocation4 + $0x28] sm:$0xff]
    %v4800 = vld [vmem:[#allocation4 + $0x30] sm:$0xff]
    %v4801 = vld [vmem:[#allocation4 + $0x38] sm:$0xff]
    %v4802 = vld [vmem:[#allocation5] sm:$0xff]
    %v4803 = vld [vmem:[#allocation5 + $0x8] sm:$0xff]
    %v4804 = vld [vmem:[#allocation5 + $0x10] sm:$0xff]
    %v4805 = vld [vmem:[#allocation5 + $0x18] sm:$0xff]
    %v4806 = vld [vmem:[#allocation5 + $0x20] sm:$0xff]
    %v4807 = vld [vmem:[#allocation5 + $0x28] sm:$0xff]
    %v4808 = vld [vmem:[#allocation5 + $0x30] sm:$0xff]
    %v4809 = vld [vmem:[#allocation5 + $0x38] sm:$0xff]
    %v4810 = vld [vmem:[%s5] sm:$0xff]
    %v4811 = vld [vmem:[%s5 + $0x8] sm:$0xff]
    %v4812 = vld [vmem:[%s5 + $0x10] sm:$0xff]
    %v4813 = vld [vmem:[%s5 + $0x18] sm:$0xff]
    %v4814 = vld [vmem:[%s5 + $0x20] sm:$0xff]
    %v4815 = vld [vmem:[%s5 + $0x28] sm:$0xff]
    %v4816 = vld [vmem:[%s5 + $0x30] sm:$0xff]
    %v4817 = vld [vmem:[%s5 + $0x38] sm:$0xff]
    %v4818 = vld [vmem:[%s5 + $0x40] sm:$0xff]
    %v4819 = vld [vmem:[%s5 + $0x48] sm:$0xff]
    %v4820 = vld [vmem:[%s5 + $0x50] sm:$0xff]
    %v4821 = vld [vmem:[%s5 + $0x58] sm:$0xff]
    %v4822 = vld [vmem:[%s5 + $0x60] sm:$0xff]
    %v4823 = vld [vmem:[%s5 + $0x68] sm:$0xff]
    %v4824 = vld [vmem:[%s5 + $0x70] sm:$0xff]
    %v4825 = vld [vmem:[%s5 + $0x78] sm:$0xff]
    %v4826 = vld [vmem:[%s5 + $0x80] sm:$0xff]
    %v4827 = vld [vmem:[%s5 + $0x88] sm:$0xff]
    %v4828 = vld [vmem:[%s5 + $0x90] sm:$0xff]
    %v4829 = vld [vmem:[%s5 + $0x98] sm:$0xff]
    %v4830 = vld [vmem:[%s5 + $0xa0] sm:$0xff]
    %v4831 = vld [vmem:[%s5 + $0xa8] sm:$0xff]
    %v4832 = vld [vmem:[%s5 + $0xb0] sm:$0xff]
    %v4833 = vld [vmem:[%s5 + $0xb8] sm:$0xff]
    %v4834 = vld [vmem:[%s5 + $0xc0] sm:$0xff]
    %v4835 = vld [vmem:[%s5 + $0xc8] sm:$0xff]
    %v4836 = vld [vmem:[%s5 + $0xd0] sm:$0xff]
    %v4837 = vld [vmem:[%s5 + $0xd8] sm:$0xff]
    %v4838 = vld [vmem:[%s5 + $0xe0] sm:$0xff]
    %v4839 = vld [vmem:[%s5 + $0xe8] sm:$0xff]
    %v4840 = vld [vmem:[%s5 + $0xf0] sm:$0xff]
    %v4841 = vld [vmem:[%s5 + $0xf8] sm:$0xff]
    %v4842 = vld [vmem:[%s5 + $0x100] sm:$0xff]
    %v4843 = vld [vmem:[%s5 + $0x108] sm:$0xff]
    %v4844 = vld [vmem:[%s5 + $0x110] sm:$0xff]
    %v4845 = vld [vmem:[%s5 + $0x118] sm:$0xff]
    %v4846 = vld [vmem:[%s5 + $0x120] sm:$0xff]
    %v4847 = vld [vmem:[%s5 + $0x128] sm:$0xff]
    %v4848 = vld [vmem:[%s5 + $0x130] sm:$0xff]
    %v4849 = vld [vmem:[%s5 + $0x138] sm:$0xff]
    %v4850 = vld [vmem:[%s5 + $0x140] sm:$0xff]
    %v4851 = vld [vmem:[%s5 + $0x148] sm:$0xff]
    %v4852 = vld [vmem:[%s5 + $0x150] sm:$0xff]
    %v4853 = vld [vmem:[%s5 + $0x158] sm:$0xff]
    %v4854 = vld [vmem:[%s5 + $0x160] sm:$0xff]
    %v4855 = vld [vmem:[%s5 + $0x168] sm:$0xff]
    %v4856 = vld [vmem:[%s5 + $0x170] sm:$0xff]
    %v4857 = vld [vmem:[%s5 + $0x178] sm:$0xff]
    %v4858 = vld [vmem:[%s5 + $0x180] sm:$0xff]
    %v4859 = vld [vmem:[%s5 + $0x188] sm:$0xff]
    %v4860 = vld [vmem:[%s5 + $0x190] sm:$0xff]
    %v4861 = vld [vmem:[%s5 + $0x198] sm:$0xff]
    %v4862 = vld [vmem:[%s5 + $0x1a0] sm:$0xff]
    %v4863 = vld [vmem:[%s5 + $0x1a8] sm:$0xff]
    %v4864 = vld [vmem:[%s5 + $0x1b0] sm:$0xff]
    %v4865 = vld [vmem:[%s5 + $0x1b8] sm:$0xff]
    %v4866 = vld [vmem:[%s5 + $0x1c0] sm:$0xff]
    %v4867 = vld [vmem:[%s5 + $0x1c8] sm:$0xff]
    %v4868 = vld [vmem:[%s5 + $0x1d0] sm:$0xff]
    %v4869 = vld [vmem:[%s5 + $0x1d8] sm:$0xff]
    %v4870 = vld [vmem:[%s5 + $0x1e0] sm:$0xff]
    %v4871 = vld [vmem:[%s5 + $0x1e8] sm:$0xff]
    %v4872 = vld [vmem:[%s5 + $0x1f0] sm:$0xff]
    %v4873 = vld [vmem:[%s5 + $0x1f8] sm:$0xff]
    %v4874 = vld [vmem:[%s5 + $0x200] sm:$0xff]
    %v4875 = vld [vmem:[%s5 + $0x208] sm:$0xff]
    %v4876 = vld [vmem:[%s5 + $0x210] sm:$0xff]
    %v4877 = vld [vmem:[%s5 + $0x218] sm:$0xff]
    %v4878 = vld [vmem:[%s5 + $0x220] sm:$0xff]
    %v4879 = vld [vmem:[%s5 + $0x228] sm:$0xff]
    %v4880 = vld [vmem:[%s5 + $0x230] sm:$0xff]
    %v4881 = vld [vmem:[%s5 + $0x238] sm:$0xff]
    %v4882 = vld [vmem:[%s5 + $0x240] sm:$0xff]
    %v4883 = vld [vmem:[%s5 + $0x248] sm:$0xff]
    %v4884 = vld [vmem:[%s5 + $0x250] sm:$0xff]
    %v4885 = vld [vmem:[%s5 + $0x258] sm:$0xff]
    %v4886 = vld [vmem:[%s5 + $0x260] sm:$0xff]
    %v4887 = vld [vmem:[%s5 + $0x268] sm:$0xff]
    %v4888 = vld [vmem:[%s5 + $0x270] sm:$0xff]
    %v4889 = vld [vmem:[%s5 + $0x278] sm:$0xff]
    %v4890 = vld [vmem:[%s5 + $0x280] sm:$0xff]
    %v4891 = vld [vmem:[%s5 + $0x288] sm:$0xff]
    %v4892 = vld [vmem:[%s5 + $0x290] sm:$0xff]
    %v4893 = vld [vmem:[%s5 + $0x298] sm:$0xff]
    %v4894 = vld [vmem:[%s5 + $0x2a0] sm:$0xff]
    %v4895 = vld [vmem:[%s5 + $0x2a8] sm:$0xff]
    %v4896 = vld [vmem:[%s5 + $0x2b0] sm:$0xff]
    %v4897 = vld [vmem:[%s5 + $0x2b8] sm:$0xff]
    %v4898 = vld [vmem:[%s5 + $0x2c0] sm:$0xff]
    %v4899 = vld [vmem:[%s5 + $0x2c8] sm:$0xff]
    %v4900 = vld [vmem:[%s5 + $0x2d0] sm:$0xff]
    %v4901 = vld [vmem:[%s5 + $0x2d8] sm:$0xff]
    %v4902 = vld [vmem:[%s5 + $0x2e0] sm:$0xff]
    %v4903 = vld [vmem:[%s5 + $0x2e8] sm:$0xff]
    %v4904 = vld [vmem:[%s5 + $0x2f0] sm:$0xff]
    %v4905 = vld [vmem:[%s5 + $0x2f8] sm:$0xff]
    %v4906 = vld [vmem:[%s5 + $0x300] sm:$0xff]
    %v4907 = vld [vmem:[%s5 + $0x308] sm:$0xff]
    %v4908 = vld [vmem:[%s5 + $0x310] sm:$0xff]
    %v4909 = vld [vmem:[%s5 + $0x318] sm:$0xff]
    %v4910 = vld [vmem:[%s5 + $0x320] sm:$0xff]
    %v4911 = vld [vmem:[%s5 + $0x328] sm:$0xff]
    %v4912 = vld [vmem:[%s5 + $0x330] sm:$0xff]
    %v4913 = vld [vmem:[%s5 + $0x338] sm:$0xff]
    %v4914 = vld [vmem:[%s5 + $0x340] sm:$0xff]
    %v4915 = vld [vmem:[%s5 + $0x348] sm:$0xff]
    %v4916 = vld [vmem:[%s5 + $0x350] sm:$0xff]
    %v4917 = vld [vmem:[%s5 + $0x358] sm:$0xff]
    %v4918 = vld [vmem:[%s5 + $0x360] sm:$0xff]
    %v4919 = vld [vmem:[%s5 + $0x368] sm:$0xff]
    %v4920 = vld [vmem:[%s5 + $0x370] sm:$0xff]
    %v4921 = vld [vmem:[%s5 + $0x378] sm:$0xff]
    %v4922 = vld [vmem:[%s5 + $0x380] sm:$0xff]
    %v4923 = vld [vmem:[%s5 + $0x388] sm:$0xff]
    %v4924 = vld [vmem:[%s5 + $0x390] sm:$0xff]
    %v4925 = vld [vmem:[%s5 + $0x398] sm:$0xff]
    %v4926 = vld [vmem:[%s5 + $0x3a0] sm:$0xff]
    %v4927 = vld [vmem:[%s5 + $0x3a8] sm:$0xff]
    %v4928 = vld [vmem:[%s5 + $0x3b0] sm:$0xff]
    %v4929 = vld [vmem:[%s5 + $0x3b8] sm:$0xff]
    %v4930 = vld [vmem:[%s5 + $0x3c0] sm:$0xff]
    %v4931 = vld [vmem:[%s5 + $0x3c8] sm:$0xff]
    %v4932 = vld [vmem:[%s5 + $0x3d0] sm:$0xff]
    %v4933 = vld [vmem:[%s5 + $0x3d8] sm:$0xff]
    %v4934 = vld [vmem:[%s5 + $0x3e0] sm:$0xff]
    %v4935 = vld [vmem:[%s5 + $0x3e8] sm:$0xff]
    %v4936 = vld [vmem:[%s5 + $0x3f0] sm:$0xff]
    %v4937 = vld [vmem:[%s5 + $0x3f8] sm:$0xff]
    %4938 = vmatprep.subr.mxu0 %v4875
    %4939 = vmatpush1.msra.mxu0 %v4874
    %4940 = vmatprep.subr.mxu0 %v4879
    %4941 = vmatpush1.msra.mxu0 %v4878
    %4942 = vmatprep.subr.mxu0 %v4883
    %4943 = vmatpush1.msra.mxu0 %v4882
    %4944 = vmatprep.subr.mxu0 %v4887
    %4945 = vmatpush1.msra.mxu0 %v4886
    %4946 = vmatprep.subr.mxu0 %v4891
    %4947 = vmatpush1.msra.mxu0 %v4890
    %4948 = vmatprep.subr.mxu0 %v4895
    %4949 = vmatpush1.msra.mxu0 %v4894
    %4950 = vmatprep.subr.mxu0 %v4899
    %4951 = vmatpush1.msra.mxu0 %v4898
    %4952 = vmatprep.subr.mxu0 %v4903
    %4953 = vmatpush1.msra.mxu0 %v4902
    %4954 = vmatprep.subr.mxu0 %v4907
    %4955 = vmatpush1.msra.mxu0 %v4906
    %4956 = vmatprep.subr.mxu0 %v4911
    %4957 = vmatpush1.msra.mxu0 %v4910
    %4958 = vmatprep.subr.mxu0 %v4915
    %4959 = vmatpush1.msra.mxu0 %v4914
    %4960 = vmatprep.subr.mxu0 %v4919
    %4961 = vmatpush1.msra.mxu0 %v4918
    %4962 = vmatprep.subr.mxu0 %v4923
    %4963 = vmatpush1.msra.mxu0 %v4922
    %4964 = vmatprep.subr.mxu0 %v4927
    %4965 = vmatpush1.msra.mxu0 %v4926
    %4966 = vmatprep.subr.mxu0 %v4931
    %4967 = vmatpush1.msra.mxu0 %v4930
    %4968 = vmatprep.subr.mxu0 %v4935
    %4969 = vmatpush1.msra.mxu0 %v4934
    %4970 = vmatprep.subr.mxu0 0.0
    %4971 = vmatpush1.msra.mxu0 0.0
    %4972 = vmatprep.subr.mxu0 0.0
    %4973 = vmatpush1.msra.mxu0 0.0
    %4974 = vmatprep.subr.mxu0 0.0
    %4975 = vmatpush1.msra.mxu0 0.0
    %4976 = vmatprep.subr.mxu0 0.0
    %4977 = vmatpush1.msra.mxu0 0.0
    %4978 = vmatprep.subr.mxu0 0.0
    %4979 = vmatpush1.msra.mxu0 0.0
    %4980 = vmatprep.subr.mxu0 0.0
    %4981 = vmatpush1.msra.mxu0 0.0
    %4982 = vmatprep.subr.mxu0 0.0
    %4983 = vmatpush1.msra.mxu0 0.0
    %4984 = vmatprep.subr.mxu0 0.0
    %4985 = vmatpush1.msra.mxu0 0.0
    %4986 = vmatprep.subr.mxu0 0.0
    %4987 = vmatpush1.msra.mxu0 0.0
    %4988 = vmatprep.subr.mxu0 0.0
    %4989 = vmatpush1.msra.mxu0 0.0
    %4990 = vmatprep.subr.mxu0 0.0
    %4991 = vmatpush1.msra.mxu0 0.0
    %4992 = vmatprep.subr.mxu0 0.0
    %4993 = vmatpush1.msra.mxu0 0.0
    %4994 = vmatprep.subr.mxu0 0.0
    %4995 = vmatpush1.msra.mxu0 0.0
    %4996 = vmatprep.subr.mxu0 0.0
    %4997 = vmatpush1.msra.mxu0 0.0
    %4998 = vmatprep.subr.mxu0 0.0
    %4999 = vmatpush1.msra.mxu0 0.0
    %5000 = vmatprep.subr.mxu0 0.0
    %5001 = vmatpush1.msra.mxu0 0.0
    %5002 = vmatprep.mubr.f32.mxu0 0.0
    %5003 = vmatmul.mubr.f32.gmra.mrb[0].mxu0 %v4802
    %v5004 = vpop.f32.mrb[0].mxu0
    %v5005 = vadd.f32 0.0, %v5004
    %v5006 = vpop.f32.mrb[0].mxu0
    %v5007 = vadd.f32 0.0, %v5006
    %5008 = vmatprep.mubr.f32.mxu0 0.0
    %5009 = vmatmul.mubr.f32.gmra.mrb[0].mxu0 %v4803
    %v5010 = vpop.f32.mrb[0].mxu0
    %v5011 = vadd.f32 0.0, %v5010
    %v5012 = vpop.f32.mrb[0].mxu0
    %v5013 = vadd.f32 0.0, %v5012
    %5014 = vmatprep.mubr.f32.mxu0 0.0
    %5015 = vmatmul.mubr.f32.gmra.mrb[0].mxu0 %v4804
    %v5016 = vpop.f32.mrb[0].mxu0
    %v5017 = vadd.f32 0.0, %v5016
    %v5018 = vpop.f32.mrb[0].mxu0
    %v5019 = vadd.f32 0.0, %v5018
    %5020 = vmatprep.mubr.f32.mxu0 0.0
    %5021 = vmatmul.mubr.f32.gmra.mrb[0].mxu0 %v4805
    %v5022 = vpop.f32.mrb[0].mxu0
    %v5023 = vadd.f32 0.0, %v5022
    %v5024 = vpop.f32.mrb[0].mxu0
    %v5025 = vadd.f32 0.0, %v5024
    %5026 = vmatprep.mubr.f32.mxu0 0.0
    %5027 = vmatmul.mubr.f32.gmra.mrb[0].mxu0 %v4806
    %v5028 = vpop.f32.mrb[0].mxu0
    %v5029 = vadd.f32 0.0, %v5028
    %v5030 = vpop.f32.mrb[0].mxu0
    %v5031 = vadd.f32 0.0, %v5030
    %5032 = vmatprep.mubr.f32.mxu0 0.0
    %5033 = vmatmul.mubr.f32.gmra.mrb[0].mxu0 %v4807
    %v5034 = vpop.f32.mrb[0].mxu0
    %v5035 = vadd.f32 0.0, %v5034
    %v5036 = vpop.f32.mrb[0].mxu0
    %v5037 = vadd.f32 0.0, %v5036
    %5038 = vmatprep.mubr.f32.mxu0 0.0
    %5039 = vmatmul.mubr.f32.gmra.mrb[0].mxu0 %v4808
    %v5040 = vpop.f32.mrb[0].mxu0
    %v5041 = vadd.f32 0.0, %v5040
    %v5042 = vpop.f32.mrb[0].mxu0
    %v5043 = vadd.f32 0.0, %v5042
    %5044 = vmatprep.mubr.f32.mxu0 0.0
    %5045 = vmatmul.mubr.f32.gmra.mrb[0].mxu0 %v4809
    %v5046 = vpop.f32.mrb[0].mxu0
    %v5047 = vadd.f32 0.0, %v5046
    %v5048 = vpop.f32.mrb[0].mxu0
    %v5049 = vadd.f32 0.0, %v5048
    %5050 = vdwg.mxu0
    %5051 = vmatprep.subr.mxu0 %v4877
    %5052 = vmatpush1.msra.mxu0 %v4876
    %5053 = vmatprep.subr.mxu0 %v4881
    %5054 = vmatpush1.msra.mxu0 %v4880
    %5055 = vmatprep.subr.mxu0 %v4885
    %5056 = vmatpush1.msra.mxu0 %v4884
    %5057 = vmatprep.subr.mxu0 %v4889
    %5058 = vmatpush1.msra.mxu0 %v4888
    %5059 = vmatprep.subr.mxu0 %v4893
    %5060 = vmatpush1.msra.mxu0 %v4892
    %5061 = vmatprep.subr.mxu0 %v4897
    %5062 = vmatpush1.msra.mxu0 %v4896
    %5063 = vmatprep.subr.mxu0 %v4901
    %5064 = vmatpush1.msra.mxu0 %v4900
    %5065 = vmatprep.subr.mxu0 %v4905
    %5066 = vmatpush1.msra.mxu0 %v4904
    %5067 = vmatprep.subr.mxu0 %v4909
    %5068 = vmatpush1.msra.mxu0 %v4908
    %5069 = vmatprep.subr.mxu0 %v4913
    %5070 = vmatpush1.msra.mxu0 %v4912
    %5071 = vmatprep.subr.mxu0 %v4917
    %5072 = vmatpush1.msra.mxu0 %v4916
    %5073 = vmatprep.subr.mxu0 %v4921
    %5074 = vmatpush1.msra.mxu0 %v4920
    %5075 = vmatprep.subr.mxu0 %v4925
    %5076 = vmatpush1.msra.mxu0 %v4924
    %5077 = vmatprep.subr.mxu0 %v4929
    %5078 = vmatpush1.msra.mxu0 %v4928
    %5079 = vmatprep.subr.mxu0 %v4933
    %5080 = vmatpush1.msra.mxu0 %v4932
    %5081 = vmatprep.subr.mxu0 %v4937
    %5082 = vmatpush1.msra.mxu0 %v4936
    %5083 = vmatprep.subr.mxu0 0.0
    %5084 = vmatpush1.msra.mxu0 0.0
    %5085 = vmatprep.subr.mxu0 0.0
    %5086 = vmatpush1.msra.mxu0 0.0
    %5087 = vmatprep.subr.mxu0 0.0
    %5088 = vmatpush1.msra.mxu0 0.0
    %5089 = vmatprep.subr.mxu0 0.0
    %5090 = vmatpush1.msra.mxu0 0.0
    %5091 = vmatprep.subr.mxu0 0.0
    %5092 = vmatpush1.msra.mxu0 0.0
    %5093 = vmatprep.subr.mxu0 0.0
    %5094 = vmatpush1.msra.mxu0 0.0
    %5095 = vmatprep.subr.mxu0 0.0
    %5096 = vmatpush1.msra.mxu0 0.0
    %5097 = vmatprep.subr.mxu0 0.0
    %5098 = vmatpush1.msra.mxu0 0.0
    %5099 = vmatprep.subr.mxu0 0.0
    %5100 = vmatpush1.msra.mxu0 0.0
    %5101 = vmatprep.subr.mxu0 0.0
    %5102 = vmatpush1.msra.mxu0 0.0
    %5103 = vmatprep.subr.mxu0 0.0
    %5104 = vmatpush1.msra.mxu0 0.0
    %5105 = vmatprep.subr.mxu0 0.0
    %5106 = vmatpush1.msra.mxu0 0.0
    %5107 = vmatprep.subr.mxu0 0.0
    %5108 = vmatpush1.msra.mxu0 0.0
    %5109 = vmatprep.subr.mxu0 0.0
    %5110 = vmatpush1.msra.mxu0 0.0
    %5111 = vmatprep.subr.mxu0 0.0
    %5112 = vmatpush1.msra.mxu0 0.0
    %5113 = vmatprep.subr.mxu0 0.0
    %5114 = vmatpush1.msra.mxu0 0.0
    %5115 = vmatprep.mubr.f32.mxu0 0.0
    %5116 = vmatmul.mubr.f32.gmra.mrb[0].mxu0 %v4802
    %v5117 = vpop.f32.mrb[0].mxu0
    %v5118 = vadd.f32 0.0, %v5117
    %v5119 = vpop.f32.mrb[0].mxu0
    %v5120 = vadd.f32 0.0, %v5119
    %5121 = vmatprep.mubr.f32.mxu0 0.0
    %5122 = vmatmul.mubr.f32.gmra.mrb[0].mxu0 %v4803
    %v5123 = vpop.f32.mrb[0].mxu0
    %v5124 = vadd.f32 0.0, %v5123
    %v5125 = vpop.f32.mrb[0].mxu0
    %v5126 = vadd.f32 0.0, %v5125
    %5127 = vmatprep.mubr.f32.mxu0 0.0
    %5128 = vmatmul.mubr.f32.gmra.mrb[0].mxu0 %v4804
    %v5129 = vpop.f32.mrb[0].mxu0
    %v5130 = vadd.f32 0.0, %v5129
    %v5131 = vpop.f32.mrb[0].mxu0
    %v5132 = vadd.f32 0.0, %v5131
    %5133 = vmatprep.mubr.f32.mxu0 0.0
    %5134 = vmatmul.mubr.f32.gmra.mrb[0].mxu0 %v4805
    %v5135 = vpop.f32.mrb[0].mxu0
    %v5136 = vadd.f32 0.0, %v5135
    %v5137 = vpop.f32.mrb[0].mxu0
    %v5138 = vadd.f32 0.0, %v5137
    %5139 = vmatprep.mubr.f32.mxu0 0.0
    %5140 = vmatmul.mubr.f32.gmra.mrb[0].mxu0 %v4806
    %v5141 = vpop.f32.mrb[0].mxu0
    %v5142 = vadd.f32 0.0, %v5141
    %v5143 = vpop.f32.mrb[0].mxu0
    %v5144 = vadd.f32 0.0, %v5143
    %5145 = vmatprep.mubr.f32.mxu0 0.0
    %5146 = vmatmul.mubr.f32.gmra.mrb[0].mxu0 %v4807
    %v5147 = vpop.f32.mrb[0].mxu0
    %v5148 = vadd.f32 0.0, %v5147
    %v5149 = vpop.f32.mrb[0].mxu0
    %v5150 = vadd.f32 0.0, %v5149
    %5151 = vmatprep.mubr.f32.mxu0 0.0
    %5152 = vmatmul.mubr.f32.gmra.mrb[0].mxu0 %v4808
    %v5153 = vpop.f32.mrb[0].mxu0
    %v5154 = vadd.f32 0.0, %v5153
    %v5155 = vpop.f32.mrb[0].mxu0
    %v5156 = vadd.f32 0.0, %v5155
    %5157 = vmatprep.mubr.f32.mxu0 0.0
    %5158 = vmatmul.mubr.f32.gmra.mrb[0].mxu0 %v4809
    %v5159 = vpop.f32.mrb[0].mxu0
    %v5160 = vadd.f32 0.0, %v5159
    %v5161 = vpop.f32.mrb[0].mxu0
    %v5162 = vadd.f32 0.0, %v5161
    %5163 = vdwg.mxu0
    %5164 = vmatprep.subr.mxu0 %v4811
    %5165 = vmatpush1.msra.mxu0 %v4810
    %5166 = vmatprep.subr.mxu0 %v4815
    %5167 = vmatpush1.msra.mxu0 %v4814
    %5168 = vmatprep.subr.mxu0 %v4819
    %5169 = vmatpush1.msra.mxu0 %v4818
    %5170 = vmatprep.subr.mxu0 %v4823
    %5171 = vmatpush1.msra.mxu0 %v4822
    %5172 = vmatprep.subr.mxu0 %v4827
    %5173 = vmatpush1.msra.mxu0 %v4826
    %5174 = vmatprep.subr.mxu0 %v4831
    %5175 = vmatpush1.msra.mxu0 %v4830
    %5176 = vmatprep.subr.mxu0 %v4835
    %5177 = vmatpush1.msra.mxu0 %v4834
    %5178 = vmatprep.subr.mxu0 %v4839
    %5179 = vmatpush1.msra.mxu0 %v4838
    %5180 = vmatprep.subr.mxu0 %v4843
    %5181 = vmatpush1.msra.mxu0 %v4842
    %5182 = vmatprep.subr.mxu0 %v4847
    %5183 = vmatpush1.msra.mxu0 %v4846
    %5184 = vmatprep.subr.mxu0 %v4851
    %5185 = vmatpush1.msra.mxu0 %v4850
    %5186 = vmatprep.subr.mxu0 %v4855
    %5187 = vmatpush1.msra.mxu0 %v4854
    %5188 = vmatprep.subr.mxu0 %v4859
    %5189 = vmatpush1.msra.mxu0 %v4858
    %5190 = vmatprep.subr.mxu0 %v4863
    %5191 = vmatpush1.msra.mxu0 %v4862
    %5192 = vmatprep.subr.mxu0 %v4867
    %5193 = vmatpush1.msra.mxu0 %v4866
    %5194 = vmatprep.subr.mxu0 %v4871
    %5195 = vmatpush1.msra.mxu0 %v4870
    %5196 = vmatprep.subr.mxu0 0.0
    %5197 = vmatpush1.msra.mxu0 0.0
    %5198 = vmatprep.subr.mxu0 0.0
    %5199 = vmatpush1.msra.mxu0 0.0
    %5200 = vmatprep.subr.mxu0 0.0
    %5201 = vmatpush1.msra.mxu0 0.0
    %5202 = vmatprep.subr.mxu0 0.0
    %5203 = vmatpush1.msra.mxu0 0.0
    %5204 = vmatprep.subr.mxu0 0.0
    %5205 = vmatpush1.msra.mxu0 0.0
    %5206 = vmatprep.subr.mxu0 0.0
    %5207 = vmatpush1.msra.mxu0 0.0
    %5208 = vmatprep.subr.mxu0 0.0
    %5209 = vmatpush1.msra.mxu0 0.0
    %5210 = vmatprep.subr.mxu0 0.0
    %5211 = vmatpush1.msra.mxu0 0.0
    %5212 = vmatprep.subr.mxu0 0.0
    %5213 = vmatpush1.msra.mxu0 0.0
    %5214 = vmatprep.subr.mxu0 0.0
    %5215 = vmatpush1.msra.mxu0 0.0
    %5216 = vmatprep.subr.mxu0 0.0
    %5217 = vmatpush1.msra.mxu0 0.0
    %5218 = vmatprep.subr.mxu0 0.0
    %5219 = vmatpush1.msra.mxu0 0.0
    %5220 = vmatprep.subr.mxu0 0.0
    %5221 = vmatpush1.msra.mxu0 0.0
    %5222 = vmatprep.subr.mxu0 0.0
    %5223 = vmatpush1.msra.mxu0 0.0
    %5224 = vmatprep.subr.mxu0 0.0
    %5225 = vmatpush1.msra.mxu0 0.0
    %5226 = vmatprep.subr.mxu0 0.0
    %5227 = vmatpush1.msra.mxu0 0.0
    %5228 = vmatprep.mubr.f32.mxu0 0.0
    %5229 = vmatmul.mubr.f32.gmra.mrb[0].mxu0 %v4794
    %v5230 = vpop.f32.mrb[0].mxu0
    %v5231 = vadd.f32 %v5005, %v5230
    %v5232 = vpop.f32.mrb[0].mxu0
    %v5233 = vadd.f32 %v5007, %v5232
    %5234 = vmatprep.mubr.f32.mxu0 0.0
    %5235 = vmatmul.mubr.f32.gmra.mrb[0].mxu0 %v4795
    %v5236 = vpop.f32.mrb[0].mxu0
    %v5237 = vadd.f32 %v5011, %v5236
    %v5238 = vpop.f32.mrb[0].mxu0
    %v5239 = vadd.f32 %v5013, %v5238
    %5240 = vmatprep.mubr.f32.mxu0 0.0
    %5241 = vmatmul.mubr.f32.gmra.mrb[0].mxu0 %v4796
    %v5242 = vpop.f32.mrb[0].mxu0
    %v5243 = vadd.f32 %v5017, %v5242
    %v5244 = vpop.f32.mrb[0].mxu0
    %v5245 = vadd.f32 %v5019, %v5244
    %5246 = vmatprep.mubr.f32.mxu0 0.0
    %5247 = vmatmul.mubr.f32.gmra.mrb[0].mxu0 %v4797
    %v5248 = vpop.f32.mrb[0].mxu0
    %v5249 = vadd.f32 %v5023, %v5248
    %v5250 = vpop.f32.mrb[0].mxu0
    %v5251 = vadd.f32 %v5025, %v5250
    %5252 = vmatprep.mubr.f32.mxu0 0.0
    %5253 = vmatmul.mubr.f32.gmra.mrb[0].mxu0 %v4798
    %v5254 = vpop.f32.mrb[0].mxu0
    %v5255 = vadd.f32 %v5029, %v5254
    %v5256 = vpop.f32.mrb[0].mxu0
    %v5257 = vadd.f32 %v5031, %v5256
    %5258 = vmatprep.mubr.f32.mxu0 0.0
    %5259 = vmatmul.mubr.f32.gmra.mrb[0].mxu0 %v4799
    %v5260 = vpop.f32.mrb[0].mxu0
    %v5261 = vadd.f32 %v5035, %v5260
    %v5262 = vpop.f32.mrb[0].mxu0
    %v5263 = vadd.f32 %v5037, %v5262
    %5264 = vmatprep.mubr.f32.mxu0 0.0
    %5265 = vmatmul.mubr.f32.gmra.mrb[0].mxu0 %v4800
    %v5266 = vpop.f32.mrb[0].mxu0
    %v5267 = vadd.f32 %v5041, %v5266
    %v5268 = vpop.f32.mrb[0].mxu0
    %v5269 = vadd.f32 %v5043, %v5268
    %5270 = vmatprep.mubr.f32.mxu0 0.0
    %5271 = vmatmul.mubr.f32.gmra.mrb[0].mxu0 %v4801
    %v5272 = vpop.f32.mrb[0].mxu0
    %v5273 = vadd.f32 %v5047, %v5272
    %v5274 = vpop.f32.mrb[0].mxu0
    %v5275 = vadd.f32 %v5049, %v5274
    %5276 = vdwg.mxu0
    %5277 = vmatprep.subr.mxu0 %v4813
    %5278 = vmatpush1.msra.mxu0 %v4812
    %5279 = vmatprep.subr.mxu0 %v4817
    %5280 = vmatpush1.msra.mxu0 %v4816
    %5281 = vmatprep.subr.mxu0 %v4821
    %5282 = vmatpush1.msra.mxu0 %v4820
    %5283 = vmatprep.subr.mxu0 %v4825
    %5284 = vmatpush1.msra.mxu0 %v4824
    %5285 = vmatprep.subr.mxu0 %v4829
    %5286 = vmatpush1.msra.mxu0 %v4828
    %5287 = vmatprep.subr.mxu0 %v4833
    %5288 = vmatpush1.msra.mxu0 %v4832
    %5289 = vmatprep.subr.mxu0 %v4837
    %5290 = vmatpush1.msra.mxu0 %v4836
    %5291 = vmatprep.subr.mxu0 %v4841
    %5292 = vmatpush1.msra.mxu0 %v4840
    %5293 = vmatprep.subr.mxu0 %v4845
    %5294 = vmatpush1.msra.mxu0 %v4844
    %5295 = vmatprep.subr.mxu0 %v4849
    %5296 = vmatpush1.msra.mxu0 %v4848
    %5297 = vmatprep.subr.mxu0 %v4853
    %5298 = vmatpush1.msra.mxu0 %v4852
    %5299 = vmatprep.subr.mxu0 %v4857
    %5300 = vmatpush1.msra.mxu0 %v4856
    %5301 = vmatprep.subr.mxu0 %v4861
    %5302 = vmatpush1.msra.mxu0 %v4860
    %5303 = vmatprep.subr.mxu0 %v4865
    %5304 = vmatpush1.msra.mxu0 %v4864
    %5305 = vmatprep.subr.mxu0 %v4869
    %5306 = vmatpush1.msra.mxu0 %v4868
    %5307 = vmatprep.subr.mxu0 %v4873
    %5308 = vmatpush1.msra.mxu0 %v4872
    %5309 = vmatprep.subr.mxu0 0.0
    %5310 = vmatpush1.msra.mxu0 0.0
    %5311 = vmatprep.subr.mxu0 0.0
    %5312 = vmatpush1.msra.mxu0 0.0
    %5313 = vmatprep.subr.mxu0 0.0
    %5314 = vmatpush1.msra.mxu0 0.0
    %5315 = vmatprep.subr.mxu0 0.0
    %5316 = vmatpush1.msra.mxu0 0.0
    %5317 = vmatprep.subr.mxu0 0.0
    %5318 = vmatpush1.msra.mxu0 0.0
    %5319 = vmatprep.subr.mxu0 0.0
    %5320 = vmatpush1.msra.mxu0 0.0
    %5321 = vmatprep.subr.mxu0 0.0
    %5322 = vmatpush1.msra.mxu0 0.0
    %5323 = vmatprep.subr.mxu0 0.0
    %5324 = vmatpush1.msra.mxu0 0.0
    %5325 = vmatprep.subr.mxu0 0.0
    %5326 = vmatpush1.msra.mxu0 0.0
    %5327 = vmatprep.subr.mxu0 0.0
    %5328 = vmatpush1.msra.mxu0 0.0
    %5329 = vmatprep.subr.mxu0 0.0
    %5330 = vmatpush1.msra.mxu0 0.0
    %5331 = vmatprep.subr.mxu0 0.0
    %5332 = vmatpush1.msra.mxu0 0.0
    %5333 = vmatprep.subr.mxu0 0.0
    %5334 = vmatpush1.msra.mxu0 0.0
    %5335 = vmatprep.subr.mxu0 0.0
    %5336 = vmatpush1.msra.mxu0 0.0
    %5337 = vmatprep.subr.mxu0 0.0
    %5338 = vmatpush1.msra.mxu0 0.0
    %5339 = vmatprep.subr.mxu0 0.0
    %5340 = vmatpush1.msra.mxu0 0.0
    %5341 = vmatprep.mubr.f32.mxu0 0.0
    %5342 = vmatmul.mubr.f32.gmra.mrb[0].mxu0 %v4794
    %v5343 = vpop.f32.mrb[0].mxu0
    %v5344 = vadd.f32 %v5118, %v5343
    %v5345 = vpop.f32.mrb[0].mxu0
    %v5346 = vadd.f32 %v5120, %v5345
    %5347 = vmatprep.mubr.f32.mxu0 0.0
    %5348 = vmatmul.mubr.f32.gmra.mrb[0].mxu0 %v4795
    %v5349 = vpop.f32.mrb[0].mxu0
    %v5350 = vadd.f32 %v5124, %v5349
    %v5351 = vpop.f32.mrb[0].mxu0
    %v5352 = vadd.f32 %v5126, %v5351
    %5353 = vmatprep.mubr.f32.mxu0 0.0
    %5354 = vmatmul.mubr.f32.gmra.mrb[0].mxu0 %v4796
    %v5355 = vpop.f32.mrb[0].mxu0
    %v5356 = vadd.f32 %v5130, %v5355
    %v5357 = vpop.f32.mrb[0].mxu0
    %v5358 = vadd.f32 %v5132, %v5357
    %5359 = vmatprep.mubr.f32.mxu0 0.0
    %5360 = vmatmul.mubr.f32.gmra.mrb[0].mxu0 %v4797
    %v5361 = vpop.f32.mrb[0].mxu0
    %v5362 = vadd.f32 %v5136, %v5361
    %v5363 = vpop.f32.mrb[0].mxu0
    %v5364 = vadd.f32 %v5138, %v5363
    %5365 = vmatprep.mubr.f32.mxu0 0.0
    %5366 = vmatmul.mubr.f32.gmra.mrb[0].mxu0 %v4798
    %v5367 = vpop.f32.mrb[0].mxu0
    %v5368 = vadd.f32 %v5142, %v5367
    %v5369 = vpop.f32.mrb[0].mxu0
    %v5370 = vadd.f32 %v5144, %v5369
    %5371 = vmatprep.mubr.f32.mxu0 0.0
    %5372 = vmatmul.mubr.f32.gmra.mrb[0].mxu0 %v4799
    %v5373 = vpop.f32.mrb[0].mxu0
    %v5374 = vadd.f32 %v5148, %v5373
    %v5375 = vpop.f32.mrb[0].mxu0
    %v5376 = vadd.f32 %v5150, %v5375
    %5377 = vmatprep.mubr.f32.mxu0 0.0
    %5378 = vmatmul.mubr.f32.gmra.mrb[0].mxu0 %v4800
    %v5379 = vpop.f32.mrb[0].mxu0
    %v5380 = vadd.f32 %v5154, %v5379
    %v5381 = vpop.f32.mrb[0].mxu0
    %v5382 = vadd.f32 %v5156, %v5381
    %5383 = vmatprep.mubr.f32.mxu0 0.0
    %5384 = vmatmul.mubr.f32.gmra.mrb[0].mxu0 %v4801
    %v5385 = vpop.f32.mrb[0].mxu0
    %v5386 = vadd.f32 %v5160, %v5385
    %v5387 = vpop.f32.mrb[0].mxu0
    %v5388 = vadd.f32 %v5162, %v5387
    %5389 = vdwg.mxu0
    %v5390 = vld [vmem:[%s9] sm:$0xf]
    %v5392 = vlaneseq
    %v5393 = vshrl.u32 %v5392, 7
    %v5394 = vsub.s32 0, %v5393
    %v5395 = vrot.slane %v5390, %v5394
    %v5396 = vlaneseq
    %v5397 = vshrl.u32 %v5396, 7
    %v5398 = vsub.s32 1, %v5397
    %v5399 = vrot.slane %v5390, %v5398
    %v5400 = vlaneseq
    %v5401 = vshrl.u32 %v5400, 7
    %v5402 = vsub.s32 2, %v5401
    %v5403 = vrot.slane %v5390, %v5402
    %v5404 = vlaneseq
    %v5405 = vshrl.u32 %v5404, 7
    %v5406 = vsub.s32 3, %v5405
    %v5407 = vrot.slane %v5390, %v5406
    %v5412 = vadd.f32 %v5231, %v5395
    %v5413 = vadd.f32 %v5233, %v5399
    %v5414 = vadd.f32 %v5344, %v5403
    %v5415 = vadd.f32 %v5346, %v5407
    %v5416 = vadd.f32 %v5237, %v5395
    %v5417 = vadd.f32 %v5239, %v5399
    %v5418 = vadd.f32 %v5350, %v5403
    %v5419 = vadd.f32 %v5352, %v5407
    %v5420 = vadd.f32 %v5243, %v5395
    %v5421 = vadd.f32 %v5245, %v5399
    %v5422 = vadd.f32 %v5356, %v5403
    %v5423 = vadd.f32 %v5358, %v5407
    %v5424 = vadd.f32 %v5249, %v5395
    %v5425 = vadd.f32 %v5251, %v5399
    %v5426 = vadd.f32 %v5362, %v5403
    %v5427 = vadd.f32 %v5364, %v5407
    %v5428 = vadd.f32 %v5255, %v5395
    %v5429 = vadd.f32 %v5257, %v5399
    %v5430 = vadd.f32 %v5368, %v5403
    %v5431 = vadd.f32 %v5370, %v5407
    %v5432 = vadd.f32 %v5261, %v5395
    %v5433 = vadd.f32 %v5263, %v5399
    %v5434 = vadd.f32 %v5374, %v5403
    %v5435 = vadd.f32 %v5376, %v5407
    %v5436 = vadd.f32 %v5267, %v5395
    %v5437 = vadd.f32 %v5269, %v5399
    %v5438 = vadd.f32 %v5380, %v5403
    %v5439 = vadd.f32 %v5382, %v5407
    %v5440 = vadd.f32 %v5273, %v5395
    %v5441 = vadd.f32 %v5275, %v5399
    %v5442 = vadd.f32 %v5386, %v5403
    %v5443 = vadd.f32 %v5388, %v5407
    %5444 = vst [vmem:[#allocation6] sm:$0xff] %v5412
    %5445 = vst [vmem:[#allocation6 + $0x8] sm:$0xff] %v5413
    %5446 = vst [vmem:[#allocation6 + $0x10] sm:$0xff] %v5414
    %5447 = vst [vmem:[#allocation6 + $0x18] sm:$0xff] %v5415
    %5448 = vst [vmem:[#allocation6 + $0x20] sm:$0xff] %v5416
    %5449 = vst [vmem:[#allocation6 + $0x28] sm:$0xff] %v5417
    %5450 = vst [vmem:[#allocation6 + $0x30] sm:$0xff] %v5418
    %5451 = vst [vmem:[#allocation6 + $0x38] sm:$0xff] %v5419
    %5452 = vst [vmem:[#allocation6 + $0x40] sm:$0xff] %v5420
    %5453 = vst [vmem:[#allocation6 + $0x48] sm:$0xff] %v5421
    %5454 = vst [vmem:[#allocation6 + $0x50] sm:$0xff] %v5422
    %5455 = vst [vmem:[#allocation6 + $0x58] sm:$0xff] %v5423
    %5456 = vst [vmem:[#allocation6 + $0x60] sm:$0xff] %v5424
    %5457 = vst [vmem:[#allocation6 + $0x68] sm:$0xff] %v5425
    %5458 = vst [vmem:[#allocation6 + $0x70] sm:$0xff] %v5426
    %5459 = vst [vmem:[#allocation6 + $0x78] sm:$0xff] %v5427
    %5460 = vst [vmem:[#allocation6 + $0x80] sm:$0xff] %v5428
    %5461 = vst [vmem:[#allocation6 + $0x88] sm:$0xff] %v5429
    %5462 = vst [vmem:[#allocation6 + $0x90] sm:$0xff] %v5430
    %5463 = vst [vmem:[#allocation6 + $0x98] sm:$0xff] %v5431
    %5464 = vst [vmem:[#allocation6 + $0xa0] sm:$0xff] %v5432
    %5465 = vst [vmem:[#allocation6 + $0xa8] sm:$0xff] %v5433
    %5466 = vst [vmem:[#allocation6 + $0xb0] sm:$0xff] %v5434
    %5467 = vst [vmem:[#allocation6 + $0xb8] sm:$0xff] %v5435
    %5468 = vst [vmem:[#allocation6 + $0xc0] sm:$0xff] %v5436
    %5469 = vst [vmem:[#allocation6 + $0xc8] sm:$0xff] %v5437
    %5470 = vst [vmem:[#allocation6 + $0xd0] sm:$0xff] %v5438
    %5471 = vst [vmem:[#allocation6 + $0xd8] sm:$0xff] %v5439
    %5472 = vst [vmem:[#allocation6 + $0xe0] sm:$0xff] %v5440
    %5473 = vst [vmem:[#allocation6 + $0xe8] sm:$0xff] %v5441
    %5474 = vst [vmem:[#allocation6 + $0xf0] sm:$0xff] %v5442
    %5475 = vst [vmem:[#allocation6 + $0xf8] sm:$0xff] %v5443
    %v5476 = vld [vmem:[#allocation6] sm:$0xff]
    %v5477 = vld [vmem:[#allocation6 + $0x8] sm:$0xff]
    %v5478 = vld [vmem:[#allocation6 + $0x10] sm:$0xff]
    %v5479 = vld [vmem:[#allocation6 + $0x18] sm:$0xff]
    %v5480 = vld [vmem:[#allocation12] sm:$0xff]
    %v5481 = vld [vmem:[#allocation12 + $0x8] sm:$0xff]
    %v5482 = vld [vmem:[#allocation12 + $0x10] sm:$0xff]
    %v5483 = vld [vmem:[#allocation12 + $0x18] sm:$0xff]
    %v5484 = vld [vmem:[#allocation12 + $0x20] sm:$0xff]
    %v5485 = vld [vmem:[#allocation12 + $0x28] sm:$0xff]
    %v5486 = vld [vmem:[#allocation12 + $0x30] sm:$0xff]
    %v5487 = vld [vmem:[#allocation12 + $0x38] sm:$0xff]
    %v5488 = vld [vmem:[#allocation12 + $0x40] sm:$0xff]
    %v5489 = vld [vmem:[#allocation12 + $0x48] sm:$0xff]
    %v5490 = vld [vmem:[#allocation12 + $0x50] sm:$0xff]
    %v5491 = vld [vmem:[#allocation12 + $0x58] sm:$0xff]
    %v5492 = vld [vmem:[#allocation12 + $0x60] sm:$0xff]
    %v5493 = vld [vmem:[#allocation12 + $0x68] sm:$0xff]
    %v5494 = vld [vmem:[#allocation12 + $0x70] sm:$0xff]
    %v5495 = vld [vmem:[#allocation12 + $0x78] sm:$0xff]
    %v5496 = vld [vmem:[#allocation12 + $0x80] sm:$0xff]
    %v5497 = vld [vmem:[#allocation12 + $0x88] sm:$0xff]
    %v5498 = vld [vmem:[#allocation12 + $0x90] sm:$0xff]
    %v5499 = vld [vmem:[#allocation12 + $0x98] sm:$0xff]
    %v5500 = vld [vmem:[#allocation12 + $0xa0] sm:$0xff]
    %v5501 = vld [vmem:[#allocation12 + $0xa8] sm:$0xff]
    %v5502 = vld [vmem:[#allocation12 + $0xb0] sm:$0xff]
    %v5503 = vld [vmem:[#allocation12 + $0xb8] sm:$0xff]
    %v5504 = vld [vmem:[#allocation12 + $0xc0] sm:$0xff]
    %v5505 = vld [vmem:[#allocation12 + $0xc8] sm:$0xff]
    %v5506 = vld [vmem:[#allocation12 + $0xd0] sm:$0xff]
    %v5507 = vld [vmem:[#allocation12 + $0xd8] sm:$0xff]
    %v5508 = vld [vmem:[#allocation12 + $0xe0] sm:$0xff]
    %v5509 = vld [vmem:[#allocation12 + $0xe8] sm:$0xff]
    %v5510 = vld [vmem:[#allocation12 + $0xf0] sm:$0xff]
    %v5511 = vld [vmem:[#allocation12 + $0xf8] sm:$0xff]
    %v5512 = vld [vmem:[#allocation12 + $0x100] sm:$0xff]
    %v5513 = vld [vmem:[#allocation12 + $0x108] sm:$0xff]
    %v5514 = vld [vmem:[#allocation12 + $0x110] sm:$0xff]
    %v5515 = vld [vmem:[#allocation12 + $0x118] sm:$0xff]
    %v5516 = vld [vmem:[#allocation12 + $0x120] sm:$0xff]
    %v5517 = vld [vmem:[#allocation12 + $0x128] sm:$0xff]
    %v5518 = vld [vmem:[#allocation12 + $0x130] sm:$0xff]
    %v5519 = vld [vmem:[#allocation12 + $0x138] sm:$0xff]
    %v5520 = vld [vmem:[#allocation12 + $0x140] sm:$0xff]
    %v5521 = vld [vmem:[#allocation12 + $0x148] sm:$0xff]
    %v5522 = vld [vmem:[#allocation12 + $0x150] sm:$0xff]
    %v5523 = vld [vmem:[#allocation12 + $0x158] sm:$0xff]
    %v5524 = vld [vmem:[#allocation12 + $0x160] sm:$0xff]
    %v5525 = vld [vmem:[#allocation12 + $0x168] sm:$0xff]
    %v5526 = vld [vmem:[#allocation12 + $0x170] sm:$0xff]
    %v5527 = vld [vmem:[#allocation12 + $0x178] sm:$0xff]
    %v5528 = vld [vmem:[#allocation12 + $0x180] sm:$0xff]
    %v5529 = vld [vmem:[#allocation12 + $0x188] sm:$0xff]
    %v5530 = vld [vmem:[#allocation12 + $0x190] sm:$0xff]
    %v5531 = vld [vmem:[#allocation12 + $0x198] sm:$0xff]
    %v5532 = vld [vmem:[#allocation12 + $0x1a0] sm:$0xff]
    %v5533 = vld [vmem:[#allocation12 + $0x1a8] sm:$0xff]
    %v5534 = vld [vmem:[#allocation12 + $0x1b0] sm:$0xff]
    %v5535 = vld [vmem:[#allocation12 + $0x1b8] sm:$0xff]
    %v5536 = vld [vmem:[#allocation12 + $0x1c0] sm:$0xff]
    %v5537 = vld [vmem:[#allocation12 + $0x1c8] sm:$0xff]
    %v5538 = vld [vmem:[#allocation12 + $0x1d0] sm:$0xff]
    %v5539 = vld [vmem:[#allocation12 + $0x1d8] sm:$0xff]
    %v5540 = vld [vmem:[#allocation12 + $0x1e0] sm:$0xff]
    %v5541 = vld [vmem:[#allocation12 + $0x1e8] sm:$0xff]
    %v5542 = vld [vmem:[#allocation12 + $0x1f0] sm:$0xff]
    %v5543 = vld [vmem:[#allocation12 + $0x1f8] sm:$0xff]
    %5544 = vmatprep.subr.mxu0 %v5481
    %5545 = vmatpush1.msra.mxu0 %v5480
    %5546 = vmatprep.subr.mxu0 %v5485
    %5547 = vmatpush1.msra.mxu0 %v5484
    %5548 = vmatprep.subr.mxu0 %v5489
    %5549 = vmatpush1.msra.mxu0 %v5488
    %5550 = vmatprep.subr.mxu0 %v5493
    %5551 = vmatpush1.msra.mxu0 %v5492
    %5552 = vmatprep.subr.mxu0 %v5497
    %5553 = vmatpush1.msra.mxu0 %v5496
    %5554 = vmatprep.subr.mxu0 %v5501
    %5555 = vmatpush1.msra.mxu0 %v5500
    %5556 = vmatprep.subr.mxu0 %v5505
    %5557 = vmatpush1.msra.mxu0 %v5504
    %5558 = vmatprep.subr.mxu0 %v5509
    %5559 = vmatpush1.msra.mxu0 %v5508
    %5560 = vmatprep.subr.mxu0 %v5513
    %5561 = vmatpush1.msra.mxu0 %v5512
    %5562 = vmatprep.subr.mxu0 %v5517
    %5563 = vmatpush1.msra.mxu0 %v5516
    %5564 = vmatprep.subr.mxu0 %v5521
    %5565 = vmatpush1.msra.mxu0 %v5520
    %5566 = vmatprep.subr.mxu0 %v5525
    %5567 = vmatpush1.msra.mxu0 %v5524
    %5568 = vmatprep.subr.mxu0 %v5529
    %5569 = vmatpush1.msra.mxu0 %v5528
    %5570 = vmatprep.subr.mxu0 %v5533
    %5571 = vmatpush1.msra.mxu0 %v5532
    %5572 = vmatprep.subr.mxu0 %v5537
    %5573 = vmatpush1.msra.mxu0 %v5536
    %5574 = vmatprep.subr.mxu0 %v5541
    %5575 = vmatpush1.msra.mxu0 %v5540
    %5576 = vmatprep.subr.mxu0 0.0
    %5577 = vmatpush1.msra.mxu0 0.0
    %5578 = vmatprep.subr.mxu0 0.0
    %5579 = vmatpush1.msra.mxu0 0.0
    %5580 = vmatprep.subr.mxu0 0.0
    %5581 = vmatpush1.msra.mxu0 0.0
    %5582 = vmatprep.subr.mxu0 0.0
    %5583 = vmatpush1.msra.mxu0 0.0
    %5584 = vmatprep.subr.mxu0 0.0
    %5585 = vmatpush1.msra.mxu0 0.0
    %5586 = vmatprep.subr.mxu0 0.0
    %5587 = vmatpush1.msra.mxu0 0.0
    %5588 = vmatprep.subr.mxu0 0.0
    %5589 = vmatpush1.msra.mxu0 0.0
    %5590 = vmatprep.subr.mxu0 0.0
    %5591 = vmatpush1.msra.mxu0 0.0
    %5592 = vmatprep.subr.mxu0 0.0
    %5593 = vmatpush1.msra.mxu0 0.0
    %5594 = vmatprep.subr.mxu0 0.0
    %5595 = vmatpush1.msra.mxu0 0.0
    %5596 = vmatprep.subr.mxu0 0.0
    %5597 = vmatpush1.msra.mxu0 0.0
    %5598 = vmatprep.subr.mxu0 0.0
    %5599 = vmatpush1.msra.mxu0 0.0
    %5600 = vmatprep.subr.mxu0 0.0
    %5601 = vmatpush1.msra.mxu0 0.0
    %5602 = vmatprep.subr.mxu0 0.0
    %5603 = vmatpush1.msra.mxu0 0.0
    %5604 = vmatprep.subr.mxu0 0.0
    %5605 = vmatpush1.msra.mxu0 0.0
    %5606 = vmatprep.subr.mxu0 0.0
    %5607 = vmatpush1.msra.mxu0 0.0
    %5608 = vmatprep.mubr.f32.mxu0 0.0
    %5609 = vmatmul.mubr.f32.gmra.mrb[0].mxu0 0.0
    %v5610 = vpop.f32.mrb[0].mxu0
    %v5611 = vadd.f32 0.0, %v5610
    %v5612 = vpop.f32.mrb[0].mxu0
    %v5613 = vadd.f32 0.0, %v5612
    %5614 = vdwg.mxu0
    %5615 = vmatprep.subr.mxu0 %v5483
    %5616 = vmatpush1.msra.mxu0 %v5482
    %5617 = vmatprep.subr.mxu0 %v5487
    %5618 = vmatpush1.msra.mxu0 %v5486
    %5619 = vmatprep.subr.mxu0 %v5491
    %5620 = vmatpush1.msra.mxu0 %v5490
    %5621 = vmatprep.subr.mxu0 %v5495
    %5622 = vmatpush1.msra.mxu0 %v5494
    %5623 = vmatprep.subr.mxu0 %v5499
    %5624 = vmatpush1.msra.mxu0 %v5498
    %5625 = vmatprep.subr.mxu0 %v5503
    %5626 = vmatpush1.msra.mxu0 %v5502
    %5627 = vmatprep.subr.mxu0 %v5507
    %5628 = vmatpush1.msra.mxu0 %v5506
    %5629 = vmatprep.subr.mxu0 %v5511
    %5630 = vmatpush1.msra.mxu0 %v5510
    %5631 = vmatprep.subr.mxu0 %v5515
    %5632 = vmatpush1.msra.mxu0 %v5514
    %5633 = vmatprep.subr.mxu0 %v5519
    %5634 = vmatpush1.msra.mxu0 %v5518
    %5635 = vmatprep.subr.mxu0 %v5523
    %5636 = vmatpush1.msra.mxu0 %v5522
    %5637 = vmatprep.subr.mxu0 %v5527
    %5638 = vmatpush1.msra.mxu0 %v5526
    %5639 = vmatprep.subr.mxu0 %v5531
    %5640 = vmatpush1.msra.mxu0 %v5530
    %5641 = vmatprep.subr.mxu0 %v5535
    %5642 = vmatpush1.msra.mxu0 %v5534
    %5643 = vmatprep.subr.mxu0 %v5539
    %5644 = vmatpush1.msra.mxu0 %v5538
    %5645 = vmatprep.subr.mxu0 %v5543
    %5646 = vmatpush1.msra.mxu0 %v5542
    %5647 = vmatprep.subr.mxu0 0.0
    %5648 = vmatpush1.msra.mxu0 0.0
    %5649 = vmatprep.subr.mxu0 0.0
    %5650 = vmatpush1.msra.mxu0 0.0
    %5651 = vmatprep.subr.mxu0 0.0
    %5652 = vmatpush1.msra.mxu0 0.0
    %5653 = vmatprep.subr.mxu0 0.0
    %5654 = vmatpush1.msra.mxu0 0.0
    %5655 = vmatprep.subr.mxu0 0.0
    %5656 = vmatpush1.msra.mxu0 0.0
    %5657 = vmatprep.subr.mxu0 0.0
    %5658 = vmatpush1.msra.mxu0 0.0
    %5659 = vmatprep.subr.mxu0 0.0
    %5660 = vmatpush1.msra.mxu0 0.0
    %5661 = vmatprep.subr.mxu0 0.0
    %5662 = vmatpush1.msra.mxu0 0.0
    %5663 = vmatprep.subr.mxu0 0.0
    %5664 = vmatpush1.msra.mxu0 0.0
    %5665 = vmatprep.subr.mxu0 0.0
    %5666 = vmatpush1.msra.mxu0 0.0
    %5667 = vmatprep.subr.mxu0 0.0
    %5668 = vmatpush1.msra.mxu0 0.0
    %5669 = vmatprep.subr.mxu0 0.0
    %5670 = vmatpush1.msra.mxu0 0.0
    %5671 = vmatprep.subr.mxu0 0.0
    %5672 = vmatpush1.msra.mxu0 0.0
    %5673 = vmatprep.subr.mxu0 0.0
    %5674 = vmatpush1.msra.mxu0 0.0
    %5675 = vmatprep.subr.mxu0 0.0
    %5676 = vmatpush1.msra.mxu0 0.0
    %5677 = vmatprep.subr.mxu0 0.0
    %5678 = vmatpush1.msra.mxu0 0.0
    %5679 = vmatprep.mubr.f32.mxu0 0.0
    %5680 = vmatmul.mubr.f32.gmra.mrb[0].mxu0 0.0
    %v5681 = vpop.f32.mrb[0].mxu0
    %v5682 = vadd.f32 0.0, %v5681
    %v5683 = vpop.f32.mrb[0].mxu0
    %v5684 = vadd.f32 0.0, %v5683
    %5685 = vdwg.mxu0
    %v5686 = vadd.f32 %v5476, %v5611
    %v5687 = vadd.f32 %v5477, %v5613
    %v5688 = vadd.f32 %v5478, %v5682
    %v5689 = vadd.f32 %v5479, %v5684
    %v5690 = vxor.u32 %v5686, 2147483648
    %v5691 = vmul.f32 %v5690, 1.442695
    %v5692 = vpow.pop %v5691
    %v5693 = vadd.f32 %v5692, 1.0
    %v5694 = vrcp.pop %v5693
    %v5695 = vmul.f32 1.0, %v5694
    %v5696 = vxor.u32 %v5687, 2147483648
    %v5697 = vmul.f32 %v5696, 1.442695
    %v5698 = vpow.pop %v5697
    %v5699 = vadd.f32 %v5698, 1.0
    %v5700 = vrcp.pop %v5699
    %v5701 = vmul.f32 1.0, %v5700
    %v5702 = vtanh.pop %v5688
    %v5703 = vxor.u32 %v5689, 2147483648
    %v5704 = vmul.f32 %v5703, 1.442695
    %v5705 = vpow.pop %v5704
    %v5706 = vadd.f32 %v5705, 1.0
    %v5707 = vrcp.pop %v5706
    %v5708 = vmul.f32 1.0, %v5707
    %v5709 = vmul.f32 %v5701, 0.0
    %v5710 = vmul.f32 %v5695, %v5702
    %v5711 = vadd.f32 %v5709, %v5710
    %v5712 = vtanh.pop %v5711
    %v5713 = vmul.f32 %v5708, %v5712
    %s5714 = scalar_lea.vmem [#allocation6], 32
    %v5715 = vld [vmem:[%s5714] sm:$0xff]
    %v5716 = vld [vmem:[%s5714 + $0x8] sm:$0xff]
    %v5717 = vld [vmem:[%s5714 + $0x10] sm:$0xff]
    %v5718 = vld [vmem:[%s5714 + $0x18] sm:$0xff]
    %5719 = vmatprep.subr.mxu0 %v5481
    %5720 = vmatpush1.msra.mxu0 %v5480
    %5721 = vmatprep.subr.mxu0 %v5485
    %5722 = vmatpush1.msra.mxu0 %v5484
    %5723 = vmatprep.subr.mxu0 %v5489
    %5724 = vmatpush1.msra.mxu0 %v5488
    %5725 = vmatprep.subr.mxu0 %v5493
    %5726 = vmatpush1.msra.mxu0 %v5492
    %5727 = vmatprep.subr.mxu0 %v5497
    %5728 = vmatpush1.msra.mxu0 %v5496
    %5729 = vmatprep.subr.mxu0 %v5501
    %5730 = vmatpush1.msra.mxu0 %v5500
    %5731 = vmatprep.subr.mxu0 %v5505
    %5732 = vmatpush1.msra.mxu0 %v5504
    %5733 = vmatprep.subr.mxu0 %v5509
    %5734 = vmatpush1.msra.mxu0 %v5508
    %5735 = vmatprep.subr.mxu0 %v5513
    %5736 = vmatpush1.msra.mxu0 %v5512
    %5737 = vmatprep.subr.mxu0 %v5517
    %5738 = vmatpush1.msra.mxu0 %v5516
    %5739 = vmatprep.subr.mxu0 %v5521
    %5740 = vmatpush1.msra.mxu0 %v5520
    %5741 = vmatprep.subr.mxu0 %v5525
    %5742 = vmatpush1.msra.mxu0 %v5524
    %5743 = vmatprep.subr.mxu0 %v5529
    %5744 = vmatpush1.msra.mxu0 %v5528
    %5745 = vmatprep.subr.mxu0 %v5533
    %5746 = vmatpush1.msra.mxu0 %v5532
    %5747 = vmatprep.subr.mxu0 %v5537
    %5748 = vmatpush1.msra.mxu0 %v5536
    %5749 = vmatprep.subr.mxu0 %v5541
    %5750 = vmatpush1.msra.mxu0 %v5540
    %5751 = vmatprep.subr.mxu0 0.0
    %5752 = vmatpush1.msra.mxu0 0.0
    %5753 = vmatprep.subr.mxu0 0.0
    %5754 = vmatpush1.msra.mxu0 0.0
    %5755 = vmatprep.subr.mxu0 0.0
    %5756 = vmatpush1.msra.mxu0 0.0
    %5757 = vmatprep.subr.mxu0 0.0
    %5758 = vmatpush1.msra.mxu0 0.0
    %5759 = vmatprep.subr.mxu0 0.0
    %5760 = vmatpush1.msra.mxu0 0.0
    %5761 = vmatprep.subr.mxu0 0.0
    %5762 = vmatpush1.msra.mxu0 0.0
    %5763 = vmatprep.subr.mxu0 0.0
    %5764 = vmatpush1.msra.mxu0 0.0
    %5765 = vmatprep.subr.mxu0 0.0
    %5766 = vmatpush1.msra.mxu0 0.0
    %5767 = vmatprep.subr.mxu0 0.0
    %5768 = vmatpush1.msra.mxu0 0.0
    %5769 = vmatprep.subr.mxu0 0.0
    %5770 = vmatpush1.msra.mxu0 0.0
    %5771 = vmatprep.subr.mxu0 0.0
    %5772 = vmatpush1.msra.mxu0 0.0
    %5773 = vmatprep.subr.mxu0 0.0
    %5774 = vmatpush1.msra.mxu0 0.0
    %5775 = vmatprep.subr.mxu0 0.0
    %5776 = vmatpush1.msra.mxu0 0.0
    %5777 = vmatprep.subr.mxu0 0.0
    %5778 = vmatpush1.msra.mxu0 0.0
    %5779 = vmatprep.subr.mxu0 0.0
    %5780 = vmatpush1.msra.mxu0 0.0
    %5781 = vmatprep.subr.mxu0 0.0
    %5782 = vmatpush1.msra.mxu0 0.0
    %5783 = vmatprep.mubr.f32.mxu0 0.0
    %5784 = vmatmul.mubr.f32.gmra.mrb[0].mxu0 %v5713
    %v5785 = vpop.f32.mrb[0].mxu0
    %v5786 = vadd.f32 0.0, %v5785
    %v5787 = vpop.f32.mrb[0].mxu0
    %v5788 = vadd.f32 0.0, %v5787
    %5789 = vdwg.mxu0
    %5790 = vmatprep.subr.mxu0 %v5483
    %5791 = vmatpush1.msra.mxu0 %v5482
    %5792 = vmatprep.subr.mxu0 %v5487
    %5793 = vmatpush1.msra.mxu0 %v5486
    %5794 = vmatprep.subr.mxu0 %v5491
    %5795 = vmatpush1.msra.mxu0 %v5490
    %5796 = vmatprep.subr.mxu0 %v5495
    %5797 = vmatpush1.msra.mxu0 %v5494
    %5798 = vmatprep.subr.mxu0 %v5499
    %5799 = vmatpush1.msra.mxu0 %v5498
    %5800 = vmatprep.subr.mxu0 %v5503
    %5801 = vmatpush1.msra.mxu0 %v5502
    %5802 = vmatprep.subr.mxu0 %v5507
    %5803 = vmatpush1.msra.mxu0 %v5506
    %5804 = vmatprep.subr.mxu0 %v5511
    %5805 = vmatpush1.msra.mxu0 %v5510
    %5806 = vmatprep.subr.mxu0 %v5515
    %5807 = vmatpush1.msra.mxu0 %v5514
    %5808 = vmatprep.subr.mxu0 %v5519
    %5809 = vmatpush1.msra.mxu0 %v5518
    %5810 = vmatprep.subr.mxu0 %v5523
    %5811 = vmatpush1.msra.mxu0 %v5522
    %5812 = vmatprep.subr.mxu0 %v5527
    %5813 = vmatpush1.msra.mxu0 %v5526
    %5814 = vmatprep.subr.mxu0 %v5531
    %5815 = vmatpush1.msra.mxu0 %v5530
    %5816 = vmatprep.subr.mxu0 %v5535
    %5817 = vmatpush1.msra.mxu0 %v5534
    %5818 = vmatprep.subr.mxu0 %v5539
    %5819 = vmatpush1.msra.mxu0 %v5538
    %5820 = vmatprep.subr.mxu0 %v5543
    %5821 = vmatpush1.msra.mxu0 %v5542
    %5822 = vmatprep.subr.mxu0 0.0
    %5823 = vmatpush1.msra.mxu0 0.0
    %5824 = vmatprep.subr.mxu0 0.0
    %5825 = vmatpush1.msra.mxu0 0.0
    %5826 = vmatprep.subr.mxu0 0.0
    %5827 = vmatpush1.msra.mxu0 0.0
    %5828 = vmatprep.subr.mxu0 0.0
    %5829 = vmatpush1.msra.mxu0 0.0
    %5830 = vmatprep.subr.mxu0 0.0
    %5831 = vmatpush1.msra.mxu0 0.0
    %5832 = vmatprep.subr.mxu0 0.0
    %5833 = vmatpush1.msra.mxu0 0.0
    %5834 = vmatprep.subr.mxu0 0.0
    %5835 = vmatpush1.msra.mxu0 0.0
    %5836 = vmatprep.subr.mxu0 0.0
    %5837 = vmatpush1.msra.mxu0 0.0
    %5838 = vmatprep.subr.mxu0 0.0
    %5839 = vmatpush1.msra.mxu0 0.0
    %5840 = vmatprep.subr.mxu0 0.0
    %5841 = vmatpush1.msra.mxu0 0.0
    %5842 = vmatprep.subr.mxu0 0.0
    %5843 = vmatpush1.msra.mxu0 0.0
    %5844 = vmatprep.subr.mxu0 0.0
    %5845 = vmatpush1.msra.mxu0 0.0
    %5846 = vmatprep.subr.mxu0 0.0
    %5847 = vmatpush1.msra.mxu0 0.0
    %5848 = vmatprep.subr.mxu0 0.0
    %5849 = vmatpush1.msra.mxu0 0.0
    %5850 = vmatprep.subr.mxu0 0.0
    %5851 = vmatpush1.msra.mxu0 0.0
    %5852 = vmatprep.subr.mxu0 0.0
    %5853 = vmatpush1.msra.mxu0 0.0
    %5854 = vmatprep.mubr.f32.mxu0 0.0
    %5855 = vmatmul.mubr.f32.gmra.mrb[0].mxu0 %v5713
    %v5856 = vpop.f32.mrb[0].mxu0
    %v5857 = vadd.f32 0.0, %v5856
    %v5858 = vpop.f32.mrb[0].mxu0
    %v5859 = vadd.f32 0.0, %v5858
    %5860 = vdwg.mxu0
    %v5861 = vadd.f32 %v5715, %v5786
    %v5862 = vadd.f32 %v5716, %v5788
    %v5863 = vadd.f32 %v5717, %v5857
    %v5864 = vadd.f32 %v5718, %v5859
    %v5865 = vxor.u32 %v5861, 2147483648
    %v5866 = vmul.f32 %v5865, 1.442695
    %v5867 = vpow.pop %v5866
    %v5868 = vadd.f32 %v5867, 1.0
    %v5869 = vrcp.pop %v5868
    %v5870 = vmul.f32 1.0, %v5869
    %v5871 = vxor.u32 %v5862, 2147483648
    %v5872 = vmul.f32 %v5871, 1.442695
    %v5873 = vpow.pop %v5872
    %v5874 = vadd.f32 %v5873, 1.0
    %v5875 = vrcp.pop %v5874
    %v5876 = vmul.f32 1.0, %v5875
    %v5877 = vtanh.pop %v5863
    %v5878 = vxor.u32 %v5864, 2147483648
    %v5879 = vmul.f32 %v5878, 1.442695
    %v5880 = vpow.pop %v5879
    %v5881 = vadd.f32 %v5880, 1.0
    %v5882 = vrcp.pop %v5881
    %v5883 = vmul.f32 1.0, %v5882
    %v5884 = vmul.f32 %v5876, %v5711
    %v5885 = vmul.f32 %v5870, %v5877
    %v5886 = vadd.f32 %v5884, %v5885
    %v5887 = vtanh.pop %v5886
    %v5888 = vmul.f32 %v5883, %v5887
    %s5889 = scalar_lea.vmem [#allocation6], 64
    %v5890 = vld [vmem:[%s5889] sm:$0xff]
    %v5891 = vld [vmem:[%s5889 + $0x8] sm:$0xff]
    %v5892 = vld [vmem:[%s5889 + $0x10] sm:$0xff]
    %v5893 = vld [vmem:[%s5889 + $0x18] sm:$0xff]
    %5894 = vmatprep.subr.mxu0 %v5481
    %5895 = vmatpush1.msra.mxu0 %v5480
    %5896 = vmatprep.subr.mxu0 %v5485
    %5897 = vmatpush1.msra.mxu0 %v5484
    %5898 = vmatprep.subr.mxu0 %v5489
    %5899 = vmatpush1.msra.mxu0 %v5488
    %5900 = vmatprep.subr.mxu0 %v5493
    %5901 = vmatpush1.msra.mxu0 %v5492
    %5902 = vmatprep.subr.mxu0 %v5497
    %5903 = vmatpush1.msra.mxu0 %v5496
    %5904 = vmatprep.subr.mxu0 %v5501
    %5905 = vmatpush1.msra.mxu0 %v5500
    %5906 = vmatprep.subr.mxu0 %v5505
    %5907 = vmatpush1.msra.mxu0 %v5504
    %5908 = vmatprep.subr.mxu0 %v5509
    %5909 = vmatpush1.msra.mxu0 %v5508
    %5910 = vmatprep.subr.mxu0 %v5513
    %5911 = vmatpush1.msra.mxu0 %v5512
    %5912 = vmatprep.subr.mxu0 %v5517
    %5913 = vmatpush1.msra.mxu0 %v5516
    %5914 = vmatprep.subr.mxu0 %v5521
    %5915 = vmatpush1.msra.mxu0 %v5520
    %5916 = vmatprep.subr.mxu0 %v5525
    %5917 = vmatpush1.msra.mxu0 %v5524
    %5918 = vmatprep.subr.mxu0 %v5529
    %5919 = vmatpush1.msra.mxu0 %v5528
    %5920 = vmatprep.subr.mxu0 %v5533
    %5921 = vmatpush1.msra.mxu0 %v5532
    %5922 = vmatprep.subr.mxu0 %v5537
    %5923 = vmatpush1.msra.mxu0 %v5536
    %5924 = vmatprep.subr.mxu0 %v5541
    %5925 = vmatpush1.msra.mxu0 %v5540
    %5926 = vmatprep.subr.mxu0 0.0
    %5927 = vmatpush1.msra.mxu0 0.0
    %5928 = vmatprep.subr.mxu0 0.0
    %5929 = vmatpush1.msra.mxu0 0.0
    %5930 = vmatprep.subr.mxu0 0.0
    %5931 = vmatpush1.msra.mxu0 0.0
    %5932 = vmatprep.subr.mxu0 0.0
    %5933 = vmatpush1.msra.mxu0 0.0
    %5934 = vmatprep.subr.mxu0 0.0
    %5935 = vmatpush1.msra.mxu0 0.0
    %5936 = vmatprep.subr.mxu0 0.0
    %5937 = vmatpush1.msra.mxu0 0.0
    %5938 = vmatprep.subr.mxu0 0.0
    %5939 = vmatpush1.msra.mxu0 0.0
    %5940 = vmatprep.subr.mxu0 0.0
    %5941 = vmatpush1.msra.mxu0 0.0
    %5942 = vmatprep.subr.mxu0 0.0
    %5943 = vmatpush1.msra.mxu0 0.0
    %5944 = vmatprep.subr.mxu0 0.0
    %5945 = vmatpush1.msra.mxu0 0.0
    %5946 = vmatprep.subr.mxu0 0.0
    %5947 = vmatpush1.msra.mxu0 0.0
    %5948 = vmatprep.subr.mxu0 0.0
    %5949 = vmatpush1.msra.mxu0 0.0
    %5950 = vmatprep.subr.mxu0 0.0
    %5951 = vmatpush1.msra.mxu0 0.0
    %5952 = vmatprep.subr.mxu0 0.0
    %5953 = vmatpush1.msra.mxu0 0.0
    %5954 = vmatprep.subr.mxu0 0.0
    %5955 = vmatpush1.msra.mxu0 0.0
    %5956 = vmatprep.subr.mxu0 0.0
    %5957 = vmatpush1.msra.mxu0 0.0
    %5958 = vmatprep.mubr.f32.mxu0 0.0
    %5959 = vmatmul.mubr.f32.gmra.mrb[0].mxu0 %v5888
    %v5960 = vpop.f32.mrb[0].mxu0
    %v5961 = vadd.f32 0.0, %v5960
    %v5962 = vpop.f32.mrb[0].mxu0
    %v5963 = vadd.f32 0.0, %v5962
    %5964 = vdwg.mxu0
    %5965 = vmatprep.subr.mxu0 %v5483
    %5966 = vmatpush1.msra.mxu0 %v5482
    %5967 = vmatprep.subr.mxu0 %v5487
    %5968 = vmatpush1.msra.mxu0 %v5486
    %5969 = vmatprep.subr.mxu0 %v5491
    %5970 = vmatpush1.msra.mxu0 %v5490
    %5971 = vmatprep.subr.mxu0 %v5495
    %5972 = vmatpush1.msra.mxu0 %v5494
    %5973 = vmatprep.subr.mxu0 %v5499
    %5974 = vmatpush1.msra.mxu0 %v5498
    %5975 = vmatprep.subr.mxu0 %v5503
    %5976 = vmatpush1.msra.mxu0 %v5502
    %5977 = vmatprep.subr.mxu0 %v5507
    %5978 = vmatpush1.msra.mxu0 %v5506
    %5979 = vmatprep.subr.mxu0 %v5511
    %5980 = vmatpush1.msra.mxu0 %v5510
    %5981 = vmatprep.subr.mxu0 %v5515
    %5982 = vmatpush1.msra.mxu0 %v5514
    %5983 = vmatprep.subr.mxu0 %v5519
    %5984 = vmatpush1.msra.mxu0 %v5518
    %5985 = vmatprep.subr.mxu0 %v5523
    %5986 = vmatpush1.msra.mxu0 %v5522
    %5987 = vmatprep.subr.mxu0 %v5527
    %5988 = vmatpush1.msra.mxu0 %v5526
    %5989 = vmatprep.subr.mxu0 %v5531
    %5990 = vmatpush1.msra.mxu0 %v5530
    %5991 = vmatprep.subr.mxu0 %v5535
    %5992 = vmatpush1.msra.mxu0 %v5534
    %5993 = vmatprep.subr.mxu0 %v5539
    %5994 = vmatpush1.msra.mxu0 %v5538
    %5995 = vmatprep.subr.mxu0 %v5543
    %5996 = vmatpush1.msra.mxu0 %v5542
    %5997 = vmatprep.subr.mxu0 0.0
    %5998 = vmatpush1.msra.mxu0 0.0
    %5999 = vmatprep.subr.mxu0 0.0
    %6000 = vmatpush1.msra.mxu0 0.0
    %6001 = vmatprep.subr.mxu0 0.0
    %6002 = vmatpush1.msra.mxu0 0.0
    %6003 = vmatprep.subr.mxu0 0.0
    %6004 = vmatpush1.msra.mxu0 0.0
    %6005 = vmatprep.subr.mxu0 0.0
    %6006 = vmatpush1.msra.mxu0 0.0
    %6007 = vmatprep.subr.mxu0 0.0
    %6008 = vmatpush1.msra.mxu0 0.0
    %6009 = vmatprep.subr.mxu0 0.0
    %6010 = vmatpush1.msra.mxu0 0.0
    %6011 = vmatprep.subr.mxu0 0.0
    %6012 = vmatpush1.msra.mxu0 0.0
    %6013 = vmatprep.subr.mxu0 0.0
    %6014 = vmatpush1.msra.mxu0 0.0
    %6015 = vmatprep.subr.mxu0 0.0
    %6016 = vmatpush1.msra.mxu0 0.0
    %6017 = vmatprep.subr.mxu0 0.0
    %6018 = vmatpush1.msra.mxu0 0.0
    %6019 = vmatprep.subr.mxu0 0.0
    %6020 = vmatpush1.msra.mxu0 0.0
    %6021 = vmatprep.subr.mxu0 0.0
    %6022 = vmatpush1.msra.mxu0 0.0
    %6023 = vmatprep.subr.mxu0 0.0
    %6024 = vmatpush1.msra.mxu0 0.0
    %6025 = vmatprep.subr.mxu0 0.0
    %6026 = vmatpush1.msra.mxu0 0.0
    %6027 = vmatprep.subr.mxu0 0.0
    %6028 = vmatpush1.msra.mxu0 0.0
    %6029 = vmatprep.mubr.f32.mxu0 0.0
    %6030 = vmatmul.mubr.f32.gmra.mrb[0].mxu0 %v5888
    %v6031 = vpop.f32.mrb[0].mxu0
    %v6032 = vadd.f32 0.0, %v6031
    %v6033 = vpop.f32.mrb[0].mxu0
    %v6034 = vadd.f32 0.0, %v6033
    %6035 = vdwg.mxu0
    %v6036 = vadd.f32 %v5890, %v5961
    %v6037 = vadd.f32 %v5891, %v5963
    %v6038 = vadd.f32 %v5892, %v6032
    %v6039 = vadd.f32 %v5893, %v6034
    %v6040 = vxor.u32 %v6036, 2147483648
    %v6041 = vmul.f32 %v6040, 1.442695
    %v6042 = vpow.pop %v6041
    %v6043 = vadd.f32 %v6042, 1.0
    %v6044 = vrcp.pop %v6043
    %v6045 = vmul.f32 1.0, %v6044
    %v6046 = vxor.u32 %v6037, 2147483648
    %v6047 = vmul.f32 %v6046, 1.442695
    %v6048 = vpow.pop %v6047
    %v6049 = vadd.f32 %v6048, 1.0
    %v6050 = vrcp.pop %v6049
    %v6051 = vmul.f32 1.0, %v6050
    %v6052 = vtanh.pop %v6038
    %v6053 = vxor.u32 %v6039, 2147483648
    %v6054 = vmul.f32 %v6053, 1.442695
    %v6055 = vpow.pop %v6054
    %v6056 = vadd.f32 %v6055, 1.0
    %v6057 = vrcp.pop %v6056
    %v6058 = vmul.f32 1.0, %v6057
    %v6059 = vmul.f32 %v6051, %v5886
    %v6060 = vmul.f32 %v6045, %v6052
    %v6061 = vadd.f32 %v6059, %v6060
    %v6062 = vtanh.pop %v6061
    %v6063 = vmul.f32 %v6058, %v6062
    %s6064 = scalar_lea.vmem [#allocation6], 96
    %v6065 = vld [vmem:[%s6064] sm:$0xff]
    %v6066 = vld [vmem:[%s6064 + $0x8] sm:$0xff]
    %v6067 = vld [vmem:[%s6064 + $0x10] sm:$0xff]
    %v6068 = vld [vmem:[%s6064 + $0x18] sm:$0xff]
    %6069 = vmatprep.subr.mxu0 %v5481
    %6070 = vmatpush1.msra.mxu0 %v5480
    %6071 = vmatprep.subr.mxu0 %v5485
    %6072 = vmatpush1.msra.mxu0 %v5484
    %6073 = vmatprep.subr.mxu0 %v5489
    %6074 = vmatpush1.msra.mxu0 %v5488
    %6075 = vmatprep.subr.mxu0 %v5493
    %6076 = vmatpush1.msra.mxu0 %v5492
    %6077 = vmatprep.subr.mxu0 %v5497
    %6078 = vmatpush1.msra.mxu0 %v5496
    %6079 = vmatprep.subr.mxu0 %v5501
    %6080 = vmatpush1.msra.mxu0 %v5500
    %6081 = vmatprep.subr.mxu0 %v5505
    %6082 = vmatpush1.msra.mxu0 %v5504
    %6083 = vmatprep.subr.mxu0 %v5509
    %6084 = vmatpush1.msra.mxu0 %v5508
    %6085 = vmatprep.subr.mxu0 %v5513
    %6086 = vmatpush1.msra.mxu0 %v5512
    %6087 = vmatprep.subr.mxu0 %v5517
    %6088 = vmatpush1.msra.mxu0 %v5516
    %6089 = vmatprep.subr.mxu0 %v5521
    %6090 = vmatpush1.msra.mxu0 %v5520
    %6091 = vmatprep.subr.mxu0 %v5525
    %6092 = vmatpush1.msra.mxu0 %v5524
    %6093 = vmatprep.subr.mxu0 %v5529
    %6094 = vmatpush1.msra.mxu0 %v5528
    %6095 = vmatprep.subr.mxu0 %v5533
    %6096 = vmatpush1.msra.mxu0 %v5532
    %6097 = vmatprep.subr.mxu0 %v5537
    %6098 = vmatpush1.msra.mxu0 %v5536
    %6099 = vmatprep.subr.mxu0 %v5541
    %6100 = vmatpush1.msra.mxu0 %v5540
    %6101 = vmatprep.subr.mxu0 0.0
    %6102 = vmatpush1.msra.mxu0 0.0
    %6103 = vmatprep.subr.mxu0 0.0
    %6104 = vmatpush1.msra.mxu0 0.0
    %6105 = vmatprep.subr.mxu0 0.0
    %6106 = vmatpush1.msra.mxu0 0.0
    %6107 = vmatprep.subr.mxu0 0.0
    %6108 = vmatpush1.msra.mxu0 0.0
    %6109 = vmatprep.subr.mxu0 0.0
    %6110 = vmatpush1.msra.mxu0 0.0
    %6111 = vmatprep.subr.mxu0 0.0
    %6112 = vmatpush1.msra.mxu0 0.0
    %6113 = vmatprep.subr.mxu0 0.0
    %6114 = vmatpush1.msra.mxu0 0.0
    %6115 = vmatprep.subr.mxu0 0.0
    %6116 = vmatpush1.msra.mxu0 0.0
    %6117 = vmatprep.subr.mxu0 0.0
    %6118 = vmatpush1.msra.mxu0 0.0
    %6119 = vmatprep.subr.mxu0 0.0
    %6120 = vmatpush1.msra.mxu0 0.0
    %6121 = vmatprep.subr.mxu0 0.0
    %6122 = vmatpush1.msra.mxu0 0.0
    %6123 = vmatprep.subr.mxu0 0.0
    %6124 = vmatpush1.msra.mxu0 0.0
    %6125 = vmatprep.subr.mxu0 0.0
    %6126 = vmatpush1.msra.mxu0 0.0
    %6127 = vmatprep.subr.mxu0 0.0
    %6128 = vmatpush1.msra.mxu0 0.0
    %6129 = vmatprep.subr.mxu0 0.0
    %6130 = vmatpush1.msra.mxu0 0.0
    %6131 = vmatprep.subr.mxu0 0.0
    %6132 = vmatpush1.msra.mxu0 0.0
    %6133 = vmatprep.mubr.f32.mxu0 0.0
    %6134 = vmatmul.mubr.f32.gmra.mrb[0].mxu0 %v6063
    %v6135 = vpop.f32.mrb[0].mxu0
    %v6136 = vadd.f32 0.0, %v6135
    %v6137 = vpop.f32.mrb[0].mxu0
    %v6138 = vadd.f32 0.0, %v6137
    %6139 = vdwg.mxu0
    %6140 = vmatprep.subr.mxu0 %v5483
    %6141 = vmatpush1.msra.mxu0 %v5482
    %6142 = vmatprep.subr.mxu0 %v5487
    %6143 = vmatpush1.msra.mxu0 %v5486
    %6144 = vmatprep.subr.mxu0 %v5491
    %6145 = vmatpush1.msra.mxu0 %v5490
    %6146 = vmatprep.subr.mxu0 %v5495
    %6147 = vmatpush1.msra.mxu0 %v5494
    %6148 = vmatprep.subr.mxu0 %v5499
    %6149 = vmatpush1.msra.mxu0 %v5498
    %6150 = vmatprep.subr.mxu0 %v5503
    %6151 = vmatpush1.msra.mxu0 %v5502
    %6152 = vmatprep.subr.mxu0 %v5507
    %6153 = vmatpush1.msra.mxu0 %v5506
    %6154 = vmatprep.subr.mxu0 %v5511
    %6155 = vmatpush1.msra.mxu0 %v5510
    %6156 = vmatprep.subr.mxu0 %v5515
    %6157 = vmatpush1.msra.mxu0 %v5514
    %6158 = vmatprep.subr.mxu0 %v5519
    %6159 = vmatpush1.msra.mxu0 %v5518
    %6160 = vmatprep.subr.mxu0 %v5523
    %6161 = vmatpush1.msra.mxu0 %v5522
    %6162 = vmatprep.subr.mxu0 %v5527
    %6163 = vmatpush1.msra.mxu0 %v5526
    %6164 = vmatprep.subr.mxu0 %v5531
    %6165 = vmatpush1.msra.mxu0 %v5530
    %6166 = vmatprep.subr.mxu0 %v5535
    %6167 = vmatpush1.msra.mxu0 %v5534
    %6168 = vmatprep.subr.mxu0 %v5539
    %6169 = vmatpush1.msra.mxu0 %v5538
    %6170 = vmatprep.subr.mxu0 %v5543
    %6171 = vmatpush1.msra.mxu0 %v5542
    %6172 = vmatprep.subr.mxu0 0.0
    %6173 = vmatpush1.msra.mxu0 0.0
    %6174 = vmatprep.subr.mxu0 0.0
    %6175 = vmatpush1.msra.mxu0 0.0
    %6176 = vmatprep.subr.mxu0 0.0
    %6177 = vmatpush1.msra.mxu0 0.0
    %6178 = vmatprep.subr.mxu0 0.0
    %6179 = vmatpush1.msra.mxu0 0.0
    %6180 = vmatprep.subr.mxu0 0.0
    %6181 = vmatpush1.msra.mxu0 0.0
    %6182 = vmatprep.subr.mxu0 0.0
    %6183 = vmatpush1.msra.mxu0 0.0
    %6184 = vmatprep.subr.mxu0 0.0
    %6185 = vmatpush1.msra.mxu0 0.0
    %6186 = vmatprep.subr.mxu0 0.0
    %6187 = vmatpush1.msra.mxu0 0.0
    %6188 = vmatprep.subr.mxu0 0.0
    %6189 = vmatpush1.msra.mxu0 0.0
    %6190 = vmatprep.subr.mxu0 0.0
    %6191 = vmatpush1.msra.mxu0 0.0
    %6192 = vmatprep.subr.mxu0 0.0
    %6193 = vmatpush1.msra.mxu0 0.0
    %6194 = vmatprep.subr.mxu0 0.0
    %6195 = vmatpush1.msra.mxu0 0.0
    %6196 = vmatprep.subr.mxu0 0.0
    %6197 = vmatpush1.msra.mxu0 0.0
    %6198 = vmatprep.subr.mxu0 0.0
    %6199 = vmatpush1.msra.mxu0 0.0
    %6200 = vmatprep.subr.mxu0 0.0
    %6201 = vmatpush1.msra.mxu0 0.0
    %6202 = vmatprep.subr.mxu0 0.0
    %6203 = vmatpush1.msra.mxu0 0.0
    %6204 = vmatprep.mubr.f32.mxu0 0.0
    %6205 = vmatmul.mubr.f32.gmra.mrb[0].mxu0 %v6063
    %v6206 = vpop.f32.mrb[0].mxu0
    %v6207 = vadd.f32 0.0, %v6206
    %v6208 = vpop.f32.mrb[0].mxu0
    %v6209 = vadd.f32 0.0, %v6208
    %6210 = vdwg.mxu0
    %v6211 = vadd.f32 %v6065, %v6136
    %v6212 = vadd.f32 %v6066, %v6138
    %v6213 = vadd.f32 %v6067, %v6207
    %v6214 = vadd.f32 %v6068, %v6209
    %v6215 = vxor.u32 %v6211, 2147483648
    %v6216 = vmul.f32 %v6215, 1.442695
    %v6217 = vpow.pop %v6216
    %v6218 = vadd.f32 %v6217, 1.0
    %v6219 = vrcp.pop %v6218
    %v6220 = vmul.f32 1.0, %v6219
    %v6221 = vxor.u32 %v6212, 2147483648
    %v6222 = vmul.f32 %v6221, 1.442695
    %v6223 = vpow.pop %v6222
    %v6224 = vadd.f32 %v6223, 1.0
    %v6225 = vrcp.pop %v6224
    %v6226 = vmul.f32 1.0, %v6225
    %v6227 = vtanh.pop %v6213
    %v6228 = vxor.u32 %v6214, 2147483648
    %v6229 = vmul.f32 %v6228, 1.442695
    %v6230 = vpow.pop %v6229
    %v6231 = vadd.f32 %v6230, 1.0
    %v6232 = vrcp.pop %v6231
    %v6233 = vmul.f32 1.0, %v6232
    %v6234 = vmul.f32 %v6226, %v6061
    %v6235 = vmul.f32 %v6220, %v6227
    %v6236 = vadd.f32 %v6234, %v6235
    %v6237 = vtanh.pop %v6236
    %v6238 = vmul.f32 %v6233, %v6237
    %s6239 = scalar_lea.vmem [#allocation6], 128
    %v6240 = vld [vmem:[%s6239] sm:$0xff]
    %v6241 = vld [vmem:[%s6239 + $0x8] sm:$0xff]
    %v6242 = vld [vmem:[%s6239 + $0x10] sm:$0xff]
    %v6243 = vld [vmem:[%s6239 + $0x18] sm:$0xff]
    %6244 = vmatprep.subr.mxu0 %v5481
    %6245 = vmatpush1.msra.mxu0 %v5480
    %6246 = vmatprep.subr.mxu0 %v5485
    %6247 = vmatpush1.msra.mxu0 %v5484
    %6248 = vmatprep.subr.mxu0 %v5489
    %6249 = vmatpush1.msra.mxu0 %v5488
    %6250 = vmatprep.subr.mxu0 %v5493
    %6251 = vmatpush1.msra.mxu0 %v5492
    %6252 = vmatprep.subr.mxu0 %v5497
    %6253 = vmatpush1.msra.mxu0 %v5496
    %6254 = vmatprep.subr.mxu0 %v5501
    %6255 = vmatpush1.msra.mxu0 %v5500
    %6256 = vmatprep.subr.mxu0 %v5505
    %6257 = vmatpush1.msra.mxu0 %v5504
    %6258 = vmatprep.subr.mxu0 %v5509
    %6259 = vmatpush1.msra.mxu0 %v5508
    %6260 = vmatprep.subr.mxu0 %v5513
    %6261 = vmatpush1.msra.mxu0 %v5512
    %6262 = vmatprep.subr.mxu0 %v5517
    %6263 = vmatpush1.msra.mxu0 %v5516
    %6264 = vmatprep.subr.mxu0 %v5521
    %6265 = vmatpush1.msra.mxu0 %v5520
    %6266 = vmatprep.subr.mxu0 %v5525
    %6267 = vmatpush1.msra.mxu0 %v5524
    %6268 = vmatprep.subr.mxu0 %v5529
    %6269 = vmatpush1.msra.mxu0 %v5528
    %6270 = vmatprep.subr.mxu0 %v5533
    %6271 = vmatpush1.msra.mxu0 %v5532
    %6272 = vmatprep.subr.mxu0 %v5537
    %6273 = vmatpush1.msra.mxu0 %v5536
    %6274 = vmatprep.subr.mxu0 %v5541
    %6275 = vmatpush1.msra.mxu0 %v5540
    %6276 = vmatprep.subr.mxu0 0.0
    %6277 = vmatpush1.msra.mxu0 0.0
    %6278 = vmatprep.subr.mxu0 0.0
    %6279 = vmatpush1.msra.mxu0 0.0
    %6280 = vmatprep.subr.mxu0 0.0
    %6281 = vmatpush1.msra.mxu0 0.0
    %6282 = vmatprep.subr.mxu0 0.0
    %6283 = vmatpush1.msra.mxu0 0.0
    %6284 = vmatprep.subr.mxu0 0.0
    %6285 = vmatpush1.msra.mxu0 0.0
    %6286 = vmatprep.subr.mxu0 0.0
    %6287 = vmatpush1.msra.mxu0 0.0
    %6288 = vmatprep.subr.mxu0 0.0
    %6289 = vmatpush1.msra.mxu0 0.0
    %6290 = vmatprep.subr.mxu0 0.0
    %6291 = vmatpush1.msra.mxu0 0.0
    %6292 = vmatprep.subr.mxu0 0.0
    %6293 = vmatpush1.msra.mxu0 0.0
    %6294 = vmatprep.subr.mxu0 0.0
    %6295 = vmatpush1.msra.mxu0 0.0
    %6296 = vmatprep.subr.mxu0 0.0
    %6297 = vmatpush1.msra.mxu0 0.0
    %6298 = vmatprep.subr.mxu0 0.0
    %6299 = vmatpush1.msra.mxu0 0.0
    %6300 = vmatprep.subr.mxu0 0.0
    %6301 = vmatpush1.msra.mxu0 0.0
    %6302 = vmatprep.subr.mxu0 0.0
    %6303 = vmatpush1.msra.mxu0 0.0
    %6304 = vmatprep.subr.mxu0 0.0
    %6305 = vmatpush1.msra.mxu0 0.0
    %6306 = vmatprep.subr.mxu0 0.0
    %6307 = vmatpush1.msra.mxu0 0.0
    %6308 = vmatprep.mubr.f32.mxu0 0.0
    %6309 = vmatmul.mubr.f32.gmra.mrb[0].mxu0 %v6238
    %v6310 = vpop.f32.mrb[0].mxu0
    %v6311 = vadd.f32 0.0, %v6310
    %v6312 = vpop.f32.mrb[0].mxu0
    %v6313 = vadd.f32 0.0, %v6312
    %6314 = vdwg.mxu0
    %6315 = vmatprep.subr.mxu0 %v5483
    %6316 = vmatpush1.msra.mxu0 %v5482
    %6317 = vmatprep.subr.mxu0 %v5487
    %6318 = vmatpush1.msra.mxu0 %v5486
    %6319 = vmatprep.subr.mxu0 %v5491
    %6320 = vmatpush1.msra.mxu0 %v5490
    %6321 = vmatprep.subr.mxu0 %v5495
    %6322 = vmatpush1.msra.mxu0 %v5494
    %6323 = vmatprep.subr.mxu0 %v5499
    %6324 = vmatpush1.msra.mxu0 %v5498
    %6325 = vmatprep.subr.mxu0 %v5503
    %6326 = vmatpush1.msra.mxu0 %v5502
    %6327 = vmatprep.subr.mxu0 %v5507
    %6328 = vmatpush1.msra.mxu0 %v5506
    %6329 = vmatprep.subr.mxu0 %v5511
    %6330 = vmatpush1.msra.mxu0 %v5510
    %6331 = vmatprep.subr.mxu0 %v5515
    %6332 = vmatpush1.msra.mxu0 %v5514
    %6333 = vmatprep.subr.mxu0 %v5519
    %6334 = vmatpush1.msra.mxu0 %v5518
    %6335 = vmatprep.subr.mxu0 %v5523
    %6336 = vmatpush1.msra.mxu0 %v5522
    %6337 = vmatprep.subr.mxu0 %v5527
    %6338 = vmatpush1.msra.mxu0 %v5526
    %6339 = vmatprep.subr.mxu0 %v5531
    %6340 = vmatpush1.msra.mxu0 %v5530
    %6341 = vmatprep.subr.mxu0 %v5535
    %6342 = vmatpush1.msra.mxu0 %v5534
    %6343 = vmatprep.subr.mxu0 %v5539
    %6344 = vmatpush1.msra.mxu0 %v5538
    %6345 = vmatprep.subr.mxu0 %v5543
    %6346 = vmatpush1.msra.mxu0 %v5542
    %6347 = vmatprep.subr.mxu0 0.0
    %6348 = vmatpush1.msra.mxu0 0.0
    %6349 = vmatprep.subr.mxu0 0.0
    %6350 = vmatpush1.msra.mxu0 0.0
    %6351 = vmatprep.subr.mxu0 0.0
    %6352 = vmatpush1.msra.mxu0 0.0
    %6353 = vmatprep.subr.mxu0 0.0
    %6354 = vmatpush1.msra.mxu0 0.0
    %6355 = vmatprep.subr.mxu0 0.0
    %6356 = vmatpush1.msra.mxu0 0.0
    %6357 = vmatprep.subr.mxu0 0.0
    %6358 = vmatpush1.msra.mxu0 0.0
    %6359 = vmatprep.subr.mxu0 0.0
    %6360 = vmatpush1.msra.mxu0 0.0
    %6361 = vmatprep.subr.mxu0 0.0
    %6362 = vmatpush1.msra.mxu0 0.0
    %6363 = vmatprep.subr.mxu0 0.0
    %6364 = vmatpush1.msra.mxu0 0.0
    %6365 = vmatprep.subr.mxu0 0.0
    %6366 = vmatpush1.msra.mxu0 0.0
    %6367 = vmatprep.subr.mxu0 0.0
    %6368 = vmatpush1.msra.mxu0 0.0
    %6369 = vmatprep.subr.mxu0 0.0
    %6370 = vmatpush1.msra.mxu0 0.0
    %6371 = vmatprep.subr.mxu0 0.0
    %6372 = vmatpush1.msra.mxu0 0.0
    %6373 = vmatprep.subr.mxu0 0.0
    %6374 = vmatpush1.msra.mxu0 0.0
    %6375 = vmatprep.subr.mxu0 0.0
    %6376 = vmatpush1.msra.mxu0 0.0
    %6377 = vmatprep.subr.mxu0 0.0
    %6378 = vmatpush1.msra.mxu0 0.0
    %6379 = vmatprep.mubr.f32.mxu0 0.0
    %6380 = vmatmul.mubr.f32.gmra.mrb[0].mxu0 %v6238
    %v6381 = vpop.f32.mrb[0].mxu0
    %v6382 = vadd.f32 0.0, %v6381
    %v6383 = vpop.f32.mrb[0].mxu0
    %v6384 = vadd.f32 0.0, %v6383
    %6385 = vdwg.mxu0
    %v6386 = vadd.f32 %v6240, %v6311
    %v6387 = vadd.f32 %v6241, %v6313
    %v6388 = vadd.f32 %v6242, %v6382
    %v6389 = vadd.f32 %v6243, %v6384
    %v6390 = vxor.u32 %v6386, 2147483648
    %v6391 = vmul.f32 %v6390, 1.442695
    %v6392 = vpow.pop %v6391
    %v6393 = vadd.f32 %v6392, 1.0
    %v6394 = vrcp.pop %v6393
    %v6395 = vmul.f32 1.0, %v6394
    %v6396 = vxor.u32 %v6387, 2147483648
    %v6397 = vmul.f32 %v6396, 1.442695
    %v6398 = vpow.pop %v6397
    %v6399 = vadd.f32 %v6398, 1.0
    %v6400 = vrcp.pop %v6399
    %v6401 = vmul.f32 1.0, %v6400
    %v6402 = vtanh.pop %v6388
    %v6403 = vxor.u32 %v6389, 2147483648
    %v6404 = vmul.f32 %v6403, 1.442695
    %v6405 = vpow.pop %v6404
    %v6406 = vadd.f32 %v6405, 1.0
    %v6407 = vrcp.pop %v6406
    %v6408 = vmul.f32 1.0, %v6407
    %v6409 = vmul.f32 %v6401, %v6236
    %v6410 = vmul.f32 %v6395, %v6402
    %v6411 = vadd.f32 %v6409, %v6410
    %v6412 = vtanh.pop %v6411
    %v6413 = vmul.f32 %v6408, %v6412
    %s6414 = scalar_lea.vmem [#allocation6], 160
    %v6415 = vld [vmem:[%s6414] sm:$0xff]
    %v6416 = vld [vmem:[%s6414 + $0x8] sm:$0xff]
    %v6417 = vld [vmem:[%s6414 + $0x10] sm:$0xff]
    %v6418 = vld [vmem:[%s6414 + $0x18] sm:$0xff]
    %6419 = vmatprep.subr.mxu0 %v5481
    %6420 = vmatpush1.msra.mxu0 %v5480
    %6421 = vmatprep.subr.mxu0 %v5485
    %6422 = vmatpush1.msra.mxu0 %v5484
    %6423 = vmatprep.subr.mxu0 %v5489
    %6424 = vmatpush1.msra.mxu0 %v5488
    %6425 = vmatprep.subr.mxu0 %v5493
    %6426 = vmatpush1.msra.mxu0 %v5492
    %6427 = vmatprep.subr.mxu0 %v5497
    %6428 = vmatpush1.msra.mxu0 %v5496
    %6429 = vmatprep.subr.mxu0 %v5501
    %6430 = vmatpush1.msra.mxu0 %v5500
    %6431 = vmatprep.subr.mxu0 %v5505
    %6432 = vmatpush1.msra.mxu0 %v5504
    %6433 = vmatprep.subr.mxu0 %v5509
    %6434 = vmatpush1.msra.mxu0 %v5508
    %6435 = vmatprep.subr.mxu0 %v5513
    %6436 = vmatpush1.msra.mxu0 %v5512
    %6437 = vmatprep.subr.mxu0 %v5517
    %6438 = vmatpush1.msra.mxu0 %v5516
    %6439 = vmatprep.subr.mxu0 %v5521
    %6440 = vmatpush1.msra.mxu0 %v5520
    %6441 = vmatprep.subr.mxu0 %v5525
    %6442 = vmatpush1.msra.mxu0 %v5524
    %6443 = vmatprep.subr.mxu0 %v5529
    %6444 = vmatpush1.msra.mxu0 %v5528
    %6445 = vmatprep.subr.mxu0 %v5533
    %6446 = vmatpush1.msra.mxu0 %v5532
    %6447 = vmatprep.subr.mxu0 %v5537
    %6448 = vmatpush1.msra.mxu0 %v5536
    %6449 = vmatprep.subr.mxu0 %v5541
    %6450 = vmatpush1.msra.mxu0 %v5540
    %6451 = vmatprep.subr.mxu0 0.0
    %6452 = vmatpush1.msra.mxu0 0.0
    %6453 = vmatprep.subr.mxu0 0.0
    %6454 = vmatpush1.msra.mxu0 0.0
    %6455 = vmatprep.subr.mxu0 0.0
    %6456 = vmatpush1.msra.mxu0 0.0
    %6457 = vmatprep.subr.mxu0 0.0
    %6458 = vmatpush1.msra.mxu0 0.0
    %6459 = vmatprep.subr.mxu0 0.0
    %6460 = vmatpush1.msra.mxu0 0.0
    %6461 = vmatprep.subr.mxu0 0.0
    %6462 = vmatpush1.msra.mxu0 0.0
    %6463 = vmatprep.subr.mxu0 0.0
    %6464 = vmatpush1.msra.mxu0 0.0
    %6465 = vmatprep.subr.mxu0 0.0
    %6466 = vmatpush1.msra.mxu0 0.0
    %6467 = vmatprep.subr.mxu0 0.0
    %6468 = vmatpush1.msra.mxu0 0.0
    %6469 = vmatprep.subr.mxu0 0.0
    %6470 = vmatpush1.msra.mxu0 0.0
    %6471 = vmatprep.subr.mxu0 0.0
    %6472 = vmatpush1.msra.mxu0 0.0
    %6473 = vmatprep.subr.mxu0 0.0
    %6474 = vmatpush1.msra.mxu0 0.0
    %6475 = vmatprep.subr.mxu0 0.0
    %6476 = vmatpush1.msra.mxu0 0.0
    %6477 = vmatprep.subr.mxu0 0.0
    %6478 = vmatpush1.msra.mxu0 0.0
    %6479 = vmatprep.subr.mxu0 0.0
    %6480 = vmatpush1.msra.mxu0 0.0
    %6481 = vmatprep.subr.mxu0 0.0
    %6482 = vmatpush1.msra.mxu0 0.0
    %6483 = vmatprep.mubr.f32.mxu0 0.0
    %6484 = vmatmul.mubr.f32.gmra.mrb[0].mxu0 %v6413
    %v6485 = vpop.f32.mrb[0].mxu0
    %v6486 = vadd.f32 0.0, %v6485
    %v6487 = vpop.f32.mrb[0].mxu0
    %v6488 = vadd.f32 0.0, %v6487
    %6489 = vdwg.mxu0
    %6490 = vmatprep.subr.mxu0 %v5483
    %6491 = vmatpush1.msra.mxu0 %v5482
    %6492 = vmatprep.subr.mxu0 %v5487
    %6493 = vmatpush1.msra.mxu0 %v5486
    %6494 = vmatprep.subr.mxu0 %v5491
    %6495 = vmatpush1.msra.mxu0 %v5490
    %6496 = vmatprep.subr.mxu0 %v5495
    %6497 = vmatpush1.msra.mxu0 %v5494
    %6498 = vmatprep.subr.mxu0 %v5499
    %6499 = vmatpush1.msra.mxu0 %v5498
    %6500 = vmatprep.subr.mxu0 %v5503
    %6501 = vmatpush1.msra.mxu0 %v5502
    %6502 = vmatprep.subr.mxu0 %v5507
    %6503 = vmatpush1.msra.mxu0 %v5506
    %6504 = vmatprep.subr.mxu0 %v5511
    %6505 = vmatpush1.msra.mxu0 %v5510
    %6506 = vmatprep.subr.mxu0 %v5515
    %6507 = vmatpush1.msra.mxu0 %v5514
    %6508 = vmatprep.subr.mxu0 %v5519
    %6509 = vmatpush1.msra.mxu0 %v5518
    %6510 = vmatprep.subr.mxu0 %v5523
    %6511 = vmatpush1.msra.mxu0 %v5522
    %6512 = vmatprep.subr.mxu0 %v5527
    %6513 = vmatpush1.msra.mxu0 %v5526
    %6514 = vmatprep.subr.mxu0 %v5531
    %6515 = vmatpush1.msra.mxu0 %v5530
    %6516 = vmatprep.subr.mxu0 %v5535
    %6517 = vmatpush1.msra.mxu0 %v5534
    %6518 = vmatprep.subr.mxu0 %v5539
    %6519 = vmatpush1.msra.mxu0 %v5538
    %6520 = vmatprep.subr.mxu0 %v5543
    %6521 = vmatpush1.msra.mxu0 %v5542
    %6522 = vmatprep.subr.mxu0 0.0
    %6523 = vmatpush1.msra.mxu0 0.0
    %6524 = vmatprep.subr.mxu0 0.0
    %6525 = vmatpush1.msra.mxu0 0.0
    %6526 = vmatprep.subr.mxu0 0.0
    %6527 = vmatpush1.msra.mxu0 0.0
    %6528 = vmatprep.subr.mxu0 0.0
    %6529 = vmatpush1.msra.mxu0 0.0
    %6530 = vmatprep.subr.mxu0 0.0
    %6531 = vmatpush1.msra.mxu0 0.0
    %6532 = vmatprep.subr.mxu0 0.0
    %6533 = vmatpush1.msra.mxu0 0.0
    %6534 = vmatprep.subr.mxu0 0.0
    %6535 = vmatpush1.msra.mxu0 0.0
    %6536 = vmatprep.subr.mxu0 0.0
    %6537 = vmatpush1.msra.mxu0 0.0
    %6538 = vmatprep.subr.mxu0 0.0
    %6539 = vmatpush1.msra.mxu0 0.0
    %6540 = vmatprep.subr.mxu0 0.0
    %6541 = vmatpush1.msra.mxu0 0.0
    %6542 = vmatprep.subr.mxu0 0.0
    %6543 = vmatpush1.msra.mxu0 0.0
    %6544 = vmatprep.subr.mxu0 0.0
    %6545 = vmatpush1.msra.mxu0 0.0
    %6546 = vmatprep.subr.mxu0 0.0
    %6547 = vmatpush1.msra.mxu0 0.0
    %6548 = vmatprep.subr.mxu0 0.0
    %6549 = vmatpush1.msra.mxu0 0.0
    %6550 = vmatprep.subr.mxu0 0.0
    %6551 = vmatpush1.msra.mxu0 0.0
    %6552 = vmatprep.subr.mxu0 0.0
    %6553 = vmatpush1.msra.mxu0 0.0
    %6554 = vmatprep.mubr.f32.mxu0 0.0
    %6555 = vmatmul.mubr.f32.gmra.mrb[0].mxu0 %v6413
    %v6556 = vpop.f32.mrb[0].mxu0
    %v6557 = vadd.f32 0.0, %v6556
    %v6558 = vpop.f32.mrb[0].mxu0
    %v6559 = vadd.f32 0.0, %v6558
    %6560 = vdwg.mxu0
    %v6561 = vadd.f32 %v6415, %v6486
    %v6562 = vadd.f32 %v6416, %v6488
    %v6563 = vadd.f32 %v6417, %v6557
    %v6564 = vadd.f32 %v6418, %v6559
    %v6565 = vxor.u32 %v6561, 2147483648
    %v6566 = vmul.f32 %v6565, 1.442695
    %v6567 = vpow.pop %v6566
    %v6568 = vadd.f32 %v6567, 1.0
    %v6569 = vrcp.pop %v6568
    %v6570 = vmul.f32 1.0, %v6569
    %v6571 = vxor.u32 %v6562, 2147483648
    %v6572 = vmul.f32 %v6571, 1.442695
    %v6573 = vpow.pop %v6572
    %v6574 = vadd.f32 %v6573, 1.0
    %v6575 = vrcp.pop %v6574
    %v6576 = vmul.f32 1.0, %v6575
    %v6577 = vtanh.pop %v6563
    %v6578 = vxor.u32 %v6564, 2147483648
    %v6579 = vmul.f32 %v6578, 1.442695
    %v6580 = vpow.pop %v6579
    %v6581 = vadd.f32 %v6580, 1.0
    %v6582 = vrcp.pop %v6581
    %v6583 = vmul.f32 1.0, %v6582
    %v6584 = vmul.f32 %v6576, %v6411
    %v6585 = vmul.f32 %v6570, %v6577
    %v6586 = vadd.f32 %v6584, %v6585
    %v6587 = vtanh.pop %v6586
    %v6588 = vmul.f32 %v6583, %v6587
    %s6589 = scalar_lea.vmem [#allocation6], 192
    %v6590 = vld [vmem:[%s6589] sm:$0xff]
    %v6591 = vld [vmem:[%s6589 + $0x8] sm:$0xff]
    %v6592 = vld [vmem:[%s6589 + $0x10] sm:$0xff]
    %v6593 = vld [vmem:[%s6589 + $0x18] sm:$0xff]
    %6594 = vmatprep.subr.mxu0 %v5481
    %6595 = vmatpush1.msra.mxu0 %v5480
    %6596 = vmatprep.subr.mxu0 %v5485
    %6597 = vmatpush1.msra.mxu0 %v5484
    %6598 = vmatprep.subr.mxu0 %v5489
    %6599 = vmatpush1.msra.mxu0 %v5488
    %6600 = vmatprep.subr.mxu0 %v5493
    %6601 = vmatpush1.msra.mxu0 %v5492
    %6602 = vmatprep.subr.mxu0 %v5497
    %6603 = vmatpush1.msra.mxu0 %v5496
    %6604 = vmatprep.subr.mxu0 %v5501
    %6605 = vmatpush1.msra.mxu0 %v5500
    %6606 = vmatprep.subr.mxu0 %v5505
    %6607 = vmatpush1.msra.mxu0 %v5504
    %6608 = vmatprep.subr.mxu0 %v5509
    %6609 = vmatpush1.msra.mxu0 %v5508
    %6610 = vmatprep.subr.mxu0 %v5513
    %6611 = vmatpush1.msra.mxu0 %v5512
    %6612 = vmatprep.subr.mxu0 %v5517
    %6613 = vmatpush1.msra.mxu0 %v5516
    %6614 = vmatprep.subr.mxu0 %v5521
    %6615 = vmatpush1.msra.mxu0 %v5520
    %6616 = vmatprep.subr.mxu0 %v5525
    %6617 = vmatpush1.msra.mxu0 %v5524
    %6618 = vmatprep.subr.mxu0 %v5529
    %6619 = vmatpush1.msra.mxu0 %v5528
    %6620 = vmatprep.subr.mxu0 %v5533
    %6621 = vmatpush1.msra.mxu0 %v5532
    %6622 = vmatprep.subr.mxu0 %v5537
    %6623 = vmatpush1.msra.mxu0 %v5536
    %6624 = vmatprep.subr.mxu0 %v5541
    %6625 = vmatpush1.msra.mxu0 %v5540
    %6626 = vmatprep.subr.mxu0 0.0
    %6627 = vmatpush1.msra.mxu0 0.0
    %6628 = vmatprep.subr.mxu0 0.0
    %6629 = vmatpush1.msra.mxu0 0.0
    %6630 = vmatprep.subr.mxu0 0.0
    %6631 = vmatpush1.msra.mxu0 0.0
    %6632 = vmatprep.subr.mxu0 0.0
    %6633 = vmatpush1.msra.mxu0 0.0
    %6634 = vmatprep.subr.mxu0 0.0
    %6635 = vmatpush1.msra.mxu0 0.0
    %6636 = vmatprep.subr.mxu0 0.0
    %6637 = vmatpush1.msra.mxu0 0.0
    %6638 = vmatprep.subr.mxu0 0.0
    %6639 = vmatpush1.msra.mxu0 0.0
    %6640 = vmatprep.subr.mxu0 0.0
    %6641 = vmatpush1.msra.mxu0 0.0
    %6642 = vmatprep.subr.mxu0 0.0
    %6643 = vmatpush1.msra.mxu0 0.0
    %6644 = vmatprep.subr.mxu0 0.0
    %6645 = vmatpush1.msra.mxu0 0.0
    %6646 = vmatprep.subr.mxu0 0.0
    %6647 = vmatpush1.msra.mxu0 0.0
    %6648 = vmatprep.subr.mxu0 0.0
    %6649 = vmatpush1.msra.mxu0 0.0
    %6650 = vmatprep.subr.mxu0 0.0
    %6651 = vmatpush1.msra.mxu0 0.0
    %6652 = vmatprep.subr.mxu0 0.0
    %6653 = vmatpush1.msra.mxu0 0.0
    %6654 = vmatprep.subr.mxu0 0.0
    %6655 = vmatpush1.msra.mxu0 0.0
    %6656 = vmatprep.subr.mxu0 0.0
    %6657 = vmatpush1.msra.mxu0 0.0
    %6658 = vmatprep.mubr.f32.mxu0 0.0
    %6659 = vmatmul.mubr.f32.gmra.mrb[0].mxu0 %v6588
    %v6660 = vpop.f32.mrb[0].mxu0
    %v6661 = vadd.f32 0.0, %v6660
    %v6662 = vpop.f32.mrb[0].mxu0
    %v6663 = vadd.f32 0.0, %v6662
    %6664 = vdwg.mxu0
    %6665 = vmatprep.subr.mxu0 %v5483
    %6666 = vmatpush1.msra.mxu0 %v5482
    %6667 = vmatprep.subr.mxu0 %v5487
    %6668 = vmatpush1.msra.mxu0 %v5486
    %6669 = vmatprep.subr.mxu0 %v5491
    %6670 = vmatpush1.msra.mxu0 %v5490
    %6671 = vmatprep.subr.mxu0 %v5495
    %6672 = vmatpush1.msra.mxu0 %v5494
    %6673 = vmatprep.subr.mxu0 %v5499
    %6674 = vmatpush1.msra.mxu0 %v5498
    %6675 = vmatprep.subr.mxu0 %v5503
    %6676 = vmatpush1.msra.mxu0 %v5502
    %6677 = vmatprep.subr.mxu0 %v5507
    %6678 = vmatpush1.msra.mxu0 %v5506
    %6679 = vmatprep.subr.mxu0 %v5511
    %6680 = vmatpush1.msra.mxu0 %v5510
    %6681 = vmatprep.subr.mxu0 %v5515
    %6682 = vmatpush1.msra.mxu0 %v5514
    %6683 = vmatprep.subr.mxu0 %v5519
    %6684 = vmatpush1.msra.mxu0 %v5518
    %6685 = vmatprep.subr.mxu0 %v5523
    %6686 = vmatpush1.msra.mxu0 %v5522
    %6687 = vmatprep.subr.mxu0 %v5527
    %6688 = vmatpush1.msra.mxu0 %v5526
    %6689 = vmatprep.subr.mxu0 %v5531
    %6690 = vmatpush1.msra.mxu0 %v5530
    %6691 = vmatprep.subr.mxu0 %v5535
    %6692 = vmatpush1.msra.mxu0 %v5534
    %6693 = vmatprep.subr.mxu0 %v5539
    %6694 = vmatpush1.msra.mxu0 %v5538
    %6695 = vmatprep.subr.mxu0 %v5543
    %6696 = vmatpush1.msra.mxu0 %v5542
    %6697 = vmatprep.subr.mxu0 0.0
    %6698 = vmatpush1.msra.mxu0 0.0
    %6699 = vmatprep.subr.mxu0 0.0
    %6700 = vmatpush1.msra.mxu0 0.0
    %6701 = vmatprep.subr.mxu0 0.0
    %6702 = vmatpush1.msra.mxu0 0.0
    %6703 = vmatprep.subr.mxu0 0.0
    %6704 = vmatpush1.msra.mxu0 0.0
    %6705 = vmatprep.subr.mxu0 0.0
    %6706 = vmatpush1.msra.mxu0 0.0
    %6707 = vmatprep.subr.mxu0 0.0
    %6708 = vmatpush1.msra.mxu0 0.0
    %6709 = vmatprep.subr.mxu0 0.0
    %6710 = vmatpush1.msra.mxu0 0.0
    %6711 = vmatprep.subr.mxu0 0.0
    %6712 = vmatpush1.msra.mxu0 0.0
    %6713 = vmatprep.subr.mxu0 0.0
    %6714 = vmatpush1.msra.mxu0 0.0
    %6715 = vmatprep.subr.mxu0 0.0
    %6716 = vmatpush1.msra.mxu0 0.0
    %6717 = vmatprep.subr.mxu0 0.0
    %6718 = vmatpush1.msra.mxu0 0.0
    %6719 = vmatprep.subr.mxu0 0.0
    %6720 = vmatpush1.msra.mxu0 0.0
    %6721 = vmatprep.subr.mxu0 0.0
    %6722 = vmatpush1.msra.mxu0 0.0
    %6723 = vmatprep.subr.mxu0 0.0
    %6724 = vmatpush1.msra.mxu0 0.0
    %6725 = vmatprep.subr.mxu0 0.0
    %6726 = vmatpush1.msra.mxu0 0.0
    %6727 = vmatprep.subr.mxu0 0.0
    %6728 = vmatpush1.msra.mxu0 0.0
    %6729 = vmatprep.mubr.f32.mxu0 0.0
    %6730 = vmatmul.mubr.f32.gmra.mrb[0].mxu0 %v6588
    %v6731 = vpop.f32.mrb[0].mxu0
    %v6732 = vadd.f32 0.0, %v6731
    %v6733 = vpop.f32.mrb[0].mxu0
    %v6734 = vadd.f32 0.0, %v6733
    %6735 = vdwg.mxu0
    %v6736 = vadd.f32 %v6590, %v6661
    %v6737 = vadd.f32 %v6591, %v6663
    %v6738 = vadd.f32 %v6592, %v6732
    %v6739 = vadd.f32 %v6593, %v6734
    %v6740 = vxor.u32 %v6736, 2147483648
    %v6741 = vmul.f32 %v6740, 1.442695
    %v6742 = vpow.pop %v6741
    %v6743 = vadd.f32 %v6742, 1.0
    %v6744 = vrcp.pop %v6743
    %v6745 = vmul.f32 1.0, %v6744
    %v6746 = vxor.u32 %v6737, 2147483648
    %v6747 = vmul.f32 %v6746, 1.442695
    %v6748 = vpow.pop %v6747
    %v6749 = vadd.f32 %v6748, 1.0
    %v6750 = vrcp.pop %v6749
    %v6751 = vmul.f32 1.0, %v6750
    %v6752 = vtanh.pop %v6738
    %v6753 = vxor.u32 %v6739, 2147483648
    %v6754 = vmul.f32 %v6753, 1.442695
    %v6755 = vpow.pop %v6754
    %v6756 = vadd.f32 %v6755, 1.0
    %v6757 = vrcp.pop %v6756
    %v6758 = vmul.f32 1.0, %v6757
    %v6759 = vmul.f32 %v6751, %v6586
    %v6760 = vmul.f32 %v6745, %v6752
    %v6761 = vadd.f32 %v6759, %v6760
    %v6762 = vtanh.pop %v6761
    %v6763 = vmul.f32 %v6758, %v6762
    %s6764 = scalar_lea.vmem [#allocation6], 224
    %v6765 = vld [vmem:[%s6764] sm:$0xff]
    %v6766 = vld [vmem:[%s6764 + $0x8] sm:$0xff]
    %v6767 = vld [vmem:[%s6764 + $0x10] sm:$0xff]
    %v6768 = vld [vmem:[%s6764 + $0x18] sm:$0xff]
    %6769 = vmatprep.subr.mxu0 %v5481
    %6770 = vmatpush1.msra.mxu0 %v5480
    %6771 = vmatprep.subr.mxu0 %v5485
    %6772 = vmatpush1.msra.mxu0 %v5484
    %6773 = vmatprep.subr.mxu0 %v5489
    %6774 = vmatpush1.msra.mxu0 %v5488
    %6775 = vmatprep.subr.mxu0 %v5493
    %6776 = vmatpush1.msra.mxu0 %v5492
    %6777 = vmatprep.subr.mxu0 %v5497
    %6778 = vmatpush1.msra.mxu0 %v5496
    %6779 = vmatprep.subr.mxu0 %v5501
    %6780 = vmatpush1.msra.mxu0 %v5500
    %6781 = vmatprep.subr.mxu0 %v5505
    %6782 = vmatpush1.msra.mxu0 %v5504
    %6783 = vmatprep.subr.mxu0 %v5509
    %6784 = vmatpush1.msra.mxu0 %v5508
    %6785 = vmatprep.subr.mxu0 %v5513
    %6786 = vmatpush1.msra.mxu0 %v5512
    %6787 = vmatprep.subr.mxu0 %v5517
    %6788 = vmatpush1.msra.mxu0 %v5516
    %6789 = vmatprep.subr.mxu0 %v5521
    %6790 = vmatpush1.msra.mxu0 %v5520
    %6791 = vmatprep.subr.mxu0 %v5525
    %6792 = vmatpush1.msra.mxu0 %v5524
    %6793 = vmatprep.subr.mxu0 %v5529
    %6794 = vmatpush1.msra.mxu0 %v5528
    %6795 = vmatprep.subr.mxu0 %v5533
    %6796 = vmatpush1.msra.mxu0 %v5532
    %6797 = vmatprep.subr.mxu0 %v5537
    %6798 = vmatpush1.msra.mxu0 %v5536
    %6799 = vmatprep.subr.mxu0 %v5541
    %6800 = vmatpush1.msra.mxu0 %v5540
    %6801 = vmatprep.subr.mxu0 0.0
    %6802 = vmatpush1.msra.mxu0 0.0
    %6803 = vmatprep.subr.mxu0 0.0
    %6804 = vmatpush1.msra.mxu0 0.0
    %6805 = vmatprep.subr.mxu0 0.0
    %6806 = vmatpush1.msra.mxu0 0.0
    %6807 = vmatprep.subr.mxu0 0.0
    %6808 = vmatpush1.msra.mxu0 0.0
    %6809 = vmatprep.subr.mxu0 0.0
    %6810 = vmatpush1.msra.mxu0 0.0
    %6811 = vmatprep.subr.mxu0 0.0
    %6812 = vmatpush1.msra.mxu0 0.0
    %6813 = vmatprep.subr.mxu0 0.0
    %6814 = vmatpush1.msra.mxu0 0.0
    %6815 = vmatprep.subr.mxu0 0.0
    %6816 = vmatpush1.msra.mxu0 0.0
    %6817 = vmatprep.subr.mxu0 0.0
    %6818 = vmatpush1.msra.mxu0 0.0
    %6819 = vmatprep.subr.mxu0 0.0
    %6820 = vmatpush1.msra.mxu0 0.0
    %6821 = vmatprep.subr.mxu0 0.0
    %6822 = vmatpush1.msra.mxu0 0.0
    %6823 = vmatprep.subr.mxu0 0.0
    %6824 = vmatpush1.msra.mxu0 0.0
    %6825 = vmatprep.subr.mxu0 0.0
    %6826 = vmatpush1.msra.mxu0 0.0
    %6827 = vmatprep.subr.mxu0 0.0
    %6828 = vmatpush1.msra.mxu0 0.0
    %6829 = vmatprep.subr.mxu0 0.0
    %6830 = vmatpush1.msra.mxu0 0.0
    %6831 = vmatprep.subr.mxu0 0.0
    %6832 = vmatpush1.msra.mxu0 0.0
    %6833 = vmatprep.mubr.f32.mxu0 0.0
    %6834 = vmatmul.mubr.f32.gmra.mrb[0].mxu0 %v6763
    %v6835 = vpop.f32.mrb[0].mxu0
    %v6836 = vadd.f32 0.0, %v6835
    %v6837 = vpop.f32.mrb[0].mxu0
    %v6838 = vadd.f32 0.0, %v6837
    %6839 = vdwg.mxu0
    %6840 = vmatprep.subr.mxu0 %v5483
    %6841 = vmatpush1.msra.mxu0 %v5482
    %6842 = vmatprep.subr.mxu0 %v5487
    %6843 = vmatpush1.msra.mxu0 %v5486
    %6844 = vmatprep.subr.mxu0 %v5491
    %6845 = vmatpush1.msra.mxu0 %v5490
    %6846 = vmatprep.subr.mxu0 %v5495
    %6847 = vmatpush1.msra.mxu0 %v5494
    %6848 = vmatprep.subr.mxu0 %v5499
    %6849 = vmatpush1.msra.mxu0 %v5498
    %6850 = vmatprep.subr.mxu0 %v5503
    %6851 = vmatpush1.msra.mxu0 %v5502
    %6852 = vmatprep.subr.mxu0 %v5507
    %6853 = vmatpush1.msra.mxu0 %v5506
    %6854 = vmatprep.subr.mxu0 %v5511
    %6855 = vmatpush1.msra.mxu0 %v5510
    %6856 = vmatprep.subr.mxu0 %v5515
    %6857 = vmatpush1.msra.mxu0 %v5514
    %6858 = vmatprep.subr.mxu0 %v5519
    %6859 = vmatpush1.msra.mxu0 %v5518
    %6860 = vmatprep.subr.mxu0 %v5523
    %6861 = vmatpush1.msra.mxu0 %v5522
    %6862 = vmatprep.subr.mxu0 %v5527
    %6863 = vmatpush1.msra.mxu0 %v5526
    %6864 = vmatprep.subr.mxu0 %v5531
    %6865 = vmatpush1.msra.mxu0 %v5530
    %6866 = vmatprep.subr.mxu0 %v5535
    %6867 = vmatpush1.msra.mxu0 %v5534
    %6868 = vmatprep.subr.mxu0 %v5539
    %6869 = vmatpush1.msra.mxu0 %v5538
    %6870 = vmatprep.subr.mxu0 %v5543
    %6871 = vmatpush1.msra.mxu0 %v5542
    %6872 = vmatprep.subr.mxu0 0.0
    %6873 = vmatpush1.msra.mxu0 0.0
    %6874 = vmatprep.subr.mxu0 0.0
    %6875 = vmatpush1.msra.mxu0 0.0
    %6876 = vmatprep.subr.mxu0 0.0
    %6877 = vmatpush1.msra.mxu0 0.0
    %6878 = vmatprep.subr.mxu0 0.0
    %6879 = vmatpush1.msra.mxu0 0.0
    %6880 = vmatprep.subr.mxu0 0.0
    %6881 = vmatpush1.msra.mxu0 0.0
    %6882 = vmatprep.subr.mxu0 0.0
    %6883 = vmatpush1.msra.mxu0 0.0
    %6884 = vmatprep.subr.mxu0 0.0
    %6885 = vmatpush1.msra.mxu0 0.0
    %6886 = vmatprep.subr.mxu0 0.0
    %6887 = vmatpush1.msra.mxu0 0.0
    %6888 = vmatprep.subr.mxu0 0.0
    %6889 = vmatpush1.msra.mxu0 0.0
    %6890 = vmatprep.subr.mxu0 0.0
    %6891 = vmatpush1.msra.mxu0 0.0
    %6892 = vmatprep.subr.mxu0 0.0
    %6893 = vmatpush1.msra.mxu0 0.0
    %6894 = vmatprep.subr.mxu0 0.0
    %6895 = vmatpush1.msra.mxu0 0.0
    %6896 = vmatprep.subr.mxu0 0.0
    %6897 = vmatpush1.msra.mxu0 0.0
    %6898 = vmatprep.subr.mxu0 0.0
    %6899 = vmatpush1.msra.mxu0 0.0
    %6900 = vmatprep.subr.mxu0 0.0
    %6901 = vmatpush1.msra.mxu0 0.0
    %6902 = vmatprep.subr.mxu0 0.0
    %6903 = vmatpush1.msra.mxu0 0.0
    %6904 = vmatprep.mubr.f32.mxu0 0.0
    %6905 = vmatmul.mubr.f32.gmra.mrb[0].mxu0 %v6763
    %v6906 = vpop.f32.mrb[0].mxu0
    %v6907 = vadd.f32 0.0, %v6906
    %v6908 = vpop.f32.mrb[0].mxu0
    %v6909 = vadd.f32 0.0, %v6908
    %6910 = vdwg.mxu0
    %v6911 = vadd.f32 %v6765, %v6836
    %v6912 = vadd.f32 %v6766, %v6838
    %v6913 = vadd.f32 %v6767, %v6907
    %v6914 = vadd.f32 %v6768, %v6909
    %v6915 = vxor.u32 %v6911, 2147483648
    %v6916 = vmul.f32 %v6915, 1.442695
    %v6917 = vpow.pop %v6916
    %v6918 = vadd.f32 %v6917, 1.0
    %v6919 = vrcp.pop %v6918
    %v6920 = vmul.f32 1.0, %v6919
    %v6921 = vxor.u32 %v6912, 2147483648
    %v6922 = vmul.f32 %v6921, 1.442695
    %v6923 = vpow.pop %v6922
    %v6924 = vadd.f32 %v6923, 1.0
    %v6925 = vrcp.pop %v6924
    %v6926 = vmul.f32 1.0, %v6925
    %v6927 = vtanh.pop %v6913
    %v6928 = vxor.u32 %v6914, 2147483648
    %v6929 = vmul.f32 %v6928, 1.442695
    %v6930 = vpow.pop %v6929
    %v6931 = vadd.f32 %v6930, 1.0
    %v6932 = vrcp.pop %v6931
    %v6933 = vmul.f32 1.0, %v6932
    %v6934 = vmul.f32 %v6926, %v6761
    %v6935 = vmul.f32 %v6920, %v6927
    %v6936 = vadd.f32 %v6934, %v6935
    %v6937 = vtanh.pop %v6936
    %v6938 = vmul.f32 %v6933, %v6937
    %v6939 = vld [vmem:[%s2866] sm:$0xff]
    %v6940 = vld [vmem:[#allocation11] sm:$0xff]
    %v6941 = vld [vmem:[#allocation11 + $0x8] sm:$0xff]
    %v6942 = vld [vmem:[#allocation11 + $0x10] sm:$0xff]
    %v6943 = vld [vmem:[#allocation11 + $0x18] sm:$0xff]
    %v6944 = vld [vmem:[#allocation11 + $0x20] sm:$0xff]
    %v6945 = vld [vmem:[#allocation11 + $0x28] sm:$0xff]
    %v6946 = vld [vmem:[#allocation11 + $0x30] sm:$0xff]
    %v6947 = vld [vmem:[#allocation11 + $0x38] sm:$0xff]
    %v6948 = vld [vmem:[#allocation11 + $0x40] sm:$0xff]
    %v6949 = vld [vmem:[#allocation11 + $0x48] sm:$0xff]
    %v6950 = vld [vmem:[#allocation11 + $0x50] sm:$0xff]
    %v6951 = vld [vmem:[#allocation11 + $0x58] sm:$0xff]
    %v6952 = vld [vmem:[#allocation11 + $0x60] sm:$0xff]
    %v6953 = vld [vmem:[#allocation11 + $0x68] sm:$0xff]
    %v6954 = vld [vmem:[#allocation11 + $0x70] sm:$0xff]
    %v6955 = vld [vmem:[#allocation11 + $0x78] sm:$0xff]
    %v6956 = vld [vmem:[#allocation11 + $0x80] sm:$0xff]
    %v6957 = vld [vmem:[#allocation11 + $0x88] sm:$0xff]
    %v6958 = vld [vmem:[#allocation11 + $0x90] sm:$0xff]
    %v6959 = vld [vmem:[#allocation11 + $0x98] sm:$0xff]
    %v6960 = vld [vmem:[#allocation11 + $0xa0] sm:$0xff]
    %v6961 = vld [vmem:[#allocation11 + $0xa8] sm:$0xff]
    %v6962 = vld [vmem:[#allocation11 + $0xb0] sm:$0xff]
    %v6963 = vld [vmem:[#allocation11 + $0xb8] sm:$0xff]
    %v6964 = vld [vmem:[#allocation11 + $0xc0] sm:$0xff]
    %v6965 = vld [vmem:[#allocation11 + $0xc8] sm:$0xff]
    %v6966 = vld [vmem:[#allocation11 + $0xd0] sm:$0xff]
    %v6967 = vld [vmem:[#allocation11 + $0xd8] sm:$0xff]
    %v6968 = vld [vmem:[#allocation11 + $0xe0] sm:$0xff]
    %v6969 = vld [vmem:[#allocation11 + $0xe8] sm:$0xff]
    %v6970 = vld [vmem:[#allocation11 + $0xf0] sm:$0xff]
    %v6971 = vld [vmem:[#allocation11 + $0xf8] sm:$0xff]
    %v6972 = vld [vmem:[#allocation11 + $0x100] sm:$0xff]
    %v6973 = vld [vmem:[#allocation11 + $0x108] sm:$0xff]
    %v6974 = vld [vmem:[#allocation11 + $0x110] sm:$0xff]
    %v6975 = vld [vmem:[#allocation11 + $0x118] sm:$0xff]
    %v6976 = vld [vmem:[#allocation11 + $0x120] sm:$0xff]
    %v6977 = vld [vmem:[#allocation11 + $0x128] sm:$0xff]
    %v6978 = vld [vmem:[#allocation11 + $0x130] sm:$0xff]
    %v6979 = vld [vmem:[#allocation11 + $0x138] sm:$0xff]
    %v6980 = vld [vmem:[#allocation11 + $0x140] sm:$0xff]
    %v6981 = vld [vmem:[#allocation11 + $0x148] sm:$0xff]
    %v6982 = vld [vmem:[#allocation11 + $0x150] sm:$0xff]
    %v6983 = vld [vmem:[#allocation11 + $0x158] sm:$0xff]
    %v6984 = vld [vmem:[#allocation11 + $0x160] sm:$0xff]
    %v6985 = vld [vmem:[#allocation11 + $0x168] sm:$0xff]
    %v6986 = vld [vmem:[#allocation11 + $0x170] sm:$0xff]
    %v6987 = vld [vmem:[#allocation11 + $0x178] sm:$0xff]
    %v6988 = vld [vmem:[#allocation11 + $0x180] sm:$0xff]
    %v6989 = vld [vmem:[#allocation11 + $0x188] sm:$0xff]
    %v6990 = vld [vmem:[#allocation11 + $0x190] sm:$0xff]
    %v6991 = vld [vmem:[#allocation11 + $0x198] sm:$0xff]
    %v6992 = vld [vmem:[#allocation11 + $0x1a0] sm:$0xff]
    %v6993 = vld [vmem:[#allocation11 + $0x1a8] sm:$0xff]
    %v6994 = vld [vmem:[#allocation11 + $0x1b0] sm:$0xff]
    %v6995 = vld [vmem:[#allocation11 + $0x1b8] sm:$0xff]
    %v6996 = vld [vmem:[#allocation11 + $0x1c0] sm:$0xff]
    %v6997 = vld [vmem:[#allocation11 + $0x1c8] sm:$0xff]
    %v6998 = vld [vmem:[#allocation11 + $0x1d0] sm:$0xff]
    %v6999 = vld [vmem:[#allocation11 + $0x1d8] sm:$0xff]
    %v7000 = vld [vmem:[#allocation11 + $0x1e0] sm:$0xff]
    %v7001 = vld [vmem:[#allocation11 + $0x1e8] sm:$0xff]
    %v7002 = vld [vmem:[#allocation11 + $0x1f0] sm:$0xff]
    %v7003 = vld [vmem:[#allocation11 + $0x1f8] sm:$0xff]
    %v7004 = vld [vmem:[%s3107] sm:$0xff]
    %v7005 = vld [vmem:[#allocation11 + $0x200] sm:$0xff]
    %v7006 = vld [vmem:[#allocation11 + $0x208] sm:$0xff]
    %v7007 = vld [vmem:[#allocation11 + $0x210] sm:$0xff]
    %v7008 = vld [vmem:[#allocation11 + $0x218] sm:$0xff]
    %v7009 = vld [vmem:[#allocation11 + $0x220] sm:$0xff]
    %v7010 = vld [vmem:[#allocation11 + $0x228] sm:$0xff]
    %v7011 = vld [vmem:[#allocation11 + $0x230] sm:$0xff]
    %v7012 = vld [vmem:[#allocation11 + $0x238] sm:$0xff]
    %v7013 = vld [vmem:[#allocation11 + $0x240] sm:$0xff]
    %v7014 = vld [vmem:[#allocation11 + $0x248] sm:$0xff]
    %v7015 = vld [vmem:[#allocation11 + $0x250] sm:$0xff]
    %v7016 = vld [vmem:[#allocation11 + $0x258] sm:$0xff]
    %v7017 = vld [vmem:[#allocation11 + $0x260] sm:$0xff]
    %v7018 = vld [vmem:[#allocation11 + $0x268] sm:$0xff]
    %v7019 = vld [vmem:[#allocation11 + $0x270] sm:$0xff]
    %v7020 = vld [vmem:[#allocation11 + $0x278] sm:$0xff]
    %v7021 = vld [vmem:[#allocation11 + $0x280] sm:$0xff]
    %v7022 = vld [vmem:[#allocation11 + $0x288] sm:$0xff]
    %v7023 = vld [vmem:[#allocation11 + $0x290] sm:$0xff]
    %v7024 = vld [vmem:[#allocation11 + $0x298] sm:$0xff]
    %v7025 = vld [vmem:[#allocation11 + $0x2a0] sm:$0xff]
    %v7026 = vld [vmem:[#allocation11 + $0x2a8] sm:$0xff]
    %v7027 = vld [vmem:[#allocation11 + $0x2b0] sm:$0xff]
    %v7028 = vld [vmem:[#allocation11 + $0x2b8] sm:$0xff]
    %v7029 = vld [vmem:[#allocation11 + $0x2c0] sm:$0xff]
    %v7030 = vld [vmem:[#allocation11 + $0x2c8] sm:$0xff]
    %v7031 = vld [vmem:[#allocation11 + $0x2d0] sm:$0xff]
    %v7032 = vld [vmem:[#allocation11 + $0x2d8] sm:$0xff]
    %v7033 = vld [vmem:[#allocation11 + $0x2e0] sm:$0xff]
    %v7034 = vld [vmem:[#allocation11 + $0x2e8] sm:$0xff]
    %v7035 = vld [vmem:[#allocation11 + $0x2f0] sm:$0xff]
    %v7036 = vld [vmem:[#allocation11 + $0x2f8] sm:$0xff]
    %v7037 = vld [vmem:[#allocation11 + $0x300] sm:$0xff]
    %v7038 = vld [vmem:[#allocation11 + $0x308] sm:$0xff]
    %v7039 = vld [vmem:[#allocation11 + $0x310] sm:$0xff]
    %v7040 = vld [vmem:[#allocation11 + $0x318] sm:$0xff]
    %v7041 = vld [vmem:[#allocation11 + $0x320] sm:$0xff]
    %v7042 = vld [vmem:[#allocation11 + $0x328] sm:$0xff]
    %v7043 = vld [vmem:[#allocation11 + $0x330] sm:$0xff]
    %v7044 = vld [vmem:[#allocation11 + $0x338] sm:$0xff]
    %v7045 = vld [vmem:[#allocation11 + $0x340] sm:$0xff]
    %v7046 = vld [vmem:[#allocation11 + $0x348] sm:$0xff]
    %v7047 = vld [vmem:[#allocation11 + $0x350] sm:$0xff]
    %v7048 = vld [vmem:[#allocation11 + $0x358] sm:$0xff]
    %v7049 = vld [vmem:[#allocation11 + $0x360] sm:$0xff]
    %v7050 = vld [vmem:[#allocation11 + $0x368] sm:$0xff]
    %v7051 = vld [vmem:[#allocation11 + $0x370] sm:$0xff]
    %v7052 = vld [vmem:[#allocation11 + $0x378] sm:$0xff]
    %v7053 = vld [vmem:[#allocation11 + $0x380] sm:$0xff]
    %v7054 = vld [vmem:[#allocation11 + $0x388] sm:$0xff]
    %v7055 = vld [vmem:[#allocation11 + $0x390] sm:$0xff]
    %v7056 = vld [vmem:[#allocation11 + $0x398] sm:$0xff]
    %v7057 = vld [vmem:[#allocation11 + $0x3a0] sm:$0xff]
    %v7058 = vld [vmem:[#allocation11 + $0x3a8] sm:$0xff]
    %v7059 = vld [vmem:[#allocation11 + $0x3b0] sm:$0xff]
    %v7060 = vld [vmem:[#allocation11 + $0x3b8] sm:$0xff]
    %v7061 = vld [vmem:[#allocation11 + $0x3c0] sm:$0xff]
    %v7062 = vld [vmem:[#allocation11 + $0x3c8] sm:$0xff]
    %v7063 = vld [vmem:[#allocation11 + $0x3d0] sm:$0xff]
    %v7064 = vld [vmem:[#allocation11 + $0x3d8] sm:$0xff]
    %v7065 = vld [vmem:[#allocation11 + $0x3e0] sm:$0xff]
    %v7066 = vld [vmem:[#allocation11 + $0x3e8] sm:$0xff]
    %v7067 = vld [vmem:[#allocation11 + $0x3f0] sm:$0xff]
    %v7068 = vld [vmem:[#allocation11 + $0x3f8] sm:$0xff]
    %7069 = vmatprep.subr.mxu0 %v7006
    %7070 = vmatpush1.msra.mxu0 %v7005
    %7071 = vmatprep.subr.mxu0 %v7010
    %7072 = vmatpush1.msra.mxu0 %v7009
    %7073 = vmatprep.subr.mxu0 %v7014
    %7074 = vmatpush1.msra.mxu0 %v7013
    %7075 = vmatprep.subr.mxu0 %v7018
    %7076 = vmatpush1.msra.mxu0 %v7017
    %7077 = vmatprep.subr.mxu0 %v7022
    %7078 = vmatpush1.msra.mxu0 %v7021
    %7079 = vmatprep.subr.mxu0 %v7026
    %7080 = vmatpush1.msra.mxu0 %v7025
    %7081 = vmatprep.subr.mxu0 %v7030
    %7082 = vmatpush1.msra.mxu0 %v7029
    %7083 = vmatprep.subr.mxu0 %v7034
    %7084 = vmatpush1.msra.mxu0 %v7033
    %7085 = vmatprep.subr.mxu0 %v7038
    %7086 = vmatpush1.msra.mxu0 %v7037
    %7087 = vmatprep.subr.mxu0 %v7042
    %7088 = vmatpush1.msra.mxu0 %v7041
    %7089 = vmatprep.subr.mxu0 %v7046
    %7090 = vmatpush1.msra.mxu0 %v7045
    %7091 = vmatprep.subr.mxu0 %v7050
    %7092 = vmatpush1.msra.mxu0 %v7049
    %7093 = vmatprep.subr.mxu0 %v7054
    %7094 = vmatpush1.msra.mxu0 %v7053
    %7095 = vmatprep.subr.mxu0 %v7058
    %7096 = vmatpush1.msra.mxu0 %v7057
    %7097 = vmatprep.subr.mxu0 %v7062
    %7098 = vmatpush1.msra.mxu0 %v7061
    %7099 = vmatprep.subr.mxu0 %v7066
    %7100 = vmatpush1.msra.mxu0 %v7065
    %7101 = vmatprep.subr.mxu0 0.0
    %7102 = vmatpush1.msra.mxu0 0.0
    %7103 = vmatprep.subr.mxu0 0.0
    %7104 = vmatpush1.msra.mxu0 0.0
    %7105 = vmatprep.subr.mxu0 0.0
    %7106 = vmatpush1.msra.mxu0 0.0
    %7107 = vmatprep.subr.mxu0 0.0
    %7108 = vmatpush1.msra.mxu0 0.0
    %7109 = vmatprep.subr.mxu0 0.0
    %7110 = vmatpush1.msra.mxu0 0.0
    %7111 = vmatprep.subr.mxu0 0.0
    %7112 = vmatpush1.msra.mxu0 0.0
    %7113 = vmatprep.subr.mxu0 0.0
    %7114 = vmatpush1.msra.mxu0 0.0
    %7115 = vmatprep.subr.mxu0 0.0
    %7116 = vmatpush1.msra.mxu0 0.0
    %7117 = vmatprep.subr.mxu0 0.0
    %7118 = vmatpush1.msra.mxu0 0.0
    %7119 = vmatprep.subr.mxu0 0.0
    %7120 = vmatpush1.msra.mxu0 0.0
    %7121 = vmatprep.subr.mxu0 0.0
    %7122 = vmatpush1.msra.mxu0 0.0
    %7123 = vmatprep.subr.mxu0 0.0
    %7124 = vmatpush1.msra.mxu0 0.0
    %7125 = vmatprep.subr.mxu0 0.0
    %7126 = vmatpush1.msra.mxu0 0.0
    %7127 = vmatprep.subr.mxu0 0.0
    %7128 = vmatpush1.msra.mxu0 0.0
    %7129 = vmatprep.subr.mxu0 0.0
    %7130 = vmatpush1.msra.mxu0 0.0
    %7131 = vmatprep.subr.mxu0 0.0
    %7132 = vmatpush1.msra.mxu0 0.0
    %7133 = vmatprep.mubr.f32.mxu0 0.0
    %7134 = vmatmul.mubr.f32.gmra.mrb[0].mxu0 %v7004
    %v7135 = vpop.f32.mrb[0].mxu0
    %v7136 = vadd.f32 0.0, %v7135
    %v7137 = vpop.f32.mrb[0].mxu0
    %v7138 = vadd.f32 0.0, %v7137
    %7139 = vdwg.mxu0
    %7140 = vmatprep.subr.mxu0 %v7008
    %7141 = vmatpush1.msra.mxu0 %v7007
    %7142 = vmatprep.subr.mxu0 %v7012
    %7143 = vmatpush1.msra.mxu0 %v7011
    %7144 = vmatprep.subr.mxu0 %v7016
    %7145 = vmatpush1.msra.mxu0 %v7015
    %7146 = vmatprep.subr.mxu0 %v7020
    %7147 = vmatpush1.msra.mxu0 %v7019
    %7148 = vmatprep.subr.mxu0 %v7024
    %7149 = vmatpush1.msra.mxu0 %v7023
    %7150 = vmatprep.subr.mxu0 %v7028
    %7151 = vmatpush1.msra.mxu0 %v7027
    %7152 = vmatprep.subr.mxu0 %v7032
    %7153 = vmatpush1.msra.mxu0 %v7031
    %7154 = vmatprep.subr.mxu0 %v7036
    %7155 = vmatpush1.msra.mxu0 %v7035
    %7156 = vmatprep.subr.mxu0 %v7040
    %7157 = vmatpush1.msra.mxu0 %v7039
    %7158 = vmatprep.subr.mxu0 %v7044
    %7159 = vmatpush1.msra.mxu0 %v7043
    %7160 = vmatprep.subr.mxu0 %v7048
    %7161 = vmatpush1.msra.mxu0 %v7047
    %7162 = vmatprep.subr.mxu0 %v7052
    %7163 = vmatpush1.msra.mxu0 %v7051
    %7164 = vmatprep.subr.mxu0 %v7056
    %7165 = vmatpush1.msra.mxu0 %v7055
    %7166 = vmatprep.subr.mxu0 %v7060
    %7167 = vmatpush1.msra.mxu0 %v7059
    %7168 = vmatprep.subr.mxu0 %v7064
    %7169 = vmatpush1.msra.mxu0 %v7063
    %7170 = vmatprep.subr.mxu0 %v7068
    %7171 = vmatpush1.msra.mxu0 %v7067
    %7172 = vmatprep.subr.mxu0 0.0
    %7173 = vmatpush1.msra.mxu0 0.0
    %7174 = vmatprep.subr.mxu0 0.0
    %7175 = vmatpush1.msra.mxu0 0.0
    %7176 = vmatprep.subr.mxu0 0.0
    %7177 = vmatpush1.msra.mxu0 0.0
    %7178 = vmatprep.subr.mxu0 0.0
    %7179 = vmatpush1.msra.mxu0 0.0
    %7180 = vmatprep.subr.mxu0 0.0
    %7181 = vmatpush1.msra.mxu0 0.0
    %7182 = vmatprep.subr.mxu0 0.0
    %7183 = vmatpush1.msra.mxu0 0.0
    %7184 = vmatprep.subr.mxu0 0.0
    %7185 = vmatpush1.msra.mxu0 0.0
    %7186 = vmatprep.subr.mxu0 0.0
    %7187 = vmatpush1.msra.mxu0 0.0
    %7188 = vmatprep.subr.mxu0 0.0
    %7189 = vmatpush1.msra.mxu0 0.0
    %7190 = vmatprep.subr.mxu0 0.0
    %7191 = vmatpush1.msra.mxu0 0.0
    %7192 = vmatprep.subr.mxu0 0.0
    %7193 = vmatpush1.msra.mxu0 0.0
    %7194 = vmatprep.subr.mxu0 0.0
    %7195 = vmatpush1.msra.mxu0 0.0
    %7196 = vmatprep.subr.mxu0 0.0
    %7197 = vmatpush1.msra.mxu0 0.0
    %7198 = vmatprep.subr.mxu0 0.0
    %7199 = vmatpush1.msra.mxu0 0.0
    %7200 = vmatprep.subr.mxu0 0.0
    %7201 = vmatpush1.msra.mxu0 0.0
    %7202 = vmatprep.subr.mxu0 0.0
    %7203 = vmatpush1.msra.mxu0 0.0
    %7204 = vmatprep.mubr.f32.mxu0 0.0
    %7205 = vmatmul.mubr.f32.gmra.mrb[0].mxu0 %v7004
    %v7206 = vpop.f32.mrb[0].mxu0
    %v7207 = vadd.f32 0.0, %v7206
    %v7208 = vpop.f32.mrb[0].mxu0
    %v7209 = vadd.f32 0.0, %v7208
    %7210 = vdwg.mxu0
    %7211 = vmatprep.subr.mxu0 %v6941
    %7212 = vmatpush1.msra.mxu0 %v6940
    %7213 = vmatprep.subr.mxu0 %v6945
    %7214 = vmatpush1.msra.mxu0 %v6944
    %7215 = vmatprep.subr.mxu0 %v6949
    %7216 = vmatpush1.msra.mxu0 %v6948
    %7217 = vmatprep.subr.mxu0 %v6953
    %7218 = vmatpush1.msra.mxu0 %v6952
    %7219 = vmatprep.subr.mxu0 %v6957
    %7220 = vmatpush1.msra.mxu0 %v6956
    %7221 = vmatprep.subr.mxu0 %v6961
    %7222 = vmatpush1.msra.mxu0 %v6960
    %7223 = vmatprep.subr.mxu0 %v6965
    %7224 = vmatpush1.msra.mxu0 %v6964
    %7225 = vmatprep.subr.mxu0 %v6969
    %7226 = vmatpush1.msra.mxu0 %v6968
    %7227 = vmatprep.subr.mxu0 %v6973
    %7228 = vmatpush1.msra.mxu0 %v6972
    %7229 = vmatprep.subr.mxu0 %v6977
    %7230 = vmatpush1.msra.mxu0 %v6976
    %7231 = vmatprep.subr.mxu0 %v6981
    %7232 = vmatpush1.msra.mxu0 %v6980
    %7233 = vmatprep.subr.mxu0 %v6985
    %7234 = vmatpush1.msra.mxu0 %v6984
    %7235 = vmatprep.subr.mxu0 %v6989
    %7236 = vmatpush1.msra.mxu0 %v6988
    %7237 = vmatprep.subr.mxu0 %v6993
    %7238 = vmatpush1.msra.mxu0 %v6992
    %7239 = vmatprep.subr.mxu0 %v6997
    %7240 = vmatpush1.msra.mxu0 %v6996
    %7241 = vmatprep.subr.mxu0 %v7001
    %7242 = vmatpush1.msra.mxu0 %v7000
    %7243 = vmatprep.subr.mxu0 0.0
    %7244 = vmatpush1.msra.mxu0 0.0
    %7245 = vmatprep.subr.mxu0 0.0
    %7246 = vmatpush1.msra.mxu0 0.0
    %7247 = vmatprep.subr.mxu0 0.0
    %7248 = vmatpush1.msra.mxu0 0.0
    %7249 = vmatprep.subr.mxu0 0.0
    %7250 = vmatpush1.msra.mxu0 0.0
    %7251 = vmatprep.subr.mxu0 0.0
    %7252 = vmatpush1.msra.mxu0 0.0
    %7253 = vmatprep.subr.mxu0 0.0
    %7254 = vmatpush1.msra.mxu0 0.0
    %7255 = vmatprep.subr.mxu0 0.0
    %7256 = vmatpush1.msra.mxu0 0.0
    %7257 = vmatprep.subr.mxu0 0.0
    %7258 = vmatpush1.msra.mxu0 0.0
    %7259 = vmatprep.subr.mxu0 0.0
    %7260 = vmatpush1.msra.mxu0 0.0
    %7261 = vmatprep.subr.mxu0 0.0
    %7262 = vmatpush1.msra.mxu0 0.0
    %7263 = vmatprep.subr.mxu0 0.0
    %7264 = vmatpush1.msra.mxu0 0.0
    %7265 = vmatprep.subr.mxu0 0.0
    %7266 = vmatpush1.msra.mxu0 0.0
    %7267 = vmatprep.subr.mxu0 0.0
    %7268 = vmatpush1.msra.mxu0 0.0
    %7269 = vmatprep.subr.mxu0 0.0
    %7270 = vmatpush1.msra.mxu0 0.0
    %7271 = vmatprep.subr.mxu0 0.0
    %7272 = vmatpush1.msra.mxu0 0.0
    %7273 = vmatprep.subr.mxu0 0.0
    %7274 = vmatpush1.msra.mxu0 0.0
    %7275 = vmatprep.mubr.f32.mxu0 0.0
    %7276 = vmatmul.mubr.f32.gmra.mrb[0].mxu0 %v6939
    %v7277 = vpop.f32.mrb[0].mxu0
    %v7278 = vadd.f32 %v7136, %v7277
    %v7279 = vpop.f32.mrb[0].mxu0
    %v7280 = vadd.f32 %v7138, %v7279
    %7281 = vdwg.mxu0
    %7282 = vmatprep.subr.mxu0 %v6943
    %7283 = vmatpush1.msra.mxu0 %v6942
    %7284 = vmatprep.subr.mxu0 %v6947
    %7285 = vmatpush1.msra.mxu0 %v6946
    %7286 = vmatprep.subr.mxu0 %v6951
    %7287 = vmatpush1.msra.mxu0 %v6950
    %7288 = vmatprep.subr.mxu0 %v6955
    %7289 = vmatpush1.msra.mxu0 %v6954
    %7290 = vmatprep.subr.mxu0 %v6959
    %7291 = vmatpush1.msra.mxu0 %v6958
    %7292 = vmatprep.subr.mxu0 %v6963
    %7293 = vmatpush1.msra.mxu0 %v6962
    %7294 = vmatprep.subr.mxu0 %v6967
    %7295 = vmatpush1.msra.mxu0 %v6966
    %7296 = vmatprep.subr.mxu0 %v6971
    %7297 = vmatpush1.msra.mxu0 %v6970
    %7298 = vmatprep.subr.mxu0 %v6975
    %7299 = vmatpush1.msra.mxu0 %v6974
    %7300 = vmatprep.subr.mxu0 %v6979
    %7301 = vmatpush1.msra.mxu0 %v6978
    %7302 = vmatprep.subr.mxu0 %v6983
    %7303 = vmatpush1.msra.mxu0 %v6982
    %7304 = vmatprep.subr.mxu0 %v6987
    %7305 = vmatpush1.msra.mxu0 %v6986
    %7306 = vmatprep.subr.mxu0 %v6991
    %7307 = vmatpush1.msra.mxu0 %v6990
    %7308 = vmatprep.subr.mxu0 %v6995
    %7309 = vmatpush1.msra.mxu0 %v6994
    %7310 = vmatprep.subr.mxu0 %v6999
    %7311 = vmatpush1.msra.mxu0 %v6998
    %7312 = vmatprep.subr.mxu0 %v7003
    %7313 = vmatpush1.msra.mxu0 %v7002
    %7314 = vmatprep.subr.mxu0 0.0
    %7315 = vmatpush1.msra.mxu0 0.0
    %7316 = vmatprep.subr.mxu0 0.0
    %7317 = vmatpush1.msra.mxu0 0.0
    %7318 = vmatprep.subr.mxu0 0.0
    %7319 = vmatpush1.msra.mxu0 0.0
    %7320 = vmatprep.subr.mxu0 0.0
    %7321 = vmatpush1.msra.mxu0 0.0
    %7322 = vmatprep.subr.mxu0 0.0
    %7323 = vmatpush1.msra.mxu0 0.0
    %7324 = vmatprep.subr.mxu0 0.0
    %7325 = vmatpush1.msra.mxu0 0.0
    %7326 = vmatprep.subr.mxu0 0.0
    %7327 = vmatpush1.msra.mxu0 0.0
    %7328 = vmatprep.subr.mxu0 0.0
    %7329 = vmatpush1.msra.mxu0 0.0
    %7330 = vmatprep.subr.mxu0 0.0
    %7331 = vmatpush1.msra.mxu0 0.0
    %7332 = vmatprep.subr.mxu0 0.0
    %7333 = vmatpush1.msra.mxu0 0.0
    %7334 = vmatprep.subr.mxu0 0.0
    %7335 = vmatpush1.msra.mxu0 0.0
    %7336 = vmatprep.subr.mxu0 0.0
    %7337 = vmatpush1.msra.mxu0 0.0
    %7338 = vmatprep.subr.mxu0 0.0
    %7339 = vmatpush1.msra.mxu0 0.0
    %7340 = vmatprep.subr.mxu0 0.0
    %7341 = vmatpush1.msra.mxu0 0.0
    %7342 = vmatprep.subr.mxu0 0.0
    %7343 = vmatpush1.msra.mxu0 0.0
    %7344 = vmatprep.subr.mxu0 0.0
    %7345 = vmatpush1.msra.mxu0 0.0
    %7346 = vmatprep.mubr.f32.mxu0 0.0
    %7347 = vmatmul.mubr.f32.gmra.mrb[0].mxu0 %v6939
    %v7348 = vpop.f32.mrb[0].mxu0
    %v7349 = vadd.f32 %v7207, %v7348
    %v7350 = vpop.f32.mrb[0].mxu0
    %v7351 = vadd.f32 %v7209, %v7350
    %7352 = vdwg.mxu0
    %v7353 = vld [vmem:[%s10] sm:$0xf]
    %v7355 = vlaneseq
    %v7356 = vshrl.u32 %v7355, 7
    %v7357 = vsub.s32 0, %v7356
    %v7358 = vrot.slane %v7353, %v7357
    %v7359 = vlaneseq
    %v7360 = vshrl.u32 %v7359, 7
    %v7361 = vsub.s32 1, %v7360
    %v7362 = vrot.slane %v7353, %v7361
    %v7363 = vlaneseq
    %v7364 = vshrl.u32 %v7363, 7
    %v7365 = vsub.s32 2, %v7364
    %v7366 = vrot.slane %v7353, %v7365
    %v7367 = vlaneseq
    %v7368 = vshrl.u32 %v7367, 7
    %v7369 = vsub.s32 3, %v7368
    %v7370 = vrot.slane %v7353, %v7369
    %v7375 = vadd.f32 %v7278, %v7358
    %v7376 = vadd.f32 %v7280, %v7362
    %v7377 = vadd.f32 %v7349, %v7366
    %v7378 = vadd.f32 %v7351, %v7370
    %v7379 = vld [vmem:[#allocation14] sm:$0xff]
    %v7380 = vld [vmem:[#allocation14 + $0x8] sm:$0xff]
    %v7381 = vld [vmem:[#allocation14 + $0x10] sm:$0xff]
    %v7382 = vld [vmem:[#allocation14 + $0x18] sm:$0xff]
    %v7383 = vld [vmem:[#allocation14 + $0x20] sm:$0xff]
    %v7384 = vld [vmem:[#allocation14 + $0x28] sm:$0xff]
    %v7385 = vld [vmem:[#allocation14 + $0x30] sm:$0xff]
    %v7386 = vld [vmem:[#allocation14 + $0x38] sm:$0xff]
    %v7387 = vld [vmem:[#allocation14 + $0x40] sm:$0xff]
    %v7388 = vld [vmem:[#allocation14 + $0x48] sm:$0xff]
    %v7389 = vld [vmem:[#allocation14 + $0x50] sm:$0xff]
    %v7390 = vld [vmem:[#allocation14 + $0x58] sm:$0xff]
    %v7391 = vld [vmem:[#allocation14 + $0x60] sm:$0xff]
    %v7392 = vld [vmem:[#allocation14 + $0x68] sm:$0xff]
    %v7393 = vld [vmem:[#allocation14 + $0x70] sm:$0xff]
    %v7394 = vld [vmem:[#allocation14 + $0x78] sm:$0xff]
    %v7395 = vld [vmem:[#allocation14 + $0x80] sm:$0xff]
    %v7396 = vld [vmem:[#allocation14 + $0x88] sm:$0xff]
    %v7397 = vld [vmem:[#allocation14 + $0x90] sm:$0xff]
    %v7398 = vld [vmem:[#allocation14 + $0x98] sm:$0xff]
    %v7399 = vld [vmem:[#allocation14 + $0xa0] sm:$0xff]
    %v7400 = vld [vmem:[#allocation14 + $0xa8] sm:$0xff]
    %v7401 = vld [vmem:[#allocation14 + $0xb0] sm:$0xff]
    %v7402 = vld [vmem:[#allocation14 + $0xb8] sm:$0xff]
    %v7403 = vld [vmem:[#allocation14 + $0xc0] sm:$0xff]
    %v7404 = vld [vmem:[#allocation14 + $0xc8] sm:$0xff]
    %v7405 = vld [vmem:[#allocation14 + $0xd0] sm:$0xff]
    %v7406 = vld [vmem:[#allocation14 + $0xd8] sm:$0xff]
    %v7407 = vld [vmem:[#allocation14 + $0xe0] sm:$0xff]
    %v7408 = vld [vmem:[#allocation14 + $0xe8] sm:$0xff]
    %v7409 = vld [vmem:[#allocation14 + $0xf0] sm:$0xff]
    %v7410 = vld [vmem:[#allocation14 + $0xf8] sm:$0xff]
    %v7411 = vld [vmem:[#allocation14 + $0x100] sm:$0xff]
    %v7412 = vld [vmem:[#allocation14 + $0x108] sm:$0xff]
    %v7413 = vld [vmem:[#allocation14 + $0x110] sm:$0xff]
    %v7414 = vld [vmem:[#allocation14 + $0x118] sm:$0xff]
    %v7415 = vld [vmem:[#allocation14 + $0x120] sm:$0xff]
    %v7416 = vld [vmem:[#allocation14 + $0x128] sm:$0xff]
    %v7417 = vld [vmem:[#allocation14 + $0x130] sm:$0xff]
    %v7418 = vld [vmem:[#allocation14 + $0x138] sm:$0xff]
    %v7419 = vld [vmem:[#allocation14 + $0x140] sm:$0xff]
    %v7420 = vld [vmem:[#allocation14 + $0x148] sm:$0xff]
    %v7421 = vld [vmem:[#allocation14 + $0x150] sm:$0xff]
    %v7422 = vld [vmem:[#allocation14 + $0x158] sm:$0xff]
    %v7423 = vld [vmem:[#allocation14 + $0x160] sm:$0xff]
    %v7424 = vld [vmem:[#allocation14 + $0x168] sm:$0xff]
    %v7425 = vld [vmem:[#allocation14 + $0x170] sm:$0xff]
    %v7426 = vld [vmem:[#allocation14 + $0x178] sm:$0xff]
    %v7427 = vld [vmem:[#allocation14 + $0x180] sm:$0xff]
    %v7428 = vld [vmem:[#allocation14 + $0x188] sm:$0xff]
    %v7429 = vld [vmem:[#allocation14 + $0x190] sm:$0xff]
    %v7430 = vld [vmem:[#allocation14 + $0x198] sm:$0xff]
    %v7431 = vld [vmem:[#allocation14 + $0x1a0] sm:$0xff]
    %v7432 = vld [vmem:[#allocation14 + $0x1a8] sm:$0xff]
    %v7433 = vld [vmem:[#allocation14 + $0x1b0] sm:$0xff]
    %v7434 = vld [vmem:[#allocation14 + $0x1b8] sm:$0xff]
    %v7435 = vld [vmem:[#allocation14 + $0x1c0] sm:$0xff]
    %v7436 = vld [vmem:[#allocation14 + $0x1c8] sm:$0xff]
    %v7437 = vld [vmem:[#allocation14 + $0x1d0] sm:$0xff]
    %v7438 = vld [vmem:[#allocation14 + $0x1d8] sm:$0xff]
    %v7439 = vld [vmem:[#allocation14 + $0x1e0] sm:$0xff]
    %v7440 = vld [vmem:[#allocation14 + $0x1e8] sm:$0xff]
    %v7441 = vld [vmem:[#allocation14 + $0x1f0] sm:$0xff]
    %v7442 = vld [vmem:[#allocation14 + $0x1f8] sm:$0xff]
    %7443 = vmatprep.subr.mxu0 %v7380
    %7444 = vmatpush1.msra.mxu0 %v7379
    %7445 = vmatprep.subr.mxu0 %v7384
    %7446 = vmatpush1.msra.mxu0 %v7383
    %7447 = vmatprep.subr.mxu0 %v7388
    %7448 = vmatpush1.msra.mxu0 %v7387
    %7449 = vmatprep.subr.mxu0 %v7392
    %7450 = vmatpush1.msra.mxu0 %v7391
    %7451 = vmatprep.subr.mxu0 %v7396
    %7452 = vmatpush1.msra.mxu0 %v7395
    %7453 = vmatprep.subr.mxu0 %v7400
    %7454 = vmatpush1.msra.mxu0 %v7399
    %7455 = vmatprep.subr.mxu0 %v7404
    %7456 = vmatpush1.msra.mxu0 %v7403
    %7457 = vmatprep.subr.mxu0 %v7408
    %7458 = vmatpush1.msra.mxu0 %v7407
    %7459 = vmatprep.subr.mxu0 %v7412
    %7460 = vmatpush1.msra.mxu0 %v7411
    %7461 = vmatprep.subr.mxu0 %v7416
    %7462 = vmatpush1.msra.mxu0 %v7415
    %7463 = vmatprep.subr.mxu0 %v7420
    %7464 = vmatpush1.msra.mxu0 %v7419
    %7465 = vmatprep.subr.mxu0 %v7424
    %7466 = vmatpush1.msra.mxu0 %v7423
    %7467 = vmatprep.subr.mxu0 %v7428
    %7468 = vmatpush1.msra.mxu0 %v7427
    %7469 = vmatprep.subr.mxu0 %v7432
    %7470 = vmatpush1.msra.mxu0 %v7431
    %7471 = vmatprep.subr.mxu0 %v7436
    %7472 = vmatpush1.msra.mxu0 %v7435
    %7473 = vmatprep.subr.mxu0 %v7440
    %7474 = vmatpush1.msra.mxu0 %v7439
    %7475 = vmatprep.subr.mxu0 0.0
    %7476 = vmatpush1.msra.mxu0 0.0
    %7477 = vmatprep.subr.mxu0 0.0
    %7478 = vmatpush1.msra.mxu0 0.0
    %7479 = vmatprep.subr.mxu0 0.0
    %7480 = vmatpush1.msra.mxu0 0.0
    %7481 = vmatprep.subr.mxu0 0.0
    %7482 = vmatpush1.msra.mxu0 0.0
    %7483 = vmatprep.subr.mxu0 0.0
    %7484 = vmatpush1.msra.mxu0 0.0
    %7485 = vmatprep.subr.mxu0 0.0
    %7486 = vmatpush1.msra.mxu0 0.0
    %7487 = vmatprep.subr.mxu0 0.0
    %7488 = vmatpush1.msra.mxu0 0.0
    %7489 = vmatprep.subr.mxu0 0.0
    %7490 = vmatpush1.msra.mxu0 0.0
    %7491 = vmatprep.subr.mxu0 0.0
    %7492 = vmatpush1.msra.mxu0 0.0
    %7493 = vmatprep.subr.mxu0 0.0
    %7494 = vmatpush1.msra.mxu0 0.0
    %7495 = vmatprep.subr.mxu0 0.0
    %7496 = vmatpush1.msra.mxu0 0.0
    %7497 = vmatprep.subr.mxu0 0.0
    %7498 = vmatpush1.msra.mxu0 0.0
    %7499 = vmatprep.subr.mxu0 0.0
    %7500 = vmatpush1.msra.mxu0 0.0
    %7501 = vmatprep.subr.mxu0 0.0
    %7502 = vmatpush1.msra.mxu0 0.0
    %7503 = vmatprep.subr.mxu0 0.0
    %7504 = vmatpush1.msra.mxu0 0.0
    %7505 = vmatprep.subr.mxu0 0.0
    %7506 = vmatpush1.msra.mxu0 0.0
    %7507 = vmatprep.mubr.f32.mxu0 0.0
    %7508 = vmatmul.mubr.f32.gmra.mrb[0].mxu0 0.0
    %v7509 = vpop.f32.mrb[0].mxu0
    %v7510 = vadd.f32 0.0, %v7509
    %v7511 = vpop.f32.mrb[0].mxu0
    %v7512 = vadd.f32 0.0, %v7511
    %7513 = vdwg.mxu0
    %7514 = vmatprep.subr.mxu0 %v7382
    %7515 = vmatpush1.msra.mxu0 %v7381
    %7516 = vmatprep.subr.mxu0 %v7386
    %7517 = vmatpush1.msra.mxu0 %v7385
    %7518 = vmatprep.subr.mxu0 %v7390
    %7519 = vmatpush1.msra.mxu0 %v7389
    %7520 = vmatprep.subr.mxu0 %v7394
    %7521 = vmatpush1.msra.mxu0 %v7393
    %7522 = vmatprep.subr.mxu0 %v7398
    %7523 = vmatpush1.msra.mxu0 %v7397
    %7524 = vmatprep.subr.mxu0 %v7402
    %7525 = vmatpush1.msra.mxu0 %v7401
    %7526 = vmatprep.subr.mxu0 %v7406
    %7527 = vmatpush1.msra.mxu0 %v7405
    %7528 = vmatprep.subr.mxu0 %v7410
    %7529 = vmatpush1.msra.mxu0 %v7409
    %7530 = vmatprep.subr.mxu0 %v7414
    %7531 = vmatpush1.msra.mxu0 %v7413
    %7532 = vmatprep.subr.mxu0 %v7418
    %7533 = vmatpush1.msra.mxu0 %v7417
    %7534 = vmatprep.subr.mxu0 %v7422
    %7535 = vmatpush1.msra.mxu0 %v7421
    %7536 = vmatprep.subr.mxu0 %v7426
    %7537 = vmatpush1.msra.mxu0 %v7425
    %7538 = vmatprep.subr.mxu0 %v7430
    %7539 = vmatpush1.msra.mxu0 %v7429
    %7540 = vmatprep.subr.mxu0 %v7434
    %7541 = vmatpush1.msra.mxu0 %v7433
    %7542 = vmatprep.subr.mxu0 %v7438
    %7543 = vmatpush1.msra.mxu0 %v7437
    %7544 = vmatprep.subr.mxu0 %v7442
    %7545 = vmatpush1.msra.mxu0 %v7441
    %7546 = vmatprep.subr.mxu0 0.0
    %7547 = vmatpush1.msra.mxu0 0.0
    %7548 = vmatprep.subr.mxu0 0.0
    %7549 = vmatpush1.msra.mxu0 0.0
    %7550 = vmatprep.subr.mxu0 0.0
    %7551 = vmatpush1.msra.mxu0 0.0
    %7552 = vmatprep.subr.mxu0 0.0
    %7553 = vmatpush1.msra.mxu0 0.0
    %7554 = vmatprep.subr.mxu0 0.0
    %7555 = vmatpush1.msra.mxu0 0.0
    %7556 = vmatprep.subr.mxu0 0.0
    %7557 = vmatpush1.msra.mxu0 0.0
    %7558 = vmatprep.subr.mxu0 0.0
    %7559 = vmatpush1.msra.mxu0 0.0
    %7560 = vmatprep.subr.mxu0 0.0
    %7561 = vmatpush1.msra.mxu0 0.0
    %7562 = vmatprep.subr.mxu0 0.0
    %7563 = vmatpush1.msra.mxu0 0.0
    %7564 = vmatprep.subr.mxu0 0.0
    %7565 = vmatpush1.msra.mxu0 0.0
    %7566 = vmatprep.subr.mxu0 0.0
    %7567 = vmatpush1.msra.mxu0 0.0
    %7568 = vmatprep.subr.mxu0 0.0
    %7569 = vmatpush1.msra.mxu0 0.0
    %7570 = vmatprep.subr.mxu0 0.0
    %7571 = vmatpush1.msra.mxu0 0.0
    %7572 = vmatprep.subr.mxu0 0.0
    %7573 = vmatpush1.msra.mxu0 0.0
    %7574 = vmatprep.subr.mxu0 0.0
    %7575 = vmatpush1.msra.mxu0 0.0
    %7576 = vmatprep.subr.mxu0 0.0
    %7577 = vmatpush1.msra.mxu0 0.0
    %7578 = vmatprep.mubr.f32.mxu0 0.0
    %7579 = vmatmul.mubr.f32.gmra.mrb[0].mxu0 0.0
    %v7580 = vpop.f32.mrb[0].mxu0
    %v7581 = vadd.f32 0.0, %v7580
    %v7582 = vpop.f32.mrb[0].mxu0
    %v7583 = vadd.f32 0.0, %v7582
    %7584 = vdwg.mxu0
    %v7585 = vadd.f32 %v7375, %v7510
    %v7586 = vadd.f32 %v7376, %v7512
    %v7587 = vadd.f32 %v7377, %v7581
    %v7588 = vadd.f32 %v7378, %v7583
    %v7589 = vxor.u32 %v7585, 2147483648
    %v7590 = vmul.f32 %v7589, 1.442695
    %v7591 = vpow.pop %v7590
    %v7592 = vadd.f32 %v7591, 1.0
    %v7593 = vrcp.pop %v7592
    %v7594 = vmul.f32 1.0, %v7593
    %v7595 = vxor.u32 %v7586, 2147483648
    %v7596 = vmul.f32 %v7595, 1.442695
    %v7597 = vpow.pop %v7596
    %v7598 = vadd.f32 %v7597, 1.0
    %v7599 = vrcp.pop %v7598
    %v7600 = vmul.f32 1.0, %v7599
    %v7601 = vtanh.pop %v7587
    %v7602 = vxor.u32 %v7588, 2147483648
    %v7603 = vmul.f32 %v7602, 1.442695
    %v7604 = vpow.pop %v7603
    %v7605 = vadd.f32 %v7604, 1.0
    %v7606 = vrcp.pop %v7605
    %v7607 = vmul.f32 1.0, %v7606
    %v7608 = vmul.f32 %v7600, 0.0
    %v7609 = vmul.f32 %v7594, %v7601
    %v7610 = vadd.f32 %v7608, %v7609
    %v7611 = vtanh.pop %v7610
    %v7612 = vmul.f32 %v7607, %v7611
    %v7613 = vld [vmem:[%s11] sm:$0xff]
    %v7614 = vld [vmem:[%s11 + $0x8] sm:$0xff]
    %v7615 = vld [vmem:[%s11 + $0x10] sm:$0xff]
    %v7616 = vld [vmem:[%s11 + $0x18] sm:$0xff]
    %v7617 = vld [vmem:[%s11 + $0x20] sm:$0xff]
    %v7618 = vld [vmem:[%s11 + $0x28] sm:$0xff]
    %v7619 = vld [vmem:[%s11 + $0x30] sm:$0xff]
    %v7620 = vld [vmem:[%s11 + $0x38] sm:$0xff]
    %v7621 = vld [vmem:[%s11 + $0x40] sm:$0xff]
    %v7622 = vld [vmem:[%s11 + $0x48] sm:$0xff]
    %v7623 = vld [vmem:[%s11 + $0x50] sm:$0xff]
    %v7624 = vld [vmem:[%s11 + $0x58] sm:$0xff]
    %v7625 = vld [vmem:[%s11 + $0x60] sm:$0xff]
    %v7626 = vld [vmem:[%s11 + $0x68] sm:$0xff]
    %v7627 = vld [vmem:[%s11 + $0x70] sm:$0xff]
    %v7628 = vld [vmem:[%s11 + $0x78] sm:$0xff]
    %v7629 = vld [vmem:[%s11 + $0x80] sm:$0xff]
    %v7630 = vld [vmem:[%s11 + $0x88] sm:$0xff]
    %v7631 = vld [vmem:[%s11 + $0x90] sm:$0xff]
    %v7632 = vld [vmem:[%s11 + $0x98] sm:$0xff]
    %v7633 = vld [vmem:[%s11 + $0xa0] sm:$0xff]
    %v7634 = vld [vmem:[%s11 + $0xa8] sm:$0xff]
    %v7635 = vld [vmem:[%s11 + $0xb0] sm:$0xff]
    %v7636 = vld [vmem:[%s11 + $0xb8] sm:$0xff]
    %v7637 = vld [vmem:[%s11 + $0xc0] sm:$0xff]
    %v7638 = vld [vmem:[%s11 + $0xc8] sm:$0xff]
    %v7639 = vld [vmem:[%s11 + $0xd0] sm:$0xff]
    %v7640 = vld [vmem:[%s11 + $0xd8] sm:$0xff]
    %v7641 = vld [vmem:[%s11 + $0xe0] sm:$0xff]
    %v7642 = vld [vmem:[%s11 + $0xe8] sm:$0xff]
    %v7643 = vld [vmem:[%s11 + $0xf0] sm:$0xff]
    %v7644 = vld [vmem:[%s11 + $0xf8] sm:$0xff]
    %7645 = vmatprep.subr.mxu0 0.0
    %7646 = vmatpush1.msra.mxu0 %v7629
    %7647 = vmatprep.subr.mxu0 0.0
    %7648 = vmatpush1.msra.mxu0 %v7630
    %7649 = vmatprep.subr.mxu0 0.0
    %7650 = vmatpush1.msra.mxu0 %v7631
    %7651 = vmatprep.subr.mxu0 0.0
    %7652 = vmatpush1.msra.mxu0 %v7632
    %7653 = vmatprep.subr.mxu0 0.0
    %7654 = vmatpush1.msra.mxu0 %v7633
    %7655 = vmatprep.subr.mxu0 0.0
    %7656 = vmatpush1.msra.mxu0 %v7634
    %7657 = vmatprep.subr.mxu0 0.0
    %7658 = vmatpush1.msra.mxu0 %v7635
    %7659 = vmatprep.subr.mxu0 0.0
    %7660 = vmatpush1.msra.mxu0 %v7636
    %7661 = vmatprep.subr.mxu0 0.0
    %7662 = vmatpush1.msra.mxu0 %v7637
    %7663 = vmatprep.subr.mxu0 0.0
    %7664 = vmatpush1.msra.mxu0 %v7638
    %7665 = vmatprep.subr.mxu0 0.0
    %7666 = vmatpush1.msra.mxu0 %v7639
    %7667 = vmatprep.subr.mxu0 0.0
    %7668 = vmatpush1.msra.mxu0 %v7640
    %7669 = vmatprep.subr.mxu0 0.0
    %7670 = vmatpush1.msra.mxu0 %v7641
    %7671 = vmatprep.subr.mxu0 0.0
    %7672 = vmatpush1.msra.mxu0 %v7642
    %7673 = vmatprep.subr.mxu0 0.0
    %7674 = vmatpush1.msra.mxu0 %v7643
    %7675 = vmatprep.subr.mxu0 0.0
    %7676 = vmatpush1.msra.mxu0 %v7644
    %7677 = vmatprep.subr.mxu0 0.0
    %7678 = vmatpush1.msra.mxu0 0.0
    %7679 = vmatprep.subr.mxu0 0.0
    %7680 = vmatpush1.msra.mxu0 0.0
    %7681 = vmatprep.subr.mxu0 0.0
    %7682 = vmatpush1.msra.mxu0 0.0
    %7683 = vmatprep.subr.mxu0 0.0
    %7684 = vmatpush1.msra.mxu0 0.0
    %7685 = vmatprep.subr.mxu0 0.0
    %7686 = vmatpush1.msra.mxu0 0.0
    %7687 = vmatprep.subr.mxu0 0.0
    %7688 = vmatpush1.msra.mxu0 0.0
    %7689 = vmatprep.subr.mxu0 0.0
    %7690 = vmatpush1.msra.mxu0 0.0
    %7691 = vmatprep.subr.mxu0 0.0
    %7692 = vmatpush1.msra.mxu0 0.0
    %7693 = vmatprep.subr.mxu0 0.0
    %7694 = vmatpush1.msra.mxu0 0.0
    %7695 = vmatprep.subr.mxu0 0.0
    %7696 = vmatpush1.msra.mxu0 0.0
    %7697 = vmatprep.subr.mxu0 0.0
    %7698 = vmatpush1.msra.mxu0 0.0
    %7699 = vmatprep.subr.mxu0 0.0
    %7700 = vmatpush1.msra.mxu0 0.0
    %7701 = vmatprep.subr.mxu0 0.0
    %7702 = vmatpush1.msra.mxu0 0.0
    %7703 = vmatprep.subr.mxu0 0.0
    %7704 = vmatpush1.msra.mxu0 0.0
    %7705 = vmatprep.subr.mxu0 0.0
    %7706 = vmatpush1.msra.mxu0 0.0
    %7707 = vmatprep.subr.mxu0 0.0
    %7708 = vmatpush1.msra.mxu0 0.0
    %7709 = vmatprep.mubr.f32.mxu0 0.0
    %7710 = vmatmul.mubr.f32.gmra.mrb[0].mxu0 %v7612
    %v7711 = vpop.f32.mrb[0].mxu0
    %v7712 = vadd.f32 0.0, %v7711
    %v7713 = vpop.f32.mrb[0].mxu0
    %7714 = vdwg.mxu0
    %7715 = vmatprep.subr.mxu0 0.0
    %7716 = vmatpush1.msra.mxu0 %v7613
    %7717 = vmatprep.subr.mxu0 0.0
    %7718 = vmatpush1.msra.mxu0 %v7614
    %7719 = vmatprep.subr.mxu0 0.0
    %7720 = vmatpush1.msra.mxu0 %v7615
    %7721 = vmatprep.subr.mxu0 0.0
    %7722 = vmatpush1.msra.mxu0 %v7616
    %7723 = vmatprep.subr.mxu0 0.0
    %7724 = vmatpush1.msra.mxu0 %v7617
    %7725 = vmatprep.subr.mxu0 0.0
    %7726 = vmatpush1.msra.mxu0 %v7618
    %7727 = vmatprep.subr.mxu0 0.0
    %7728 = vmatpush1.msra.mxu0 %v7619
    %7729 = vmatprep.subr.mxu0 0.0
    %7730 = vmatpush1.msra.mxu0 %v7620
    %7731 = vmatprep.subr.mxu0 0.0
    %7732 = vmatpush1.msra.mxu0 %v7621
    %7733 = vmatprep.subr.mxu0 0.0
    %7734 = vmatpush1.msra.mxu0 %v7622
    %7735 = vmatprep.subr.mxu0 0.0
    %7736 = vmatpush1.msra.mxu0 %v7623
    %7737 = vmatprep.subr.mxu0 0.0
    %7738 = vmatpush1.msra.mxu0 %v7624
    %7739 = vmatprep.subr.mxu0 0.0
    %7740 = vmatpush1.msra.mxu0 %v7625
    %7741 = vmatprep.subr.mxu0 0.0
    %7742 = vmatpush1.msra.mxu0 %v7626
    %7743 = vmatprep.subr.mxu0 0.0
    %7744 = vmatpush1.msra.mxu0 %v7627
    %7745 = vmatprep.subr.mxu0 0.0
    %7746 = vmatpush1.msra.mxu0 %v7628
    %7747 = vmatprep.subr.mxu0 0.0
    %7748 = vmatpush1.msra.mxu0 0.0
    %7749 = vmatprep.subr.mxu0 0.0
    %7750 = vmatpush1.msra.mxu0 0.0
    %7751 = vmatprep.subr.mxu0 0.0
    %7752 = vmatpush1.msra.mxu0 0.0
    %7753 = vmatprep.subr.mxu0 0.0
    %7754 = vmatpush1.msra.mxu0 0.0
    %7755 = vmatprep.subr.mxu0 0.0
    %7756 = vmatpush1.msra.mxu0 0.0
    %7757 = vmatprep.subr.mxu0 0.0
    %7758 = vmatpush1.msra.mxu0 0.0
    %7759 = vmatprep.subr.mxu0 0.0
    %7760 = vmatpush1.msra.mxu0 0.0
    %7761 = vmatprep.subr.mxu0 0.0
    %7762 = vmatpush1.msra.mxu0 0.0
    %7763 = vmatprep.subr.mxu0 0.0
    %7764 = vmatpush1.msra.mxu0 0.0
    %7765 = vmatprep.subr.mxu0 0.0
    %7766 = vmatpush1.msra.mxu0 0.0
    %7767 = vmatprep.subr.mxu0 0.0
    %7768 = vmatpush1.msra.mxu0 0.0
    %7769 = vmatprep.subr.mxu0 0.0
    %7770 = vmatpush1.msra.mxu0 0.0
    %7771 = vmatprep.subr.mxu0 0.0
    %7772 = vmatpush1.msra.mxu0 0.0
    %7773 = vmatprep.subr.mxu0 0.0
    %7774 = vmatpush1.msra.mxu0 0.0
    %7775 = vmatprep.subr.mxu0 0.0
    %7776 = vmatpush1.msra.mxu0 0.0
    %7777 = vmatprep.subr.mxu0 0.0
    %7778 = vmatpush1.msra.mxu0 0.0
    %7779 = vmatprep.mubr.f32.mxu0 0.0
    %7780 = vmatmul.mubr.f32.gmra.mrb[0].mxu0 %v6938
    %v7781 = vpop.f32.mrb[0].mxu0
    %v7782 = vadd.f32 %v7712, %v7781
    %v7783 = vpop.f32.mrb[0].mxu0
    %7784 = vdwg.mxu0
    %v7785 = vld [vmem:[%s12] sm:$0x1]
    %v7787 = vlaneseq
    %v7788 = vshrl.u32 %v7787, 7
    %v7789 = vsub.s32 0, %v7788
    %v7790 = vrot.slane %v7785, %v7789
    %v7792 = vadd.f32 %v7782, %v7790
    %vm7793 = vcmask 39936
    %7794 = vst.msk [vmem:[%s13] sm:$0xff] %vm7793, %v7792
    // Predicated region
    $region74: #{net_forward.1} parent=1 // pred_check
      _
    $region75: #{net_forward.1} parent=1 // pred_check_branch
      %7796 = sbr.rel (0) target = $region77
    $region76: #{net_forward.1} parent=1 // pred_region
      _
    $region77: #{net_forward.1} parent=1 // pred_fallthru
      _
    // Predicated region
    $region78: #{net_forward.1} parent=1 // pred_check
      _
    $region79: #{net_forward.1} parent=1 // pred_check_branch
      %7798 = sbr.rel (0) target = $region81
    $region80: #{net_forward.1} parent=1 // pred_region
      _
    $region81: #{net_forward.1} parent=1 // pred_fallthru
      _
    %7799 = vsyncpa [#allocation8], 1
    %7800 = vsyncpa [#allocation10], 1
    %7801 = vsyncpa [#allocation13], 1

</llo_original>
